<compile_context>
chip_gen: v7x
topology: tpu7x:2x2x1
jax: 0.10.0
libtpu: 0.0.40
codegen_flags: <defaults>
</compile_context>

<pallas_src>
import functools

import jax
import jax.numpy as jnp
from jax.experimental import pallas as pl
from jax.experimental.pallas import tpu as pltpu

LANE = 128
COL0 = 8          # interior column start inside the padded scratch (8-aligned)


def _round_up(v, m):
    return (v + m - 1) // m * m


# ---------------------------------------------------------------------------
# In-kernel helpers
# ---------------------------------------------------------------------------
def _zero_halo(ref, H, W):
    """Zero only the conv halo of a (He, Wp, C) scratch whose interior lives at
    rows [1:1+H], cols [COL0:COL0+W].  The interior is fully overwritten every
    grid step and stale lanes >= cin never reach the MXU, so this is all the
    per-step re-initialization needed (and it is megacore-safe)."""
    He, Wp, C = ref.shape
    dt = ref.dtype
    ref[0:1, :, :] = jnp.zeros((1, Wp, C), dt)                           # top pad row
    ref[1 + H:He, :, :] = jnp.zeros((He - 1 - H, Wp, C), dt)             # bottom pad + slack
    ref[1:1 + H, 0:COL0, :] = jnp.zeros((H, COL0, C), dt)                # left pad cols
    ref[1:1 + H, COL0 + W:Wp, :] = jnp.zeros((H, Wp - COL0 - W, C), dt)  # right pad cols


def _conv3x3_relu(pad_ref, w_ref, b_ref, *, Hout, d, cin):
    """3x3 conv (dilation d, padding 1) + bias + ReLU over the spatially padded
    f32 scratch, as 9 accumulating MXU matmuls (bf16 operands, f32 accum).
    No im2col slab is materialized; each tap's LHS is a sublane-offset slice of
    the flattened scratch, lane-sliced to the real `cin` channels.  Returns an
    (Hout, Wp, C) f32 slab whose columns beyond the valid output width are
    garbage (caller crops them before any reuse)."""
    He, Wp, C = pad_ref.shape
    xf = pad_ref[:, :, :cin].reshape(He * Wp, cin)      # free reshape: Wp % 8 == 0
    M = Hout * Wp
    acc = jnp.zeros((M, C), jnp.float32)
    for kh in range(3):
        for kw in range(3):
            t = kh * 3 + kw
            off = kh * d * Wp + kw * d + (COL0 - 1)     # static sublane offset
            lhs = xf[off:off + M, :].astype(jnp.bfloat16)
            acc = acc + jnp.dot(lhs, w_ref[t * C:t * C + cin, :],
                                preferred_element_type=jnp.float32)
    return jnp.maximum(acc + b_ref[...], 0.0).reshape(Hout, Wp, C)


def _upblock_kernel(x1_ref, x2_ref, wh_ref, bh_ref, w1_ref, b1_ref,
                    w2_ref, b2_ref, o_ref, s0_ref, s1_ref, s2_ref, *,
                    H2, W2, H1, W1, Hf, c1, c2, outc, d):
    _zero_halo(s0_ref, H2, W2)
    _zero_halo(s1_ref, H2, W2)
    _zero_halo(s2_ref, H1, W1)

    # ---- halfChanelConv: 3x3, dilation 1, padding 1, ReLU on upsampled x1.
    # Its weights were packed with output channels shifted to lanes [c2:c2+outc]
    # so the result already sits where the fused concat needs it.
    s0_ref[1:1 + H2, COL0:COL0 + W2, :c1] = x1_ref[0].astype(jnp.float32)
    h = _conv3x3_relu(s0_ref, wh_ref, bh_ref, Hout=H2, d=1, cin=c1)

    # ---- conv stage 1 over concat([x2, h]) fused into ONE conv: x2 in lanes
    # [0:c2], h in lanes [c2:c2+outc] of one scratch, unsplit conv1 weights.
    # (h/y1 are cropped to the valid width so garbage columns never reach the
    # scratch — required for the halo-only zeroing to stay correct.)
    s1_ref[1:1 + H2, COL0:COL0 + W2, :c2] = x2_ref[0].astype(jnp.float32)
    s1_ref[1:1 + H2, COL0:COL0 + W2, c2:c2 + outc] = h[:, :W2, c2:c2 + outc]
    y1 = _conv3x3_relu(s1_ref, w1_ref, b1_ref, Hout=H1, d=d, cin=c2 + outc)

    # ---- conv stage 2: 3x3, dilation d, padding 1, ReLU
    s2_ref[1:1 + H1, COL0:COL0 + W1, :outc] = y1[:, :W1, :outc]
    y2 = _conv3x3_relu(s2_ref, w2_ref, b2_ref, Hout=Hf, d=d, cin=outc)

    Wfp = o_ref.shape[2]
    o_ref[...] = y2[:, :Wfp, :outc].reshape(1, Hf, Wfp, outc).astype(o_ref.dtype)


# ---------------------------------------------------------------------------
# Wrapper-side parameter packing (bf16 im2col weights, f32 biases)
# ---------------------------------------------------------------------------
def _pack_weight(w_hwio, cpad, out_off=0):
    _, _, cin, cout = w_hwio.shape
    wp = jnp.zeros((3, 3, cpad, cpad), jnp.float32)
    wp = wp.at[:, :, :cin, out_off:out_off + cout].set(w_hwio.astype(jnp.float32))
    return wp.reshape(9 * cpad, cpad).astype(jnp.bfloat16)


def _pack_bias(b, cpad, out_off=0):
    return jnp.zeros((1, cpad), jnp.float32).at[0, out_off:out_off + b.shape[0]].set(b)


# TODO(synk): nearest-neighbor upsample + NCHW<->NHWC transposes stay as plain
# XLA layout glue outside the kernel.
def nearest_interpolate_nchw(x, out_h, out_w):
    """F.interpolate(mode='nearest'): src_idx = floor(dst_idx * in/out)."""
    _, _, H, W = x.shape
    hi = (jnp.arange(out_h) * H) // out_h
    wi = (jnp.arange(out_w) * W) // out_w
    return x[:, :, hi[:, None], wi[None, :]]


# ---------------------------------------------------------------------------
# UpBlock forward (NCHW in, NCHW out)
# ---------------------------------------------------------------------------
@functools.partial(jax.jit, static_argnames=("dilation",))
def upblock_forward(params, x1, x2, *, dilation):
    N, c1, _, _ = x1.shape
    _, c2, H2, W2 = x2.shape
    outc = params["w_half"].shape[-1]
    cin1 = params["w_c1"].shape[-2]
    assert cin1 == c2 + outc, "concat width must match conv1 input channels"
    d = dilation

    cpad = _round_up(max(c1, cin1, outc), LANE)   # MXU lane width (weights only)

    # x1 = F.interpolate(x1, size=(H2, W2), mode='nearest'); NCHW -> NHWC with
    # REAL channel counts (no 128-lane HBM padding), bf16 to halve HBM reads.
    x1u = nearest_interpolate_nchw(x1, H2, W2)
    x1n = jnp.transpose(x1u, (0, 2, 3, 1)).astype(jnp.bfloat16)
    x2n = jnp.transpose(x2, (0, 2, 3, 1)).astype(jnp.bfloat16)

    # conv output sizes (PyTorch: H + 2*pad - dilation*(k-1), pad=1, k=3)
    H1, W1 = H2 + 2 - 2 * d, W2 + 2 - 2 * d
    Hf, Wf = H1 + 2 - 2 * d, W1 + 2 - 2 * d
    assert Hf > 0 and Wf > 0

    # padded-scratch geometry: interior at cols [COL0:COL0+W] (aligned stores),
    # width covers the right conv-pad column, rounded to a sublane multiple.
    Wp0 = _round_up(W2 + COL0 + 1, 8)
    Wp1 = _round_up(W1 + COL0 + 1, 8)
    Wfp = _round_up(Wf, 8)                 # sublane-dense output slab, cropped below
    assert 2 * d + COL0 - 1 < min(Wp0, Wp1)

    wh = _pack_weight(params["w_half"], cpad, out_off=c2)   # pre-shifted for the concat
    w1 = _pack_weight(params["w_c1"], cpad)
    w2 = _pack_weight(params["w_c2"], cpad)
    bh = _pack_bias(params["b_half"], cpad, out_off=c2)
    b1 = _pack_bias(params["b_c1"], cpad)
    b2 = _pack_bias(params["b_c2"], cpad)

    kernel = functools.partial(_upblock_kernel, H2=H2, W2=W2, H1=H1, W1=W1,
                               Hf=Hf, c1=c1, c2=c2, outc=outc, d=d)

    x1_spec = pl.BlockSpec((1, H2, W2, c1), lambda n: (n, 0, 0, 0))
    x2_spec = pl.BlockSpec((1, H2, W2, c2), lambda n: (n, 0, 0, 0))
    w_spec = pl.BlockSpec((9 * cpad, cpad), lambda n: (0, 0))
    b_spec = pl.BlockSpec((1, cpad), lambda n: (0, 0))

    out_p = pl.pallas_call(
        kernel,
        out_shape=jax.ShapeDtypeStruct((N, Hf, Wfp, outc), jnp.float32),
        grid=(N,),
        in_specs=[x1_spec, x2_spec,
                  w_spec, b_spec,          # halfChanelConv (outputs at lanes [c2:c2+outc])
                  w_spec, b_spec,          # conv stage 1 (unsplit, fused concat)
                  w_spec, b_spec],         # conv stage 2
        out_specs=pl.BlockSpec((1, Hf, Wfp, outc), lambda n: (n, 0, 0, 0)),
        scratch_shapes=[
            pltpu.VMEM((H2 + 3, Wp0, cpad), jnp.float32),   # padded x1
            pltpu.VMEM((H2 + 3, Wp0, cpad), jnp.float32),   # padded concat([x2, h])
            pltpu.VMEM((H1 + 3, Wp1, cpad), jnp.float32),   # padded y1
        ],
        compiler_params=pltpu.CompilerParams(
            dimension_semantics=("parallel",),
            vmem_limit_bytes=32 * 1024 * 1024,
        ),
    )(x1n, x2n, wh, bh, w1, b1, w2, b2)

    # drop the padded output columns, NHWC -> NCHW
    return jnp.transpose(out_p[:, :, :Wf, :], (0, 3, 1, 2)).astype(x1.dtype)


# ---------------------------------------------------------------------------
# Parameters (deterministic kaiming-normal-style init, HWIO layout)
# ---------------------------------------------------------------------------
def init_upblock_params(key, inchannels, outchannels):
    ks = jax.random.split(key, 6)

    def kaiming(k, cin, cout):
        fan_in = cin * 3 * 3
        std = (2.0 / fan_in) ** 0.5
        return jax.random.normal(k, (3, 3, cin, cout), jnp.float32) * std

    def bias(k, cin, cout):
        bound = 1.0 / (cin * 3 * 3) ** 0.5
        return jax.random.uniform(k, (cout,), jnp.float32, -bound, bound)

    return {
        "w_half": kaiming(ks[0], inchannels, outchannels),
        "b_half": bias(ks[1], inchannels, outchannels),
        "w_c1": kaiming(ks[2], inchannels, outchannels),
        "b_c1": bias(ks[3], inchannels, outchannels),
        "w_c2": kaiming(ks[4], outchannels, outchannels),
        "b_c2": bias(ks[5], outchannels, outchannels),
    }


# ---------------------------------------------------------------------------
# Pure-JAX f32 reference (correctness check)
# ---------------------------------------------------------------------------
def _ref_conv_relu(x_nhwc, w_hwio, b, dilation):
    y = jax.lax.conv_general_dilated(
        x_nhwc, w_hwio, window_strides=(1, 1),
        padding=((1, 1), (1, 1)), rhs_dilation=(dilation, dilation),
        dimension_numbers=("NHWC", "HWIO", "NHWC"))
    return jax.nn.relu(y + b)


def ref_upblock_forward(params, x1, x2, *, dilation):
    H2, W2 = x2.shape[2], x2.shape[3]
    x1 = nearest_interpolate_nchw(x1, H2, W2)
    x1_nhwc = jnp.transpose(x1, (0, 2, 3, 1))
    x2_nhwc = jnp.transpose(x2, (0, 2, 3, 1))
    h = _ref_conv_relu(x1_nhwc, params["w_half"], params["b_half"], 1)
    x = jnp.concatenate([x2_nhwc, h], axis=-1)
    x = _ref_conv_relu(x, params["w_c1"], params["b_c1"], dilation)
    x = _ref_conv_relu(x, params["w_c2"], params["b_c2"], dilation)
    return jnp.transpose(x, (0, 3, 1, 2))


if __name__ == "__main__":
    key = jax.random.PRNGKey(0)
    k_p, k_x1, k_x2 = jax.random.split(key, 3)

    inchannels, outchannels, dilation = 8, 4, 2
    batch = 2

    params = init_upblock_params(k_p, inchannels, outchannels)

    # x1: deeper feature map (inchannels, half spatial); x2: skip connection
    # with (inchannels - outchannels) channels so the concat has `inchannels`.
    x1 = jax.random.normal(k_x1, (batch, inchannels, 8, 8), jnp.float32)
    x2 = jax.random.normal(k_x2, (batch, inchannels - outchannels, 16, 16),
                           jnp.float32)

    out = jax.block_until_ready(upblock_forward(params, x1, x2, dilation=dilation))
    ref = jax.block_until_ready(ref_upblock_forward(params, x1, x2, dilation=dilation))

    assert out.shape == ref.shape, (out.shape, ref.shape)
    # bf16 MXU operands with f32 accumulation -> slightly loosened tolerance
    assert jnp.allclose(out, ref, atol=1e-1, rtol=5e-2), float(
        jnp.max(jnp.abs(out - ref)))

    print("KERNEL_OK")
</pallas_src>

<mosaic_0001>
module attributes {stable_mosaic.version = 11 : i64} {
  func.func @_upblock_kernel(%arg0: i32, %arg1: memref<1x16x16x8xbf16, #tpu.memory_space<vmem>>, %arg2: memref<1x16x16x4xbf16, #tpu.memory_space<vmem>>, %arg3: memref<1152x128xbf16, #tpu.memory_space<vmem>>, %arg4: memref<1x128xf32, #tpu.memory_space<vmem>>, %arg5: memref<1152x128xbf16, #tpu.memory_space<vmem>>, %arg6: memref<1x128xf32, #tpu.memory_space<vmem>>, %arg7: memref<1152x128xbf16, #tpu.memory_space<vmem>>, %arg8: memref<1x128xf32, #tpu.memory_space<vmem>>, %arg9: memref<1x12x16x4xf32, #tpu.memory_space<vmem>>, %arg10: memref<19x32x128xf32, #tpu.memory_space<vmem>>, %arg11: memref<19x32x128xf32, #tpu.memory_space<vmem>>, %arg12: memref<17x24x128xf32, #tpu.memory_space<vmem>>) attributes {dimension_semantics = [#tpu.dimension_semantics<parallel>], iteration_bounds = array<i64: 2>, scalar_prefetch = 0 : i64, scratch_operands = 3 : i64, tpu.core_type = #tpu.core_type<tc>, window_params = [{transform_indices = @transform_0, window_bounds = array<i64: 1, 16, 16, 8>}, {transform_indices = @transform_1, window_bounds = array<i64: 1, 16, 16, 4>}, {pipeline_mode = #tpu.pipeline_mode<synchronous>, transform_indices = @transform_2, window_bounds = array<i64: 1152, 128>}, {pipeline_mode = #tpu.pipeline_mode<synchronous>, transform_indices = @transform_3, window_bounds = array<i64: 1, 128>}, {pipeline_mode = #tpu.pipeline_mode<synchronous>, transform_indices = @transform_4, window_bounds = array<i64: 1152, 128>}, {pipeline_mode = #tpu.pipeline_mode<synchronous>, transform_indices = @transform_5, window_bounds = array<i64: 1, 128>}, {pipeline_mode = #tpu.pipeline_mode<synchronous>, transform_indices = @transform_6, window_bounds = array<i64: 1152, 128>}, {pipeline_mode = #tpu.pipeline_mode<synchronous>, transform_indices = @transform_7, window_bounds = array<i64: 1, 128>}, {transform_indices = @transform_8, window_bounds = array<i64: 1, 12, 16, 4>}]} {
    %cst = arith.constant 0.000000e+00 : f32
    %0 = vector.broadcast %cst : f32 to vector<1x32x128xf32>
    %c0 = arith.constant 0 : index
    %c0_0 = arith.constant 0 : index
    %c0_1 = arith.constant 0 : index
    %1 = vector.load %arg10[%c0, %c0_0, %c0_1] : memref<19x32x128xf32, #tpu.memory_space<vmem>>, vector<1x32x128xf32>
    tpu.vector_store %arg10[%c0, %c0_0, %c0_1], %0 {strides = array<i32>} : memref<19x32x128xf32, #tpu.memory_space<vmem>>, vector<1x32x128xf32>,
    %cst_2 = arith.constant 0.000000e+00 : f32
    %2 = vector.broadcast %cst_2 : f32 to vector<2x32x128xf32>
    %c17 = arith.constant 17 : index
    %c0_3 = arith.constant 0 : index
    %c0_4 = arith.constant 0 : index
    %3 = vector.load %arg10[%c17, %c0_3, %c0_4] : memref<19x32x128xf32, #tpu.memory_space<vmem>>, vector<2x32x128xf32>
    tpu.vector_store %arg10[%c17, %c0_3, %c0_4], %2 {strides = array<i32>} : memref<19x32x128xf32, #tpu.memory_space<vmem>>, vector<2x32x128xf32>,
    %cst_5 = arith.constant 0.000000e+00 : f32
    %4 = vector.broadcast %cst_5 : f32 to vector<16x8x128xf32>
    %c1 = arith.constant 1 : index
    %c0_6 = arith.constant 0 : index
    %c0_7 = arith.constant 0 : index
    %5 = vector.load %arg10[%c1, %c0_6, %c0_7] : memref<19x32x128xf32, #tpu.memory_space<vmem>>, vector<16x8x128xf32>
    tpu.vector_store %arg10[%c1, %c0_6, %c0_7], %4 {strides = array<i32>} : memref<19x32x128xf32, #tpu.memory_space<vmem>>, vector<16x8x128xf32>,
    %cst_8 = arith.constant 0.000000e+00 : f32
    %6 = vector.broadcast %cst_8 : f32 to vector<16x8x128xf32>
    %c1_9 = arith.constant 1 : index
    %c24 = arith.constant 24 : index
    %c0_10 = arith.constant 0 : index
    %7 = vector.load %arg10[%c1_9, %c24, %c0_10] : memref<19x32x128xf32, #tpu.memory_space<vmem>>, vector<16x8x128xf32>
    tpu.vector_store %arg10[%c1_9, %c24, %c0_10], %6 {strides = array<i32>} : memref<19x32x128xf32, #tpu.memory_space<vmem>>, vector<16x8x128xf32>,
    %cst_11 = arith.constant 0.000000e+00 : f32
    %8 = vector.broadcast %cst_11 : f32 to vector<1x32x128xf32>
    %c0_12 = arith.constant 0 : index
    %c0_13 = arith.constant 0 : index
    %c0_14 = arith.constant 0 : index
    %9 = vector.load %arg11[%c0_12, %c0_13, %c0_14] : memref<19x32x128xf32, #tpu.memory_space<vmem>>, vector<1x32x128xf32>
    tpu.vector_store %arg11[%c0_12, %c0_13, %c0_14], %8 {strides = array<i32>} : memref<19x32x128xf32, #tpu.memory_space<vmem>>, vector<1x32x128xf32>,
    %cst_15 = arith.constant 0.000000e+00 : f32
    %10 = vector.broadcast %cst_15 : f32 to vector<2x32x128xf32>
    %c17_16 = arith.constant 17 : index
    %c0_17 = arith.constant 0 : index
    %c0_18 = arith.constant 0 : index
    %11 = vector.load %arg11[%c17_16, %c0_17, %c0_18] : memref<19x32x128xf32, #tpu.memory_space<vmem>>, vector<2x32x128xf32>
    tpu.vector_store %arg11[%c17_16, %c0_17, %c0_18], %10 {strides = array<i32>} : memref<19x32x128xf32, #tpu.memory_space<vmem>>, vector<2x32x128xf32>,
    %cst_19 = arith.constant 0.000000e+00 : f32
    %12 = vector.broadcast %cst_19 : f32 to vector<16x8x128xf32>
    %c1_20 = arith.constant 1 : index
    %c0_21 = arith.constant 0 : index
    %c0_22 = arith.constant 0 : index
    %13 = vector.load %arg11[%c1_20, %c0_21, %c0_22] : memref<19x32x128xf32, #tpu.memory_space<vmem>>, vector<16x8x128xf32>
    tpu.vector_store %arg11[%c1_20, %c0_21, %c0_22], %12 {strides = array<i32>} : memref<19x32x128xf32, #tpu.memory_space<vmem>>, vector<16x8x128xf32>,
    %cst_23 = arith.constant 0.000000e+00 : f32
    %14 = vector.broadcast %cst_23 : f32 to vector<16x8x128xf32>
    %c1_24 = arith.constant 1 : index
    %c24_25 = arith.constant 24 : index
    %c0_26 = arith.constant 0 : index
    %15 = vector.load %arg11[%c1_24, %c24_25, %c0_26] : memref<19x32x128xf32, #tpu.memory_space<vmem>>, vector<16x8x128xf32>
    tpu.vector_store %arg11[%c1_24, %c24_25, %c0_26], %14 {strides = array<i32>} : memref<19x32x128xf32, #tpu.memory_space<vmem>>, vector<16x8x128xf32>,
    %cst_27 = arith.constant 0.000000e+00 : f32
    %16 = vector.broadcast %cst_27 : f32 to vector<1x24x128xf32>
    %c0_28 = arith.constant 0 : index
    %c0_29 = arith.constant 0 : index
    %c0_30 = arith.constant 0 : index
    %17 = vector.load %arg12[%c0_28, %c0_29, %c0_30] : memref<17x24x128xf32, #tpu.memory_space<vmem>>, vector<1x24x128xf32>
    tpu.vector_store %arg12[%c0_28, %c0_29, %c0_30], %16 {strides = array<i32>} : memref<17x24x128xf32, #tpu.memory_space<vmem>>, vector<1x24x128xf32>,
    %cst_31 = arith.constant 0.000000e+00 : f32
    %18 = vector.broadcast %cst_31 : f32 to vector<2x24x128xf32>
    %c15 = arith.constant 15 : index
    %c0_32 = arith.constant 0 : index
    %c0_33 = arith.constant 0 : index
    %19 = vector.load %arg12[%c15, %c0_32, %c0_33] : memref<17x24x128xf32, #tpu.memory_space<vmem>>, vector<2x24x128xf32>
    tpu.vector_store %arg12[%c15, %c0_32, %c0_33], %18 {strides = array<i32>} : memref<17x24x128xf32, #tpu.memory_space<vmem>>, vector<2x24x128xf32>,
    %cst_34 = arith.constant 0.000000e+00 : f32
    %20 = vector.broadcast %cst_34 : f32 to vector<14x8x128xf32>
    %c1_35 = arith.constant 1 : index
    %c0_36 = arith.constant 0 : index
    %c0_37 = arith.constant 0 : index
    %21 = vector.load %arg12[%c1_35, %c0_36, %c0_37] : memref<17x24x128xf32, #tpu.memory_space<vmem>>, vector<14x8x128xf32>
    tpu.vector_store %arg12[%c1_35, %c0_36, %c0_37], %20 {strides = array<i32>} : memref<17x24x128xf32, #tpu.memory_space<vmem>>, vector<14x8x128xf32>,
    %cst_38 = arith.constant 0.000000e+00 : f32
    %22 = vector.broadcast %cst_38 : f32 to vector<14x2x128xf32>
    %c1_39 = arith.constant 1 : index
    %c22 = arith.constant 22 : index
    %c0_40 = arith.constant 0 : index
    %23 = vector.load %arg12[%c1_39, %c22, %c0_40] : memref<17x24x128xf32, #tpu.memory_space<vmem>>, vector<14x2x128xf32>
    tpu.vector_store %arg12[%c1_39, %c22, %c0_40], %22 {strides = array<i32>} : memref<17x24x128xf32, #tpu.memory_space<vmem>>, vector<14x2x128xf32>,
    %c0_41 = arith.constant 0 : index
    %c0_42 = arith.constant 0 : index
    %c0_43 = arith.constant 0 : index
    %c0_44 = arith.constant 0 : index
    %24 = vector.load %arg1[%c0_41, %c0_42, %c0_43, %c0_44] : memref<1x16x16x8xbf16, #tpu.memory_space<vmem>>, vector<1x16x16x8xbf16>
    %25 = vector.shape_cast %24 : vector<1x16x16x8xbf16> to vector<16x16x8xbf16>
    %26 = arith.extf %25 : vector<16x16x8xbf16> to vector<16x16x8xf32>
    %c1_45 = arith.constant 1 : index
    %c8 = arith.constant 8 : index
    %c0_46 = arith.constant 0 : index
    %27 = vector.load %arg10[%c1_45, %c8, %c0_46] : memref<19x32x128xf32, #tpu.memory_space<vmem>>, vector<16x16x8xf32>
    tpu.vector_store %arg10[%c1_45, %c8, %c0_46], %26 {strides = array<i32>} : memref<19x32x128xf32, #tpu.memory_space<vmem>>, vector<16x16x8xf32>,
    %c0_47 = arith.constant 0 : index
    %c0_48 = arith.constant 0 : index
    %c0_49 = arith.constant 0 : index
    %28 = vector.load %arg10[%c0_47, %c0_48, %c0_49] : memref<19x32x128xf32, #tpu.memory_space<vmem>>, vector<19x32x8xf32>
    %29 = vector.shape_cast %28 : vector<19x32x8xf32> to vector<608x8xf32>
    %cst_50 = arith.constant 0.000000e+00 : f32
    %30 = vector.broadcast %cst_50 : f32 to vector<512x128xf32>
    %31 = vector.extract_strided_slice %29 {offsets = [7, 0], sizes = [512, 8], strides = [1, 1]} : vector<608x8xf32> to vector<512x8xf32>
    %32 = arith.truncf %31 : vector<512x8xf32> to vector<512x8xbf16>
    %c0_51 = arith.constant 0 : index
    %c0_52 = arith.constant 0 : index
    %33 = vector.load %arg3[%c0_51, %c0_52] : memref<1152x128xbf16, #tpu.memory_space<vmem>>, vector<8x128xbf16>
    %cst_53 = arith.constant dense<0.000000e+00> : vector<512x128xf32>
    %34 = tpu.matmul %32, %33, %cst_53 {dimension_numbers = #tpu.dot_dimension_numbers<[1], [0], [0], [1], [0, 0, 1, 1], [], []>} : vector<512x8xbf16>, vector<8x128xbf16>, vector<512x128xf32> -> vector<512x128xf32>
    %35 = arith.addf %30, %34 : vector<512x128xf32>
    %36 = vector.extract_strided_slice %29 {offsets = [8, 0], sizes = [512, 8], strides = [1, 1]} : vector<608x8xf32> to vector<512x8xf32>
    %37 = arith.truncf %36 : vector<512x8xf32> to vector<512x8xbf16>
    %c128 = arith.constant 128 : index
    %c0_54 = arith.constant 0 : index
    %38 = vector.load %arg3[%c128, %c0_54] : memref<1152x128xbf16, #tpu.memory_space<vmem>>, vector<8x128xbf16>
    %cst_55 = arith.constant dense<0.000000e+00> : vector<512x128xf32>
    %39 = tpu.matmul %37, %38, %cst_55 {dimension_numbers = #tpu.dot_dimension_numbers<[1], [0], [0], [1], [0, 0, 1, 1], [], []>} : vector<512x8xbf16>, vector<8x128xbf16>, vector<512x128xf32> -> vector<512x128xf32>
    %40 = arith.addf %35, %39 : vector<512x128xf32>
    %41 = vector.extract_strided_slice %29 {offsets = [9, 0], sizes = [512, 8], strides = [1, 1]} : vector<608x8xf32> to vector<512x8xf32>
    %42 = arith.truncf %41 : vector<512x8xf32> to vector<512x8xbf16>
    %c256 = arith.constant 256 : index
    %c0_56 = arith.constant 0 : index
    %43 = vector.load %arg3[%c256, %c0_56] : memref<1152x128xbf16, #tpu.memory_space<vmem>>, vector<8x128xbf16>
    %cst_57 = arith.constant dense<0.000000e+00> : vector<512x128xf32>
    %44 = tpu.matmul %42, %43, %cst_57 {dimension_numbers = #tpu.dot_dimension_numbers<[1], [0], [0], [1], [0, 0, 1, 1], [], []>} : vector<512x8xbf16>, vector<8x128xbf16>, vector<512x128xf32> -> vector<512x128xf32>
    %45 = arith.addf %40, %44 : vector<512x128xf32>
    %46 = vector.extract_strided_slice %29 {offsets = [39, 0], sizes = [512, 8], strides = [1, 1]} : vector<608x8xf32> to vector<512x8xf32>
    %47 = arith.truncf %46 : vector<512x8xf32> to vector<512x8xbf16>
    %c384 = arith.constant 384 : index
    %c0_58 = arith.constant 0 : index
    %48 = vector.load %arg3[%c384, %c0_58] : memref<1152x128xbf16, #tpu.memory_space<vmem>>, vector<8x128xbf16>
    %cst_59 = arith.constant dense<0.000000e+00> : vector<512x128xf32>
    %49 = tpu.matmul %47, %48, %cst_59 {dimension_numbers = #tpu.dot_dimension_numbers<[1], [0], [0], [1], [0, 0, 1, 1], [], []>} : vector<512x8xbf16>, vector<8x128xbf16>, vector<512x128xf32> -> vector<512x128xf32>
    %50 = arith.addf %45, %49 : vector<512x128xf32>
    %51 = vector.extract_strided_slice %29 {offsets = [40, 0], sizes = [512, 8], strides = [1, 1]} : vector<608x8xf32> to vector<512x8xf32>
    %52 = arith.truncf %51 : vector<512x8xf32> to vector<512x8xbf16>
    %c512 = arith.constant 512 : index
    %c0_60 = arith.constant 0 : index
    %53 = vector.load %arg3[%c512, %c0_60] : memref<1152x128xbf16, #tpu.memory_space<vmem>>, vector<8x128xbf16>
    %cst_61 = arith.constant dense<0.000000e+00> : vector<512x128xf32>
    %54 = tpu.matmul %52, %53, %cst_61 {dimension_numbers = #tpu.dot_dimension_numbers<[1], [0], [0], [1], [0, 0, 1, 1], [], []>} : vector<512x8xbf16>, vector<8x128xbf16>, vector<512x128xf32> -> vector<512x128xf32>
    %55 = arith.addf %50, %54 : vector<512x128xf32>
    %56 = vector.extract_strided_slice %29 {offsets = [41, 0], sizes = [512, 8], strides = [1, 1]} : vector<608x8xf32> to vector<512x8xf32>
    %57 = arith.truncf %56 : vector<512x8xf32> to vector<512x8xbf16>
    %c640 = arith.constant 640 : index
    %c0_62 = arith.constant 0 : index
    %58 = vector.load %arg3[%c640, %c0_62] : memref<1152x128xbf16, #tpu.memory_space<vmem>>, vector<8x128xbf16>
    %cst_63 = arith.constant dense<0.000000e+00> : vector<512x128xf32>
    %59 = tpu.matmul %57, %58, %cst_63 {dimension_numbers = #tpu.dot_dimension_numbers<[1], [0], [0], [1], [0, 0, 1, 1], [], []>} : vector<512x8xbf16>, vector<8x128xbf16>, vector<512x128xf32> -> vector<512x128xf32>
    %60 = arith.addf %55, %59 : vector<512x128xf32>
    %61 = vector.extract_strided_slice %29 {offsets = [71, 0], sizes = [512, 8], strides = [1, 1]} : vector<608x8xf32> to vector<512x8xf32>
    %62 = arith.truncf %61 : vector<512x8xf32> to vector<512x8xbf16>
    %c768 = arith.constant 768 : index
    %c0_64 = arith.constant 0 : index
    %63 = vector.load %arg3[%c768, %c0_64] : memref<1152x128xbf16, #tpu.memory_space<vmem>>, vector<8x128xbf16>
    %cst_65 = arith.constant dense<0.000000e+00> : vector<512x128xf32>
    %64 = tpu.matmul %62, %63, %cst_65 {dimension_numbers = #tpu.dot_dimension_numbers<[1], [0], [0], [1], [0, 0, 1, 1], [], []>} : vector<512x8xbf16>, vector<8x128xbf16>, vector<512x128xf32> -> vector<512x128xf32>
    %65 = arith.addf %60, %64 : vector<512x128xf32>
    %66 = vector.extract_strided_slice %29 {offsets = [72, 0], sizes = [512, 8], strides = [1, 1]} : vector<608x8xf32> to vector<512x8xf32>
    %67 = arith.truncf %66 : vector<512x8xf32> to vector<512x8xbf16>
    %c896 = arith.constant 896 : index
    %c0_66 = arith.constant 0 : index
    %68 = vector.load %arg3[%c896, %c0_66] : memref<1152x128xbf16, #tpu.memory_space<vmem>>, vector<8x128xbf16>
    %cst_67 = arith.constant dense<0.000000e+00> : vector<512x128xf32>
    %69 = tpu.matmul %67, %68, %cst_67 {dimension_numbers = #tpu.dot_dimension_numbers<[1], [0], [0], [1], [0, 0, 1, 1], [], []>} : vector<512x8xbf16>, vector<8x128xbf16>, vector<512x128xf32> -> vector<512x128xf32>
    %70 = arith.addf %65, %69 : vector<512x128xf32>
    %71 = vector.extract_strided_slice %29 {offsets = [73, 0], sizes = [512, 8], strides = [1, 1]} : vector<608x8xf32> to vector<512x8xf32>
    %72 = arith.truncf %71 : vector<512x8xf32> to vector<512x8xbf16>
    %c1024 = arith.constant 1024 : index
    %c0_68 = arith.constant 0 : index
    %73 = vector.load %arg3[%c1024, %c0_68] : memref<1152x128xbf16, #tpu.memory_space<vmem>>, vector<8x128xbf16>
    %cst_69 = arith.constant dense<0.000000e+00> : vector<512x128xf32>
    %74 = tpu.matmul %72, %73, %cst_69 {dimension_numbers = #tpu.dot_dimension_numbers<[1], [0], [0], [1], [0, 0, 1, 1], [], []>} : vector<512x8xbf16>, vector<8x128xbf16>, vector<512x128xf32> -> vector<512x128xf32>
    %75 = arith.addf %70, %74 : vector<512x128xf32>
    %c0_70 = arith.constant 0 : index
    %c0_71 = arith.constant 0 : index
    %76 = vector.load %arg4[%c0_70, %c0_71] : memref<1x128xf32, #tpu.memory_space<vmem>>, vector<1x128xf32>
    %77 = vector.broadcast %76 : vector<1x128xf32> to vector<512x128xf32>
    %78 = arith.addf %75, %77 : vector<512x128xf32>
    %cst_72 = arith.constant 0.000000e+00 : f32
    %79 = vector.broadcast %cst_72 : f32 to vector<512x128xf32>
    %80 = arith.maximumf %78, %79 : vector<512x128xf32>
    %81 = vector.shape_cast %80 : vector<512x128xf32> to vector<16x32x128xf32>
    %c0_73 = arith.constant 0 : index
    %c0_74 = arith.constant 0 : index
    %c0_75 = arith.constant 0 : index
    %c0_76 = arith.constant 0 : index
    %82 = vector.load %arg2[%c0_73, %c0_74, %c0_75, %c0_76] : memref<1x16x16x4xbf16, #tpu.memory_space<vmem>>, vector<1x16x16x4xbf16>
    %83 = vector.shape_cast %82 : vector<1x16x16x4xbf16> to vector<16x16x4xbf16>
    %84 = arith.extf %83 : vector<16x16x4xbf16> to vector<16x16x4xf32>
    %c1_77 = arith.constant 1 : index
    %c8_78 = arith.constant 8 : index
    %c0_79 = arith.constant 0 : index
    %85 = vector.load %arg11[%c1_77, %c8_78, %c0_79] : memref<19x32x128xf32, #tpu.memory_space<vmem>>, vector<16x16x4xf32>
    tpu.vector_store %arg11[%c1_77, %c8_78, %c0_79], %84 {strides = array<i32>} : memref<19x32x128xf32, #tpu.memory_space<vmem>>, vector<16x16x4xf32>,
    %86 = vector.extract_strided_slice %81 {offsets = [0, 0, 4], sizes = [16, 16, 4], strides = [1, 1, 1]} : vector<16x32x128xf32> to vector<16x16x4xf32>
    %c1_80 = arith.constant 1 : index
    %c8_81 = arith.constant 8 : index
    %c4 = arith.constant 4 : index
    %87 = vector.load %arg11[%c1_80, %c8_81, %c4] : memref<19x32x128xf32, #tpu.memory_space<vmem>>, vector<16x16x4xf32>
    tpu.vector_store %arg11[%c1_80, %c8_81, %c4], %86 {strides = array<i32>} : memref<19x32x128xf32, #tpu.memory_space<vmem>>, vector<16x16x4xf32>,
    %c0_82 = arith.constant 0 : index
    %c0_83 = arith.constant 0 : index
    %c0_84 = arith.constant 0 : index
    %88 = vector.load %arg11[%c0_82, %c0_83, %c0_84] : memref<19x32x128xf32, #tpu.memory_space<vmem>>, vector<19x32x8xf32>
    %89 = vector.shape_cast %88 : vector<19x32x8xf32> to vector<608x8xf32>
    %cst_85 = arith.constant 0.000000e+00 : f32
    %90 = vector.broadcast %cst_85 : f32 to vector<448x128xf32>
    %91 = vector.extract_strided_slice %89 {offsets = [7, 0], sizes = [448, 8], strides = [1, 1]} : vector<608x8xf32> to vector<448x8xf32>
    %92 = arith.truncf %91 : vector<448x8xf32> to vector<448x8xbf16>
    %c0_86 = arith.constant 0 : index
    %c0_87 = arith.constant 0 : index
    %93 = vector.load %arg5[%c0_86, %c0_87] : memref<1152x128xbf16, #tpu.memory_space<vmem>>, vector<8x128xbf16>
    %cst_88 = arith.constant dense<0.000000e+00> : vector<448x128xf32>
    %94 = tpu.matmul %92, %93, %cst_88 {dimension_numbers = #tpu.dot_dimension_numbers<[1], [0], [0], [1], [0, 0, 1, 1], [], []>} : vector<448x8xbf16>, vector<8x128xbf16>, vector<448x128xf32> -> vector<448x128xf32>
    %95 = arith.addf %90, %94 : vector<448x128xf32>
    %96 = vector.extract_strided_slice %89 {offsets = [9, 0], sizes = [448, 8], strides = [1, 1]} : vector<608x8xf32> to vector<448x8xf32>
    %97 = arith.truncf %96 : vector<448x8xf32> to vector<448x8xbf16>
    %c128_89 = arith.constant 128 : index
    %c0_90 = arith.constant 0 : index
    %98 = vector.load %arg5[%c128_89, %c0_90] : memref<1152x128xbf16, #tpu.memory_space<vmem>>, vector<8x128xbf16>
    %cst_91 = arith.constant dense<0.000000e+00> : vector<448x128xf32>
    %99 = tpu.matmul %97, %98, %cst_91 {dimension_numbers = #tpu.dot_dimension_numbers<[1], [0], [0], [1], [0, 0, 1, 1], [], []>} : vector<448x8xbf16>, vector<8x128xbf16>, vector<448x128xf32> -> vector<448x128xf32>
    %100 = arith.addf %95, %99 : vector<448x128xf32>
    %101 = vector.extract_strided_slice %89 {offsets = [11, 0], sizes = [448, 8], strides = [1, 1]} : vector<608x8xf32> to vector<448x8xf32>
    %102 = arith.truncf %101 : vector<448x8xf32> to vector<448x8xbf16>
    %c256_92 = arith.constant 256 : index
    %c0_93 = arith.constant 0 : index
    %103 = vector.load %arg5[%c256_92, %c0_93] : memref<1152x128xbf16, #tpu.memory_space<vmem>>, vector<8x128xbf16>
    %cst_94 = arith.constant dense<0.000000e+00> : vector<448x128xf32>
    %104 = tpu.matmul %102, %103, %cst_94 {dimension_numbers = #tpu.dot_dimension_numbers<[1], [0], [0], [1], [0, 0, 1, 1], [], []>} : vector<448x8xbf16>, vector<8x128xbf16>, vector<448x128xf32> -> vector<448x128xf32>
    %105 = arith.addf %100, %104 : vector<448x128xf32>
    %106 = vector.extract_strided_slice %89 {offsets = [71, 0], sizes = [448, 8], strides = [1, 1]} : vector<608x8xf32> to vector<448x8xf32>
    %107 = arith.truncf %106 : vector<448x8xf32> to vector<448x8xbf16>
    %c384_95 = arith.constant 384 : index
    %c0_96 = arith.constant 0 : index
    %108 = vector.load %arg5[%c384_95, %c0_96] : memref<1152x128xbf16, #tpu.memory_space<vmem>>, vector<8x128xbf16>
    %cst_97 = arith.constant dense<0.000000e+00> : vector<448x128xf32>
    %109 = tpu.matmul %107, %108, %cst_97 {dimension_numbers = #tpu.dot_dimension_numbers<[1], [0], [0], [1], [0, 0, 1, 1], [], []>} : vector<448x8xbf16>, vector<8x128xbf16>, vector<448x128xf32> -> vector<448x128xf32>
    %110 = arith.addf %105, %109 : vector<448x128xf32>
    %111 = vector.extract_strided_slice %89 {offsets = [73, 0], sizes = [448, 8], strides = [1, 1]} : vector<608x8xf32> to vector<448x8xf32>
    %112 = arith.truncf %111 : vector<448x8xf32> to vector<448x8xbf16>
    %c512_98 = arith.constant 512 : index
    %c0_99 = arith.constant 0 : index
    %113 = vector.load %arg5[%c512_98, %c0_99] : memref<1152x128xbf16, #tpu.memory_space<vmem>>, vector<8x128xbf16>
    %cst_100 = arith.constant dense<0.000000e+00> : vector<448x128xf32>
    %114 = tpu.matmul %112, %113, %cst_100 {dimension_numbers = #tpu.dot_dimension_numbers<[1], [0], [0], [1], [0, 0, 1, 1], [], []>} : vector<448x8xbf16>, vector<8x128xbf16>, vector<448x128xf32> -> vector<448x128xf32>
    %115 = arith.addf %110, %114 : vector<448x128xf32>
    %116 = vector.extract_strided_slice %89 {offsets = [75, 0], sizes = [448, 8], strides = [1, 1]} : vector<608x8xf32> to vector<448x8xf32>
    %117 = arith.truncf %116 : vector<448x8xf32> to vector<448x8xbf16>
    %c640_101 = arith.constant 640 : index
    %c0_102 = arith.constant 0 : index
    %118 = vector.load %arg5[%c640_101, %c0_102] : memref<1152x128xbf16, #tpu.memory_space<vmem>>, vector<8x128xbf16>
    %cst_103 = arith.constant dense<0.000000e+00> : vector<448x128xf32>
    %119 = tpu.matmul %117, %118, %cst_103 {dimension_numbers = #tpu.dot_dimension_numbers<[1], [0], [0], [1], [0, 0, 1, 1], [], []>} : vector<448x8xbf16>, vector<8x128xbf16>, vector<448x128xf32> -> vector<448x128xf32>
    %120 = arith.addf %115, %119 : vector<448x128xf32>
    %121 = vector.extract_strided_slice %89 {offsets = [135, 0], sizes = [448, 8], strides = [1, 1]} : vector<608x8xf32> to vector<448x8xf32>
    %122 = arith.truncf %121 : vector<448x8xf32> to vector<448x8xbf16>
    %c768_104 = arith.constant 768 : index
    %c0_105 = arith.constant 0 : index
    %123 = vector.load %arg5[%c768_104, %c0_105] : memref<1152x128xbf16, #tpu.memory_space<vmem>>, vector<8x128xbf16>
    %cst_106 = arith.constant dense<0.000000e+00> : vector<448x128xf32>
    %124 = tpu.matmul %122, %123, %cst_106 {dimension_numbers = #tpu.dot_dimension_numbers<[1], [0], [0], [1], [0, 0, 1, 1], [], []>} : vector<448x8xbf16>, vector<8x128xbf16>, vector<448x128xf32> -> vector<448x128xf32>
    %125 = arith.addf %120, %124 : vector<448x128xf32>
    %126 = vector.extract_strided_slice %89 {offsets = [137, 0], sizes = [448, 8], strides = [1, 1]} : vector<608x8xf32> to vector<448x8xf32>
    %127 = arith.truncf %126 : vector<448x8xf32> to vector<448x8xbf16>
    %c896_107 = arith.constant 896 : index
    %c0_108 = arith.constant 0 : index
    %128 = vector.load %arg5[%c896_107, %c0_108] : memref<1152x128xbf16, #tpu.memory_space<vmem>>, vector<8x128xbf16>
    %cst_109 = arith.constant dense<0.000000e+00> : vector<448x128xf32>
    %129 = tpu.matmul %127, %128, %cst_109 {dimension_numbers = #tpu.dot_dimension_numbers<[1], [0], [0], [1], [0, 0, 1, 1], [], []>} : vector<448x8xbf16>, vector<8x128xbf16>, vector<448x128xf32> -> vector<448x128xf32>
    %130 = arith.addf %125, %129 : vector<448x128xf32>
    %131 = vector.extract_strided_slice %89 {offsets = [139, 0], sizes = [448, 8], strides = [1, 1]} : vector<608x8xf32> to vector<448x8xf32>
    %132 = arith.truncf %131 : vector<448x8xf32> to vector<448x8xbf16>
    %c1024_110 = arith.constant 1024 : index
    %c0_111 = arith.constant 0 : index
    %133 = vector.load %arg5[%c1024_110, %c0_111] : memref<1152x128xbf16, #tpu.memory_space<vmem>>, vector<8x128xbf16>
    %cst_112 = arith.constant dense<0.000000e+00> : vector<448x128xf32>
    %134 = tpu.matmul %132, %133, %cst_112 {dimension_numbers = #tpu.dot_dimension_numbers<[1], [0], [0], [1], [0, 0, 1, 1], [], []>} : vector<448x8xbf16>, vector<8x128xbf16>, vector<448x128xf32> -> vector<448x128xf32>
    %135 = arith.addf %130, %134 : vector<448x128xf32>
    %c0_113 = arith.constant 0 : index
    %c0_114 = arith.constant 0 : index
    %136 = vector.load %arg6[%c0_113, %c0_114] : memref<1x128xf32, #tpu.memory_space<vmem>>, vector<1x128xf32>
    %137 = vector.broadcast %136 : vector<1x128xf32> to vector<448x128xf32>
    %138 = arith.addf %135, %137 : vector<448x128xf32>
    %cst_115 = arith.constant 0.000000e+00 : f32
    %139 = vector.broadcast %cst_115 : f32 to vector<448x128xf32>
    %140 = arith.maximumf %138, %139 : vector<448x128xf32>
    %141 = vector.shape_cast %140 : vector<448x128xf32> to vector<14x32x128xf32>
    %142 = vector.extract_strided_slice %141 {offsets = [0, 0, 0], sizes = [14, 14, 4], strides = [1, 1, 1]} : vector<14x32x128xf32> to vector<14x14x4xf32>
    %c1_116 = arith.constant 1 : index
    %c8_117 = arith.constant 8 : index
    %c0_118 = arith.constant 0 : index
    %143 = vector.load %arg12[%c1_116, %c8_117, %c0_118] : memref<17x24x128xf32, #tpu.memory_space<vmem>>, vector<14x14x4xf32>
    tpu.vector_store %arg12[%c1_116, %c8_117, %c0_118], %142 {strides = array<i32>} : memref<17x24x128xf32, #tpu.memory_space<vmem>>, vector<14x14x4xf32>,
    %c0_119 = arith.constant 0 : index
    %c0_120 = arith.constant 0 : index
    %c0_121 = arith.constant 0 : index
    %144 = vector.load %arg12[%c0_119, %c0_120, %c0_121] : memref<17x24x128xf32, #tpu.memory_space<vmem>>, vector<17x24x4xf32>
    %145 = vector.shape_cast %144 : vector<17x24x4xf32> to vector<408x4xf32>
    %cst_122 = arith.constant 0.000000e+00 : f32
    %146 = vector.broadcast %cst_122 : f32 to vector<288x128xf32>
    %147 = vector.extract_strided_slice %145 {offsets = [7, 0], sizes = [288, 4], strides = [1, 1]} : vector<408x4xf32> to vector<288x4xf32>
    %148 = arith.truncf %147 : vector<288x4xf32> to vector<288x4xbf16>
    %c0_123 = arith.constant 0 : index
    %c0_124 = arith.constant 0 : index
    %149 = vector.load %arg7[%c0_123, %c0_124] : memref<1152x128xbf16, #tpu.memory_space<vmem>>, vector<4x128xbf16>
    %cst_125 = arith.constant dense<0.000000e+00> : vector<288x128xf32>
    %150 = tpu.matmul %148, %149, %cst_125 {dimension_numbers = #tpu.dot_dimension_numbers<[1], [0], [0], [1], [0, 0, 1, 1], [], []>} : vector<288x4xbf16>, vector<4x128xbf16>, vector<288x128xf32> -> vector<288x128xf32>
    %151 = arith.addf %146, %150 : vector<288x128xf32>
    %152 = vector.extract_strided_slice %145 {offsets = [9, 0], sizes = [288, 4], strides = [1, 1]} : vector<408x4xf32> to vector<288x4xf32>
    %153 = arith.truncf %152 : vector<288x4xf32> to vector<288x4xbf16>
    %c128_126 = arith.constant 128 : index
    %c0_127 = arith.constant 0 : index
    %154 = vector.load %arg7[%c128_126, %c0_127] : memref<1152x128xbf16, #tpu.memory_space<vmem>>, vector<4x128xbf16>
    %cst_128 = arith.constant dense<0.000000e+00> : vector<288x128xf32>
    %155 = tpu.matmul %153, %154, %cst_128 {dimension_numbers = #tpu.dot_dimension_numbers<[1], [0], [0], [1], [0, 0, 1, 1], [], []>} : vector<288x4xbf16>, vector<4x128xbf16>, vector<288x128xf32> -> vector<288x128xf32>
    %156 = arith.addf %151, %155 : vector<288x128xf32>
    %157 = vector.extract_strided_slice %145 {offsets = [11, 0], sizes = [288, 4], strides = [1, 1]} : vector<408x4xf32> to vector<288x4xf32>
    %158 = arith.truncf %157 : vector<288x4xf32> to vector<288x4xbf16>
    %c256_129 = arith.constant 256 : index
    %c0_130 = arith.constant 0 : index
    %159 = vector.load %arg7[%c256_129, %c0_130] : memref<1152x128xbf16, #tpu.memory_space<vmem>>, vector<4x128xbf16>
    %cst_131 = arith.constant dense<0.000000e+00> : vector<288x128xf32>
    %160 = tpu.matmul %158, %159, %cst_131 {dimension_numbers = #tpu.dot_dimension_numbers<[1], [0], [0], [1], [0, 0, 1, 1], [], []>} : vector<288x4xbf16>, vector<4x128xbf16>, vector<288x128xf32> -> vector<288x128xf32>
    %161 = arith.addf %156, %160 : vector<288x128xf32>
    %162 = vector.extract_strided_slice %145 {offsets = [55, 0], sizes = [288, 4], strides = [1, 1]} : vector<408x4xf32> to vector<288x4xf32>
    %163 = arith.truncf %162 : vector<288x4xf32> to vector<288x4xbf16>
    %c384_132 = arith.constant 384 : index
    %c0_133 = arith.constant 0 : index
    %164 = vector.load %arg7[%c384_132, %c0_133] : memref<1152x128xbf16, #tpu.memory_space<vmem>>, vector<4x128xbf16>
    %cst_134 = arith.constant dense<0.000000e+00> : vector<288x128xf32>
    %165 = tpu.matmul %163, %164, %cst_134 {dimension_numbers = #tpu.dot_dimension_numbers<[1], [0], [0], [1], [0, 0, 1, 1], [], []>} : vector<288x4xbf16>, vector<4x128xbf16>, vector<288x128xf32> -> vector<288x128xf32>
    %166 = arith.addf %161, %165 : vector<288x128xf32>
    %167 = vector.extract_strided_slice %145 {offsets = [57, 0], sizes = [288, 4], strides = [1, 1]} : vector<408x4xf32> to vector<288x4xf32>
    %168 = arith.truncf %167 : vector<288x4xf32> to vector<288x4xbf16>
    %c512_135 = arith.constant 512 : index
    %c0_136 = arith.constant 0 : index
    %169 = vector.load %arg7[%c512_135, %c0_136] : memref<1152x128xbf16, #tpu.memory_space<vmem>>, vector<4x128xbf16>
    %cst_137 = arith.constant dense<0.000000e+00> : vector<288x128xf32>
    %170 = tpu.matmul %168, %169, %cst_137 {dimension_numbers = #tpu.dot_dimension_numbers<[1], [0], [0], [1], [0, 0, 1, 1], [], []>} : vector<288x4xbf16>, vector<4x128xbf16>, vector<288x128xf32> -> vector<288x128xf32>
    %171 = arith.addf %166, %170 : vector<288x128xf32>
    %172 = vector.extract_strided_slice %145 {offsets = [59, 0], sizes = [288, 4], strides = [1, 1]} : vector<408x4xf32> to vector<288x4xf32>
    %173 = arith.truncf %172 : vector<288x4xf32> to vector<288x4xbf16>
    %c640_138 = arith.constant 640 : index
    %c0_139 = arith.constant 0 : index
    %174 = vector.load %arg7[%c640_138, %c0_139] : memref<1152x128xbf16, #tpu.memory_space<vmem>>, vector<4x128xbf16>
    %cst_140 = arith.constant dense<0.000000e+00> : vector<288x128xf32>
    %175 = tpu.matmul %173, %174, %cst_140 {dimension_numbers = #tpu.dot_dimension_numbers<[1], [0], [0], [1], [0, 0, 1, 1], [], []>} : vector<288x4xbf16>, vector<4x128xbf16>, vector<288x128xf32> -> vector<288x128xf32>
    %176 = arith.addf %171, %175 : vector<288x128xf32>
    %177 = vector.extract_strided_slice %145 {offsets = [103, 0], sizes = [288, 4], strides = [1, 1]} : vector<408x4xf32> to vector<288x4xf32>
    %178 = arith.truncf %177 : vector<288x4xf32> to vector<288x4xbf16>
    %c768_141 = arith.constant 768 : index
    %c0_142 = arith.constant 0 : index
    %179 = vector.load %arg7[%c768_141, %c0_142] : memref<1152x128xbf16, #tpu.memory_space<vmem>>, vector<4x128xbf16>
    %cst_143 = arith.constant dense<0.000000e+00> : vector<288x128xf32>
    %180 = tpu.matmul %178, %179, %cst_143 {dimension_numbers = #tpu.dot_dimension_numbers<[1], [0], [0], [1], [0, 0, 1, 1], [], []>} : vector<288x4xbf16>, vector<4x128xbf16>, vector<288x128xf32> -> vector<288x128xf32>
    %181 = arith.addf %176, %180 : vector<288x128xf32>
    %182 = vector.extract_strided_slice %145 {offsets = [105, 0], sizes = [288, 4], strides = [1, 1]} : vector<408x4xf32> to vector<288x4xf32>
    %183 = arith.truncf %182 : vector<288x4xf32> to vector<288x4xbf16>
    %c896_144 = arith.constant 896 : index
    %c0_145 = arith.constant 0 : index
    %184 = vector.load %arg7[%c896_144, %c0_145] : memref<1152x128xbf16, #tpu.memory_space<vmem>>, vector<4x128xbf16>
    %cst_146 = arith.constant dense<0.000000e+00> : vector<288x128xf32>
    %185 = tpu.matmul %183, %184, %cst_146 {dimension_numbers = #tpu.dot_dimension_numbers<[1], [0], [0], [1], [0, 0, 1, 1], [], []>} : vector<288x4xbf16>, vector<4x128xbf16>, vector<288x128xf32> -> vector<288x128xf32>
    %186 = arith.addf %181, %185 : vector<288x128xf32>
    %187 = vector.extract_strided_slice %145 {offsets = [107, 0], sizes = [288, 4], strides = [1, 1]} : vector<408x4xf32> to vector<288x4xf32>
    %188 = arith.truncf %187 : vector<288x4xf32> to vector<288x4xbf16>
    %c1024_147 = arith.constant 1024 : index
    %c0_148 = arith.constant 0 : index
    %189 = vector.load %arg7[%c1024_147, %c0_148] : memref<1152x128xbf16, #tpu.memory_space<vmem>>, vector<4x128xbf16>
    %cst_149 = arith.constant dense<0.000000e+00> : vector<288x128xf32>
    %190 = tpu.matmul %188, %189, %cst_149 {dimension_numbers = #tpu.dot_dimension_numbers<[1], [0], [0], [1], [0, 0, 1, 1], [], []>} : vector<288x4xbf16>, vector<4x128xbf16>, vector<288x128xf32> -> vector<288x128xf32>
    %191 = arith.addf %186, %190 : vector<288x128xf32>
    %c0_150 = arith.constant 0 : index
    %c0_151 = arith.constant 0 : index
    %192 = vector.load %arg8[%c0_150, %c0_151] : memref<1x128xf32, #tpu.memory_space<vmem>>, vector<1x128xf32>
    %193 = vector.broadcast %192 : vector<1x128xf32> to vector<288x128xf32>
    %194 = arith.addf %191, %193 : vector<288x128xf32>
    %cst_152 = arith.constant 0.000000e+00 : f32
    %195 = vector.broadcast %cst_152 : f32 to vector<288x128xf32>
    %196 = arith.maximumf %194, %195 : vector<288x128xf32>
    %197 = vector.shape_cast %196 : vector<288x128xf32> to vector<12x24x128xf32>
    %198 = vector.extract_strided_slice %197 {offsets = [0, 0, 0], sizes = [12, 16, 4], strides = [1, 1, 1]} : vector<12x24x128xf32> to vector<12x16x4xf32>
    %199 = vector.shape_cast %198 : vector<12x16x4xf32> to vector<1x12x16x4xf32>
    %c0_153 = arith.constant 0 : index
    %c0_154 = arith.constant 0 : index
    %c0_155 = arith.constant 0 : index
    %c0_156 = arith.constant 0 : index
    %200 = vector.load %arg9[%c0_153, %c0_154, %c0_155, %c0_156] : memref<1x12x16x4xf32, #tpu.memory_space<vmem>>, vector<1x12x16x4xf32>
    tpu.vector_store %arg9[%c0_153, %c0_154, %c0_155, %c0_156], %199 {strides = array<i32>} : memref<1x12x16x4xf32, #tpu.memory_space<vmem>>, vector<1x12x16x4xf32>,
    return
  }
  func.func @transform_0(%arg0: i32) -> (i32, i32, i32, i32) {
    %c0_i32 = arith.constant 0 : i32
    %c0_i32_0 = arith.constant 0 : i32
    %c0_i32_1 = arith.constant 0 : i32
    %c0_i32_2 = arith.constant 0 : i32
    return %arg0, %c0_i32, %c0_i32_0, %c0_i32_1 : i32, i32, i32, i32
  }
  func.func @transform_1(%arg0: i32) -> (i32, i32, i32, i32) {
    %c0_i32 = arith.constant 0 : i32
    %c0_i32_0 = arith.constant 0 : i32
    %c0_i32_1 = arith.constant 0 : i32
    %c0_i32_2 = arith.constant 0 : i32
    return %arg0, %c0_i32, %c0_i32_0, %c0_i32_1 : i32, i32, i32, i32
  }
  func.func @transform_2(%arg0: i32) -> (i32, i32) {
    %c0_i32 = arith.constant 0 : i32
    %c0_i32_0 = arith.constant 0 : i32
    %c0_i32_1 = arith.constant 0 : i32
    return %c0_i32, %c0_i32_0 : i32, i32
  }
  func.func @transform_3(%arg0: i32) -> (i32, i32) {
    %c0_i32 = arith.constant 0 : i32
    %c0_i32_0 = arith.constant 0 : i32
    %c0_i32_1 = arith.constant 0 : i32
    return %c0_i32, %c0_i32_0 : i32, i32
  }
  func.func @transform_4(%arg0: i32) -> (i32, i32) {
    %c0_i32 = arith.constant 0 : i32
    %c0_i32_0 = arith.constant 0 : i32
    %c0_i32_1 = arith.constant 0 : i32
    return %c0_i32, %c0_i32_0 : i32, i32
  }
  func.func @transform_5(%arg0: i32) -> (i32, i32) {
    %c0_i32 = arith.constant 0 : i32
    %c0_i32_0 = arith.constant 0 : i32
    %c0_i32_1 = arith.constant 0 : i32
    return %c0_i32, %c0_i32_0 : i32, i32
  }
  func.func @transform_6(%arg0: i32) -> (i32, i32) {
    %c0_i32 = arith.constant 0 : i32
    %c0_i32_0 = arith.constant 0 : i32
    %c0_i32_1 = arith.constant 0 : i32
    return %c0_i32, %c0_i32_0 : i32, i32
  }
  func.func @transform_7(%arg0: i32) -> (i32, i32) {
    %c0_i32 = arith.constant 0 : i32
    %c0_i32_0 = arith.constant 0 : i32
    %c0_i32_1 = arith.constant 0 : i32
    return %c0_i32, %c0_i32_0 : i32, i32
  }
  func.func @transform_8(%arg0: i32) -> (i32, i32, i32, i32) {
    %c0_i32 = arith.constant 0 : i32
    %c0_i32_0 = arith.constant 0 : i32
    %c0_i32_1 = arith.constant 0 : i32
    %c0_i32_2 = arith.constant 0 : i32
    return %arg0, %c0_i32, %c0_i32_0, %c0_i32_1 : i32, i32, i32, i32
  }
}

</mosaic_0001>

<llo_original>
// kernel: upblock_forward.1
$region0: #{upblock_forward.1}
  #allocation0 [shape = 'u32[]', space=smem, size = 0x4, offset = 0x4, fixed_abs, tag = 'smem constant byte address 0x4 - core index']
  #allocation1 [shape = 'u32[144,128]{1,0:T(1,128)}', space=vmem, size = 0x12000, scoped, tag = 'internal scratch']
  #allocation2 [shape = 'f32[19,32,128]{2,1,0:T(8,128)}', space=vmem, size = 0x4c000, scoped, tag = 'scratch operand']
  #allocation3 [shape = 'f32[19,32,128]{2,1,0:T(8,128)}', space=vmem, size = 0x4c000, scoped, tag = 'scratch operand']
  #allocation4 [shape = 'f32[17,24,128]{2,1,0:T(8,128)}', space=vmem, size = 0x33000, scoped, tag = 'scratch operand']
  %s0 = inlined_call_operand.vmem [shape: bf16[2,16,16,8], index: 0, kind: input, shape index: {}]
  %s1 = inlined_call_operand.vmem [shape: bf16[2,16,16,4], index: 1, kind: input, shape index: {}]
  %s2 = inlined_call_operand.vmem [shape: bf16[1152,128], index: 2, kind: input, shape index: {}]
  %s3 = inlined_call_operand.vmem [shape: f32[1,128], index: 3, kind: input, shape index: {}]
  %s4 = inlined_call_operand.vmem [shape: bf16[1152,128], index: 4, kind: input, shape index: {}]
  %s5 = inlined_call_operand.vmem [shape: f32[1,128], index: 5, kind: input, shape index: {}]
  %s6 = inlined_call_operand.vmem [shape: bf16[1152,128], index: 6, kind: input, shape index: {}]
  %s7 = inlined_call_operand.vmem [shape: f32[1,128], index: 7, kind: input, shape index: {}]
  %s8 = inlined_call_operand.vmem [shape: f32[2,12,16,4], index: 8, kind: output, shape index: {}]
  %s9 = sld [smem:[#allocation0]]
  $region65: #{upblock_forward.1} parent=0
    _
  %s11 = ssub.s32 1, %s9
  %s12 = scalar_select 0, %s11, %s9
  loop: start=0, step=1, limit=4
  $region2: #{upblock_forward.1} parent=0 // loop_pre_header
    _
  $region3: #{upblock_forward.1} parent=0 // loop_header
    %s14 = sphi 0, %s18
    %p15 = scmp.ge.s32.totalorder %s14, 4
    %s24 = sphi 0, %s26
    %s27 = sphi 0, %s24
    %s28 = sphi 0, %s27
    %s44 = sphi 0, %s28
    %s50 = sphi 0, %s52
    %s53 = sphi 0, %s50
    %s54 = sphi 0, %s53
    %s70 = sphi 0, %s54
    %s74 = sphi 0, %s74
    %s76 = sphi 0, %s74
    %s77 = sphi 0, %s76
    %s91 = sphi 0, %s77
    %s95 = sphi 0, %s95
    %s97 = sphi 0, %s95
    %s98 = sphi 0, %s97
    %s112 = sphi 0, %s98
    %s116 = sphi 0, %s116
    %s118 = sphi 0, %s116
    %s119 = sphi 0, %s118
    %s133 = sphi 0, %s119
    %s137 = sphi 0, %s137
    %s139 = sphi 0, %s137
    %s140 = sphi 0, %s139
    %s154 = sphi 0, %s140
    %s158 = sphi 0, %s158
    %s160 = sphi 0, %s158
    %s161 = sphi 0, %s160
    %s175 = sphi 0, %s161
    %s179 = sphi 0, %s179
    %s181 = sphi 0, %s179
    %s182 = sphi 0, %s181
    %s196 = sphi 0, %s182
    %s202 = sphi 0, %s204
    %s205 = sphi 0, %s202
    %s206 = sphi 0, %s205
    %s222 = sphi 0, %s206
  $region4: #{upblock_forward.1} parent=0 // loop_header_branch
    %17 = sbr.rel (%p15) target = $region8
  $region5: #{upblock_forward.1} parent=0 // loop_body
    %s19 = ssub.s32 %s14, 1
    %s20 = ssub.s32 %s14, 2
    %s21 = sadd.s32 %s14, 1
    %s22 = ssub.s32 %s14, %s21
    %p23 = scmp.eq.s32.totalorder %s22, 0
    %s25 = sadd.s32 %s24, 1
    %s26 = scalar_select %p23, %s24, %s25
    %p29 = pneg %p23
    %p30 = scmp.eq.s32.totalorder %s14, 1
    %p31 = por %p29, %p30
    %p32 = scmp.ne.s32.totalorder %s24, %s27
    %p33 = scmp.eq.s32.totalorder %s14, 0
    %p34 = por %p32, %p33
    %p35 = scmp.ne.s32.totalorder %s24, %s27
    %p36 = scmp.eq.s32.totalorder %s19, 1
    %p37 = por %p35, %p36
    %p38 = scmp.ne.s32.totalorder %s27, %s28
    %p39 = scmp.eq.s32.totalorder %s19, 0
    %p40 = por %p38, %p39
    %p41 = scmp.ne.s32.totalorder %s27, %s28
    %p42 = scmp.eq.s32.totalorder %s20, 1
    %p43 = por %p41, %p42
    %p45 = scmp.ne.s32.totalorder %s28, %s44
    %p46 = scmp.eq.s32.totalorder %s20, 0
    %p47 = por %p45, %p46
    %s48 = ssub.s32 %s14, %s21
    %p49 = scmp.eq.s32.totalorder %s48, 0
    %s51 = sadd.s32 %s50, 1
    %s52 = scalar_select %p49, %s50, %s51
    %p55 = pneg %p49
    %p56 = scmp.eq.s32.totalorder %s14, 1
    %p57 = por %p55, %p56
    %p58 = scmp.ne.s32.totalorder %s50, %s53
    %p59 = scmp.eq.s32.totalorder %s14, 0
    %p60 = por %p58, %p59
    %p61 = scmp.ne.s32.totalorder %s50, %s53
    %p62 = scmp.eq.s32.totalorder %s19, 1
    %p63 = por %p61, %p62
    %p64 = scmp.ne.s32.totalorder %s53, %s54
    %p65 = scmp.eq.s32.totalorder %s19, 0
    %p66 = por %p64, %p65
    %p67 = scmp.ne.s32.totalorder %s53, %s54
    %p68 = scmp.eq.s32.totalorder %s20, 1
    %p69 = por %p67, %p68
    %p71 = scmp.ne.s32.totalorder %s54, %s70
    %p72 = scmp.eq.s32.totalorder %s20, 0
    %p73 = por %p71, %p72
    %s75 = sadd.s32 %s74, 1
    %p78 = scmp.eq.s32.totalorder %s14, 1
    %p79 = scmp.ne.s32.totalorder %s74, %s76
    %p80 = scmp.eq.s32.totalorder %s14, 0
    %p81 = por %p79, %p80
    %p82 = scmp.ne.s32.totalorder %s74, %s76
    %p83 = scmp.eq.s32.totalorder %s19, 1
    %p84 = por %p82, %p83
    %p85 = scmp.ne.s32.totalorder %s76, %s77
    %p86 = scmp.eq.s32.totalorder %s19, 0
    %p87 = por %p85, %p86
    %p88 = scmp.ne.s32.totalorder %s76, %s77
    %p89 = scmp.eq.s32.totalorder %s20, 1
    %p90 = por %p88, %p89
    %p92 = scmp.ne.s32.totalorder %s77, %s91
    %p93 = scmp.eq.s32.totalorder %s20, 0
    %p94 = por %p92, %p93
    %s96 = sadd.s32 %s95, 1
    %p99 = scmp.eq.s32.totalorder %s14, 1
    %p100 = scmp.ne.s32.totalorder %s95, %s97
    %p101 = scmp.eq.s32.totalorder %s14, 0
    %p102 = por %p100, %p101
    %p103 = scmp.ne.s32.totalorder %s95, %s97
    %p104 = scmp.eq.s32.totalorder %s19, 1
    %p105 = por %p103, %p104
    %p106 = scmp.ne.s32.totalorder %s97, %s98
    %p107 = scmp.eq.s32.totalorder %s19, 0
    %p108 = por %p106, %p107
    %p109 = scmp.ne.s32.totalorder %s97, %s98
    %p110 = scmp.eq.s32.totalorder %s20, 1
    %p111 = por %p109, %p110
    %p113 = scmp.ne.s32.totalorder %s98, %s112
    %p114 = scmp.eq.s32.totalorder %s20, 0
    %p115 = por %p113, %p114
    %s117 = sadd.s32 %s116, 1
    %p120 = scmp.eq.s32.totalorder %s14, 1
    %p121 = scmp.ne.s32.totalorder %s116, %s118
    %p122 = scmp.eq.s32.totalorder %s14, 0
    %p123 = por %p121, %p122
    %p124 = scmp.ne.s32.totalorder %s116, %s118
    %p125 = scmp.eq.s32.totalorder %s19, 1
    %p126 = por %p124, %p125
    %p127 = scmp.ne.s32.totalorder %s118, %s119
    %p128 = scmp.eq.s32.totalorder %s19, 0
    %p129 = por %p127, %p128
    %p130 = scmp.ne.s32.totalorder %s118, %s119
    %p131 = scmp.eq.s32.totalorder %s20, 1
    %p132 = por %p130, %p131
    %p134 = scmp.ne.s32.totalorder %s119, %s133
    %p135 = scmp.eq.s32.totalorder %s20, 0
    %p136 = por %p134, %p135
    %s138 = sadd.s32 %s137, 1
    %p141 = scmp.eq.s32.totalorder %s14, 1
    %p142 = scmp.ne.s32.totalorder %s137, %s139
    %p143 = scmp.eq.s32.totalorder %s14, 0
    %p144 = por %p142, %p143
    %p145 = scmp.ne.s32.totalorder %s137, %s139
    %p146 = scmp.eq.s32.totalorder %s19, 1
    %p147 = por %p145, %p146
    %p148 = scmp.ne.s32.totalorder %s139, %s140
    %p149 = scmp.eq.s32.totalorder %s19, 0
    %p150 = por %p148, %p149
    %p151 = scmp.ne.s32.totalorder %s139, %s140
    %p152 = scmp.eq.s32.totalorder %s20, 1
    %p153 = por %p151, %p152
    %p155 = scmp.ne.s32.totalorder %s140, %s154
    %p156 = scmp.eq.s32.totalorder %s20, 0
    %p157 = por %p155, %p156
    %s159 = sadd.s32 %s158, 1
    %p162 = scmp.eq.s32.totalorder %s14, 1
    %p163 = scmp.ne.s32.totalorder %s158, %s160
    %p164 = scmp.eq.s32.totalorder %s14, 0
    %p165 = por %p163, %p164
    %p166 = scmp.ne.s32.totalorder %s158, %s160
    %p167 = scmp.eq.s32.totalorder %s19, 1
    %p168 = por %p166, %p167
    %p169 = scmp.ne.s32.totalorder %s160, %s161
    %p170 = scmp.eq.s32.totalorder %s19, 0
    %p171 = por %p169, %p170
    %p172 = scmp.ne.s32.totalorder %s160, %s161
    %p173 = scmp.eq.s32.totalorder %s20, 1
    %p174 = por %p172, %p173
    %p176 = scmp.ne.s32.totalorder %s161, %s175
    %p177 = scmp.eq.s32.totalorder %s20, 0
    %p178 = por %p176, %p177
    %s180 = sadd.s32 %s179, 1
    %p183 = scmp.eq.s32.totalorder %s14, 1
    %p184 = scmp.ne.s32.totalorder %s179, %s181
    %p185 = scmp.eq.s32.totalorder %s14, 0
    %p186 = por %p184, %p185
    %p187 = scmp.ne.s32.totalorder %s179, %s181
    %p188 = scmp.eq.s32.totalorder %s19, 1
    %p189 = por %p187, %p188
    %p190 = scmp.ne.s32.totalorder %s181, %s182
    %p191 = scmp.eq.s32.totalorder %s19, 0
    %p192 = por %p190, %p191
    %p193 = scmp.ne.s32.totalorder %s181, %s182
    %p194 = scmp.eq.s32.totalorder %s20, 1
    %p195 = por %p193, %p194
    %p197 = scmp.ne.s32.totalorder %s182, %s196
    %p198 = scmp.eq.s32.totalorder %s20, 0
    %p199 = por %p197, %p198
    %s200 = ssub.s32 %s14, %s21
    %p201 = scmp.eq.s32.totalorder %s200, 0
    %s203 = sadd.s32 %s202, 1
    %s204 = scalar_select %p201, %s202, %s203
    %p207 = pneg %p201
    %p208 = scmp.eq.s32.totalorder %s14, 1
    %p209 = por %p207, %p208
    %p210 = scmp.ne.s32.totalorder %s202, %s205
    %p211 = scmp.eq.s32.totalorder %s14, 0
    %p212 = por %p210, %p211
    %p213 = scmp.ne.s32.totalorder %s202, %s205
    %p214 = scmp.eq.s32.totalorder %s19, 1
    %p215 = por %p213, %p214
    %p216 = scmp.ne.s32.totalorder %s205, %s206
    %p217 = scmp.eq.s32.totalorder %s19, 0
    %p218 = por %p216, %p217
    %p219 = scmp.ne.s32.totalorder %s205, %s206
    %p220 = scmp.eq.s32.totalorder %s20, 1
    %p221 = por %p219, %p220
    %p223 = scmp.ne.s32.totalorder %s206, %s222
    %p224 = scmp.eq.s32.totalorder %s20, 0
    %p225 = por %p223, %p224
    %p226 = scmp.le.s32.totalorder 1, %s14
    %p227 = scmp.lt.s32.totalorder %s14, 3
    %p228 = pnand %p226, %p227
    %p229 = pneg %p228
    // Predicated region
    $region9: #{upblock_forward.1} parent=5 // pred_check
      _
    $region10: #{upblock_forward.1} parent=5 // pred_check_branch
      %231 = sbr.rel (%p228) target = $region12
    $region11: #{upblock_forward.1} parent=5 // pred_region
      %s232 = ssub.s32 %s14, 1
      // Predicated region
      $region13: #{upblock_forward.1} parent=11 // pred_check
        %p233 = pneg %p87
      $region14: #{upblock_forward.1} parent=11 // pred_check_branch
        %235 = sbr.rel (%p233) target = $region16
      $region15: #{upblock_forward.1} parent=11 // pred_region
        _
      $region16: #{upblock_forward.1} parent=11 // pred_fallthru
        _
      // Predicated region
      $region17: #{upblock_forward.1} parent=11 // pred_check
        %p236 = pneg %p108
      $region18: #{upblock_forward.1} parent=11 // pred_check_branch
        %238 = sbr.rel (%p236) target = $region20
      $region19: #{upblock_forward.1} parent=11 // pred_region
        _
      $region20: #{upblock_forward.1} parent=11 // pred_fallthru
        _
      // Predicated region
      $region21: #{upblock_forward.1} parent=11 // pred_check
        %p239 = pneg %p129
      $region22: #{upblock_forward.1} parent=11 // pred_check_branch
        %241 = sbr.rel (%p239) target = $region24
      $region23: #{upblock_forward.1} parent=11 // pred_region
        _
      $region24: #{upblock_forward.1} parent=11 // pred_fallthru
        _
      // Predicated region
      $region25: #{upblock_forward.1} parent=11 // pred_check
        %p242 = pneg %p150
      $region26: #{upblock_forward.1} parent=11 // pred_check_branch
        %244 = sbr.rel (%p242) target = $region28
      $region27: #{upblock_forward.1} parent=11 // pred_region
        _
      $region28: #{upblock_forward.1} parent=11 // pred_fallthru
        _
      // Predicated region
      $region29: #{upblock_forward.1} parent=11 // pred_check
        %p245 = pneg %p171
      $region30: #{upblock_forward.1} parent=11 // pred_check_branch
        %247 = sbr.rel (%p245) target = $region32
      $region31: #{upblock_forward.1} parent=11 // pred_region
        _
      $region32: #{upblock_forward.1} parent=11 // pred_fallthru
        _
      // Predicated region
      $region33: #{upblock_forward.1} parent=11 // pred_check
        %p248 = pneg %p192
      $region34: #{upblock_forward.1} parent=11 // pred_check_branch
        %250 = sbr.rel (%p248) target = $region36
      $region35: #{upblock_forward.1} parent=11 // pred_region
        _
      $region36: #{upblock_forward.1} parent=11 // pred_fallthru
        _
    $region12: #{upblock_forward.1} parent=5 // pred_fallthru
      _
    %p251 = scmp.lt.s32.totalorder %s14, 2
    // Predicated region
    $region37: #{upblock_forward.1} parent=5 // pred_check
      %p252 = pneg %p251
    $region38: #{upblock_forward.1} parent=5 // pred_check_branch
      %254 = sbr.rel (%p252) target = $region40
    $region39: #{upblock_forward.1} parent=5 // pred_region
      // Predicated region
      $region41: #{upblock_forward.1} parent=39 // pred_check
        %p255 = pneg %p34
      $region42: #{upblock_forward.1} parent=39 // pred_check_branch
        %257 = sbr.rel (%p255) target = $region44
      $region43: #{upblock_forward.1} parent=39 // pred_region
        %p258 = scmp.lt.s32.totalorder %s14, 1
        %s259 = scalar_select %p258, %s14, 1
        %s260 = smul.addr %s259, 32
        %s261 = smul.addr %s260, 4
        %s262 = scalar_lea.vmem %s0, %s261
      $region44: #{upblock_forward.1} parent=39 // pred_fallthru
        _
      // Predicated region
      $region45: #{upblock_forward.1} parent=39 // pred_check
        %p263 = pneg %p60
      $region46: #{upblock_forward.1} parent=39 // pred_check_branch
        %265 = sbr.rel (%p263) target = $region48
      $region47: #{upblock_forward.1} parent=39 // pred_region
        %p266 = scmp.lt.s32.totalorder %s14, 1
        %s267 = scalar_select %p266, %s14, 1
        %s268 = smul.addr %s267, 32
        %s269 = smul.addr %s268, 4
        %s270 = scalar_lea.vmem %s1, %s269
      $region48: #{upblock_forward.1} parent=39 // pred_fallthru
        _
    $region40: #{upblock_forward.1} parent=5 // pred_fallthru
      _
    %p271 = scmp.le.s32.totalorder 1, %s14
    %p272 = scmp.lt.s32.totalorder %s14, 3
    %p273 = pnand %p271, %p272
    %p274 = pneg %p273
    // Predicated region
    $region49: #{upblock_forward.1} parent=5 // pred_check
      _
    $region50: #{upblock_forward.1} parent=5 // pred_check_branch
      %276 = sbr.rel (%p273) target = $region52
    $region51: #{upblock_forward.1} parent=5 // pred_region
      %s277 = ssub.s32 %s14, 1
      %p278 = scmp.lt.s32.totalorder %s19, 1
      %s279 = scalar_select %p278, %s19, 1
      %s280 = smul.addr %s279, 32
      %s281 = smul.addr %s280, 4
      %s282 = scalar_lea.vmem %s0, %s281
      %p283 = pneg %p40
      %p284 = pneg %p37
      %p285 = scmp.lt.s32.totalorder %s19, 1
      %s286 = scalar_select %p285, %s19, 1
      %s287 = smul.addr %s286, 32
      %s288 = smul.addr %s287, 4
      %s289 = scalar_lea.vmem %s1, %s288
      %p290 = pneg %p66
      %p291 = pneg %p63
      %p292 = pneg %p87
      %p293 = pneg %p84
      %p294 = pneg %p108
      %p295 = pneg %p105
      %p296 = pneg %p129
      %p297 = pneg %p126
      %p298 = pneg %p150
      %p299 = pneg %p147
      %p300 = pneg %p171
      %p301 = pneg %p168
      %p302 = pneg %p192
      %p303 = pneg %p189
      %p304 = pneg %p218
      %p305 = pneg %p215
      %p306 = scmp.lt.s32.totalorder %s19, 1
      %s307 = scalar_select %p306, %s19, 1
      %s308 = smul.addr %s307, 24
      %s309 = smul.addr %s308, 8
      %s310 = scalar_lea.vmem %s8, %s309
      %p311 = scmp.lt.s32.totalorder %s19, 1
      %s312 = scalar_select %p311, %s19, 1
      %s313 = smul.addr %s312, 32
      %s314 = smul.addr %s313, 4
      %s315 = scalar_lea.vmem %s0, %s314
      %p316 = scmp.lt.s32.totalorder %s19, 1
      %s317 = scalar_select %p316, %s19, 1
      %s318 = smul.addr %s317, 32
      %s319 = smul.addr %s318, 4
      %s320 = scalar_lea.vmem %s1, %s319
      %p321 = scmp.lt.s32.totalorder %s19, 1
      %s322 = scalar_select %p321, %s19, 1
      %s323 = smul.addr %s322, 24
      %s324 = smul.addr %s323, 8
      %s325 = scalar_lea.vmem %s8, %s324
      %327 = vst [vmem:[#allocation2] sm:$0xff] 0.0
      %328 = vst [vmem:[#allocation2 + $0x8] sm:$0xff] 0.0
      %329 = vst [vmem:[#allocation2 + $0x10] sm:$0xff] 0.0
      %330 = vst [vmem:[#allocation2 + $0x18] sm:$0xff] 0.0
      %s331 = scalar_lea.vmem [#allocation2], 544
      %332 = vst [vmem:[%s331] sm:$0xff] 0.0
      %333 = vst [vmem:[%s331 + $0x8] sm:$0xff] 0.0
      %334 = vst [vmem:[%s331 + $0x10] sm:$0xff] 0.0
      %335 = vst [vmem:[%s331 + $0x18] sm:$0xff] 0.0
      %336 = vst [vmem:[%s331 + $0x20] sm:$0xff] 0.0
      %337 = vst [vmem:[%s331 + $0x28] sm:$0xff] 0.0
      %338 = vst [vmem:[%s331 + $0x30] sm:$0xff] 0.0
      %339 = vst [vmem:[%s331 + $0x38] sm:$0xff] 0.0
      %s340 = scalar_lea.vmem [#allocation2], 32
      %341 = vst [vmem:[%s340] sm:$0xff] 0.0
      %342 = vst [vmem:[%s340 + $0x20] sm:$0xff] 0.0
      %343 = vst [vmem:[%s340 + $0x40] sm:$0xff] 0.0
      %344 = vst [vmem:[%s340 + $0x60] sm:$0xff] 0.0
      %345 = vst [vmem:[%s340 + $0x80] sm:$0xff] 0.0
      %346 = vst [vmem:[%s340 + $0xa0] sm:$0xff] 0.0
      %347 = vst [vmem:[%s340 + $0xc0] sm:$0xff] 0.0
      %348 = vst [vmem:[%s340 + $0xe0] sm:$0xff] 0.0
      %349 = vst [vmem:[%s340 + $0x100] sm:$0xff] 0.0
      %350 = vst [vmem:[%s340 + $0x120] sm:$0xff] 0.0
      %351 = vst [vmem:[%s340 + $0x140] sm:$0xff] 0.0
      %352 = vst [vmem:[%s340 + $0x160] sm:$0xff] 0.0
      %353 = vst [vmem:[%s340 + $0x180] sm:$0xff] 0.0
      %354 = vst [vmem:[%s340 + $0x1a0] sm:$0xff] 0.0
      %355 = vst [vmem:[%s340 + $0x1c0] sm:$0xff] 0.0
      %356 = vst [vmem:[%s340 + $0x1e0] sm:$0xff] 0.0
      %357 = vst [vmem:[%s340 + $0x18] sm:$0xff] 0.0
      %358 = vst [vmem:[%s340 + $0x38] sm:$0xff] 0.0
      %359 = vst [vmem:[%s340 + $0x58] sm:$0xff] 0.0
      %360 = vst [vmem:[%s340 + $0x78] sm:$0xff] 0.0
      %361 = vst [vmem:[%s340 + $0x98] sm:$0xff] 0.0
      %362 = vst [vmem:[%s340 + $0xb8] sm:$0xff] 0.0
      %363 = vst [vmem:[%s340 + $0xd8] sm:$0xff] 0.0
      %364 = vst [vmem:[%s340 + $0xf8] sm:$0xff] 0.0
      %365 = vst [vmem:[%s340 + $0x118] sm:$0xff] 0.0
      %366 = vst [vmem:[%s340 + $0x138] sm:$0xff] 0.0
      %367 = vst [vmem:[%s340 + $0x158] sm:$0xff] 0.0
      %368 = vst [vmem:[%s340 + $0x178] sm:$0xff] 0.0
      %369 = vst [vmem:[%s340 + $0x198] sm:$0xff] 0.0
      %370 = vst [vmem:[%s340 + $0x1b8] sm:$0xff] 0.0
      %371 = vst [vmem:[%s340 + $0x1d8] sm:$0xff] 0.0
      %372 = vst [vmem:[%s340 + $0x1f8] sm:$0xff] 0.0
      %373 = vst [vmem:[#allocation3] sm:$0xff] 0.0
      %374 = vst [vmem:[#allocation3 + $0x8] sm:$0xff] 0.0
      %375 = vst [vmem:[#allocation3 + $0x10] sm:$0xff] 0.0
      %376 = vst [vmem:[#allocation3 + $0x18] sm:$0xff] 0.0
      %s377 = scalar_lea.vmem [#allocation3], 544
      %378 = vst [vmem:[%s377] sm:$0xff] 0.0
      %379 = vst [vmem:[%s377 + $0x8] sm:$0xff] 0.0
      %380 = vst [vmem:[%s377 + $0x10] sm:$0xff] 0.0
      %381 = vst [vmem:[%s377 + $0x18] sm:$0xff] 0.0
      %382 = vst [vmem:[%s377 + $0x20] sm:$0xff] 0.0
      %383 = vst [vmem:[%s377 + $0x28] sm:$0xff] 0.0
      %384 = vst [vmem:[%s377 + $0x30] sm:$0xff] 0.0
      %385 = vst [vmem:[%s377 + $0x38] sm:$0xff] 0.0
      %s386 = scalar_lea.vmem [#allocation3], 32
      %387 = vst [vmem:[%s386] sm:$0xff] 0.0
      %388 = vst [vmem:[%s386 + $0x20] sm:$0xff] 0.0
      %389 = vst [vmem:[%s386 + $0x40] sm:$0xff] 0.0
      %390 = vst [vmem:[%s386 + $0x60] sm:$0xff] 0.0
      %391 = vst [vmem:[%s386 + $0x80] sm:$0xff] 0.0
      %392 = vst [vmem:[%s386 + $0xa0] sm:$0xff] 0.0
      %393 = vst [vmem:[%s386 + $0xc0] sm:$0xff] 0.0
      %394 = vst [vmem:[%s386 + $0xe0] sm:$0xff] 0.0
      %395 = vst [vmem:[%s386 + $0x100] sm:$0xff] 0.0
      %396 = vst [vmem:[%s386 + $0x120] sm:$0xff] 0.0
      %397 = vst [vmem:[%s386 + $0x140] sm:$0xff] 0.0
      %398 = vst [vmem:[%s386 + $0x160] sm:$0xff] 0.0
      %399 = vst [vmem:[%s386 + $0x180] sm:$0xff] 0.0
      %400 = vst [vmem:[%s386 + $0x1a0] sm:$0xff] 0.0
      %401 = vst [vmem:[%s386 + $0x1c0] sm:$0xff] 0.0
      %402 = vst [vmem:[%s386 + $0x1e0] sm:$0xff] 0.0
      %403 = vst [vmem:[%s386 + $0x18] sm:$0xff] 0.0
      %404 = vst [vmem:[%s386 + $0x38] sm:$0xff] 0.0
      %405 = vst [vmem:[%s386 + $0x58] sm:$0xff] 0.0
      %406 = vst [vmem:[%s386 + $0x78] sm:$0xff] 0.0
      %407 = vst [vmem:[%s386 + $0x98] sm:$0xff] 0.0
      %408 = vst [vmem:[%s386 + $0xb8] sm:$0xff] 0.0
      %409 = vst [vmem:[%s386 + $0xd8] sm:$0xff] 0.0
      %410 = vst [vmem:[%s386 + $0xf8] sm:$0xff] 0.0
      %411 = vst [vmem:[%s386 + $0x118] sm:$0xff] 0.0
      %412 = vst [vmem:[%s386 + $0x138] sm:$0xff] 0.0
      %413 = vst [vmem:[%s386 + $0x158] sm:$0xff] 0.0
      %414 = vst [vmem:[%s386 + $0x178] sm:$0xff] 0.0
      %415 = vst [vmem:[%s386 + $0x198] sm:$0xff] 0.0
      %416 = vst [vmem:[%s386 + $0x1b8] sm:$0xff] 0.0
      %417 = vst [vmem:[%s386 + $0x1d8] sm:$0xff] 0.0
      %418 = vst [vmem:[%s386 + $0x1f8] sm:$0xff] 0.0
      %419 = vst [vmem:[#allocation4] sm:$0xff] 0.0
      %420 = vst [vmem:[#allocation4 + $0x8] sm:$0xff] 0.0
      %421 = vst [vmem:[#allocation4 + $0x10] sm:$0xff] 0.0
      %s422 = scalar_lea.vmem [#allocation4], 360
      %423 = vst [vmem:[%s422] sm:$0xff] 0.0
      %424 = vst [vmem:[%s422 + $0x8] sm:$0xff] 0.0
      %425 = vst [vmem:[%s422 + $0x10] sm:$0xff] 0.0
      %426 = vst [vmem:[%s422 + $0x18] sm:$0xff] 0.0
      %427 = vst [vmem:[%s422 + $0x20] sm:$0xff] 0.0
      %428 = vst [vmem:[%s422 + $0x28] sm:$0xff] 0.0
      %s429 = scalar_lea.vmem [#allocation4], 24
      %430 = vst [vmem:[%s429] sm:$0xff] 0.0
      %431 = vst [vmem:[%s429 + $0x18] sm:$0xff] 0.0
      %432 = vst [vmem:[%s429 + $0x30] sm:$0xff] 0.0
      %433 = vst [vmem:[%s429 + $0x48] sm:$0xff] 0.0
      %434 = vst [vmem:[%s429 + $0x60] sm:$0xff] 0.0
      %435 = vst [vmem:[%s429 + $0x78] sm:$0xff] 0.0
      %436 = vst [vmem:[%s429 + $0x90] sm:$0xff] 0.0
      %437 = vst [vmem:[%s429 + $0xa8] sm:$0xff] 0.0
      %438 = vst [vmem:[%s429 + $0xc0] sm:$0xff] 0.0
      %439 = vst [vmem:[%s429 + $0xd8] sm:$0xff] 0.0
      %440 = vst [vmem:[%s429 + $0xf0] sm:$0xff] 0.0
      %441 = vst [vmem:[%s429 + $0x108] sm:$0xff] 0.0
      %442 = vst [vmem:[%s429 + $0x120] sm:$0xff] 0.0
      %443 = vst [vmem:[%s429 + $0x138] sm:$0xff] 0.0
      %444 = vst [vmem:[%s429 + $0x16] sm:$0x3] 0.0
      %445 = vst [vmem:[%s429 + $0x2e] sm:$0x3] 0.0
      %446 = vst [vmem:[%s429 + $0x46] sm:$0x3] 0.0
      %447 = vst [vmem:[%s429 + $0x5e] sm:$0x3] 0.0
      %448 = vst [vmem:[%s429 + $0x76] sm:$0x3] 0.0
      %449 = vst [vmem:[%s429 + $0x8e] sm:$0x3] 0.0
      %450 = vst [vmem:[%s429 + $0xa6] sm:$0x3] 0.0
      %451 = vst [vmem:[%s429 + $0xbe] sm:$0x3] 0.0
      %452 = vst [vmem:[%s429 + $0xd6] sm:$0x3] 0.0
      %453 = vst [vmem:[%s429 + $0xee] sm:$0x3] 0.0
      %454 = vst [vmem:[%s429 + $0x106] sm:$0x3] 0.0
      %455 = vst [vmem:[%s429 + $0x11e] sm:$0x3] 0.0
      %456 = vst [vmem:[%s429 + $0x136] sm:$0x3] 0.0
      %457 = vst [vmem:[%s429 + $0x14e] sm:$0x3] 0.0
      %v458 = vld [vmem:[%s315] sm:$0xf]
      %v459 = vld [vmem:[%s315 + $0x4] sm:$0xf]
      %v460 = vld [vmem:[%s315 + $0x8] sm:$0xf]
      %v461 = vld [vmem:[%s315 + $0xc] sm:$0xf]
      %v462 = vld [vmem:[%s315 + $0x10] sm:$0xf]
      %v463 = vld [vmem:[%s315 + $0x14] sm:$0xf]
      %v464 = vld [vmem:[%s315 + $0x18] sm:$0xf]
      %v465 = vld [vmem:[%s315 + $0x1c] sm:$0xf]
      %v466 = vld [vmem:[%s315 + $0x20] sm:$0xf]
      %v467 = vld [vmem:[%s315 + $0x24] sm:$0xf]
      %v468 = vld [vmem:[%s315 + $0x28] sm:$0xf]
      %v469 = vld [vmem:[%s315 + $0x2c] sm:$0xf]
      %v470 = vld [vmem:[%s315 + $0x30] sm:$0xf]
      %v471 = vld [vmem:[%s315 + $0x34] sm:$0xf]
      %v472 = vld [vmem:[%s315 + $0x38] sm:$0xf]
      %v473 = vld [vmem:[%s315 + $0x3c] sm:$0xf]
      %v474 = vld [vmem:[%s315 + $0x40] sm:$0xf]
      %v475 = vld [vmem:[%s315 + $0x44] sm:$0xf]
      %v476 = vld [vmem:[%s315 + $0x48] sm:$0xf]
      %v477 = vld [vmem:[%s315 + $0x4c] sm:$0xf]
      %v478 = vld [vmem:[%s315 + $0x50] sm:$0xf]
      %v479 = vld [vmem:[%s315 + $0x54] sm:$0xf]
      %v480 = vld [vmem:[%s315 + $0x58] sm:$0xf]
      %v481 = vld [vmem:[%s315 + $0x5c] sm:$0xf]
      %v482 = vld [vmem:[%s315 + $0x60] sm:$0xf]
      %v483 = vld [vmem:[%s315 + $0x64] sm:$0xf]
      %v484 = vld [vmem:[%s315 + $0x68] sm:$0xf]
      %v485 = vld [vmem:[%s315 + $0x6c] sm:$0xf]
      %v486 = vld [vmem:[%s315 + $0x70] sm:$0xf]
      %v487 = vld [vmem:[%s315 + $0x74] sm:$0xf]
      %v488 = vld [vmem:[%s315 + $0x78] sm:$0xf]
      %v489 = vld [vmem:[%s315 + $0x7c] sm:$0xf]
      %v490 = vunpack.c.l.bf16 %v458
      %v491 = vunpack.c.l.bf16 %v459
      %v492 = vunpack.c.l.bf16 %v460
      %v493 = vunpack.c.l.bf16 %v461
      %v494 = vunpack.c.l.bf16 %v462
      %v495 = vunpack.c.l.bf16 %v463
      %v496 = vunpack.c.l.bf16 %v464
      %v497 = vunpack.c.l.bf16 %v465
      %v498 = vunpack.c.l.bf16 %v466
      %v499 = vunpack.c.l.bf16 %v467
      %v500 = vunpack.c.l.bf16 %v468
      %v501 = vunpack.c.l.bf16 %v469
      %v502 = vunpack.c.l.bf16 %v470
      %v503 = vunpack.c.l.bf16 %v471
      %v504 = vunpack.c.l.bf16 %v472
      %v505 = vunpack.c.l.bf16 %v473
      %v506 = vunpack.c.l.bf16 %v474
      %v507 = vunpack.c.l.bf16 %v475
      %v508 = vunpack.c.l.bf16 %v476
      %v509 = vunpack.c.l.bf16 %v477
      %v510 = vunpack.c.l.bf16 %v478
      %v511 = vunpack.c.l.bf16 %v479
      %v512 = vunpack.c.l.bf16 %v480
      %v513 = vunpack.c.l.bf16 %v481
      %v514 = vunpack.c.l.bf16 %v482
      %v515 = vunpack.c.l.bf16 %v483
      %v516 = vunpack.c.l.bf16 %v484
      %v517 = vunpack.c.l.bf16 %v485
      %v518 = vunpack.c.l.bf16 %v486
      %v519 = vunpack.c.l.bf16 %v487
      %v520 = vunpack.c.l.bf16 %v488
      %v521 = vunpack.c.l.bf16 %v489
      %vm522 = vcmask 64512
      %523 = vst.msk [vmem:[%s340 + $0x8] sm:$0xff] %vm522, %v490
      %524 = vst.msk [vmem:[%s340 + $0x10] sm:$0xff] %vm522, %v491
      %525 = vst.msk [vmem:[%s340 + $0x28] sm:$0xff] %vm522, %v492
      %526 = vst.msk [vmem:[%s340 + $0x30] sm:$0xff] %vm522, %v493
      %527 = vst.msk [vmem:[%s340 + $0x48] sm:$0xff] %vm522, %v494
      %528 = vst.msk [vmem:[%s340 + $0x50] sm:$0xff] %vm522, %v495
      %529 = vst.msk [vmem:[%s340 + $0x68] sm:$0xff] %vm522, %v496
      %530 = vst.msk [vmem:[%s340 + $0x70] sm:$0xff] %vm522, %v497
      %531 = vst.msk [vmem:[%s340 + $0x88] sm:$0xff] %vm522, %v498
      %532 = vst.msk [vmem:[%s340 + $0x90] sm:$0xff] %vm522, %v499
      %533 = vst.msk [vmem:[%s340 + $0xa8] sm:$0xff] %vm522, %v500
      %534 = vst.msk [vmem:[%s340 + $0xb0] sm:$0xff] %vm522, %v501
      %535 = vst.msk [vmem:[%s340 + $0xc8] sm:$0xff] %vm522, %v502
      %536 = vst.msk [vmem:[%s340 + $0xd0] sm:$0xff] %vm522, %v503
      %537 = vst.msk [vmem:[%s340 + $0xe8] sm:$0xff] %vm522, %v504
      %538 = vst.msk [vmem:[%s340 + $0xf0] sm:$0xff] %vm522, %v505
      %539 = vst.msk [vmem:[%s340 + $0x108] sm:$0xff] %vm522, %v506
      %540 = vst.msk [vmem:[%s340 + $0x110] sm:$0xff] %vm522, %v507
      %541 = vst.msk [vmem:[%s340 + $0x128] sm:$0xff] %vm522, %v508
      %542 = vst.msk [vmem:[%s340 + $0x130] sm:$0xff] %vm522, %v509
      %543 = vst.msk [vmem:[%s340 + $0x148] sm:$0xff] %vm522, %v510
      %544 = vst.msk [vmem:[%s340 + $0x150] sm:$0xff] %vm522, %v511
      %545 = vst.msk [vmem:[%s340 + $0x168] sm:$0xff] %vm522, %v512
      %546 = vst.msk [vmem:[%s340 + $0x170] sm:$0xff] %vm522, %v513
      %547 = vst.msk [vmem:[%s340 + $0x188] sm:$0xff] %vm522, %v514
      %548 = vst.msk [vmem:[%s340 + $0x190] sm:$0xff] %vm522, %v515
      %549 = vst.msk [vmem:[%s340 + $0x1a8] sm:$0xff] %vm522, %v516
      %550 = vst.msk [vmem:[%s340 + $0x1b0] sm:$0xff] %vm522, %v517
      %551 = vst.msk [vmem:[%s340 + $0x1c8] sm:$0xff] %vm522, %v518
      %552 = vst.msk [vmem:[%s340 + $0x1d0] sm:$0xff] %vm522, %v519
      %553 = vst.msk [vmem:[%s340 + $0x1e8] sm:$0xff] %vm522, %v520
      %554 = vst.msk [vmem:[%s340 + $0x1f0] sm:$0xff] %vm522, %v521
      %v555 = vld [vmem:[#allocation2] sm:$0xff]
      %v556 = vld [vmem:[#allocation2 + $0x8] sm:$0xff]
      %v557 = vld [vmem:[#allocation2 + $0x10] sm:$0xff]
      %v558 = vld [vmem:[#allocation2 + $0x18] sm:$0xff]
      %v559 = vld [vmem:[#allocation2 + $0x20] sm:$0xff]
      %v560 = vld [vmem:[#allocation2 + $0x28] sm:$0xff]
      %v561 = vld [vmem:[#allocation2 + $0x30] sm:$0xff]
      %v562 = vld [vmem:[#allocation2 + $0x38] sm:$0xff]
      %v563 = vld [vmem:[#allocation2 + $0x40] sm:$0xff]
      %v564 = vld [vmem:[#allocation2 + $0x48] sm:$0xff]
      %v565 = vld [vmem:[#allocation2 + $0x50] sm:$0xff]
      %v566 = vld [vmem:[#allocation2 + $0x58] sm:$0xff]
      %v567 = vld [vmem:[#allocation2 + $0x60] sm:$0xff]
      %v568 = vld [vmem:[#allocation2 + $0x68] sm:$0xff]
      %v569 = vld [vmem:[#allocation2 + $0x70] sm:$0xff]
      %v570 = vld [vmem:[#allocation2 + $0x78] sm:$0xff]
      %v571 = vld [vmem:[#allocation2 + $0x80] sm:$0xff]
      %v572 = vld [vmem:[#allocation2 + $0x88] sm:$0xff]
      %v573 = vld [vmem:[#allocation2 + $0x90] sm:$0xff]
      %v574 = vld [vmem:[#allocation2 + $0x98] sm:$0xff]
      %v575 = vld [vmem:[#allocation2 + $0xa0] sm:$0xff]
      %v576 = vld [vmem:[#allocation2 + $0xa8] sm:$0xff]
      %v577 = vld [vmem:[#allocation2 + $0xb0] sm:$0xff]
      %v578 = vld [vmem:[#allocation2 + $0xb8] sm:$0xff]
      %v579 = vld [vmem:[#allocation2 + $0xc0] sm:$0xff]
      %v580 = vld [vmem:[#allocation2 + $0xc8] sm:$0xff]
      %v581 = vld [vmem:[#allocation2 + $0xd0] sm:$0xff]
      %v582 = vld [vmem:[#allocation2 + $0xd8] sm:$0xff]
      %v583 = vld [vmem:[#allocation2 + $0xe0] sm:$0xff]
      %v584 = vld [vmem:[#allocation2 + $0xe8] sm:$0xff]
      %v585 = vld [vmem:[#allocation2 + $0xf0] sm:$0xff]
      %v586 = vld [vmem:[#allocation2 + $0xf8] sm:$0xff]
      %v587 = vld [vmem:[#allocation2 + $0x100] sm:$0xff]
      %v588 = vld [vmem:[#allocation2 + $0x108] sm:$0xff]
      %v589 = vld [vmem:[#allocation2 + $0x110] sm:$0xff]
      %v590 = vld [vmem:[#allocation2 + $0x118] sm:$0xff]
      %v591 = vld [vmem:[#allocation2 + $0x120] sm:$0xff]
      %v592 = vld [vmem:[#allocation2 + $0x128] sm:$0xff]
      %v593 = vld [vmem:[#allocation2 + $0x130] sm:$0xff]
      %v594 = vld [vmem:[#allocation2 + $0x138] sm:$0xff]
      %v595 = vld [vmem:[#allocation2 + $0x140] sm:$0xff]
      %v596 = vld [vmem:[#allocation2 + $0x148] sm:$0xff]
      %v597 = vld [vmem:[#allocation2 + $0x150] sm:$0xff]
      %v598 = vld [vmem:[#allocation2 + $0x158] sm:$0xff]
      %v599 = vld [vmem:[#allocation2 + $0x160] sm:$0xff]
      %v600 = vld [vmem:[#allocation2 + $0x168] sm:$0xff]
      %v601 = vld [vmem:[#allocation2 + $0x170] sm:$0xff]
      %v602 = vld [vmem:[#allocation2 + $0x178] sm:$0xff]
      %v603 = vld [vmem:[#allocation2 + $0x180] sm:$0xff]
      %v604 = vld [vmem:[#allocation2 + $0x188] sm:$0xff]
      %v605 = vld [vmem:[#allocation2 + $0x190] sm:$0xff]
      %v606 = vld [vmem:[#allocation2 + $0x198] sm:$0xff]
      %v607 = vld [vmem:[#allocation2 + $0x1a0] sm:$0xff]
      %v608 = vld [vmem:[#allocation2 + $0x1a8] sm:$0xff]
      %v609 = vld [vmem:[#allocation2 + $0x1b0] sm:$0xff]
      %v610 = vld [vmem:[#allocation2 + $0x1b8] sm:$0xff]
      %v611 = vld [vmem:[#allocation2 + $0x1c0] sm:$0xff]
      %v612 = vld [vmem:[#allocation2 + $0x1c8] sm:$0xff]
      %v613 = vld [vmem:[#allocation2 + $0x1d0] sm:$0xff]
      %v614 = vld [vmem:[#allocation2 + $0x1d8] sm:$0xff]
      %v615 = vld [vmem:[#allocation2 + $0x1e0] sm:$0xff]
      %v616 = vld [vmem:[#allocation2 + $0x1e8] sm:$0xff]
      %v617 = vld [vmem:[#allocation2 + $0x1f0] sm:$0xff]
      %v618 = vld [vmem:[#allocation2 + $0x1f8] sm:$0xff]
      %v619 = vld [vmem:[#allocation2 + $0x200] sm:$0xff]
      %v620 = vld [vmem:[#allocation2 + $0x208] sm:$0xff]
      %v621 = vld [vmem:[#allocation2 + $0x210] sm:$0xff]
      %v622 = vld [vmem:[#allocation2 + $0x218] sm:$0xff]
      %v623 = vld [vmem:[#allocation2 + $0x220] sm:$0xff]
      %v624 = vld [vmem:[#allocation2 + $0x228] sm:$0xff]
      %v625 = vld [vmem:[#allocation2 + $0x230] sm:$0xff]
      %v626 = vld [vmem:[#allocation2 + $0x238] sm:$0xff]
      %v627 = vld [vmem:[#allocation2 + $0x240] sm:$0xff]
      %v628 = vld [vmem:[#allocation2 + $0x248] sm:$0xff]
      %v629 = vpack.c.bf16 %v556, %v555
      %v630 = vpack.c.bf16 %v558, %v557
      %v631 = vpack.c.bf16 %v560, %v559
      %v632 = vpack.c.bf16 %v562, %v561
      %v633 = vpack.c.bf16 %v564, %v563
      %v634 = vpack.c.bf16 %v566, %v565
      %v635 = vpack.c.bf16 %v568, %v567
      %v636 = vpack.c.bf16 %v570, %v569
      %v637 = vpack.c.bf16 %v572, %v571
      %v638 = vpack.c.bf16 %v574, %v573
      %v639 = vpack.c.bf16 %v576, %v575
      %v640 = vpack.c.bf16 %v578, %v577
      %v641 = vpack.c.bf16 %v580, %v579
      %v642 = vpack.c.bf16 %v582, %v581
      %v643 = vpack.c.bf16 %v584, %v583
      %v644 = vpack.c.bf16 %v586, %v585
      %v645 = vpack.c.bf16 %v588, %v587
      %v646 = vpack.c.bf16 %v590, %v589
      %v647 = vpack.c.bf16 %v592, %v591
      %v648 = vpack.c.bf16 %v594, %v593
      %v649 = vpack.c.bf16 %v596, %v595
      %v650 = vpack.c.bf16 %v598, %v597
      %v651 = vpack.c.bf16 %v600, %v599
      %v652 = vpack.c.bf16 %v602, %v601
      %v653 = vpack.c.bf16 %v604, %v603
      %v654 = vpack.c.bf16 %v606, %v605
      %v655 = vpack.c.bf16 %v608, %v607
      %v656 = vpack.c.bf16 %v610, %v609
      %v657 = vpack.c.bf16 %v612, %v611
      %v658 = vpack.c.bf16 %v614, %v613
      %v659 = vpack.c.bf16 %v616, %v615
      %v660 = vpack.c.bf16 %v618, %v617
      %v661 = vpack.c.bf16 %v619, %v619
      %v662 = vld [vmem:[%s2] sm:$0xf]
      %v663 = vpack.c.bf16 %v557, %v556
      %v664 = vpack.c.bf16 %v559, %v558
      %v665 = vpack.c.bf16 %v561, %v560
      %v666 = vpack.c.bf16 %v563, %v562
      %v667 = vpack.c.bf16 %v565, %v564
      %v668 = vpack.c.bf16 %v567, %v566
      %v669 = vpack.c.bf16 %v569, %v568
      %v670 = vpack.c.bf16 %v571, %v570
      %v671 = vpack.c.bf16 %v573, %v572
      %v672 = vpack.c.bf16 %v575, %v574
      %v673 = vpack.c.bf16 %v577, %v576
      %v674 = vpack.c.bf16 %v579, %v578
      %v675 = vpack.c.bf16 %v581, %v580
      %v676 = vpack.c.bf16 %v583, %v582
      %v677 = vpack.c.bf16 %v585, %v584
      %v678 = vpack.c.bf16 %v587, %v586
      %v679 = vpack.c.bf16 %v589, %v588
      %v680 = vpack.c.bf16 %v591, %v590
      %v681 = vpack.c.bf16 %v593, %v592
      %v682 = vpack.c.bf16 %v595, %v594
      %v683 = vpack.c.bf16 %v597, %v596
      %v684 = vpack.c.bf16 %v599, %v598
      %v685 = vpack.c.bf16 %v601, %v600
      %v686 = vpack.c.bf16 %v603, %v602
      %v687 = vpack.c.bf16 %v605, %v604
      %v688 = vpack.c.bf16 %v607, %v606
      %v689 = vpack.c.bf16 %v609, %v608
      %v690 = vpack.c.bf16 %v611, %v610
      %v691 = vpack.c.bf16 %v613, %v612
      %v692 = vpack.c.bf16 %v615, %v614
      %v693 = vpack.c.bf16 %v617, %v616
      %v694 = vpack.c.bf16 %v619, %v618
      %v695 = vld [vmem:[%s2 + $0x40] sm:$0xf]
      %v697 = vsel %vm522, %v663, 0
      %v700 = vsel %vm522, %v664, 0
      %v703 = vsel %vm522, %v665, 0
      %v706 = vsel %vm522, %v666, 0
      %v709 = vsel %vm522, %v667, 0
      %v712 = vsel %vm522, %v668, 0
      %v715 = vsel %vm522, %v669, 0
      %v718 = vsel %vm522, %v670, 0
      %v721 = vsel %vm522, %v671, 0
      %v724 = vsel %vm522, %v672, 0
      %v727 = vsel %vm522, %v673, 0
      %v730 = vsel %vm522, %v674, 0
      %v733 = vsel %vm522, %v675, 0
      %v736 = vsel %vm522, %v676, 0
      %v739 = vsel %vm522, %v677, 0
      %v742 = vsel %vm522, %v678, 0
      %v745 = vsel %vm522, %v679, 0
      %v748 = vsel %vm522, %v680, 0
      %v751 = vsel %vm522, %v681, 0
      %v754 = vsel %vm522, %v682, 0
      %v757 = vsel %vm522, %v683, 0
      %v760 = vsel %vm522, %v684, 0
      %v763 = vsel %vm522, %v685, 0
      %v766 = vsel %vm522, %v686, 0
      %v769 = vsel %vm522, %v687, 0
      %v772 = vsel %vm522, %v688, 0
      %v775 = vsel %vm522, %v689, 0
      %v778 = vsel %vm522, %v690, 0
      %v781 = vsel %vm522, %v691, 0
      %v784 = vsel %vm522, %v692, 0
      %v787 = vsel %vm522, %v693, 0
      %v790 = vsel %vm522, %v694, 0
      %vm792 = vcmask 1043456
      %v794 = vsel %vm792, %v695, 0
      %796 = vmatprep.subr.bf16.mxu0 0
      %797 = vmatpush1.bf16.msra.mxu0 %v794
      %798 = vmatprep.subr.bf16.mxu0 0
      %799 = vmatpush1.bf16.msra.mxu0 0
      %800 = vmatprep.subr.bf16.mxu0 0
      %801 = vmatpush1.bf16.msra.mxu0 0
      %802 = vmatprep.subr.bf16.mxu0 0
      %803 = vmatpush1.bf16.msra.mxu0 0
      %804 = vmatprep.subr.bf16.mxu0 0
      %805 = vmatpush1.bf16.msra.mxu0 0
      %806 = vmatprep.subr.bf16.mxu0 0
      %807 = vmatpush1.bf16.msra.mxu0 0
      %808 = vmatprep.subr.bf16.mxu0 0
      %809 = vmatpush1.bf16.msra.mxu0 0
      %810 = vmatprep.subr.bf16.mxu0 0
      %811 = vmatpush1.bf16.msra.mxu0 0
      %812 = vmatprep.subr.bf16.mxu0 0
      %813 = vmatpush1.bf16.msra.mxu0 0
      %814 = vmatprep.subr.bf16.mxu0 0
      %815 = vmatpush1.bf16.msra.mxu0 0
      %816 = vmatprep.subr.bf16.mxu0 0
      %817 = vmatpush1.bf16.msra.mxu0 0
      %818 = vmatprep.subr.bf16.mxu0 0
      %819 = vmatpush1.bf16.msra.mxu0 0
      %820 = vmatprep.subr.bf16.mxu0 0
      %821 = vmatpush1.bf16.msra.mxu0 0
      %822 = vmatprep.subr.bf16.mxu0 0
      %823 = vmatpush1.bf16.msra.mxu0 0
      %824 = vmatprep.subr.bf16.mxu0 0
      %825 = vmatpush1.bf16.msra.mxu0 0
      %826 = vmatprep.subr.bf16.mxu0 0
      %827 = vmatpush1.bf16.msra.mxu0 0
      %828 = vmatprep.mubr.bf16.mxu0 0
      %829 = vmatmul.mubr.bf16.gmra.mrb[0].mxu0 %v697
      %v830 = vpop.f32.mrb[0].mxu0
      %v831 = vadd.f32 0.0, %v830
      %v832 = vpop.f32.mrb[0].mxu0
      %v833 = vpop.f32.mrb[0].mxu0
      %v834 = vadd.f32 0.0, %v833
      %v835 = vpop.f32.mrb[0].mxu0
      %836 = vmatprep.mubr.bf16.mxu0 0
      %837 = vmatmul.mubr.bf16.gmra.mrb[0].mxu0 %v700
      %v838 = vpop.f32.mrb[0].mxu0
      %v839 = vpop.f32.mrb[0].mxu0
      %v840 = vpop.f32.mrb[0].mxu0
      %v841 = vpop.f32.mrb[0].mxu0
      %842 = vmatprep.mubr.bf16.mxu0 0
      %843 = vmatmul.mubr.bf16.gmra.mrb[0].mxu0 %v703
      %v844 = vpop.f32.mrb[0].mxu0
      %v845 = vadd.f32 0.0, %v844
      %v846 = vpop.f32.mrb[0].mxu0
      %v847 = vpop.f32.mrb[0].mxu0
      %v848 = vadd.f32 0.0, %v847
      %v849 = vpop.f32.mrb[0].mxu0
      %850 = vmatprep.mubr.bf16.mxu0 0
      %851 = vmatmul.mubr.bf16.gmra.mrb[0].mxu0 %v706
      %v852 = vpop.f32.mrb[0].mxu0
      %v853 = vpop.f32.mrb[0].mxu0
      %v854 = vpop.f32.mrb[0].mxu0
      %v855 = vpop.f32.mrb[0].mxu0
      %856 = vmatprep.mubr.bf16.mxu0 0
      %857 = vmatmul.mubr.bf16.gmra.mrb[0].mxu0 %v709
      %v858 = vpop.f32.mrb[0].mxu0
      %v859 = vadd.f32 0.0, %v858
      %v860 = vpop.f32.mrb[0].mxu0
      %v861 = vpop.f32.mrb[0].mxu0
      %v862 = vadd.f32 0.0, %v861
      %v863 = vpop.f32.mrb[0].mxu0
      %864 = vmatprep.mubr.bf16.mxu0 0
      %865 = vmatmul.mubr.bf16.gmra.mrb[0].mxu0 %v712
      %v866 = vpop.f32.mrb[0].mxu0
      %v867 = vpop.f32.mrb[0].mxu0
      %v868 = vpop.f32.mrb[0].mxu0
      %v869 = vpop.f32.mrb[0].mxu0
      %870 = vmatprep.mubr.bf16.mxu0 0
      %871 = vmatmul.mubr.bf16.gmra.mrb[0].mxu0 %v715
      %v872 = vpop.f32.mrb[0].mxu0
      %v873 = vadd.f32 0.0, %v872
      %v874 = vpop.f32.mrb[0].mxu0
      %v875 = vpop.f32.mrb[0].mxu0
      %v876 = vadd.f32 0.0, %v875
      %v877 = vpop.f32.mrb[0].mxu0
      %878 = vmatprep.mubr.bf16.mxu0 0
      %879 = vmatmul.mubr.bf16.gmra.mrb[0].mxu0 %v718
      %v880 = vpop.f32.mrb[0].mxu0
      %v881 = vpop.f32.mrb[0].mxu0
      %v882 = vpop.f32.mrb[0].mxu0
      %v883 = vpop.f32.mrb[0].mxu0
      %884 = vmatprep.mubr.bf16.mxu0 0
      %885 = vmatmul.mubr.bf16.gmra.mrb[0].mxu0 %v721
      %v886 = vpop.f32.mrb[0].mxu0
      %v887 = vadd.f32 0.0, %v886
      %v888 = vpop.f32.mrb[0].mxu0
      %v889 = vpop.f32.mrb[0].mxu0
      %v890 = vadd.f32 0.0, %v889
      %v891 = vpop.f32.mrb[0].mxu0
      %892 = vmatprep.mubr.bf16.mxu0 0
      %893 = vmatmul.mubr.bf16.gmra.mrb[0].mxu0 %v724
      %v894 = vpop.f32.mrb[0].mxu0
      %v895 = vpop.f32.mrb[0].mxu0
      %v896 = vpop.f32.mrb[0].mxu0
      %v897 = vpop.f32.mrb[0].mxu0
      %898 = vmatprep.mubr.bf16.mxu0 0
      %899 = vmatmul.mubr.bf16.gmra.mrb[0].mxu0 %v727
      %v900 = vpop.f32.mrb[0].mxu0
      %v901 = vadd.f32 0.0, %v900
      %v902 = vpop.f32.mrb[0].mxu0
      %v903 = vpop.f32.mrb[0].mxu0
      %v904 = vadd.f32 0.0, %v903
      %v905 = vpop.f32.mrb[0].mxu0
      %906 = vmatprep.mubr.bf16.mxu0 0
      %907 = vmatmul.mubr.bf16.gmra.mrb[0].mxu0 %v730
      %v908 = vpop.f32.mrb[0].mxu0
      %v909 = vpop.f32.mrb[0].mxu0
      %v910 = vpop.f32.mrb[0].mxu0
      %v911 = vpop.f32.mrb[0].mxu0
      %912 = vmatprep.mubr.bf16.mxu0 0
      %913 = vmatmul.mubr.bf16.gmra.mrb[0].mxu0 %v733
      %v914 = vpop.f32.mrb[0].mxu0
      %v915 = vadd.f32 0.0, %v914
      %v916 = vpop.f32.mrb[0].mxu0
      %v917 = vpop.f32.mrb[0].mxu0
      %v918 = vadd.f32 0.0, %v917
      %v919 = vpop.f32.mrb[0].mxu0
      %920 = vmatprep.mubr.bf16.mxu0 0
      %921 = vmatmul.mubr.bf16.gmra.mrb[0].mxu0 %v736
      %v922 = vpop.f32.mrb[0].mxu0
      %v923 = vpop.f32.mrb[0].mxu0
      %v924 = vpop.f32.mrb[0].mxu0
      %v925 = vpop.f32.mrb[0].mxu0
      %926 = vmatprep.mubr.bf16.mxu0 0
      %927 = vmatmul.mubr.bf16.gmra.mrb[0].mxu0 %v739
      %v928 = vpop.f32.mrb[0].mxu0
      %v929 = vadd.f32 0.0, %v928
      %v930 = vpop.f32.mrb[0].mxu0
      %v931 = vpop.f32.mrb[0].mxu0
      %v932 = vadd.f32 0.0, %v931
      %v933 = vpop.f32.mrb[0].mxu0
      %934 = vmatprep.mubr.bf16.mxu0 0
      %935 = vmatmul.mubr.bf16.gmra.mrb[0].mxu0 %v742
      %v936 = vpop.f32.mrb[0].mxu0
      %v937 = vpop.f32.mrb[0].mxu0
      %v938 = vpop.f32.mrb[0].mxu0
      %v939 = vpop.f32.mrb[0].mxu0
      %940 = vmatprep.mubr.bf16.mxu0 0
      %941 = vmatmul.mubr.bf16.gmra.mrb[0].mxu0 %v745
      %v942 = vpop.f32.mrb[0].mxu0
      %v943 = vadd.f32 0.0, %v942
      %v944 = vpop.f32.mrb[0].mxu0
      %v945 = vpop.f32.mrb[0].mxu0
      %v946 = vadd.f32 0.0, %v945
      %v947 = vpop.f32.mrb[0].mxu0
      %948 = vmatprep.mubr.bf16.mxu0 0
      %949 = vmatmul.mubr.bf16.gmra.mrb[0].mxu0 %v748
      %v950 = vpop.f32.mrb[0].mxu0
      %v951 = vpop.f32.mrb[0].mxu0
      %v952 = vpop.f32.mrb[0].mxu0
      %v953 = vpop.f32.mrb[0].mxu0
      %954 = vmatprep.mubr.bf16.mxu0 0
      %955 = vmatmul.mubr.bf16.gmra.mrb[0].mxu0 %v751
      %v956 = vpop.f32.mrb[0].mxu0
      %v957 = vadd.f32 0.0, %v956
      %v958 = vpop.f32.mrb[0].mxu0
      %v959 = vpop.f32.mrb[0].mxu0
      %v960 = vadd.f32 0.0, %v959
      %v961 = vpop.f32.mrb[0].mxu0
      %962 = vmatprep.mubr.bf16.mxu0 0
      %963 = vmatmul.mubr.bf16.gmra.mrb[0].mxu0 %v754
      %v964 = vpop.f32.mrb[0].mxu0
      %v965 = vpop.f32.mrb[0].mxu0
      %v966 = vpop.f32.mrb[0].mxu0
      %v967 = vpop.f32.mrb[0].mxu0
      %968 = vmatprep.mubr.bf16.mxu0 0
      %969 = vmatmul.mubr.bf16.gmra.mrb[0].mxu0 %v757
      %v970 = vpop.f32.mrb[0].mxu0
      %v971 = vadd.f32 0.0, %v970
      %v972 = vpop.f32.mrb[0].mxu0
      %v973 = vpop.f32.mrb[0].mxu0
      %v974 = vadd.f32 0.0, %v973
      %v975 = vpop.f32.mrb[0].mxu0
      %976 = vmatprep.mubr.bf16.mxu0 0
      %977 = vmatmul.mubr.bf16.gmra.mrb[0].mxu0 %v760
      %v978 = vpop.f32.mrb[0].mxu0
      %v979 = vpop.f32.mrb[0].mxu0
      %v980 = vpop.f32.mrb[0].mxu0
      %v981 = vpop.f32.mrb[0].mxu0
      %982 = vmatprep.mubr.bf16.mxu0 0
      %983 = vmatmul.mubr.bf16.gmra.mrb[0].mxu0 %v763
      %v984 = vpop.f32.mrb[0].mxu0
      %v985 = vadd.f32 0.0, %v984
      %v986 = vpop.f32.mrb[0].mxu0
      %v987 = vpop.f32.mrb[0].mxu0
      %v988 = vadd.f32 0.0, %v987
      %v989 = vpop.f32.mrb[0].mxu0
      %990 = vmatprep.mubr.bf16.mxu0 0
      %991 = vmatmul.mubr.bf16.gmra.mrb[0].mxu0 %v766
      %v992 = vpop.f32.mrb[0].mxu0
      %v993 = vpop.f32.mrb[0].mxu0
      %v994 = vpop.f32.mrb[0].mxu0
      %v995 = vpop.f32.mrb[0].mxu0
      %996 = vmatprep.mubr.bf16.mxu0 0
      %997 = vmatmul.mubr.bf16.gmra.mrb[0].mxu0 %v769
      %v998 = vpop.f32.mrb[0].mxu0
      %v999 = vadd.f32 0.0, %v998
      %v1000 = vpop.f32.mrb[0].mxu0
      %v1001 = vpop.f32.mrb[0].mxu0
      %v1002 = vadd.f32 0.0, %v1001
      %v1003 = vpop.f32.mrb[0].mxu0
      %1004 = vmatprep.mubr.bf16.mxu0 0
      %1005 = vmatmul.mubr.bf16.gmra.mrb[0].mxu0 %v772
      %v1006 = vpop.f32.mrb[0].mxu0
      %v1007 = vpop.f32.mrb[0].mxu0
      %v1008 = vpop.f32.mrb[0].mxu0
      %v1009 = vpop.f32.mrb[0].mxu0
      %1010 = vmatprep.mubr.bf16.mxu0 0
      %1011 = vmatmul.mubr.bf16.gmra.mrb[0].mxu0 %v775
      %v1012 = vpop.f32.mrb[0].mxu0
      %v1013 = vadd.f32 0.0, %v1012
      %v1014 = vpop.f32.mrb[0].mxu0
      %v1015 = vpop.f32.mrb[0].mxu0
      %v1016 = vadd.f32 0.0, %v1015
      %v1017 = vpop.f32.mrb[0].mxu0
      %1018 = vmatprep.mubr.bf16.mxu0 0
      %1019 = vmatmul.mubr.bf16.gmra.mrb[0].mxu0 %v778
      %v1020 = vpop.f32.mrb[0].mxu0
      %v1021 = vpop.f32.mrb[0].mxu0
      %v1022 = vpop.f32.mrb[0].mxu0
      %v1023 = vpop.f32.mrb[0].mxu0
      %1024 = vmatprep.mubr.bf16.mxu0 0
      %1025 = vmatmul.mubr.bf16.gmra.mrb[0].mxu0 %v781
      %v1026 = vpop.f32.mrb[0].mxu0
      %v1027 = vadd.f32 0.0, %v1026
      %v1028 = vpop.f32.mrb[0].mxu0
      %v1029 = vpop.f32.mrb[0].mxu0
      %v1030 = vadd.f32 0.0, %v1029
      %v1031 = vpop.f32.mrb[0].mxu0
      %1032 = vmatprep.mubr.bf16.mxu0 0
      %1033 = vmatmul.mubr.bf16.gmra.mrb[0].mxu0 %v784
      %v1034 = vpop.f32.mrb[0].mxu0
      %v1035 = vpop.f32.mrb[0].mxu0
      %v1036 = vpop.f32.mrb[0].mxu0
      %v1037 = vpop.f32.mrb[0].mxu0
      %1038 = vmatprep.mubr.bf16.mxu0 0
      %1039 = vmatmul.mubr.bf16.gmra.mrb[0].mxu0 %v787
      %v1040 = vpop.f32.mrb[0].mxu0
      %v1041 = vadd.f32 0.0, %v1040
      %v1042 = vpop.f32.mrb[0].mxu0
      %v1043 = vpop.f32.mrb[0].mxu0
      %v1044 = vadd.f32 0.0, %v1043
      %v1045 = vpop.f32.mrb[0].mxu0
      %1046 = vmatprep.mubr.bf16.mxu0 0
      %1047 = vmatmul.mubr.bf16.gmra.mrb[0].mxu0 %v790
      %v1048 = vpop.f32.mrb[0].mxu0
      %v1049 = vpop.f32.mrb[0].mxu0
      %v1050 = vpop.f32.mrb[0].mxu0
      %v1051 = vpop.f32.mrb[0].mxu0
      %1052 = vdwg.mxu0
      %vm1053 = vsmask.f32 4352
      %v1055 = vshrl.u32 %v629, 16
      %v1057 = vrot.slane %v1055, 3
      %v1058 = vshll.u32 %v629, 16
      %v1060 = vrot.slane %v1058, 4
      %v1061 = vor.u32 %v1057, %v1060
      %v1063 = vshrl.u32 %v630, 16
      %v1065 = vrot.slane %v1063, 3
      %v1066 = vshll.u32 %v630, 16
      %v1068 = vrot.slane %v1066, 4
      %v1069 = vor.u32 %v1065, %v1068
      %v1070 = vsel %vm1053, %v1061, %v1069
      %v1072 = vshrl.u32 %v631, 16
      %v1074 = vrot.slane %v1072, 3
      %v1075 = vshll.u32 %v631, 16
      %v1077 = vrot.slane %v1075, 4
      %v1078 = vor.u32 %v1074, %v1077
      %v1079 = vsel %vm1053, %v1069, %v1078
      %v1081 = vshrl.u32 %v632, 16
      %v1083 = vrot.slane %v1081, 3
      %v1084 = vshll.u32 %v632, 16
      %v1086 = vrot.slane %v1084, 4
      %v1087 = vor.u32 %v1083, %v1086
      %v1088 = vsel %vm1053, %v1078, %v1087
      %v1090 = vshrl.u32 %v633, 16
      %v1092 = vrot.slane %v1090, 3
      %v1093 = vshll.u32 %v633, 16
      %v1095 = vrot.slane %v1093, 4
      %v1096 = vor.u32 %v1092, %v1095
      %v1097 = vsel %vm1053, %v1087, %v1096
      %v1099 = vshrl.u32 %v634, 16
      %v1101 = vrot.slane %v1099, 3
      %v1102 = vshll.u32 %v634, 16
      %v1104 = vrot.slane %v1102, 4
      %v1105 = vor.u32 %v1101, %v1104
      %v1106 = vsel %vm1053, %v1096, %v1105
      %v1108 = vshrl.u32 %v635, 16
      %v1110 = vrot.slane %v1108, 3
      %v1111 = vshll.u32 %v635, 16
      %v1113 = vrot.slane %v1111, 4
      %v1114 = vor.u32 %v1110, %v1113
      %v1115 = vsel %vm1053, %v1105, %v1114
      %v1117 = vshrl.u32 %v636, 16
      %v1119 = vrot.slane %v1117, 3
      %v1120 = vshll.u32 %v636, 16
      %v1122 = vrot.slane %v1120, 4
      %v1123 = vor.u32 %v1119, %v1122
      %v1124 = vsel %vm1053, %v1114, %v1123
      %v1126 = vshrl.u32 %v637, 16
      %v1128 = vrot.slane %v1126, 3
      %v1129 = vshll.u32 %v637, 16
      %v1131 = vrot.slane %v1129, 4
      %v1132 = vor.u32 %v1128, %v1131
      %v1133 = vsel %vm1053, %v1123, %v1132
      %v1135 = vshrl.u32 %v638, 16
      %v1137 = vrot.slane %v1135, 3
      %v1138 = vshll.u32 %v638, 16
      %v1140 = vrot.slane %v1138, 4
      %v1141 = vor.u32 %v1137, %v1140
      %v1142 = vsel %vm1053, %v1132, %v1141
      %v1144 = vshrl.u32 %v639, 16
      %v1146 = vrot.slane %v1144, 3
      %v1147 = vshll.u32 %v639, 16
      %v1149 = vrot.slane %v1147, 4
      %v1150 = vor.u32 %v1146, %v1149
      %v1151 = vsel %vm1053, %v1141, %v1150
      %v1153 = vshrl.u32 %v640, 16
      %v1155 = vrot.slane %v1153, 3
      %v1156 = vshll.u32 %v640, 16
      %v1158 = vrot.slane %v1156, 4
      %v1159 = vor.u32 %v1155, %v1158
      %v1160 = vsel %vm1053, %v1150, %v1159
      %v1162 = vshrl.u32 %v641, 16
      %v1164 = vrot.slane %v1162, 3
      %v1165 = vshll.u32 %v641, 16
      %v1167 = vrot.slane %v1165, 4
      %v1168 = vor.u32 %v1164, %v1167
      %v1169 = vsel %vm1053, %v1159, %v1168
      %v1171 = vshrl.u32 %v642, 16
      %v1173 = vrot.slane %v1171, 3
      %v1174 = vshll.u32 %v642, 16
      %v1176 = vrot.slane %v1174, 4
      %v1177 = vor.u32 %v1173, %v1176
      %v1178 = vsel %vm1053, %v1168, %v1177
      %v1180 = vshrl.u32 %v643, 16
      %v1182 = vrot.slane %v1180, 3
      %v1183 = vshll.u32 %v643, 16
      %v1185 = vrot.slane %v1183, 4
      %v1186 = vor.u32 %v1182, %v1185
      %v1187 = vsel %vm1053, %v1177, %v1186
      %v1189 = vshrl.u32 %v644, 16
      %v1191 = vrot.slane %v1189, 3
      %v1192 = vshll.u32 %v644, 16
      %v1194 = vrot.slane %v1192, 4
      %v1195 = vor.u32 %v1191, %v1194
      %v1196 = vsel %vm1053, %v1186, %v1195
      %v1198 = vshrl.u32 %v645, 16
      %v1200 = vrot.slane %v1198, 3
      %v1201 = vshll.u32 %v645, 16
      %v1203 = vrot.slane %v1201, 4
      %v1204 = vor.u32 %v1200, %v1203
      %v1205 = vsel %vm1053, %v1195, %v1204
      %v1207 = vshrl.u32 %v646, 16
      %v1209 = vrot.slane %v1207, 3
      %v1210 = vshll.u32 %v646, 16
      %v1212 = vrot.slane %v1210, 4
      %v1213 = vor.u32 %v1209, %v1212
      %v1214 = vsel %vm1053, %v1204, %v1213
      %v1216 = vshrl.u32 %v647, 16
      %v1218 = vrot.slane %v1216, 3
      %v1219 = vshll.u32 %v647, 16
      %v1221 = vrot.slane %v1219, 4
      %v1222 = vor.u32 %v1218, %v1221
      %v1223 = vsel %vm1053, %v1213, %v1222
      %v1225 = vshrl.u32 %v648, 16
      %v1227 = vrot.slane %v1225, 3
      %v1228 = vshll.u32 %v648, 16
      %v1230 = vrot.slane %v1228, 4
      %v1231 = vor.u32 %v1227, %v1230
      %v1232 = vsel %vm1053, %v1222, %v1231
      %v1234 = vshrl.u32 %v649, 16
      %v1236 = vrot.slane %v1234, 3
      %v1237 = vshll.u32 %v649, 16
      %v1239 = vrot.slane %v1237, 4
      %v1240 = vor.u32 %v1236, %v1239
      %v1241 = vsel %vm1053, %v1231, %v1240
      %v1243 = vshrl.u32 %v650, 16
      %v1245 = vrot.slane %v1243, 3
      %v1246 = vshll.u32 %v650, 16
      %v1248 = vrot.slane %v1246, 4
      %v1249 = vor.u32 %v1245, %v1248
      %v1250 = vsel %vm1053, %v1240, %v1249
      %v1252 = vshrl.u32 %v651, 16
      %v1254 = vrot.slane %v1252, 3
      %v1255 = vshll.u32 %v651, 16
      %v1257 = vrot.slane %v1255, 4
      %v1258 = vor.u32 %v1254, %v1257
      %v1259 = vsel %vm1053, %v1249, %v1258
      %v1261 = vshrl.u32 %v652, 16
      %v1263 = vrot.slane %v1261, 3
      %v1264 = vshll.u32 %v652, 16
      %v1266 = vrot.slane %v1264, 4
      %v1267 = vor.u32 %v1263, %v1266
      %v1268 = vsel %vm1053, %v1258, %v1267
      %v1270 = vshrl.u32 %v653, 16
      %v1272 = vrot.slane %v1270, 3
      %v1273 = vshll.u32 %v653, 16
      %v1275 = vrot.slane %v1273, 4
      %v1276 = vor.u32 %v1272, %v1275
      %v1277 = vsel %vm1053, %v1267, %v1276
      %v1279 = vshrl.u32 %v654, 16
      %v1281 = vrot.slane %v1279, 3
      %v1282 = vshll.u32 %v654, 16
      %v1284 = vrot.slane %v1282, 4
      %v1285 = vor.u32 %v1281, %v1284
      %v1286 = vsel %vm1053, %v1276, %v1285
      %v1288 = vshrl.u32 %v655, 16
      %v1290 = vrot.slane %v1288, 3
      %v1291 = vshll.u32 %v655, 16
      %v1293 = vrot.slane %v1291, 4
      %v1294 = vor.u32 %v1290, %v1293
      %v1295 = vsel %vm1053, %v1285, %v1294
      %v1297 = vshrl.u32 %v656, 16
      %v1299 = vrot.slane %v1297, 3
      %v1300 = vshll.u32 %v656, 16
      %v1302 = vrot.slane %v1300, 4
      %v1303 = vor.u32 %v1299, %v1302
      %v1304 = vsel %vm1053, %v1294, %v1303
      %v1306 = vshrl.u32 %v657, 16
      %v1308 = vrot.slane %v1306, 3
      %v1309 = vshll.u32 %v657, 16
      %v1311 = vrot.slane %v1309, 4
      %v1312 = vor.u32 %v1308, %v1311
      %v1313 = vsel %vm1053, %v1303, %v1312
      %v1315 = vshrl.u32 %v658, 16
      %v1317 = vrot.slane %v1315, 3
      %v1318 = vshll.u32 %v658, 16
      %v1320 = vrot.slane %v1318, 4
      %v1321 = vor.u32 %v1317, %v1320
      %v1322 = vsel %vm1053, %v1312, %v1321
      %v1324 = vshrl.u32 %v659, 16
      %v1326 = vrot.slane %v1324, 3
      %v1327 = vshll.u32 %v659, 16
      %v1329 = vrot.slane %v1327, 4
      %v1330 = vor.u32 %v1326, %v1329
      %v1331 = vsel %vm1053, %v1321, %v1330
      %v1333 = vshrl.u32 %v660, 16
      %v1335 = vrot.slane %v1333, 3
      %v1336 = vshll.u32 %v660, 16
      %v1338 = vrot.slane %v1336, 4
      %v1339 = vor.u32 %v1335, %v1338
      %v1340 = vsel %vm1053, %v1330, %v1339
      %v1342 = vshrl.u32 %v661, 16
      %v1344 = vrot.slane %v1342, 3
      %v1345 = vshll.u32 %v661, 16
      %v1347 = vrot.slane %v1345, 4
      %v1348 = vor.u32 %v1344, %v1347
      %v1349 = vsel %vm1053, %v1339, %v1348
      %v1351 = vsel %vm522, %v1070, 0
      %v1354 = vsel %vm522, %v1079, 0
      %v1357 = vsel %vm522, %v1088, 0
      %v1360 = vsel %vm522, %v1097, 0
      %v1363 = vsel %vm522, %v1106, 0
      %v1366 = vsel %vm522, %v1115, 0
      %v1369 = vsel %vm522, %v1124, 0
      %v1372 = vsel %vm522, %v1133, 0
      %v1375 = vsel %vm522, %v1142, 0
      %v1378 = vsel %vm522, %v1151, 0
      %v1381 = vsel %vm522, %v1160, 0
      %v1384 = vsel %vm522, %v1169, 0
      %v1387 = vsel %vm522, %v1178, 0
      %v1390 = vsel %vm522, %v1187, 0
      %v1393 = vsel %vm522, %v1196, 0
      %v1396 = vsel %vm522, %v1205, 0
      %v1399 = vsel %vm522, %v1214, 0
      %v1402 = vsel %vm522, %v1223, 0
      %v1405 = vsel %vm522, %v1232, 0
      %v1408 = vsel %vm522, %v1241, 0
      %v1411 = vsel %vm522, %v1250, 0
      %v1414 = vsel %vm522, %v1259, 0
      %v1417 = vsel %vm522, %v1268, 0
      %v1420 = vsel %vm522, %v1277, 0
      %v1423 = vsel %vm522, %v1286, 0
      %v1426 = vsel %vm522, %v1295, 0
      %v1429 = vsel %vm522, %v1304, 0
      %v1432 = vsel %vm522, %v1313, 0
      %v1435 = vsel %vm522, %v1322, 0
      %v1438 = vsel %vm522, %v1331, 0
      %v1441 = vsel %vm522, %v1340, 0
      %v1444 = vsel %vm522, %v1349, 0
      %v1447 = vsel %vm792, %v662, 0
      %1449 = vmatprep.subr.bf16.mxu0 0
      %1450 = vmatpush1.bf16.msra.mxu0 %v1447
      %1451 = vmatprep.subr.bf16.mxu0 0
      %1452 = vmatpush1.bf16.msra.mxu0 0
      %1453 = vmatprep.subr.bf16.mxu0 0
      %1454 = vmatpush1.bf16.msra.mxu0 0
      %1455 = vmatprep.subr.bf16.mxu0 0
      %1456 = vmatpush1.bf16.msra.mxu0 0
      %1457 = vmatprep.subr.bf16.mxu0 0
      %1458 = vmatpush1.bf16.msra.mxu0 0
      %1459 = vmatprep.subr.bf16.mxu0 0
      %1460 = vmatpush1.bf16.msra.mxu0 0
      %1461 = vmatprep.subr.bf16.mxu0 0
      %1462 = vmatpush1.bf16.msra.mxu0 0
      %1463 = vmatprep.subr.bf16.mxu0 0
      %1464 = vmatpush1.bf16.msra.mxu0 0
      %1465 = vmatprep.subr.bf16.mxu0 0
      %1466 = vmatpush1.bf16.msra.mxu0 0
      %1467 = vmatprep.subr.bf16.mxu0 0
      %1468 = vmatpush1.bf16.msra.mxu0 0
      %1469 = vmatprep.subr.bf16.mxu0 0
      %1470 = vmatpush1.bf16.msra.mxu0 0
      %1471 = vmatprep.subr.bf16.mxu0 0
      %1472 = vmatpush1.bf16.msra.mxu0 0
      %1473 = vmatprep.subr.bf16.mxu0 0
      %1474 = vmatpush1.bf16.msra.mxu0 0
      %1475 = vmatprep.subr.bf16.mxu0 0
      %1476 = vmatpush1.bf16.msra.mxu0 0
      %1477 = vmatprep.subr.bf16.mxu0 0
      %1478 = vmatpush1.bf16.msra.mxu0 0
      %1479 = vmatprep.subr.bf16.mxu0 0
      %1480 = vmatpush1.bf16.msra.mxu0 0
      %1481 = vmatprep.mubr.bf16.mxu0 0
      %1482 = vmatmul.mubr.bf16.gmra.mrb[0].mxu0 %v1351
      %v1483 = vpop.f32.mrb[0].mxu0
      %v1484 = vadd.f32 %v831, %v1483
      %v1485 = vpop.f32.mrb[0].mxu0
      %v1486 = vpop.f32.mrb[0].mxu0
      %v1487 = vadd.f32 %v834, %v1486
      %v1488 = vpop.f32.mrb[0].mxu0
      %1489 = vmatprep.mubr.bf16.mxu0 0
      %1490 = vmatmul.mubr.bf16.gmra.mrb[0].mxu0 %v1354
      %v1491 = vpop.f32.mrb[0].mxu0
      %v1492 = vpop.f32.mrb[0].mxu0
      %v1493 = vpop.f32.mrb[0].mxu0
      %v1494 = vpop.f32.mrb[0].mxu0
      %1495 = vmatprep.mubr.bf16.mxu0 0
      %1496 = vmatmul.mubr.bf16.gmra.mrb[0].mxu0 %v1357
      %v1497 = vpop.f32.mrb[0].mxu0
      %v1498 = vadd.f32 %v845, %v1497
      %v1499 = vpop.f32.mrb[0].mxu0
      %v1500 = vpop.f32.mrb[0].mxu0
      %v1501 = vadd.f32 %v848, %v1500
      %v1502 = vpop.f32.mrb[0].mxu0
      %1503 = vmatprep.mubr.bf16.mxu0 0
      %1504 = vmatmul.mubr.bf16.gmra.mrb[0].mxu0 %v1360
      %v1505 = vpop.f32.mrb[0].mxu0
      %v1506 = vpop.f32.mrb[0].mxu0
      %v1507 = vpop.f32.mrb[0].mxu0
      %v1508 = vpop.f32.mrb[0].mxu0
      %1509 = vmatprep.mubr.bf16.mxu0 0
      %1510 = vmatmul.mubr.bf16.gmra.mrb[0].mxu0 %v1363
      %v1511 = vpop.f32.mrb[0].mxu0
      %v1512 = vadd.f32 %v859, %v1511
      %v1513 = vpop.f32.mrb[0].mxu0
      %v1514 = vpop.f32.mrb[0].mxu0
      %v1515 = vadd.f32 %v862, %v1514
      %v1516 = vpop.f32.mrb[0].mxu0
      %1517 = vmatprep.mubr.bf16.mxu0 0
      %1518 = vmatmul.mubr.bf16.gmra.mrb[0].mxu0 %v1366
      %v1519 = vpop.f32.mrb[0].mxu0
      %v1520 = vpop.f32.mrb[0].mxu0
      %v1521 = vpop.f32.mrb[0].mxu0
      %v1522 = vpop.f32.mrb[0].mxu0
      %1523 = vmatprep.mubr.bf16.mxu0 0
      %1524 = vmatmul.mubr.bf16.gmra.mrb[0].mxu0 %v1369
      %v1525 = vpop.f32.mrb[0].mxu0
      %v1526 = vadd.f32 %v873, %v1525
      %v1527 = vpop.f32.mrb[0].mxu0
      %v1528 = vpop.f32.mrb[0].mxu0
      %v1529 = vadd.f32 %v876, %v1528
      %v1530 = vpop.f32.mrb[0].mxu0
      %1531 = vmatprep.mubr.bf16.mxu0 0
      %1532 = vmatmul.mubr.bf16.gmra.mrb[0].mxu0 %v1372
      %v1533 = vpop.f32.mrb[0].mxu0
      %v1534 = vpop.f32.mrb[0].mxu0
      %v1535 = vpop.f32.mrb[0].mxu0
      %v1536 = vpop.f32.mrb[0].mxu0
      %1537 = vmatprep.mubr.bf16.mxu0 0
      %1538 = vmatmul.mubr.bf16.gmra.mrb[0].mxu0 %v1375
      %v1539 = vpop.f32.mrb[0].mxu0
      %v1540 = vadd.f32 %v887, %v1539
      %v1541 = vpop.f32.mrb[0].mxu0
      %v1542 = vpop.f32.mrb[0].mxu0
      %v1543 = vadd.f32 %v890, %v1542
      %v1544 = vpop.f32.mrb[0].mxu0
      %1545 = vmatprep.mubr.bf16.mxu0 0
      %1546 = vmatmul.mubr.bf16.gmra.mrb[0].mxu0 %v1378
      %v1547 = vpop.f32.mrb[0].mxu0
      %v1548 = vpop.f32.mrb[0].mxu0
      %v1549 = vpop.f32.mrb[0].mxu0
      %v1550 = vpop.f32.mrb[0].mxu0
      %1551 = vmatprep.mubr.bf16.mxu0 0
      %1552 = vmatmul.mubr.bf16.gmra.mrb[0].mxu0 %v1381
      %v1553 = vpop.f32.mrb[0].mxu0
      %v1554 = vadd.f32 %v901, %v1553
      %v1555 = vpop.f32.mrb[0].mxu0
      %v1556 = vpop.f32.mrb[0].mxu0
      %v1557 = vadd.f32 %v904, %v1556
      %v1558 = vpop.f32.mrb[0].mxu0
      %1559 = vmatprep.mubr.bf16.mxu0 0
      %1560 = vmatmul.mubr.bf16.gmra.mrb[0].mxu0 %v1384
      %v1561 = vpop.f32.mrb[0].mxu0
      %v1562 = vpop.f32.mrb[0].mxu0
      %v1563 = vpop.f32.mrb[0].mxu0
      %v1564 = vpop.f32.mrb[0].mxu0
      %1565 = vmatprep.mubr.bf16.mxu0 0
      %1566 = vmatmul.mubr.bf16.gmra.mrb[0].mxu0 %v1387
      %v1567 = vpop.f32.mrb[0].mxu0
      %v1568 = vadd.f32 %v915, %v1567
      %v1569 = vpop.f32.mrb[0].mxu0
      %v1570 = vpop.f32.mrb[0].mxu0
      %v1571 = vadd.f32 %v918, %v1570
      %v1572 = vpop.f32.mrb[0].mxu0
      %1573 = vmatprep.mubr.bf16.mxu0 0
      %1574 = vmatmul.mubr.bf16.gmra.mrb[0].mxu0 %v1390
      %v1575 = vpop.f32.mrb[0].mxu0
      %v1576 = vpop.f32.mrb[0].mxu0
      %v1577 = vpop.f32.mrb[0].mxu0
      %v1578 = vpop.f32.mrb[0].mxu0
      %1579 = vmatprep.mubr.bf16.mxu0 0
      %1580 = vmatmul.mubr.bf16.gmra.mrb[0].mxu0 %v1393
      %v1581 = vpop.f32.mrb[0].mxu0
      %v1582 = vadd.f32 %v929, %v1581
      %v1583 = vpop.f32.mrb[0].mxu0
      %v1584 = vpop.f32.mrb[0].mxu0
      %v1585 = vadd.f32 %v932, %v1584
      %v1586 = vpop.f32.mrb[0].mxu0
      %1587 = vmatprep.mubr.bf16.mxu0 0
      %1588 = vmatmul.mubr.bf16.gmra.mrb[0].mxu0 %v1396
      %v1589 = vpop.f32.mrb[0].mxu0
      %v1590 = vpop.f32.mrb[0].mxu0
      %v1591 = vpop.f32.mrb[0].mxu0
      %v1592 = vpop.f32.mrb[0].mxu0
      %1593 = vmatprep.mubr.bf16.mxu0 0
      %1594 = vmatmul.mubr.bf16.gmra.mrb[0].mxu0 %v1399
      %v1595 = vpop.f32.mrb[0].mxu0
      %v1596 = vadd.f32 %v943, %v1595
      %v1597 = vpop.f32.mrb[0].mxu0
      %v1598 = vpop.f32.mrb[0].mxu0
      %v1599 = vadd.f32 %v946, %v1598
      %v1600 = vpop.f32.mrb[0].mxu0
      %1601 = vmatprep.mubr.bf16.mxu0 0
      %1602 = vmatmul.mubr.bf16.gmra.mrb[0].mxu0 %v1402
      %v1603 = vpop.f32.mrb[0].mxu0
      %v1604 = vpop.f32.mrb[0].mxu0
      %v1605 = vpop.f32.mrb[0].mxu0
      %v1606 = vpop.f32.mrb[0].mxu0
      %1607 = vmatprep.mubr.bf16.mxu0 0
      %1608 = vmatmul.mubr.bf16.gmra.mrb[0].mxu0 %v1405
      %v1609 = vpop.f32.mrb[0].mxu0
      %v1610 = vadd.f32 %v957, %v1609
      %v1611 = vpop.f32.mrb[0].mxu0
      %v1612 = vpop.f32.mrb[0].mxu0
      %v1613 = vadd.f32 %v960, %v1612
      %v1614 = vpop.f32.mrb[0].mxu0
      %1615 = vmatprep.mubr.bf16.mxu0 0
      %1616 = vmatmul.mubr.bf16.gmra.mrb[0].mxu0 %v1408
      %v1617 = vpop.f32.mrb[0].mxu0
      %v1618 = vpop.f32.mrb[0].mxu0
      %v1619 = vpop.f32.mrb[0].mxu0
      %v1620 = vpop.f32.mrb[0].mxu0
      %1621 = vmatprep.mubr.bf16.mxu0 0
      %1622 = vmatmul.mubr.bf16.gmra.mrb[0].mxu0 %v1411
      %v1623 = vpop.f32.mrb[0].mxu0
      %v1624 = vadd.f32 %v971, %v1623
      %v1625 = vpop.f32.mrb[0].mxu0
      %v1626 = vpop.f32.mrb[0].mxu0
      %v1627 = vadd.f32 %v974, %v1626
      %v1628 = vpop.f32.mrb[0].mxu0
      %1629 = vmatprep.mubr.bf16.mxu0 0
      %1630 = vmatmul.mubr.bf16.gmra.mrb[0].mxu0 %v1414
      %v1631 = vpop.f32.mrb[0].mxu0
      %v1632 = vpop.f32.mrb[0].mxu0
      %v1633 = vpop.f32.mrb[0].mxu0
      %v1634 = vpop.f32.mrb[0].mxu0
      %1635 = vmatprep.mubr.bf16.mxu0 0
      %1636 = vmatmul.mubr.bf16.gmra.mrb[0].mxu0 %v1417
      %v1637 = vpop.f32.mrb[0].mxu0
      %v1638 = vadd.f32 %v985, %v1637
      %v1639 = vpop.f32.mrb[0].mxu0
      %v1640 = vpop.f32.mrb[0].mxu0
      %v1641 = vadd.f32 %v988, %v1640
      %v1642 = vpop.f32.mrb[0].mxu0
      %1643 = vmatprep.mubr.bf16.mxu0 0
      %1644 = vmatmul.mubr.bf16.gmra.mrb[0].mxu0 %v1420
      %v1645 = vpop.f32.mrb[0].mxu0
      %v1646 = vpop.f32.mrb[0].mxu0
      %v1647 = vpop.f32.mrb[0].mxu0
      %v1648 = vpop.f32.mrb[0].mxu0
      %1649 = vmatprep.mubr.bf16.mxu0 0
      %1650 = vmatmul.mubr.bf16.gmra.mrb[0].mxu0 %v1423
      %v1651 = vpop.f32.mrb[0].mxu0
      %v1652 = vadd.f32 %v999, %v1651
      %v1653 = vpop.f32.mrb[0].mxu0
      %v1654 = vpop.f32.mrb[0].mxu0
      %v1655 = vadd.f32 %v1002, %v1654
      %v1656 = vpop.f32.mrb[0].mxu0
      %1657 = vmatprep.mubr.bf16.mxu0 0
      %1658 = vmatmul.mubr.bf16.gmra.mrb[0].mxu0 %v1426
      %v1659 = vpop.f32.mrb[0].mxu0
      %v1660 = vpop.f32.mrb[0].mxu0
      %v1661 = vpop.f32.mrb[0].mxu0
      %v1662 = vpop.f32.mrb[0].mxu0
      %1663 = vmatprep.mubr.bf16.mxu0 0
      %1664 = vmatmul.mubr.bf16.gmra.mrb[0].mxu0 %v1429
      %v1665 = vpop.f32.mrb[0].mxu0
      %v1666 = vadd.f32 %v1013, %v1665
      %v1667 = vpop.f32.mrb[0].mxu0
      %v1668 = vpop.f32.mrb[0].mxu0
      %v1669 = vadd.f32 %v1016, %v1668
      %v1670 = vpop.f32.mrb[0].mxu0
      %1671 = vmatprep.mubr.bf16.mxu0 0
      %1672 = vmatmul.mubr.bf16.gmra.mrb[0].mxu0 %v1432
      %v1673 = vpop.f32.mrb[0].mxu0
      %v1674 = vpop.f32.mrb[0].mxu0
      %v1675 = vpop.f32.mrb[0].mxu0
      %v1676 = vpop.f32.mrb[0].mxu0
      %1677 = vmatprep.mubr.bf16.mxu0 0
      %1678 = vmatmul.mubr.bf16.gmra.mrb[0].mxu0 %v1435
      %v1679 = vpop.f32.mrb[0].mxu0
      %v1680 = vadd.f32 %v1027, %v1679
      %v1681 = vpop.f32.mrb[0].mxu0
      %v1682 = vpop.f32.mrb[0].mxu0
      %v1683 = vadd.f32 %v1030, %v1682
      %v1684 = vpop.f32.mrb[0].mxu0
      %1685 = vmatprep.mubr.bf16.mxu0 0
      %1686 = vmatmul.mubr.bf16.gmra.mrb[0].mxu0 %v1438
      %v1687 = vpop.f32.mrb[0].mxu0
      %v1688 = vpop.f32.mrb[0].mxu0
      %v1689 = vpop.f32.mrb[0].mxu0
      %v1690 = vpop.f32.mrb[0].mxu0
      %1691 = vmatprep.mubr.bf16.mxu0 0
      %1692 = vmatmul.mubr.bf16.gmra.mrb[0].mxu0 %v1441
      %v1693 = vpop.f32.mrb[0].mxu0
      %v1694 = vadd.f32 %v1041, %v1693
      %v1695 = vpop.f32.mrb[0].mxu0
      %v1696 = vpop.f32.mrb[0].mxu0
      %v1697 = vadd.f32 %v1044, %v1696
      %v1698 = vpop.f32.mrb[0].mxu0
      %1699 = vmatprep.mubr.bf16.mxu0 0
      %1700 = vmatmul.mubr.bf16.gmra.mrb[0].mxu0 %v1444
      %v1701 = vpop.f32.mrb[0].mxu0
      %v1702 = vpop.f32.mrb[0].mxu0
      %v1703 = vpop.f32.mrb[0].mxu0
      %v1704 = vpop.f32.mrb[0].mxu0
      %1705 = vdwg.mxu0
      %v1706 = vpack.c.bf16 %v620, %v620
      %v1707 = vld [vmem:[%s2 + $0x80] sm:$0xf]
      %vm1708 = vsmask.f32 7424
      %v1709 = vshrl.u32 %v663, 16
      %v1711 = vshll.u32 %v663, 16
      %v1713 = vrot.slane %v1711, 1
      %v1714 = vor.u32 %v1709, %v1713
      %v1715 = vshll.u32 %v664, 16
      %v1717 = vrot.slane %v1715, 1
      %v1718 = vsel %vm1708, %v1714, %v1717
      %v1719 = vshrl.u32 %v664, 16
      %v1721 = vor.u32 %v1719, %v1717
      %v1722 = vshll.u32 %v665, 16
      %v1724 = vrot.slane %v1722, 1
      %v1725 = vsel %vm1708, %v1721, %v1724
      %v1726 = vshrl.u32 %v665, 16
      %v1728 = vor.u32 %v1726, %v1724
      %v1729 = vshll.u32 %v666, 16
      %v1731 = vrot.slane %v1729, 1
      %v1732 = vsel %vm1708, %v1728, %v1731
      %v1733 = vshrl.u32 %v666, 16
      %v1735 = vor.u32 %v1733, %v1731
      %v1736 = vshll.u32 %v667, 16
      %v1738 = vrot.slane %v1736, 1
      %v1739 = vsel %vm1708, %v1735, %v1738
      %v1740 = vshrl.u32 %v667, 16
      %v1742 = vor.u32 %v1740, %v1738
      %v1743 = vshll.u32 %v668, 16
      %v1745 = vrot.slane %v1743, 1
      %v1746 = vsel %vm1708, %v1742, %v1745
      %v1747 = vshrl.u32 %v668, 16
      %v1749 = vor.u32 %v1747, %v1745
      %v1750 = vshll.u32 %v669, 16
      %v1752 = vrot.slane %v1750, 1
      %v1753 = vsel %vm1708, %v1749, %v1752
      %v1754 = vshrl.u32 %v669, 16
      %v1756 = vor.u32 %v1754, %v1752
      %v1757 = vshll.u32 %v670, 16
      %v1759 = vrot.slane %v1757, 1
      %v1760 = vsel %vm1708, %v1756, %v1759
      %v1761 = vshrl.u32 %v670, 16
      %v1763 = vor.u32 %v1761, %v1759
      %v1764 = vshll.u32 %v671, 16
      %v1766 = vrot.slane %v1764, 1
      %v1767 = vsel %vm1708, %v1763, %v1766
      %v1768 = vshrl.u32 %v671, 16
      %v1770 = vor.u32 %v1768, %v1766
      %v1771 = vshll.u32 %v672, 16
      %v1773 = vrot.slane %v1771, 1
      %v1774 = vsel %vm1708, %v1770, %v1773
      %v1775 = vshrl.u32 %v672, 16
      %v1777 = vor.u32 %v1775, %v1773
      %v1778 = vshll.u32 %v673, 16
      %v1780 = vrot.slane %v1778, 1
      %v1781 = vsel %vm1708, %v1777, %v1780
      %v1782 = vshrl.u32 %v673, 16
      %v1784 = vor.u32 %v1782, %v1780
      %v1785 = vshll.u32 %v674, 16
      %v1787 = vrot.slane %v1785, 1
      %v1788 = vsel %vm1708, %v1784, %v1787
      %v1789 = vshrl.u32 %v674, 16
      %v1791 = vor.u32 %v1789, %v1787
      %v1792 = vshll.u32 %v675, 16
      %v1794 = vrot.slane %v1792, 1
      %v1795 = vsel %vm1708, %v1791, %v1794
      %v1796 = vshrl.u32 %v675, 16
      %v1798 = vor.u32 %v1796, %v1794
      %v1799 = vshll.u32 %v676, 16
      %v1801 = vrot.slane %v1799, 1
      %v1802 = vsel %vm1708, %v1798, %v1801
      %v1803 = vshrl.u32 %v676, 16
      %v1805 = vor.u32 %v1803, %v1801
      %v1806 = vshll.u32 %v677, 16
      %v1808 = vrot.slane %v1806, 1
      %v1809 = vsel %vm1708, %v1805, %v1808
      %v1810 = vshrl.u32 %v677, 16
      %v1812 = vor.u32 %v1810, %v1808
      %v1813 = vshll.u32 %v678, 16
      %v1815 = vrot.slane %v1813, 1
      %v1816 = vsel %vm1708, %v1812, %v1815
      %v1817 = vshrl.u32 %v678, 16
      %v1819 = vor.u32 %v1817, %v1815
      %v1820 = vshll.u32 %v679, 16
      %v1822 = vrot.slane %v1820, 1
      %v1823 = vsel %vm1708, %v1819, %v1822
      %v1824 = vshrl.u32 %v679, 16
      %v1826 = vor.u32 %v1824, %v1822
      %v1827 = vshll.u32 %v680, 16
      %v1829 = vrot.slane %v1827, 1
      %v1830 = vsel %vm1708, %v1826, %v1829
      %v1831 = vshrl.u32 %v680, 16
      %v1833 = vor.u32 %v1831, %v1829
      %v1834 = vshll.u32 %v681, 16
      %v1836 = vrot.slane %v1834, 1
      %v1837 = vsel %vm1708, %v1833, %v1836
      %v1838 = vshrl.u32 %v681, 16
      %v1840 = vor.u32 %v1838, %v1836
      %v1841 = vshll.u32 %v682, 16
      %v1843 = vrot.slane %v1841, 1
      %v1844 = vsel %vm1708, %v1840, %v1843
      %v1845 = vshrl.u32 %v682, 16
      %v1847 = vor.u32 %v1845, %v1843
      %v1848 = vshll.u32 %v683, 16
      %v1850 = vrot.slane %v1848, 1
      %v1851 = vsel %vm1708, %v1847, %v1850
      %v1852 = vshrl.u32 %v683, 16
      %v1854 = vor.u32 %v1852, %v1850
      %v1855 = vshll.u32 %v684, 16
      %v1857 = vrot.slane %v1855, 1
      %v1858 = vsel %vm1708, %v1854, %v1857
      %v1859 = vshrl.u32 %v684, 16
      %v1861 = vor.u32 %v1859, %v1857
      %v1862 = vshll.u32 %v685, 16
      %v1864 = vrot.slane %v1862, 1
      %v1865 = vsel %vm1708, %v1861, %v1864
      %v1866 = vshrl.u32 %v685, 16
      %v1868 = vor.u32 %v1866, %v1864
      %v1869 = vshll.u32 %v686, 16
      %v1871 = vrot.slane %v1869, 1
      %v1872 = vsel %vm1708, %v1868, %v1871
      %v1873 = vshrl.u32 %v686, 16
      %v1875 = vor.u32 %v1873, %v1871
      %v1876 = vshll.u32 %v687, 16
      %v1878 = vrot.slane %v1876, 1
      %v1879 = vsel %vm1708, %v1875, %v1878
      %v1880 = vshrl.u32 %v687, 16
      %v1882 = vor.u32 %v1880, %v1878
      %v1883 = vshll.u32 %v688, 16
      %v1885 = vrot.slane %v1883, 1
      %v1886 = vsel %vm1708, %v1882, %v1885
      %v1887 = vshrl.u32 %v688, 16
      %v1889 = vor.u32 %v1887, %v1885
      %v1890 = vshll.u32 %v689, 16
      %v1892 = vrot.slane %v1890, 1
      %v1893 = vsel %vm1708, %v1889, %v1892
      %v1894 = vshrl.u32 %v689, 16
      %v1896 = vor.u32 %v1894, %v1892
      %v1897 = vshll.u32 %v690, 16
      %v1899 = vrot.slane %v1897, 1
      %v1900 = vsel %vm1708, %v1896, %v1899
      %v1901 = vshrl.u32 %v690, 16
      %v1903 = vor.u32 %v1901, %v1899
      %v1904 = vshll.u32 %v691, 16
      %v1906 = vrot.slane %v1904, 1
      %v1907 = vsel %vm1708, %v1903, %v1906
      %v1908 = vshrl.u32 %v691, 16
      %v1910 = vor.u32 %v1908, %v1906
      %v1911 = vshll.u32 %v692, 16
      %v1913 = vrot.slane %v1911, 1
      %v1914 = vsel %vm1708, %v1910, %v1913
      %v1915 = vshrl.u32 %v692, 16
      %v1917 = vor.u32 %v1915, %v1913
      %v1918 = vshll.u32 %v693, 16
      %v1920 = vrot.slane %v1918, 1
      %v1921 = vsel %vm1708, %v1917, %v1920
      %v1922 = vshrl.u32 %v693, 16
      %v1924 = vor.u32 %v1922, %v1920
      %v1925 = vshll.u32 %v694, 16
      %v1927 = vrot.slane %v1925, 1
      %v1928 = vsel %vm1708, %v1924, %v1927
      %v1929 = vshrl.u32 %v694, 16
      %v1931 = vor.u32 %v1929, %v1927
      %v1933 = vshll.u32 %v1706, 16
      %v1935 = vrot.slane %v1933, 1
      %v1936 = vsel %vm1708, %v1931, %v1935
      %v1938 = vsel %vm522, %v1718, 0
      %v1941 = vsel %vm522, %v1725, 0
      %v1944 = vsel %vm522, %v1732, 0
      %v1947 = vsel %vm522, %v1739, 0
      %v1950 = vsel %vm522, %v1746, 0
      %v1953 = vsel %vm522, %v1753, 0
      %v1956 = vsel %vm522, %v1760, 0
      %v1959 = vsel %vm522, %v1767, 0
      %v1962 = vsel %vm522, %v1774, 0
      %v1965 = vsel %vm522, %v1781, 0
      %v1968 = vsel %vm522, %v1788, 0
      %v1971 = vsel %vm522, %v1795, 0
      %v1974 = vsel %vm522, %v1802, 0
      %v1977 = vsel %vm522, %v1809, 0
      %v1980 = vsel %vm522, %v1816, 0
      %v1983 = vsel %vm522, %v1823, 0
      %v1986 = vsel %vm522, %v1830, 0
      %v1989 = vsel %vm522, %v1837, 0
      %v1992 = vsel %vm522, %v1844, 0
      %v1995 = vsel %vm522, %v1851, 0
      %v1998 = vsel %vm522, %v1858, 0
      %v2001 = vsel %vm522, %v1865, 0
      %v2004 = vsel %vm522, %v1872, 0
      %v2007 = vsel %vm522, %v1879, 0
      %v2010 = vsel %vm522, %v1886, 0
      %v2013 = vsel %vm522, %v1893, 0
      %v2016 = vsel %vm522, %v1900, 0
      %v2019 = vsel %vm522, %v1907, 0
      %v2022 = vsel %vm522, %v1914, 0
      %v2025 = vsel %vm522, %v1921, 0
      %v2028 = vsel %vm522, %v1928, 0
      %v2031 = vsel %vm522, %v1936, 0
      %v2034 = vsel %vm792, %v1707, 0
      %2036 = vmatprep.subr.bf16.mxu0 0
      %2037 = vmatpush1.bf16.msra.mxu0 %v2034
      %2038 = vmatprep.subr.bf16.mxu0 0
      %2039 = vmatpush1.bf16.msra.mxu0 0
      %2040 = vmatprep.subr.bf16.mxu0 0
      %2041 = vmatpush1.bf16.msra.mxu0 0
      %2042 = vmatprep.subr.bf16.mxu0 0
      %2043 = vmatpush1.bf16.msra.mxu0 0
      %2044 = vmatprep.subr.bf16.mxu0 0
      %2045 = vmatpush1.bf16.msra.mxu0 0
      %2046 = vmatprep.subr.bf16.mxu0 0
      %2047 = vmatpush1.bf16.msra.mxu0 0
      %2048 = vmatprep.subr.bf16.mxu0 0
      %2049 = vmatpush1.bf16.msra.mxu0 0
      %2050 = vmatprep.subr.bf16.mxu0 0
      %2051 = vmatpush1.bf16.msra.mxu0 0
      %2052 = vmatprep.subr.bf16.mxu0 0
      %2053 = vmatpush1.bf16.msra.mxu0 0
      %2054 = vmatprep.subr.bf16.mxu0 0
      %2055 = vmatpush1.bf16.msra.mxu0 0
      %2056 = vmatprep.subr.bf16.mxu0 0
      %2057 = vmatpush1.bf16.msra.mxu0 0
      %2058 = vmatprep.subr.bf16.mxu0 0
      %2059 = vmatpush1.bf16.msra.mxu0 0
      %2060 = vmatprep.subr.bf16.mxu0 0
      %2061 = vmatpush1.bf16.msra.mxu0 0
      %2062 = vmatprep.subr.bf16.mxu0 0
      %2063 = vmatpush1.bf16.msra.mxu0 0
      %2064 = vmatprep.subr.bf16.mxu0 0
      %2065 = vmatpush1.bf16.msra.mxu0 0
      %2066 = vmatprep.subr.bf16.mxu0 0
      %2067 = vmatpush1.bf16.msra.mxu0 0
      %2068 = vmatprep.mubr.bf16.mxu0 0
      %2069 = vmatmul.mubr.bf16.gmra.mrb[0].mxu0 %v1938
      %v2070 = vpop.f32.mrb[0].mxu0
      %v2071 = vadd.f32 0.0, %v2070
      %v2072 = vpop.f32.mrb[0].mxu0
      %v2073 = vpop.f32.mrb[0].mxu0
      %v2074 = vadd.f32 0.0, %v2073
      %v2075 = vpop.f32.mrb[0].mxu0
      %2076 = vmatprep.mubr.bf16.mxu0 0
      %2077 = vmatmul.mubr.bf16.gmra.mrb[0].mxu0 %v1941
      %v2078 = vpop.f32.mrb[0].mxu0
      %v2079 = vpop.f32.mrb[0].mxu0
      %v2080 = vpop.f32.mrb[0].mxu0
      %v2081 = vpop.f32.mrb[0].mxu0
      %2082 = vmatprep.mubr.bf16.mxu0 0
      %2083 = vmatmul.mubr.bf16.gmra.mrb[0].mxu0 %v1944
      %v2084 = vpop.f32.mrb[0].mxu0
      %v2085 = vadd.f32 0.0, %v2084
      %v2086 = vpop.f32.mrb[0].mxu0
      %v2087 = vpop.f32.mrb[0].mxu0
      %v2088 = vadd.f32 0.0, %v2087
      %v2089 = vpop.f32.mrb[0].mxu0
      %2090 = vmatprep.mubr.bf16.mxu0 0
      %2091 = vmatmul.mubr.bf16.gmra.mrb[0].mxu0 %v1947
      %v2092 = vpop.f32.mrb[0].mxu0
      %v2093 = vpop.f32.mrb[0].mxu0
      %v2094 = vpop.f32.mrb[0].mxu0
      %v2095 = vpop.f32.mrb[0].mxu0
      %2096 = vmatprep.mubr.bf16.mxu0 0
      %2097 = vmatmul.mubr.bf16.gmra.mrb[0].mxu0 %v1950
      %v2098 = vpop.f32.mrb[0].mxu0
      %v2099 = vadd.f32 0.0, %v2098
      %v2100 = vpop.f32.mrb[0].mxu0
      %v2101 = vpop.f32.mrb[0].mxu0
      %v2102 = vadd.f32 0.0, %v2101
      %v2103 = vpop.f32.mrb[0].mxu0
      %2104 = vmatprep.mubr.bf16.mxu0 0
      %2105 = vmatmul.mubr.bf16.gmra.mrb[0].mxu0 %v1953
      %v2106 = vpop.f32.mrb[0].mxu0
      %v2107 = vpop.f32.mrb[0].mxu0
      %v2108 = vpop.f32.mrb[0].mxu0
      %v2109 = vpop.f32.mrb[0].mxu0
      %2110 = vmatprep.mubr.bf16.mxu0 0
      %2111 = vmatmul.mubr.bf16.gmra.mrb[0].mxu0 %v1956
      %v2112 = vpop.f32.mrb[0].mxu0
      %v2113 = vadd.f32 0.0, %v2112
      %v2114 = vpop.f32.mrb[0].mxu0
      %v2115 = vpop.f32.mrb[0].mxu0
      %v2116 = vadd.f32 0.0, %v2115
      %v2117 = vpop.f32.mrb[0].mxu0
      %2118 = vmatprep.mubr.bf16.mxu0 0
      %2119 = vmatmul.mubr.bf16.gmra.mrb[0].mxu0 %v1959
      %v2120 = vpop.f32.mrb[0].mxu0
      %v2121 = vpop.f32.mrb[0].mxu0
      %v2122 = vpop.f32.mrb[0].mxu0
      %v2123 = vpop.f32.mrb[0].mxu0
      %2124 = vmatprep.mubr.bf16.mxu0 0
      %2125 = vmatmul.mubr.bf16.gmra.mrb[0].mxu0 %v1962
      %v2126 = vpop.f32.mrb[0].mxu0
      %v2127 = vadd.f32 0.0, %v2126
      %v2128 = vpop.f32.mrb[0].mxu0
      %v2129 = vpop.f32.mrb[0].mxu0
      %v2130 = vadd.f32 0.0, %v2129
      %v2131 = vpop.f32.mrb[0].mxu0
      %2132 = vmatprep.mubr.bf16.mxu0 0
      %2133 = vmatmul.mubr.bf16.gmra.mrb[0].mxu0 %v1965
      %v2134 = vpop.f32.mrb[0].mxu0
      %v2135 = vpop.f32.mrb[0].mxu0
      %v2136 = vpop.f32.mrb[0].mxu0
      %v2137 = vpop.f32.mrb[0].mxu0
      %2138 = vmatprep.mubr.bf16.mxu0 0
      %2139 = vmatmul.mubr.bf16.gmra.mrb[0].mxu0 %v1968
      %v2140 = vpop.f32.mrb[0].mxu0
      %v2141 = vadd.f32 0.0, %v2140
      %v2142 = vpop.f32.mrb[0].mxu0
      %v2143 = vpop.f32.mrb[0].mxu0
      %v2144 = vadd.f32 0.0, %v2143
      %v2145 = vpop.f32.mrb[0].mxu0
      %2146 = vmatprep.mubr.bf16.mxu0 0
      %2147 = vmatmul.mubr.bf16.gmra.mrb[0].mxu0 %v1971
      %v2148 = vpop.f32.mrb[0].mxu0
      %v2149 = vpop.f32.mrb[0].mxu0
      %v2150 = vpop.f32.mrb[0].mxu0
      %v2151 = vpop.f32.mrb[0].mxu0
      %2152 = vmatprep.mubr.bf16.mxu0 0
      %2153 = vmatmul.mubr.bf16.gmra.mrb[0].mxu0 %v1974
      %v2154 = vpop.f32.mrb[0].mxu0
      %v2155 = vadd.f32 0.0, %v2154
      %v2156 = vpop.f32.mrb[0].mxu0
      %v2157 = vpop.f32.mrb[0].mxu0
      %v2158 = vadd.f32 0.0, %v2157
      %v2159 = vpop.f32.mrb[0].mxu0
      %2160 = vmatprep.mubr.bf16.mxu0 0
      %2161 = vmatmul.mubr.bf16.gmra.mrb[0].mxu0 %v1977
      %v2162 = vpop.f32.mrb[0].mxu0
      %v2163 = vpop.f32.mrb[0].mxu0
      %v2164 = vpop.f32.mrb[0].mxu0
      %v2165 = vpop.f32.mrb[0].mxu0
      %2166 = vmatprep.mubr.bf16.mxu0 0
      %2167 = vmatmul.mubr.bf16.gmra.mrb[0].mxu0 %v1980
      %v2168 = vpop.f32.mrb[0].mxu0
      %v2169 = vadd.f32 0.0, %v2168
      %v2170 = vpop.f32.mrb[0].mxu0
      %v2171 = vpop.f32.mrb[0].mxu0
      %v2172 = vadd.f32 0.0, %v2171
      %v2173 = vpop.f32.mrb[0].mxu0
      %2174 = vmatprep.mubr.bf16.mxu0 0
      %2175 = vmatmul.mubr.bf16.gmra.mrb[0].mxu0 %v1983
      %v2176 = vpop.f32.mrb[0].mxu0
      %v2177 = vpop.f32.mrb[0].mxu0
      %v2178 = vpop.f32.mrb[0].mxu0
      %v2179 = vpop.f32.mrb[0].mxu0
      %2180 = vmatprep.mubr.bf16.mxu0 0
      %2181 = vmatmul.mubr.bf16.gmra.mrb[0].mxu0 %v1986
      %v2182 = vpop.f32.mrb[0].mxu0
      %v2183 = vadd.f32 0.0, %v2182
      %v2184 = vpop.f32.mrb[0].mxu0
      %v2185 = vpop.f32.mrb[0].mxu0
      %v2186 = vadd.f32 0.0, %v2185
      %v2187 = vpop.f32.mrb[0].mxu0
      %2188 = vmatprep.mubr.bf16.mxu0 0
      %2189 = vmatmul.mubr.bf16.gmra.mrb[0].mxu0 %v1989
      %v2190 = vpop.f32.mrb[0].mxu0
      %v2191 = vpop.f32.mrb[0].mxu0
      %v2192 = vpop.f32.mrb[0].mxu0
      %v2193 = vpop.f32.mrb[0].mxu0
      %2194 = vmatprep.mubr.bf16.mxu0 0
      %2195 = vmatmul.mubr.bf16.gmra.mrb[0].mxu0 %v1992
      %v2196 = vpop.f32.mrb[0].mxu0
      %v2197 = vadd.f32 0.0, %v2196
      %v2198 = vpop.f32.mrb[0].mxu0
      %v2199 = vpop.f32.mrb[0].mxu0
      %v2200 = vadd.f32 0.0, %v2199
      %v2201 = vpop.f32.mrb[0].mxu0
      %2202 = vmatprep.mubr.bf16.mxu0 0
      %2203 = vmatmul.mubr.bf16.gmra.mrb[0].mxu0 %v1995
      %v2204 = vpop.f32.mrb[0].mxu0
      %v2205 = vpop.f32.mrb[0].mxu0
      %v2206 = vpop.f32.mrb[0].mxu0
      %v2207 = vpop.f32.mrb[0].mxu0
      %2208 = vmatprep.mubr.bf16.mxu0 0
      %2209 = vmatmul.mubr.bf16.gmra.mrb[0].mxu0 %v1998
      %v2210 = vpop.f32.mrb[0].mxu0
      %v2211 = vadd.f32 0.0, %v2210
      %v2212 = vpop.f32.mrb[0].mxu0
      %v2213 = vpop.f32.mrb[0].mxu0
      %v2214 = vadd.f32 0.0, %v2213
      %v2215 = vpop.f32.mrb[0].mxu0
      %2216 = vmatprep.mubr.bf16.mxu0 0
      %2217 = vmatmul.mubr.bf16.gmra.mrb[0].mxu0 %v2001
      %v2218 = vpop.f32.mrb[0].mxu0
      %v2219 = vpop.f32.mrb[0].mxu0
      %v2220 = vpop.f32.mrb[0].mxu0
      %v2221 = vpop.f32.mrb[0].mxu0
      %2222 = vmatprep.mubr.bf16.mxu0 0
      %2223 = vmatmul.mubr.bf16.gmra.mrb[0].mxu0 %v2004
      %v2224 = vpop.f32.mrb[0].mxu0
      %v2225 = vadd.f32 0.0, %v2224
      %v2226 = vpop.f32.mrb[0].mxu0
      %v2227 = vpop.f32.mrb[0].mxu0
      %v2228 = vadd.f32 0.0, %v2227
      %v2229 = vpop.f32.mrb[0].mxu0
      %2230 = vmatprep.mubr.bf16.mxu0 0
      %2231 = vmatmul.mubr.bf16.gmra.mrb[0].mxu0 %v2007
      %v2232 = vpop.f32.mrb[0].mxu0
      %v2233 = vpop.f32.mrb[0].mxu0
      %v2234 = vpop.f32.mrb[0].mxu0
      %v2235 = vpop.f32.mrb[0].mxu0
      %2236 = vmatprep.mubr.bf16.mxu0 0
      %2237 = vmatmul.mubr.bf16.gmra.mrb[0].mxu0 %v2010
      %v2238 = vpop.f32.mrb[0].mxu0
      %v2239 = vadd.f32 0.0, %v2238
      %v2240 = vpop.f32.mrb[0].mxu0
      %v2241 = vpop.f32.mrb[0].mxu0
      %v2242 = vadd.f32 0.0, %v2241
      %v2243 = vpop.f32.mrb[0].mxu0
      %2244 = vmatprep.mubr.bf16.mxu0 0
      %2245 = vmatmul.mubr.bf16.gmra.mrb[0].mxu0 %v2013
      %v2246 = vpop.f32.mrb[0].mxu0
      %v2247 = vpop.f32.mrb[0].mxu0
      %v2248 = vpop.f32.mrb[0].mxu0
      %v2249 = vpop.f32.mrb[0].mxu0
      %2250 = vmatprep.mubr.bf16.mxu0 0
      %2251 = vmatmul.mubr.bf16.gmra.mrb[0].mxu0 %v2016
      %v2252 = vpop.f32.mrb[0].mxu0
      %v2253 = vadd.f32 0.0, %v2252
      %v2254 = vpop.f32.mrb[0].mxu0
      %v2255 = vpop.f32.mrb[0].mxu0
      %v2256 = vadd.f32 0.0, %v2255
      %v2257 = vpop.f32.mrb[0].mxu0
      %2258 = vmatprep.mubr.bf16.mxu0 0
      %2259 = vmatmul.mubr.bf16.gmra.mrb[0].mxu0 %v2019
      %v2260 = vpop.f32.mrb[0].mxu0
      %v2261 = vpop.f32.mrb[0].mxu0
      %v2262 = vpop.f32.mrb[0].mxu0
      %v2263 = vpop.f32.mrb[0].mxu0
      %2264 = vmatprep.mubr.bf16.mxu0 0
      %2265 = vmatmul.mubr.bf16.gmra.mrb[0].mxu0 %v2022
      %v2266 = vpop.f32.mrb[0].mxu0
      %v2267 = vadd.f32 0.0, %v2266
      %v2268 = vpop.f32.mrb[0].mxu0
      %v2269 = vpop.f32.mrb[0].mxu0
      %v2270 = vadd.f32 0.0, %v2269
      %v2271 = vpop.f32.mrb[0].mxu0
      %2272 = vmatprep.mubr.bf16.mxu0 0
      %2273 = vmatmul.mubr.bf16.gmra.mrb[0].mxu0 %v2025
      %v2274 = vpop.f32.mrb[0].mxu0
      %v2275 = vpop.f32.mrb[0].mxu0
      %v2276 = vpop.f32.mrb[0].mxu0
      %v2277 = vpop.f32.mrb[0].mxu0
      %2278 = vmatprep.mubr.bf16.mxu0 0
      %2279 = vmatmul.mubr.bf16.gmra.mrb[0].mxu0 %v2028
      %v2280 = vpop.f32.mrb[0].mxu0
      %v2281 = vadd.f32 0.0, %v2280
      %v2282 = vpop.f32.mrb[0].mxu0
      %v2283 = vpop.f32.mrb[0].mxu0
      %v2284 = vadd.f32 0.0, %v2283
      %v2285 = vpop.f32.mrb[0].mxu0
      %2286 = vmatprep.mubr.bf16.mxu0 0
      %2287 = vmatmul.mubr.bf16.gmra.mrb[0].mxu0 %v2031
      %v2288 = vpop.f32.mrb[0].mxu0
      %v2289 = vpop.f32.mrb[0].mxu0
      %v2290 = vpop.f32.mrb[0].mxu0
      %v2291 = vpop.f32.mrb[0].mxu0
      %2292 = vdwg.mxu0
      %v2293 = vadd.f32 %v1484, %v2071
      %v2294 = vadd.f32 %v1487, %v2074
      %v2295 = vadd.f32 %v1498, %v2085
      %v2296 = vadd.f32 %v1501, %v2088
      %v2297 = vadd.f32 %v1512, %v2099
      %v2298 = vadd.f32 %v1515, %v2102
      %v2299 = vadd.f32 %v1526, %v2113
      %v2300 = vadd.f32 %v1529, %v2116
      %v2301 = vadd.f32 %v1540, %v2127
      %v2302 = vadd.f32 %v1543, %v2130
      %v2303 = vadd.f32 %v1554, %v2141
      %v2304 = vadd.f32 %v1557, %v2144
      %v2305 = vadd.f32 %v1568, %v2155
      %v2306 = vadd.f32 %v1571, %v2158
      %v2307 = vadd.f32 %v1582, %v2169
      %v2308 = vadd.f32 %v1585, %v2172
      %v2309 = vadd.f32 %v1596, %v2183
      %v2310 = vadd.f32 %v1599, %v2186
      %v2311 = vadd.f32 %v1610, %v2197
      %v2312 = vadd.f32 %v1613, %v2200
      %v2313 = vadd.f32 %v1624, %v2211
      %v2314 = vadd.f32 %v1627, %v2214
      %v2315 = vadd.f32 %v1638, %v2225
      %v2316 = vadd.f32 %v1641, %v2228
      %v2317 = vadd.f32 %v1652, %v2239
      %v2318 = vadd.f32 %v1655, %v2242
      %v2319 = vadd.f32 %v1666, %v2253
      %v2320 = vadd.f32 %v1669, %v2256
      %v2321 = vadd.f32 %v1680, %v2267
      %v2322 = vadd.f32 %v1683, %v2270
      %v2323 = vadd.f32 %v1694, %v2281
      %v2324 = vadd.f32 %v1697, %v2284
      %v2325 = vpack.c.bf16 %v620, %v619
      %v2326 = vpack.c.bf16 %v622, %v621
      %v2327 = vpack.c.bf16 %v623, %v623
      %v2328 = vld [vmem:[%s2 + $0xc0] sm:$0xf]
      %v2330 = vshrl.u32 %v2325, 16
      %v2332 = vrot.slane %v2330, 3
      %v2333 = vshll.u32 %v2325, 16
      %v2335 = vrot.slane %v2333, 4
      %v2336 = vor.u32 %v2332, %v2335
      %v2337 = vsel %vm1053, %v1339, %v2336
      %v2339 = vshrl.u32 %v2326, 16
      %v2341 = vrot.slane %v2339, 3
      %v2342 = vshll.u32 %v2326, 16
      %v2344 = vrot.slane %v2342, 4
      %v2345 = vor.u32 %v2341, %v2344
      %v2346 = vsel %vm1053, %v2336, %v2345
      %v2348 = vshrl.u32 %v2327, 16
      %v2350 = vrot.slane %v2348, 3
      %v2351 = vshll.u32 %v2327, 16
      %v2353 = vrot.slane %v2351, 4
      %v2354 = vor.u32 %v2350, %v2353
      %v2355 = vsel %vm1053, %v2345, %v2354
      %v2357 = vsel %vm522, %v2337, 0
      %v2360 = vsel %vm522, %v2346, 0
      %v2363 = vsel %vm522, %v2355, 0
      %v2366 = vsel %vm792, %v2328, 0
      %2368 = vmatprep.subr.bf16.mxu0 0
      %2369 = vmatpush1.bf16.msra.mxu0 %v2366
      %2370 = vmatprep.subr.bf16.mxu0 0
      %2371 = vmatpush1.bf16.msra.mxu0 0
      %2372 = vmatprep.subr.bf16.mxu0 0
      %2373 = vmatpush1.bf16.msra.mxu0 0
      %2374 = vmatprep.subr.bf16.mxu0 0
      %2375 = vmatpush1.bf16.msra.mxu0 0
      %2376 = vmatprep.subr.bf16.mxu0 0
      %2377 = vmatpush1.bf16.msra.mxu0 0
      %2378 = vmatprep.subr.bf16.mxu0 0
      %2379 = vmatpush1.bf16.msra.mxu0 0
      %2380 = vmatprep.subr.bf16.mxu0 0
      %2381 = vmatpush1.bf16.msra.mxu0 0
      %2382 = vmatprep.subr.bf16.mxu0 0
      %2383 = vmatpush1.bf16.msra.mxu0 0
      %2384 = vmatprep.subr.bf16.mxu0 0
      %2385 = vmatpush1.bf16.msra.mxu0 0
      %2386 = vmatprep.subr.bf16.mxu0 0
      %2387 = vmatpush1.bf16.msra.mxu0 0
      %2388 = vmatprep.subr.bf16.mxu0 0
      %2389 = vmatpush1.bf16.msra.mxu0 0
      %2390 = vmatprep.subr.bf16.mxu0 0
      %2391 = vmatpush1.bf16.msra.mxu0 0
      %2392 = vmatprep.subr.bf16.mxu0 0
      %2393 = vmatpush1.bf16.msra.mxu0 0
      %2394 = vmatprep.subr.bf16.mxu0 0
      %2395 = vmatpush1.bf16.msra.mxu0 0
      %2396 = vmatprep.subr.bf16.mxu0 0
      %2397 = vmatpush1.bf16.msra.mxu0 0
      %2398 = vmatprep.subr.bf16.mxu0 0
      %2399 = vmatpush1.bf16.msra.mxu0 0
      %2400 = vmatprep.mubr.bf16.mxu0 0
      %2401 = vmatmul.mubr.bf16.gmra.mrb[0].mxu0 %v1357
      %v2402 = vpop.f32.mrb[0].mxu0
      %v2403 = vadd.f32 0.0, %v2402
      %v2404 = vpop.f32.mrb[0].mxu0
      %v2405 = vpop.f32.mrb[0].mxu0
      %v2406 = vadd.f32 0.0, %v2405
      %v2407 = vpop.f32.mrb[0].mxu0
      %2408 = vmatprep.mubr.bf16.mxu0 0
      %2409 = vmatmul.mubr.bf16.gmra.mrb[0].mxu0 %v1360
      %v2410 = vpop.f32.mrb[0].mxu0
      %v2411 = vpop.f32.mrb[0].mxu0
      %v2412 = vpop.f32.mrb[0].mxu0
      %v2413 = vpop.f32.mrb[0].mxu0
      %2414 = vmatprep.mubr.bf16.mxu0 0
      %2415 = vmatmul.mubr.bf16.gmra.mrb[0].mxu0 %v1363
      %v2416 = vpop.f32.mrb[0].mxu0
      %v2417 = vadd.f32 0.0, %v2416
      %v2418 = vpop.f32.mrb[0].mxu0
      %v2419 = vpop.f32.mrb[0].mxu0
      %v2420 = vadd.f32 0.0, %v2419
      %v2421 = vpop.f32.mrb[0].mxu0
      %2422 = vmatprep.mubr.bf16.mxu0 0
      %2423 = vmatmul.mubr.bf16.gmra.mrb[0].mxu0 %v1366
      %v2424 = vpop.f32.mrb[0].mxu0
      %v2425 = vpop.f32.mrb[0].mxu0
      %v2426 = vpop.f32.mrb[0].mxu0
      %v2427 = vpop.f32.mrb[0].mxu0
      %2428 = vmatprep.mubr.bf16.mxu0 0
      %2429 = vmatmul.mubr.bf16.gmra.mrb[0].mxu0 %v1369
      %v2430 = vpop.f32.mrb[0].mxu0
      %v2431 = vadd.f32 0.0, %v2430
      %v2432 = vpop.f32.mrb[0].mxu0
      %v2433 = vpop.f32.mrb[0].mxu0
      %v2434 = vadd.f32 0.0, %v2433
      %v2435 = vpop.f32.mrb[0].mxu0
      %2436 = vmatprep.mubr.bf16.mxu0 0
      %2437 = vmatmul.mubr.bf16.gmra.mrb[0].mxu0 %v1372
      %v2438 = vpop.f32.mrb[0].mxu0
      %v2439 = vpop.f32.mrb[0].mxu0
      %v2440 = vpop.f32.mrb[0].mxu0
      %v2441 = vpop.f32.mrb[0].mxu0
      %2442 = vmatprep.mubr.bf16.mxu0 0
      %2443 = vmatmul.mubr.bf16.gmra.mrb[0].mxu0 %v1375
      %v2444 = vpop.f32.mrb[0].mxu0
      %v2445 = vadd.f32 0.0, %v2444
      %v2446 = vpop.f32.mrb[0].mxu0
      %v2447 = vpop.f32.mrb[0].mxu0
      %v2448 = vadd.f32 0.0, %v2447
      %v2449 = vpop.f32.mrb[0].mxu0
      %2450 = vmatprep.mubr.bf16.mxu0 0
      %2451 = vmatmul.mubr.bf16.gmra.mrb[0].mxu0 %v1378
      %v2452 = vpop.f32.mrb[0].mxu0
      %v2453 = vpop.f32.mrb[0].mxu0
      %v2454 = vpop.f32.mrb[0].mxu0
      %v2455 = vpop.f32.mrb[0].mxu0
      %2456 = vmatprep.mubr.bf16.mxu0 0
      %2457 = vmatmul.mubr.bf16.gmra.mrb[0].mxu0 %v1381
      %v2458 = vpop.f32.mrb[0].mxu0
      %v2459 = vadd.f32 0.0, %v2458
      %v2460 = vpop.f32.mrb[0].mxu0
      %v2461 = vpop.f32.mrb[0].mxu0
      %v2462 = vadd.f32 0.0, %v2461
      %v2463 = vpop.f32.mrb[0].mxu0
      %2464 = vmatprep.mubr.bf16.mxu0 0
      %2465 = vmatmul.mubr.bf16.gmra.mrb[0].mxu0 %v1384
      %v2466 = vpop.f32.mrb[0].mxu0
      %v2467 = vpop.f32.mrb[0].mxu0
      %v2468 = vpop.f32.mrb[0].mxu0
      %v2469 = vpop.f32.mrb[0].mxu0
      %2470 = vmatprep.mubr.bf16.mxu0 0
      %2471 = vmatmul.mubr.bf16.gmra.mrb[0].mxu0 %v1387
      %v2472 = vpop.f32.mrb[0].mxu0
      %v2473 = vadd.f32 0.0, %v2472
      %v2474 = vpop.f32.mrb[0].mxu0
      %v2475 = vpop.f32.mrb[0].mxu0
      %v2476 = vadd.f32 0.0, %v2475
      %v2477 = vpop.f32.mrb[0].mxu0
      %2478 = vmatprep.mubr.bf16.mxu0 0
      %2479 = vmatmul.mubr.bf16.gmra.mrb[0].mxu0 %v1390
      %v2480 = vpop.f32.mrb[0].mxu0
      %v2481 = vpop.f32.mrb[0].mxu0
      %v2482 = vpop.f32.mrb[0].mxu0
      %v2483 = vpop.f32.mrb[0].mxu0
      %2484 = vmatprep.mubr.bf16.mxu0 0
      %2485 = vmatmul.mubr.bf16.gmra.mrb[0].mxu0 %v1393
      %v2486 = vpop.f32.mrb[0].mxu0
      %v2487 = vadd.f32 0.0, %v2486
      %v2488 = vpop.f32.mrb[0].mxu0
      %v2489 = vpop.f32.mrb[0].mxu0
      %v2490 = vadd.f32 0.0, %v2489
      %v2491 = vpop.f32.mrb[0].mxu0
      %2492 = vmatprep.mubr.bf16.mxu0 0
      %2493 = vmatmul.mubr.bf16.gmra.mrb[0].mxu0 %v1396
      %v2494 = vpop.f32.mrb[0].mxu0
      %v2495 = vpop.f32.mrb[0].mxu0
      %v2496 = vpop.f32.mrb[0].mxu0
      %v2497 = vpop.f32.mrb[0].mxu0
      %2498 = vmatprep.mubr.bf16.mxu0 0
      %2499 = vmatmul.mubr.bf16.gmra.mrb[0].mxu0 %v1399
      %v2500 = vpop.f32.mrb[0].mxu0
      %v2501 = vadd.f32 0.0, %v2500
      %v2502 = vpop.f32.mrb[0].mxu0
      %v2503 = vpop.f32.mrb[0].mxu0
      %v2504 = vadd.f32 0.0, %v2503
      %v2505 = vpop.f32.mrb[0].mxu0
      %2506 = vmatprep.mubr.bf16.mxu0 0
      %2507 = vmatmul.mubr.bf16.gmra.mrb[0].mxu0 %v1402
      %v2508 = vpop.f32.mrb[0].mxu0
      %v2509 = vpop.f32.mrb[0].mxu0
      %v2510 = vpop.f32.mrb[0].mxu0
      %v2511 = vpop.f32.mrb[0].mxu0
      %2512 = vmatprep.mubr.bf16.mxu0 0
      %2513 = vmatmul.mubr.bf16.gmra.mrb[0].mxu0 %v1405
      %v2514 = vpop.f32.mrb[0].mxu0
      %v2515 = vadd.f32 0.0, %v2514
      %v2516 = vpop.f32.mrb[0].mxu0
      %v2517 = vpop.f32.mrb[0].mxu0
      %v2518 = vadd.f32 0.0, %v2517
      %v2519 = vpop.f32.mrb[0].mxu0
      %2520 = vmatprep.mubr.bf16.mxu0 0
      %2521 = vmatmul.mubr.bf16.gmra.mrb[0].mxu0 %v1408
      %v2522 = vpop.f32.mrb[0].mxu0
      %v2523 = vpop.f32.mrb[0].mxu0
      %v2524 = vpop.f32.mrb[0].mxu0
      %v2525 = vpop.f32.mrb[0].mxu0
      %2526 = vmatprep.mubr.bf16.mxu0 0
      %2527 = vmatmul.mubr.bf16.gmra.mrb[0].mxu0 %v1411
      %v2528 = vpop.f32.mrb[0].mxu0
      %v2529 = vadd.f32 0.0, %v2528
      %v2530 = vpop.f32.mrb[0].mxu0
      %v2531 = vpop.f32.mrb[0].mxu0
      %v2532 = vadd.f32 0.0, %v2531
      %v2533 = vpop.f32.mrb[0].mxu0
      %2534 = vmatprep.mubr.bf16.mxu0 0
      %2535 = vmatmul.mubr.bf16.gmra.mrb[0].mxu0 %v1414
      %v2536 = vpop.f32.mrb[0].mxu0
      %v2537 = vpop.f32.mrb[0].mxu0
      %v2538 = vpop.f32.mrb[0].mxu0
      %v2539 = vpop.f32.mrb[0].mxu0
      %2540 = vmatprep.mubr.bf16.mxu0 0
      %2541 = vmatmul.mubr.bf16.gmra.mrb[0].mxu0 %v1417
      %v2542 = vpop.f32.mrb[0].mxu0
      %v2543 = vadd.f32 0.0, %v2542
      %v2544 = vpop.f32.mrb[0].mxu0
      %v2545 = vpop.f32.mrb[0].mxu0
      %v2546 = vadd.f32 0.0, %v2545
      %v2547 = vpop.f32.mrb[0].mxu0
      %2548 = vmatprep.mubr.bf16.mxu0 0
      %2549 = vmatmul.mubr.bf16.gmra.mrb[0].mxu0 %v1420
      %v2550 = vpop.f32.mrb[0].mxu0
      %v2551 = vpop.f32.mrb[0].mxu0
      %v2552 = vpop.f32.mrb[0].mxu0
      %v2553 = vpop.f32.mrb[0].mxu0
      %2554 = vmatprep.mubr.bf16.mxu0 0
      %2555 = vmatmul.mubr.bf16.gmra.mrb[0].mxu0 %v1423
      %v2556 = vpop.f32.mrb[0].mxu0
      %v2557 = vadd.f32 0.0, %v2556
      %v2558 = vpop.f32.mrb[0].mxu0
      %v2559 = vpop.f32.mrb[0].mxu0
      %v2560 = vadd.f32 0.0, %v2559
      %v2561 = vpop.f32.mrb[0].mxu0
      %2562 = vmatprep.mubr.bf16.mxu0 0
      %2563 = vmatmul.mubr.bf16.gmra.mrb[0].mxu0 %v1426
      %v2564 = vpop.f32.mrb[0].mxu0
      %v2565 = vpop.f32.mrb[0].mxu0
      %v2566 = vpop.f32.mrb[0].mxu0
      %v2567 = vpop.f32.mrb[0].mxu0
      %2568 = vmatprep.mubr.bf16.mxu0 0
      %2569 = vmatmul.mubr.bf16.gmra.mrb[0].mxu0 %v1429
      %v2570 = vpop.f32.mrb[0].mxu0
      %v2571 = vadd.f32 0.0, %v2570
      %v2572 = vpop.f32.mrb[0].mxu0
      %v2573 = vpop.f32.mrb[0].mxu0
      %v2574 = vadd.f32 0.0, %v2573
      %v2575 = vpop.f32.mrb[0].mxu0
      %2576 = vmatprep.mubr.bf16.mxu0 0
      %2577 = vmatmul.mubr.bf16.gmra.mrb[0].mxu0 %v1432
      %v2578 = vpop.f32.mrb[0].mxu0
      %v2579 = vpop.f32.mrb[0].mxu0
      %v2580 = vpop.f32.mrb[0].mxu0
      %v2581 = vpop.f32.mrb[0].mxu0
      %2582 = vmatprep.mubr.bf16.mxu0 0
      %2583 = vmatmul.mubr.bf16.gmra.mrb[0].mxu0 %v1435
      %v2584 = vpop.f32.mrb[0].mxu0
      %v2585 = vadd.f32 0.0, %v2584
      %v2586 = vpop.f32.mrb[0].mxu0
      %v2587 = vpop.f32.mrb[0].mxu0
      %v2588 = vadd.f32 0.0, %v2587
      %v2589 = vpop.f32.mrb[0].mxu0
      %2590 = vmatprep.mubr.bf16.mxu0 0
      %2591 = vmatmul.mubr.bf16.gmra.mrb[0].mxu0 %v1438
      %v2592 = vpop.f32.mrb[0].mxu0
      %v2593 = vpop.f32.mrb[0].mxu0
      %v2594 = vpop.f32.mrb[0].mxu0
      %v2595 = vpop.f32.mrb[0].mxu0
      %2596 = vmatprep.mubr.bf16.mxu0 0
      %2597 = vmatmul.mubr.bf16.gmra.mrb[0].mxu0 %v1441
      %v2598 = vpop.f32.mrb[0].mxu0
      %v2599 = vadd.f32 0.0, %v2598
      %v2600 = vpop.f32.mrb[0].mxu0
      %v2601 = vpop.f32.mrb[0].mxu0
      %v2602 = vadd.f32 0.0, %v2601
      %v2603 = vpop.f32.mrb[0].mxu0
      %2604 = vmatprep.mubr.bf16.mxu0 0
      %2605 = vmatmul.mubr.bf16.gmra.mrb[0].mxu0 %v2357
      %v2606 = vpop.f32.mrb[0].mxu0
      %v2607 = vpop.f32.mrb[0].mxu0
      %v2608 = vpop.f32.mrb[0].mxu0
      %v2609 = vpop.f32.mrb[0].mxu0
      %2610 = vmatprep.mubr.bf16.mxu0 0
      %2611 = vmatmul.mubr.bf16.gmra.mrb[0].mxu0 %v2360
      %v2612 = vpop.f32.mrb[0].mxu0
      %v2613 = vadd.f32 0.0, %v2612
      %v2614 = vpop.f32.mrb[0].mxu0
      %v2615 = vpop.f32.mrb[0].mxu0
      %v2616 = vadd.f32 0.0, %v2615
      %v2617 = vpop.f32.mrb[0].mxu0
      %2618 = vmatprep.mubr.bf16.mxu0 0
      %2619 = vmatmul.mubr.bf16.gmra.mrb[0].mxu0 %v2363
      %v2620 = vpop.f32.mrb[0].mxu0
      %v2621 = vpop.f32.mrb[0].mxu0
      %v2622 = vpop.f32.mrb[0].mxu0
      %v2623 = vpop.f32.mrb[0].mxu0
      %2624 = vdwg.mxu0
      %v2625 = vadd.f32 %v2293, %v2403
      %v2626 = vadd.f32 %v2294, %v2406
      %v2627 = vadd.f32 %v2295, %v2417
      %v2628 = vadd.f32 %v2296, %v2420
      %v2629 = vadd.f32 %v2297, %v2431
      %v2630 = vadd.f32 %v2298, %v2434
      %v2631 = vadd.f32 %v2299, %v2445
      %v2632 = vadd.f32 %v2300, %v2448
      %v2633 = vadd.f32 %v2301, %v2459
      %v2634 = vadd.f32 %v2302, %v2462
      %v2635 = vadd.f32 %v2303, %v2473
      %v2636 = vadd.f32 %v2304, %v2476
      %v2637 = vadd.f32 %v2305, %v2487
      %v2638 = vadd.f32 %v2306, %v2490
      %v2639 = vadd.f32 %v2307, %v2501
      %v2640 = vadd.f32 %v2308, %v2504
      %v2641 = vadd.f32 %v2309, %v2515
      %v2642 = vadd.f32 %v2310, %v2518
      %v2643 = vadd.f32 %v2311, %v2529
      %v2644 = vadd.f32 %v2312, %v2532
      %v2645 = vadd.f32 %v2313, %v2543
      %v2646 = vadd.f32 %v2314, %v2546
      %v2647 = vadd.f32 %v2315, %v2557
      %v2648 = vadd.f32 %v2316, %v2560
      %v2649 = vadd.f32 %v2317, %v2571
      %v2650 = vadd.f32 %v2318, %v2574
      %v2651 = vadd.f32 %v2319, %v2585
      %v2652 = vadd.f32 %v2320, %v2588
      %v2653 = vadd.f32 %v2321, %v2599
      %v2654 = vadd.f32 %v2322, %v2602
      %v2655 = vadd.f32 %v2323, %v2613
      %v2656 = vadd.f32 %v2324, %v2616
      %v2657 = vpack.c.bf16 %v621, %v620
      %v2658 = vpack.c.bf16 %v623, %v622
      %v2659 = vld [vmem:[%s2 + $0x100] sm:$0xf]
      %v2661 = vsel %vm522, %v2657, 0
      %v2664 = vsel %vm522, %v2658, 0
      %v2667 = vsel %vm792, %v2659, 0
      %2669 = vmatprep.subr.bf16.mxu0 0
      %2670 = vmatpush1.bf16.msra.mxu0 %v2667
      %2671 = vmatprep.subr.bf16.mxu0 0
      %2672 = vmatpush1.bf16.msra.mxu0 0
      %2673 = vmatprep.subr.bf16.mxu0 0
      %2674 = vmatpush1.bf16.msra.mxu0 0
      %2675 = vmatprep.subr.bf16.mxu0 0
      %2676 = vmatpush1.bf16.msra.mxu0 0
      %2677 = vmatprep.subr.bf16.mxu0 0
      %2678 = vmatpush1.bf16.msra.mxu0 0
      %2679 = vmatprep.subr.bf16.mxu0 0
      %2680 = vmatpush1.bf16.msra.mxu0 0
      %2681 = vmatprep.subr.bf16.mxu0 0
      %2682 = vmatpush1.bf16.msra.mxu0 0
      %2683 = vmatprep.subr.bf16.mxu0 0
      %2684 = vmatpush1.bf16.msra.mxu0 0
      %2685 = vmatprep.subr.bf16.mxu0 0
      %2686 = vmatpush1.bf16.msra.mxu0 0
      %2687 = vmatprep.subr.bf16.mxu0 0
      %2688 = vmatpush1.bf16.msra.mxu0 0
      %2689 = vmatprep.subr.bf16.mxu0 0
      %2690 = vmatpush1.bf16.msra.mxu0 0
      %2691 = vmatprep.subr.bf16.mxu0 0
      %2692 = vmatpush1.bf16.msra.mxu0 0
      %2693 = vmatprep.subr.bf16.mxu0 0
      %2694 = vmatpush1.bf16.msra.mxu0 0
      %2695 = vmatprep.subr.bf16.mxu0 0
      %2696 = vmatpush1.bf16.msra.mxu0 0
      %2697 = vmatprep.subr.bf16.mxu0 0
      %2698 = vmatpush1.bf16.msra.mxu0 0
      %2699 = vmatprep.subr.bf16.mxu0 0
      %2700 = vmatpush1.bf16.msra.mxu0 0
      %2701 = vmatprep.mubr.bf16.mxu0 0
      %2702 = vmatmul.mubr.bf16.gmra.mrb[0].mxu0 %v703
      %v2703 = vpop.f32.mrb[0].mxu0
      %v2704 = vadd.f32 0.0, %v2703
      %v2705 = vpop.f32.mrb[0].mxu0
      %v2706 = vpop.f32.mrb[0].mxu0
      %v2707 = vadd.f32 0.0, %v2706
      %v2708 = vpop.f32.mrb[0].mxu0
      %2709 = vmatprep.mubr.bf16.mxu0 0
      %2710 = vmatmul.mubr.bf16.gmra.mrb[0].mxu0 %v706
      %v2711 = vpop.f32.mrb[0].mxu0
      %v2712 = vpop.f32.mrb[0].mxu0
      %v2713 = vpop.f32.mrb[0].mxu0
      %v2714 = vpop.f32.mrb[0].mxu0
      %2715 = vmatprep.mubr.bf16.mxu0 0
      %2716 = vmatmul.mubr.bf16.gmra.mrb[0].mxu0 %v709
      %v2717 = vpop.f32.mrb[0].mxu0
      %v2718 = vadd.f32 0.0, %v2717
      %v2719 = vpop.f32.mrb[0].mxu0
      %v2720 = vpop.f32.mrb[0].mxu0
      %v2721 = vadd.f32 0.0, %v2720
      %v2722 = vpop.f32.mrb[0].mxu0
      %2723 = vmatprep.mubr.bf16.mxu0 0
      %2724 = vmatmul.mubr.bf16.gmra.mrb[0].mxu0 %v712
      %v2725 = vpop.f32.mrb[0].mxu0
      %v2726 = vpop.f32.mrb[0].mxu0
      %v2727 = vpop.f32.mrb[0].mxu0
      %v2728 = vpop.f32.mrb[0].mxu0
      %2729 = vmatprep.mubr.bf16.mxu0 0
      %2730 = vmatmul.mubr.bf16.gmra.mrb[0].mxu0 %v715
      %v2731 = vpop.f32.mrb[0].mxu0
      %v2732 = vadd.f32 0.0, %v2731
      %v2733 = vpop.f32.mrb[0].mxu0
      %v2734 = vpop.f32.mrb[0].mxu0
      %v2735 = vadd.f32 0.0, %v2734
      %v2736 = vpop.f32.mrb[0].mxu0
      %2737 = vmatprep.mubr.bf16.mxu0 0
      %2738 = vmatmul.mubr.bf16.gmra.mrb[0].mxu0 %v718
      %v2739 = vpop.f32.mrb[0].mxu0
      %v2740 = vpop.f32.mrb[0].mxu0
      %v2741 = vpop.f32.mrb[0].mxu0
      %v2742 = vpop.f32.mrb[0].mxu0
      %2743 = vmatprep.mubr.bf16.mxu0 0
      %2744 = vmatmul.mubr.bf16.gmra.mrb[0].mxu0 %v721
      %v2745 = vpop.f32.mrb[0].mxu0
      %v2746 = vadd.f32 0.0, %v2745
      %v2747 = vpop.f32.mrb[0].mxu0
      %v2748 = vpop.f32.mrb[0].mxu0
      %v2749 = vadd.f32 0.0, %v2748
      %v2750 = vpop.f32.mrb[0].mxu0
      %2751 = vmatprep.mubr.bf16.mxu0 0
      %2752 = vmatmul.mubr.bf16.gmra.mrb[0].mxu0 %v724
      %v2753 = vpop.f32.mrb[0].mxu0
      %v2754 = vpop.f32.mrb[0].mxu0
      %v2755 = vpop.f32.mrb[0].mxu0
      %v2756 = vpop.f32.mrb[0].mxu0
      %2757 = vmatprep.mubr.bf16.mxu0 0
      %2758 = vmatmul.mubr.bf16.gmra.mrb[0].mxu0 %v727
      %v2759 = vpop.f32.mrb[0].mxu0
      %v2760 = vadd.f32 0.0, %v2759
      %v2761 = vpop.f32.mrb[0].mxu0
      %v2762 = vpop.f32.mrb[0].mxu0
      %v2763 = vadd.f32 0.0, %v2762
      %v2764 = vpop.f32.mrb[0].mxu0
      %2765 = vmatprep.mubr.bf16.mxu0 0
      %2766 = vmatmul.mubr.bf16.gmra.mrb[0].mxu0 %v730
      %v2767 = vpop.f32.mrb[0].mxu0
      %v2768 = vpop.f32.mrb[0].mxu0
      %v2769 = vpop.f32.mrb[0].mxu0
      %v2770 = vpop.f32.mrb[0].mxu0
      %2771 = vmatprep.mubr.bf16.mxu0 0
      %2772 = vmatmul.mubr.bf16.gmra.mrb[0].mxu0 %v733
      %v2773 = vpop.f32.mrb[0].mxu0
      %v2774 = vadd.f32 0.0, %v2773
      %v2775 = vpop.f32.mrb[0].mxu0
      %v2776 = vpop.f32.mrb[0].mxu0
      %v2777 = vadd.f32 0.0, %v2776
      %v2778 = vpop.f32.mrb[0].mxu0
      %2779 = vmatprep.mubr.bf16.mxu0 0
      %2780 = vmatmul.mubr.bf16.gmra.mrb[0].mxu0 %v736
      %v2781 = vpop.f32.mrb[0].mxu0
      %v2782 = vpop.f32.mrb[0].mxu0
      %v2783 = vpop.f32.mrb[0].mxu0
      %v2784 = vpop.f32.mrb[0].mxu0
      %2785 = vmatprep.mubr.bf16.mxu0 0
      %2786 = vmatmul.mubr.bf16.gmra.mrb[0].mxu0 %v739
      %v2787 = vpop.f32.mrb[0].mxu0
      %v2788 = vadd.f32 0.0, %v2787
      %v2789 = vpop.f32.mrb[0].mxu0
      %v2790 = vpop.f32.mrb[0].mxu0
      %v2791 = vadd.f32 0.0, %v2790
      %v2792 = vpop.f32.mrb[0].mxu0
      %2793 = vmatprep.mubr.bf16.mxu0 0
      %2794 = vmatmul.mubr.bf16.gmra.mrb[0].mxu0 %v742
      %v2795 = vpop.f32.mrb[0].mxu0
      %v2796 = vpop.f32.mrb[0].mxu0
      %v2797 = vpop.f32.mrb[0].mxu0
      %v2798 = vpop.f32.mrb[0].mxu0
      %2799 = vmatprep.mubr.bf16.mxu0 0
      %2800 = vmatmul.mubr.bf16.gmra.mrb[0].mxu0 %v745
      %v2801 = vpop.f32.mrb[0].mxu0
      %v2802 = vadd.f32 0.0, %v2801
      %v2803 = vpop.f32.mrb[0].mxu0
      %v2804 = vpop.f32.mrb[0].mxu0
      %v2805 = vadd.f32 0.0, %v2804
      %v2806 = vpop.f32.mrb[0].mxu0
      %2807 = vmatprep.mubr.bf16.mxu0 0
      %2808 = vmatmul.mubr.bf16.gmra.mrb[0].mxu0 %v748
      %v2809 = vpop.f32.mrb[0].mxu0
      %v2810 = vpop.f32.mrb[0].mxu0
      %v2811 = vpop.f32.mrb[0].mxu0
      %v2812 = vpop.f32.mrb[0].mxu0
      %2813 = vmatprep.mubr.bf16.mxu0 0
      %2814 = vmatmul.mubr.bf16.gmra.mrb[0].mxu0 %v751
      %v2815 = vpop.f32.mrb[0].mxu0
      %v2816 = vadd.f32 0.0, %v2815
      %v2817 = vpop.f32.mrb[0].mxu0
      %v2818 = vpop.f32.mrb[0].mxu0
      %v2819 = vadd.f32 0.0, %v2818
      %v2820 = vpop.f32.mrb[0].mxu0
      %2821 = vmatprep.mubr.bf16.mxu0 0
      %2822 = vmatmul.mubr.bf16.gmra.mrb[0].mxu0 %v754
      %v2823 = vpop.f32.mrb[0].mxu0
      %v2824 = vpop.f32.mrb[0].mxu0
      %v2825 = vpop.f32.mrb[0].mxu0
      %v2826 = vpop.f32.mrb[0].mxu0
      %2827 = vmatprep.mubr.bf16.mxu0 0
      %2828 = vmatmul.mubr.bf16.gmra.mrb[0].mxu0 %v757
      %v2829 = vpop.f32.mrb[0].mxu0
      %v2830 = vadd.f32 0.0, %v2829
      %v2831 = vpop.f32.mrb[0].mxu0
      %v2832 = vpop.f32.mrb[0].mxu0
      %v2833 = vadd.f32 0.0, %v2832
      %v2834 = vpop.f32.mrb[0].mxu0
      %2835 = vmatprep.mubr.bf16.mxu0 0
      %2836 = vmatmul.mubr.bf16.gmra.mrb[0].mxu0 %v760
      %v2837 = vpop.f32.mrb[0].mxu0
      %v2838 = vpop.f32.mrb[0].mxu0
      %v2839 = vpop.f32.mrb[0].mxu0
      %v2840 = vpop.f32.mrb[0].mxu0
      %2841 = vmatprep.mubr.bf16.mxu0 0
      %2842 = vmatmul.mubr.bf16.gmra.mrb[0].mxu0 %v763
      %v2843 = vpop.f32.mrb[0].mxu0
      %v2844 = vadd.f32 0.0, %v2843
      %v2845 = vpop.f32.mrb[0].mxu0
      %v2846 = vpop.f32.mrb[0].mxu0
      %v2847 = vadd.f32 0.0, %v2846
      %v2848 = vpop.f32.mrb[0].mxu0
      %2849 = vmatprep.mubr.bf16.mxu0 0
      %2850 = vmatmul.mubr.bf16.gmra.mrb[0].mxu0 %v766
      %v2851 = vpop.f32.mrb[0].mxu0
      %v2852 = vpop.f32.mrb[0].mxu0
      %v2853 = vpop.f32.mrb[0].mxu0
      %v2854 = vpop.f32.mrb[0].mxu0
      %2855 = vmatprep.mubr.bf16.mxu0 0
      %2856 = vmatmul.mubr.bf16.gmra.mrb[0].mxu0 %v769
      %v2857 = vpop.f32.mrb[0].mxu0
      %v2858 = vadd.f32 0.0, %v2857
      %v2859 = vpop.f32.mrb[0].mxu0
      %v2860 = vpop.f32.mrb[0].mxu0
      %v2861 = vadd.f32 0.0, %v2860
      %v2862 = vpop.f32.mrb[0].mxu0
      %2863 = vmatprep.mubr.bf16.mxu0 0
      %2864 = vmatmul.mubr.bf16.gmra.mrb[0].mxu0 %v772
      %v2865 = vpop.f32.mrb[0].mxu0
      %v2866 = vpop.f32.mrb[0].mxu0
      %v2867 = vpop.f32.mrb[0].mxu0
      %v2868 = vpop.f32.mrb[0].mxu0
      %2869 = vmatprep.mubr.bf16.mxu0 0
      %2870 = vmatmul.mubr.bf16.gmra.mrb[0].mxu0 %v775
      %v2871 = vpop.f32.mrb[0].mxu0
      %v2872 = vadd.f32 0.0, %v2871
      %v2873 = vpop.f32.mrb[0].mxu0
      %v2874 = vpop.f32.mrb[0].mxu0
      %v2875 = vadd.f32 0.0, %v2874
      %v2876 = vpop.f32.mrb[0].mxu0
      %2877 = vmatprep.mubr.bf16.mxu0 0
      %2878 = vmatmul.mubr.bf16.gmra.mrb[0].mxu0 %v778
      %v2879 = vpop.f32.mrb[0].mxu0
      %v2880 = vpop.f32.mrb[0].mxu0
      %v2881 = vpop.f32.mrb[0].mxu0
      %v2882 = vpop.f32.mrb[0].mxu0
      %2883 = vmatprep.mubr.bf16.mxu0 0
      %2884 = vmatmul.mubr.bf16.gmra.mrb[0].mxu0 %v781
      %v2885 = vpop.f32.mrb[0].mxu0
      %v2886 = vadd.f32 0.0, %v2885
      %v2887 = vpop.f32.mrb[0].mxu0
      %v2888 = vpop.f32.mrb[0].mxu0
      %v2889 = vadd.f32 0.0, %v2888
      %v2890 = vpop.f32.mrb[0].mxu0
      %2891 = vmatprep.mubr.bf16.mxu0 0
      %2892 = vmatmul.mubr.bf16.gmra.mrb[0].mxu0 %v784
      %v2893 = vpop.f32.mrb[0].mxu0
      %v2894 = vpop.f32.mrb[0].mxu0
      %v2895 = vpop.f32.mrb[0].mxu0
      %v2896 = vpop.f32.mrb[0].mxu0
      %2897 = vmatprep.mubr.bf16.mxu0 0
      %2898 = vmatmul.mubr.bf16.gmra.mrb[0].mxu0 %v787
      %v2899 = vpop.f32.mrb[0].mxu0
      %v2900 = vadd.f32 0.0, %v2899
      %v2901 = vpop.f32.mrb[0].mxu0
      %v2902 = vpop.f32.mrb[0].mxu0
      %v2903 = vadd.f32 0.0, %v2902
      %v2904 = vpop.f32.mrb[0].mxu0
      %2905 = vmatprep.mubr.bf16.mxu0 0
      %2906 = vmatmul.mubr.bf16.gmra.mrb[0].mxu0 %v790
      %v2907 = vpop.f32.mrb[0].mxu0
      %v2908 = vpop.f32.mrb[0].mxu0
      %v2909 = vpop.f32.mrb[0].mxu0
      %v2910 = vpop.f32.mrb[0].mxu0
      %2911 = vmatprep.mubr.bf16.mxu0 0
      %2912 = vmatmul.mubr.bf16.gmra.mrb[0].mxu0 %v2661
      %v2913 = vpop.f32.mrb[0].mxu0
      %v2914 = vadd.f32 0.0, %v2913
      %v2915 = vpop.f32.mrb[0].mxu0
      %v2916 = vpop.f32.mrb[0].mxu0
      %v2917 = vadd.f32 0.0, %v2916
      %v2918 = vpop.f32.mrb[0].mxu0
      %2919 = vmatprep.mubr.bf16.mxu0 0
      %2920 = vmatmul.mubr.bf16.gmra.mrb[0].mxu0 %v2664
      %v2921 = vpop.f32.mrb[0].mxu0
      %v2922 = vpop.f32.mrb[0].mxu0
      %v2923 = vpop.f32.mrb[0].mxu0
      %v2924 = vpop.f32.mrb[0].mxu0
      %2925 = vdwg.mxu0
      %v2926 = vadd.f32 %v2625, %v2704
      %v2927 = vadd.f32 %v2626, %v2707
      %v2928 = vadd.f32 %v2627, %v2718
      %v2929 = vadd.f32 %v2628, %v2721
      %v2930 = vadd.f32 %v2629, %v2732
      %v2931 = vadd.f32 %v2630, %v2735
      %v2932 = vadd.f32 %v2631, %v2746
      %v2933 = vadd.f32 %v2632, %v2749
      %v2934 = vadd.f32 %v2633, %v2760
      %v2935 = vadd.f32 %v2634, %v2763
      %v2936 = vadd.f32 %v2635, %v2774
      %v2937 = vadd.f32 %v2636, %v2777
      %v2938 = vadd.f32 %v2637, %v2788
      %v2939 = vadd.f32 %v2638, %v2791
      %v2940 = vadd.f32 %v2639, %v2802
      %v2941 = vadd.f32 %v2640, %v2805
      %v2942 = vadd.f32 %v2641, %v2816
      %v2943 = vadd.f32 %v2642, %v2819
      %v2944 = vadd.f32 %v2643, %v2830
      %v2945 = vadd.f32 %v2644, %v2833
      %v2946 = vadd.f32 %v2645, %v2844
      %v2947 = vadd.f32 %v2646, %v2847
      %v2948 = vadd.f32 %v2647, %v2858
      %v2949 = vadd.f32 %v2648, %v2861
      %v2950 = vadd.f32 %v2649, %v2872
      %v2951 = vadd.f32 %v2650, %v2875
      %v2952 = vadd.f32 %v2651, %v2886
      %v2953 = vadd.f32 %v2652, %v2889
      %v2954 = vadd.f32 %v2653, %v2900
      %v2955 = vadd.f32 %v2654, %v2903
      %v2956 = vadd.f32 %v2655, %v2914
      %v2957 = vadd.f32 %v2656, %v2917
      %v2958 = vpack.c.bf16 %v624, %v624
      %v2959 = vld [vmem:[%s2 + $0x140] sm:$0xf]
      %v2960 = vshll.u32 %v2657, 16
      %v2962 = vrot.slane %v2960, 1
      %v2963 = vsel %vm1708, %v1931, %v2962
      %v2964 = vshrl.u32 %v2657, 16
      %v2966 = vor.u32 %v2964, %v2962
      %v2967 = vshll.u32 %v2658, 16
      %v2969 = vrot.slane %v2967, 1
      %v2970 = vsel %vm1708, %v2966, %v2969
      %v2971 = vshrl.u32 %v2658, 16
      %v2973 = vor.u32 %v2971, %v2969
      %v2975 = vshll.u32 %v2958, 16
      %v2977 = vrot.slane %v2975, 1
      %v2978 = vsel %vm1708, %v2973, %v2977
      %v2980 = vsel %vm522, %v2963, 0
      %v2983 = vsel %vm522, %v2970, 0
      %v2986 = vsel %vm522, %v2978, 0
      %v2989 = vsel %vm792, %v2959, 0
      %2991 = vmatprep.subr.bf16.mxu0 0
      %2992 = vmatpush1.bf16.msra.mxu0 %v2989
      %2993 = vmatprep.subr.bf16.mxu0 0
      %2994 = vmatpush1.bf16.msra.mxu0 0
      %2995 = vmatprep.subr.bf16.mxu0 0
      %2996 = vmatpush1.bf16.msra.mxu0 0
      %2997 = vmatprep.subr.bf16.mxu0 0
      %2998 = vmatpush1.bf16.msra.mxu0 0
      %2999 = vmatprep.subr.bf16.mxu0 0
      %3000 = vmatpush1.bf16.msra.mxu0 0
      %3001 = vmatprep.subr.bf16.mxu0 0
      %3002 = vmatpush1.bf16.msra.mxu0 0
      %3003 = vmatprep.subr.bf16.mxu0 0
      %3004 = vmatpush1.bf16.msra.mxu0 0
      %3005 = vmatprep.subr.bf16.mxu0 0
      %3006 = vmatpush1.bf16.msra.mxu0 0
      %3007 = vmatprep.subr.bf16.mxu0 0
      %3008 = vmatpush1.bf16.msra.mxu0 0
      %3009 = vmatprep.subr.bf16.mxu0 0
      %3010 = vmatpush1.bf16.msra.mxu0 0
      %3011 = vmatprep.subr.bf16.mxu0 0
      %3012 = vmatpush1.bf16.msra.mxu0 0
      %3013 = vmatprep.subr.bf16.mxu0 0
      %3014 = vmatpush1.bf16.msra.mxu0 0
      %3015 = vmatprep.subr.bf16.mxu0 0
      %3016 = vmatpush1.bf16.msra.mxu0 0
      %3017 = vmatprep.subr.bf16.mxu0 0
      %3018 = vmatpush1.bf16.msra.mxu0 0
      %3019 = vmatprep.subr.bf16.mxu0 0
      %3020 = vmatpush1.bf16.msra.mxu0 0
      %3021 = vmatprep.subr.bf16.mxu0 0
      %3022 = vmatpush1.bf16.msra.mxu0 0
      %3023 = vmatprep.mubr.bf16.mxu0 0
      %3024 = vmatmul.mubr.bf16.gmra.mrb[0].mxu0 %v1944
      %v3025 = vpop.f32.mrb[0].mxu0
      %v3026 = vadd.f32 0.0, %v3025
      %v3027 = vpop.f32.mrb[0].mxu0
      %v3028 = vpop.f32.mrb[0].mxu0
      %v3029 = vadd.f32 0.0, %v3028
      %v3030 = vpop.f32.mrb[0].mxu0
      %3031 = vmatprep.mubr.bf16.mxu0 0
      %3032 = vmatmul.mubr.bf16.gmra.mrb[0].mxu0 %v1947
      %v3033 = vpop.f32.mrb[0].mxu0
      %v3034 = vpop.f32.mrb[0].mxu0
      %v3035 = vpop.f32.mrb[0].mxu0
      %v3036 = vpop.f32.mrb[0].mxu0
      %3037 = vmatprep.mubr.bf16.mxu0 0
      %3038 = vmatmul.mubr.bf16.gmra.mrb[0].mxu0 %v1950
      %v3039 = vpop.f32.mrb[0].mxu0
      %v3040 = vadd.f32 0.0, %v3039
      %v3041 = vpop.f32.mrb[0].mxu0
      %v3042 = vpop.f32.mrb[0].mxu0
      %v3043 = vadd.f32 0.0, %v3042
      %v3044 = vpop.f32.mrb[0].mxu0
      %3045 = vmatprep.mubr.bf16.mxu0 0
      %3046 = vmatmul.mubr.bf16.gmra.mrb[0].mxu0 %v1953
      %v3047 = vpop.f32.mrb[0].mxu0
      %v3048 = vpop.f32.mrb[0].mxu0
      %v3049 = vpop.f32.mrb[0].mxu0
      %v3050 = vpop.f32.mrb[0].mxu0
      %3051 = vmatprep.mubr.bf16.mxu0 0
      %3052 = vmatmul.mubr.bf16.gmra.mrb[0].mxu0 %v1956
      %v3053 = vpop.f32.mrb[0].mxu0
      %v3054 = vadd.f32 0.0, %v3053
      %v3055 = vpop.f32.mrb[0].mxu0
      %v3056 = vpop.f32.mrb[0].mxu0
      %v3057 = vadd.f32 0.0, %v3056
      %v3058 = vpop.f32.mrb[0].mxu0
      %3059 = vmatprep.mubr.bf16.mxu0 0
      %3060 = vmatmul.mubr.bf16.gmra.mrb[0].mxu0 %v1959
      %v3061 = vpop.f32.mrb[0].mxu0
      %v3062 = vpop.f32.mrb[0].mxu0
      %v3063 = vpop.f32.mrb[0].mxu0
      %v3064 = vpop.f32.mrb[0].mxu0
      %3065 = vmatprep.mubr.bf16.mxu0 0
      %3066 = vmatmul.mubr.bf16.gmra.mrb[0].mxu0 %v1962
      %v3067 = vpop.f32.mrb[0].mxu0
      %v3068 = vadd.f32 0.0, %v3067
      %v3069 = vpop.f32.mrb[0].mxu0
      %v3070 = vpop.f32.mrb[0].mxu0
      %v3071 = vadd.f32 0.0, %v3070
      %v3072 = vpop.f32.mrb[0].mxu0
      %3073 = vmatprep.mubr.bf16.mxu0 0
      %3074 = vmatmul.mubr.bf16.gmra.mrb[0].mxu0 %v1965
      %v3075 = vpop.f32.mrb[0].mxu0
      %v3076 = vpop.f32.mrb[0].mxu0
      %v3077 = vpop.f32.mrb[0].mxu0
      %v3078 = vpop.f32.mrb[0].mxu0
      %3079 = vmatprep.mubr.bf16.mxu0 0
      %3080 = vmatmul.mubr.bf16.gmra.mrb[0].mxu0 %v1968
      %v3081 = vpop.f32.mrb[0].mxu0
      %v3082 = vadd.f32 0.0, %v3081
      %v3083 = vpop.f32.mrb[0].mxu0
      %v3084 = vpop.f32.mrb[0].mxu0
      %v3085 = vadd.f32 0.0, %v3084
      %v3086 = vpop.f32.mrb[0].mxu0
      %3087 = vmatprep.mubr.bf16.mxu0 0
      %3088 = vmatmul.mubr.bf16.gmra.mrb[0].mxu0 %v1971
      %v3089 = vpop.f32.mrb[0].mxu0
      %v3090 = vpop.f32.mrb[0].mxu0
      %v3091 = vpop.f32.mrb[0].mxu0
      %v3092 = vpop.f32.mrb[0].mxu0
      %3093 = vmatprep.mubr.bf16.mxu0 0
      %3094 = vmatmul.mubr.bf16.gmra.mrb[0].mxu0 %v1974
      %v3095 = vpop.f32.mrb[0].mxu0
      %v3096 = vadd.f32 0.0, %v3095
      %v3097 = vpop.f32.mrb[0].mxu0
      %v3098 = vpop.f32.mrb[0].mxu0
      %v3099 = vadd.f32 0.0, %v3098
      %v3100 = vpop.f32.mrb[0].mxu0
      %3101 = vmatprep.mubr.bf16.mxu0 0
      %3102 = vmatmul.mubr.bf16.gmra.mrb[0].mxu0 %v1977
      %v3103 = vpop.f32.mrb[0].mxu0
      %v3104 = vpop.f32.mrb[0].mxu0
      %v3105 = vpop.f32.mrb[0].mxu0
      %v3106 = vpop.f32.mrb[0].mxu0
      %3107 = vmatprep.mubr.bf16.mxu0 0
      %3108 = vmatmul.mubr.bf16.gmra.mrb[0].mxu0 %v1980
      %v3109 = vpop.f32.mrb[0].mxu0
      %v3110 = vadd.f32 0.0, %v3109
      %v3111 = vpop.f32.mrb[0].mxu0
      %v3112 = vpop.f32.mrb[0].mxu0
      %v3113 = vadd.f32 0.0, %v3112
      %v3114 = vpop.f32.mrb[0].mxu0
      %3115 = vmatprep.mubr.bf16.mxu0 0
      %3116 = vmatmul.mubr.bf16.gmra.mrb[0].mxu0 %v1983
      %v3117 = vpop.f32.mrb[0].mxu0
      %v3118 = vpop.f32.mrb[0].mxu0
      %v3119 = vpop.f32.mrb[0].mxu0
      %v3120 = vpop.f32.mrb[0].mxu0
      %3121 = vmatprep.mubr.bf16.mxu0 0
      %3122 = vmatmul.mubr.bf16.gmra.mrb[0].mxu0 %v1986
      %v3123 = vpop.f32.mrb[0].mxu0
      %v3124 = vadd.f32 0.0, %v3123
      %v3125 = vpop.f32.mrb[0].mxu0
      %v3126 = vpop.f32.mrb[0].mxu0
      %v3127 = vadd.f32 0.0, %v3126
      %v3128 = vpop.f32.mrb[0].mxu0
      %3129 = vmatprep.mubr.bf16.mxu0 0
      %3130 = vmatmul.mubr.bf16.gmra.mrb[0].mxu0 %v1989
      %v3131 = vpop.f32.mrb[0].mxu0
      %v3132 = vpop.f32.mrb[0].mxu0
      %v3133 = vpop.f32.mrb[0].mxu0
      %v3134 = vpop.f32.mrb[0].mxu0
      %3135 = vmatprep.mubr.bf16.mxu0 0
      %3136 = vmatmul.mubr.bf16.gmra.mrb[0].mxu0 %v1992
      %v3137 = vpop.f32.mrb[0].mxu0
      %v3138 = vadd.f32 0.0, %v3137
      %v3139 = vpop.f32.mrb[0].mxu0
      %v3140 = vpop.f32.mrb[0].mxu0
      %v3141 = vadd.f32 0.0, %v3140
      %v3142 = vpop.f32.mrb[0].mxu0
      %3143 = vmatprep.mubr.bf16.mxu0 0
      %3144 = vmatmul.mubr.bf16.gmra.mrb[0].mxu0 %v1995
      %v3145 = vpop.f32.mrb[0].mxu0
      %v3146 = vpop.f32.mrb[0].mxu0
      %v3147 = vpop.f32.mrb[0].mxu0
      %v3148 = vpop.f32.mrb[0].mxu0
      %3149 = vmatprep.mubr.bf16.mxu0 0
      %3150 = vmatmul.mubr.bf16.gmra.mrb[0].mxu0 %v1998
      %v3151 = vpop.f32.mrb[0].mxu0
      %v3152 = vadd.f32 0.0, %v3151
      %v3153 = vpop.f32.mrb[0].mxu0
      %v3154 = vpop.f32.mrb[0].mxu0
      %v3155 = vadd.f32 0.0, %v3154
      %v3156 = vpop.f32.mrb[0].mxu0
      %3157 = vmatprep.mubr.bf16.mxu0 0
      %3158 = vmatmul.mubr.bf16.gmra.mrb[0].mxu0 %v2001
      %v3159 = vpop.f32.mrb[0].mxu0
      %v3160 = vpop.f32.mrb[0].mxu0
      %v3161 = vpop.f32.mrb[0].mxu0
      %v3162 = vpop.f32.mrb[0].mxu0
      %3163 = vmatprep.mubr.bf16.mxu0 0
      %3164 = vmatmul.mubr.bf16.gmra.mrb[0].mxu0 %v2004
      %v3165 = vpop.f32.mrb[0].mxu0
      %v3166 = vadd.f32 0.0, %v3165
      %v3167 = vpop.f32.mrb[0].mxu0
      %v3168 = vpop.f32.mrb[0].mxu0
      %v3169 = vadd.f32 0.0, %v3168
      %v3170 = vpop.f32.mrb[0].mxu0
      %3171 = vmatprep.mubr.bf16.mxu0 0
      %3172 = vmatmul.mubr.bf16.gmra.mrb[0].mxu0 %v2007
      %v3173 = vpop.f32.mrb[0].mxu0
      %v3174 = vpop.f32.mrb[0].mxu0
      %v3175 = vpop.f32.mrb[0].mxu0
      %v3176 = vpop.f32.mrb[0].mxu0
      %3177 = vmatprep.mubr.bf16.mxu0 0
      %3178 = vmatmul.mubr.bf16.gmra.mrb[0].mxu0 %v2010
      %v3179 = vpop.f32.mrb[0].mxu0
      %v3180 = vadd.f32 0.0, %v3179
      %v3181 = vpop.f32.mrb[0].mxu0
      %v3182 = vpop.f32.mrb[0].mxu0
      %v3183 = vadd.f32 0.0, %v3182
      %v3184 = vpop.f32.mrb[0].mxu0
      %3185 = vmatprep.mubr.bf16.mxu0 0
      %3186 = vmatmul.mubr.bf16.gmra.mrb[0].mxu0 %v2013
      %v3187 = vpop.f32.mrb[0].mxu0
      %v3188 = vpop.f32.mrb[0].mxu0
      %v3189 = vpop.f32.mrb[0].mxu0
      %v3190 = vpop.f32.mrb[0].mxu0
      %3191 = vmatprep.mubr.bf16.mxu0 0
      %3192 = vmatmul.mubr.bf16.gmra.mrb[0].mxu0 %v2016
      %v3193 = vpop.f32.mrb[0].mxu0
      %v3194 = vadd.f32 0.0, %v3193
      %v3195 = vpop.f32.mrb[0].mxu0
      %v3196 = vpop.f32.mrb[0].mxu0
      %v3197 = vadd.f32 0.0, %v3196
      %v3198 = vpop.f32.mrb[0].mxu0
      %3199 = vmatprep.mubr.bf16.mxu0 0
      %3200 = vmatmul.mubr.bf16.gmra.mrb[0].mxu0 %v2019
      %v3201 = vpop.f32.mrb[0].mxu0
      %v3202 = vpop.f32.mrb[0].mxu0
      %v3203 = vpop.f32.mrb[0].mxu0
      %v3204 = vpop.f32.mrb[0].mxu0
      %3205 = vmatprep.mubr.bf16.mxu0 0
      %3206 = vmatmul.mubr.bf16.gmra.mrb[0].mxu0 %v2022
      %v3207 = vpop.f32.mrb[0].mxu0
      %v3208 = vadd.f32 0.0, %v3207
      %v3209 = vpop.f32.mrb[0].mxu0
      %v3210 = vpop.f32.mrb[0].mxu0
      %v3211 = vadd.f32 0.0, %v3210
      %v3212 = vpop.f32.mrb[0].mxu0
      %3213 = vmatprep.mubr.bf16.mxu0 0
      %3214 = vmatmul.mubr.bf16.gmra.mrb[0].mxu0 %v2025
      %v3215 = vpop.f32.mrb[0].mxu0
      %v3216 = vpop.f32.mrb[0].mxu0
      %v3217 = vpop.f32.mrb[0].mxu0
      %v3218 = vpop.f32.mrb[0].mxu0
      %3219 = vmatprep.mubr.bf16.mxu0 0
      %3220 = vmatmul.mubr.bf16.gmra.mrb[0].mxu0 %v2028
      %v3221 = vpop.f32.mrb[0].mxu0
      %v3222 = vadd.f32 0.0, %v3221
      %v3223 = vpop.f32.mrb[0].mxu0
      %v3224 = vpop.f32.mrb[0].mxu0
      %v3225 = vadd.f32 0.0, %v3224
      %v3226 = vpop.f32.mrb[0].mxu0
      %3227 = vmatprep.mubr.bf16.mxu0 0
      %3228 = vmatmul.mubr.bf16.gmra.mrb[0].mxu0 %v2980
      %v3229 = vpop.f32.mrb[0].mxu0
      %v3230 = vpop.f32.mrb[0].mxu0
      %v3231 = vpop.f32.mrb[0].mxu0
      %v3232 = vpop.f32.mrb[0].mxu0
      %3233 = vmatprep.mubr.bf16.mxu0 0
      %3234 = vmatmul.mubr.bf16.gmra.mrb[0].mxu0 %v2983
      %v3235 = vpop.f32.mrb[0].mxu0
      %v3236 = vadd.f32 0.0, %v3235
      %v3237 = vpop.f32.mrb[0].mxu0
      %v3238 = vpop.f32.mrb[0].mxu0
      %v3239 = vadd.f32 0.0, %v3238
      %v3240 = vpop.f32.mrb[0].mxu0
      %3241 = vmatprep.mubr.bf16.mxu0 0
      %3242 = vmatmul.mubr.bf16.gmra.mrb[0].mxu0 %v2986
      %v3243 = vpop.f32.mrb[0].mxu0
      %v3244 = vpop.f32.mrb[0].mxu0
      %v3245 = vpop.f32.mrb[0].mxu0
      %v3246 = vpop.f32.mrb[0].mxu0
      %3247 = vdwg.mxu0
      %v3248 = vadd.f32 %v2926, %v3026
      %v3249 = vadd.f32 %v2927, %v3029
      %v3250 = vadd.f32 %v2928, %v3040
      %v3251 = vadd.f32 %v2929, %v3043
      %v3252 = vadd.f32 %v2930, %v3054
      %v3253 = vadd.f32 %v2931, %v3057
      %v3254 = vadd.f32 %v2932, %v3068
      %v3255 = vadd.f32 %v2933, %v3071
      %v3256 = vadd.f32 %v2934, %v3082
      %v3257 = vadd.f32 %v2935, %v3085
      %v3258 = vadd.f32 %v2936, %v3096
      %v3259 = vadd.f32 %v2937, %v3099
      %v3260 = vadd.f32 %v2938, %v3110
      %v3261 = vadd.f32 %v2939, %v3113
      %v3262 = vadd.f32 %v2940, %v3124
      %v3263 = vadd.f32 %v2941, %v3127
      %v3264 = vadd.f32 %v2942, %v3138
      %v3265 = vadd.f32 %v2943, %v3141
      %v3266 = vadd.f32 %v2944, %v3152
      %v3267 = vadd.f32 %v2945, %v3155
      %v3268 = vadd.f32 %v2946, %v3166
      %v3269 = vadd.f32 %v2947, %v3169
      %v3270 = vadd.f32 %v2948, %v3180
      %v3271 = vadd.f32 %v2949, %v3183
      %v3272 = vadd.f32 %v2950, %v3194
      %v3273 = vadd.f32 %v2951, %v3197
      %v3274 = vadd.f32 %v2952, %v3208
      %v3275 = vadd.f32 %v2953, %v3211
      %v3276 = vadd.f32 %v2954, %v3222
      %v3277 = vadd.f32 %v2955, %v3225
      %v3278 = vadd.f32 %v2956, %v3236
      %v3279 = vadd.f32 %v2957, %v3239
      %v3280 = vpack.c.bf16 %v624, %v623
      %v3281 = vpack.c.bf16 %v626, %v625
      %v3282 = vpack.c.bf16 %v627, %v627
      %v3283 = vld [vmem:[%s2 + $0x180] sm:$0xf]
      %v3285 = vshrl.u32 %v3280, 16
      %v3287 = vrot.slane %v3285, 3
      %v3288 = vshll.u32 %v3280, 16
      %v3290 = vrot.slane %v3288, 4
      %v3291 = vor.u32 %v3287, %v3290
      %v3292 = vsel %vm1053, %v2345, %v3291
      %v3294 = vshrl.u32 %v3281, 16
      %v3296 = vrot.slane %v3294, 3
      %v3297 = vshll.u32 %v3281, 16
      %v3299 = vrot.slane %v3297, 4
      %v3300 = vor.u32 %v3296, %v3299
      %v3301 = vsel %vm1053, %v3291, %v3300
      %v3303 = vshrl.u32 %v3282, 16
      %v3305 = vrot.slane %v3303, 3
      %v3306 = vshll.u32 %v3282, 16
      %v3308 = vrot.slane %v3306, 4
      %v3309 = vor.u32 %v3305, %v3308
      %v3310 = vsel %vm1053, %v3300, %v3309
      %v3312 = vsel %vm522, %v3292, 0
      %v3315 = vsel %vm522, %v3301, 0
      %v3318 = vsel %vm522, %v3310, 0
      %v3321 = vsel %vm792, %v3283, 0
      %3323 = vmatprep.subr.bf16.mxu0 0
      %3324 = vmatpush1.bf16.msra.mxu0 %v3321
      %3325 = vmatprep.subr.bf16.mxu0 0
      %3326 = vmatpush1.bf16.msra.mxu0 0
      %3327 = vmatprep.subr.bf16.mxu0 0
      %3328 = vmatpush1.bf16.msra.mxu0 0
      %3329 = vmatprep.subr.bf16.mxu0 0
      %3330 = vmatpush1.bf16.msra.mxu0 0
      %3331 = vmatprep.subr.bf16.mxu0 0
      %3332 = vmatpush1.bf16.msra.mxu0 0
      %3333 = vmatprep.subr.bf16.mxu0 0
      %3334 = vmatpush1.bf16.msra.mxu0 0
      %3335 = vmatprep.subr.bf16.mxu0 0
      %3336 = vmatpush1.bf16.msra.mxu0 0
      %3337 = vmatprep.subr.bf16.mxu0 0
      %3338 = vmatpush1.bf16.msra.mxu0 0
      %3339 = vmatprep.subr.bf16.mxu0 0
      %3340 = vmatpush1.bf16.msra.mxu0 0
      %3341 = vmatprep.subr.bf16.mxu0 0
      %3342 = vmatpush1.bf16.msra.mxu0 0
      %3343 = vmatprep.subr.bf16.mxu0 0
      %3344 = vmatpush1.bf16.msra.mxu0 0
      %3345 = vmatprep.subr.bf16.mxu0 0
      %3346 = vmatpush1.bf16.msra.mxu0 0
      %3347 = vmatprep.subr.bf16.mxu0 0
      %3348 = vmatpush1.bf16.msra.mxu0 0
      %3349 = vmatprep.subr.bf16.mxu0 0
      %3350 = vmatpush1.bf16.msra.mxu0 0
      %3351 = vmatprep.subr.bf16.mxu0 0
      %3352 = vmatpush1.bf16.msra.mxu0 0
      %3353 = vmatprep.subr.bf16.mxu0 0
      %3354 = vmatpush1.bf16.msra.mxu0 0
      %3355 = vmatprep.mubr.bf16.mxu0 0
      %3356 = vmatmul.mubr.bf16.gmra.mrb[0].mxu0 %v1363
      %v3357 = vpop.f32.mrb[0].mxu0
      %v3358 = vadd.f32 0.0, %v3357
      %v3359 = vpop.f32.mrb[0].mxu0
      %v3360 = vpop.f32.mrb[0].mxu0
      %v3361 = vadd.f32 0.0, %v3360
      %v3362 = vpop.f32.mrb[0].mxu0
      %3363 = vmatprep.mubr.bf16.mxu0 0
      %3364 = vmatmul.mubr.bf16.gmra.mrb[0].mxu0 %v1366
      %v3365 = vpop.f32.mrb[0].mxu0
      %v3366 = vpop.f32.mrb[0].mxu0
      %v3367 = vpop.f32.mrb[0].mxu0
      %v3368 = vpop.f32.mrb[0].mxu0
      %3369 = vmatprep.mubr.bf16.mxu0 0
      %3370 = vmatmul.mubr.bf16.gmra.mrb[0].mxu0 %v1369
      %v3371 = vpop.f32.mrb[0].mxu0
      %v3372 = vadd.f32 0.0, %v3371
      %v3373 = vpop.f32.mrb[0].mxu0
      %v3374 = vpop.f32.mrb[0].mxu0
      %v3375 = vadd.f32 0.0, %v3374
      %v3376 = vpop.f32.mrb[0].mxu0
      %3377 = vmatprep.mubr.bf16.mxu0 0
      %3378 = vmatmul.mubr.bf16.gmra.mrb[0].mxu0 %v1372
      %v3379 = vpop.f32.mrb[0].mxu0
      %v3380 = vpop.f32.mrb[0].mxu0
      %v3381 = vpop.f32.mrb[0].mxu0
      %v3382 = vpop.f32.mrb[0].mxu0
      %3383 = vmatprep.mubr.bf16.mxu0 0
      %3384 = vmatmul.mubr.bf16.gmra.mrb[0].mxu0 %v1375
      %v3385 = vpop.f32.mrb[0].mxu0
      %v3386 = vadd.f32 0.0, %v3385
      %v3387 = vpop.f32.mrb[0].mxu0
      %v3388 = vpop.f32.mrb[0].mxu0
      %v3389 = vadd.f32 0.0, %v3388
      %v3390 = vpop.f32.mrb[0].mxu0
      %3391 = vmatprep.mubr.bf16.mxu0 0
      %3392 = vmatmul.mubr.bf16.gmra.mrb[0].mxu0 %v1378
      %v3393 = vpop.f32.mrb[0].mxu0
      %v3394 = vpop.f32.mrb[0].mxu0
      %v3395 = vpop.f32.mrb[0].mxu0
      %v3396 = vpop.f32.mrb[0].mxu0
      %3397 = vmatprep.mubr.bf16.mxu0 0
      %3398 = vmatmul.mubr.bf16.gmra.mrb[0].mxu0 %v1381
      %v3399 = vpop.f32.mrb[0].mxu0
      %v3400 = vadd.f32 0.0, %v3399
      %v3401 = vpop.f32.mrb[0].mxu0
      %v3402 = vpop.f32.mrb[0].mxu0
      %v3403 = vadd.f32 0.0, %v3402
      %v3404 = vpop.f32.mrb[0].mxu0
      %3405 = vmatprep.mubr.bf16.mxu0 0
      %3406 = vmatmul.mubr.bf16.gmra.mrb[0].mxu0 %v1384
      %v3407 = vpop.f32.mrb[0].mxu0
      %v3408 = vpop.f32.mrb[0].mxu0
      %v3409 = vpop.f32.mrb[0].mxu0
      %v3410 = vpop.f32.mrb[0].mxu0
      %3411 = vmatprep.mubr.bf16.mxu0 0
      %3412 = vmatmul.mubr.bf16.gmra.mrb[0].mxu0 %v1387
      %v3413 = vpop.f32.mrb[0].mxu0
      %v3414 = vadd.f32 0.0, %v3413
      %v3415 = vpop.f32.mrb[0].mxu0
      %v3416 = vpop.f32.mrb[0].mxu0
      %v3417 = vadd.f32 0.0, %v3416
      %v3418 = vpop.f32.mrb[0].mxu0
      %3419 = vmatprep.mubr.bf16.mxu0 0
      %3420 = vmatmul.mubr.bf16.gmra.mrb[0].mxu0 %v1390
      %v3421 = vpop.f32.mrb[0].mxu0
      %v3422 = vpop.f32.mrb[0].mxu0
      %v3423 = vpop.f32.mrb[0].mxu0
      %v3424 = vpop.f32.mrb[0].mxu0
      %3425 = vmatprep.mubr.bf16.mxu0 0
      %3426 = vmatmul.mubr.bf16.gmra.mrb[0].mxu0 %v1393
      %v3427 = vpop.f32.mrb[0].mxu0
      %v3428 = vadd.f32 0.0, %v3427
      %v3429 = vpop.f32.mrb[0].mxu0
      %v3430 = vpop.f32.mrb[0].mxu0
      %v3431 = vadd.f32 0.0, %v3430
      %v3432 = vpop.f32.mrb[0].mxu0
      %3433 = vmatprep.mubr.bf16.mxu0 0
      %3434 = vmatmul.mubr.bf16.gmra.mrb[0].mxu0 %v1396
      %v3435 = vpop.f32.mrb[0].mxu0
      %v3436 = vpop.f32.mrb[0].mxu0
      %v3437 = vpop.f32.mrb[0].mxu0
      %v3438 = vpop.f32.mrb[0].mxu0
      %3439 = vmatprep.mubr.bf16.mxu0 0
      %3440 = vmatmul.mubr.bf16.gmra.mrb[0].mxu0 %v1399
      %v3441 = vpop.f32.mrb[0].mxu0
      %v3442 = vadd.f32 0.0, %v3441
      %v3443 = vpop.f32.mrb[0].mxu0
      %v3444 = vpop.f32.mrb[0].mxu0
      %v3445 = vadd.f32 0.0, %v3444
      %v3446 = vpop.f32.mrb[0].mxu0
      %3447 = vmatprep.mubr.bf16.mxu0 0
      %3448 = vmatmul.mubr.bf16.gmra.mrb[0].mxu0 %v1402
      %v3449 = vpop.f32.mrb[0].mxu0
      %v3450 = vpop.f32.mrb[0].mxu0
      %v3451 = vpop.f32.mrb[0].mxu0
      %v3452 = vpop.f32.mrb[0].mxu0
      %3453 = vmatprep.mubr.bf16.mxu0 0
      %3454 = vmatmul.mubr.bf16.gmra.mrb[0].mxu0 %v1405
      %v3455 = vpop.f32.mrb[0].mxu0
      %v3456 = vadd.f32 0.0, %v3455
      %v3457 = vpop.f32.mrb[0].mxu0
      %v3458 = vpop.f32.mrb[0].mxu0
      %v3459 = vadd.f32 0.0, %v3458
      %v3460 = vpop.f32.mrb[0].mxu0
      %3461 = vmatprep.mubr.bf16.mxu0 0
      %3462 = vmatmul.mubr.bf16.gmra.mrb[0].mxu0 %v1408
      %v3463 = vpop.f32.mrb[0].mxu0
      %v3464 = vpop.f32.mrb[0].mxu0
      %v3465 = vpop.f32.mrb[0].mxu0
      %v3466 = vpop.f32.mrb[0].mxu0
      %3467 = vmatprep.mubr.bf16.mxu0 0
      %3468 = vmatmul.mubr.bf16.gmra.mrb[0].mxu0 %v1411
      %v3469 = vpop.f32.mrb[0].mxu0
      %v3470 = vadd.f32 0.0, %v3469
      %v3471 = vpop.f32.mrb[0].mxu0
      %v3472 = vpop.f32.mrb[0].mxu0
      %v3473 = vadd.f32 0.0, %v3472
      %v3474 = vpop.f32.mrb[0].mxu0
      %3475 = vmatprep.mubr.bf16.mxu0 0
      %3476 = vmatmul.mubr.bf16.gmra.mrb[0].mxu0 %v1414
      %v3477 = vpop.f32.mrb[0].mxu0
      %v3478 = vpop.f32.mrb[0].mxu0
      %v3479 = vpop.f32.mrb[0].mxu0
      %v3480 = vpop.f32.mrb[0].mxu0
      %3481 = vmatprep.mubr.bf16.mxu0 0
      %3482 = vmatmul.mubr.bf16.gmra.mrb[0].mxu0 %v1417
      %v3483 = vpop.f32.mrb[0].mxu0
      %v3484 = vadd.f32 0.0, %v3483
      %v3485 = vpop.f32.mrb[0].mxu0
      %v3486 = vpop.f32.mrb[0].mxu0
      %v3487 = vadd.f32 0.0, %v3486
      %v3488 = vpop.f32.mrb[0].mxu0
      %3489 = vmatprep.mubr.bf16.mxu0 0
      %3490 = vmatmul.mubr.bf16.gmra.mrb[0].mxu0 %v1420
      %v3491 = vpop.f32.mrb[0].mxu0
      %v3492 = vpop.f32.mrb[0].mxu0
      %v3493 = vpop.f32.mrb[0].mxu0
      %v3494 = vpop.f32.mrb[0].mxu0
      %3495 = vmatprep.mubr.bf16.mxu0 0
      %3496 = vmatmul.mubr.bf16.gmra.mrb[0].mxu0 %v1423
      %v3497 = vpop.f32.mrb[0].mxu0
      %v3498 = vadd.f32 0.0, %v3497
      %v3499 = vpop.f32.mrb[0].mxu0
      %v3500 = vpop.f32.mrb[0].mxu0
      %v3501 = vadd.f32 0.0, %v3500
      %v3502 = vpop.f32.mrb[0].mxu0
      %3503 = vmatprep.mubr.bf16.mxu0 0
      %3504 = vmatmul.mubr.bf16.gmra.mrb[0].mxu0 %v1426
      %v3505 = vpop.f32.mrb[0].mxu0
      %v3506 = vpop.f32.mrb[0].mxu0
      %v3507 = vpop.f32.mrb[0].mxu0
      %v3508 = vpop.f32.mrb[0].mxu0
      %3509 = vmatprep.mubr.bf16.mxu0 0
      %3510 = vmatmul.mubr.bf16.gmra.mrb[0].mxu0 %v1429
      %v3511 = vpop.f32.mrb[0].mxu0
      %v3512 = vadd.f32 0.0, %v3511
      %v3513 = vpop.f32.mrb[0].mxu0
      %v3514 = vpop.f32.mrb[0].mxu0
      %v3515 = vadd.f32 0.0, %v3514
      %v3516 = vpop.f32.mrb[0].mxu0
      %3517 = vmatprep.mubr.bf16.mxu0 0
      %3518 = vmatmul.mubr.bf16.gmra.mrb[0].mxu0 %v1432
      %v3519 = vpop.f32.mrb[0].mxu0
      %v3520 = vpop.f32.mrb[0].mxu0
      %v3521 = vpop.f32.mrb[0].mxu0
      %v3522 = vpop.f32.mrb[0].mxu0
      %3523 = vmatprep.mubr.bf16.mxu0 0
      %3524 = vmatmul.mubr.bf16.gmra.mrb[0].mxu0 %v1435
      %v3525 = vpop.f32.mrb[0].mxu0
      %v3526 = vadd.f32 0.0, %v3525
      %v3527 = vpop.f32.mrb[0].mxu0
      %v3528 = vpop.f32.mrb[0].mxu0
      %v3529 = vadd.f32 0.0, %v3528
      %v3530 = vpop.f32.mrb[0].mxu0
      %3531 = vmatprep.mubr.bf16.mxu0 0
      %3532 = vmatmul.mubr.bf16.gmra.mrb[0].mxu0 %v1438
      %v3533 = vpop.f32.mrb[0].mxu0
      %v3534 = vpop.f32.mrb[0].mxu0
      %v3535 = vpop.f32.mrb[0].mxu0
      %v3536 = vpop.f32.mrb[0].mxu0
      %3537 = vmatprep.mubr.bf16.mxu0 0
      %3538 = vmatmul.mubr.bf16.gmra.mrb[0].mxu0 %v1441
      %v3539 = vpop.f32.mrb[0].mxu0
      %v3540 = vadd.f32 0.0, %v3539
      %v3541 = vpop.f32.mrb[0].mxu0
      %v3542 = vpop.f32.mrb[0].mxu0
      %v3543 = vadd.f32 0.0, %v3542
      %v3544 = vpop.f32.mrb[0].mxu0
      %3545 = vmatprep.mubr.bf16.mxu0 0
      %3546 = vmatmul.mubr.bf16.gmra.mrb[0].mxu0 %v2357
      %v3547 = vpop.f32.mrb[0].mxu0
      %v3548 = vpop.f32.mrb[0].mxu0
      %v3549 = vpop.f32.mrb[0].mxu0
      %v3550 = vpop.f32.mrb[0].mxu0
      %3551 = vmatprep.mubr.bf16.mxu0 0
      %3552 = vmatmul.mubr.bf16.gmra.mrb[0].mxu0 %v2360
      %v3553 = vpop.f32.mrb[0].mxu0
      %v3554 = vadd.f32 0.0, %v3553
      %v3555 = vpop.f32.mrb[0].mxu0
      %v3556 = vpop.f32.mrb[0].mxu0
      %v3557 = vadd.f32 0.0, %v3556
      %v3558 = vpop.f32.mrb[0].mxu0
      %3559 = vmatprep.mubr.bf16.mxu0 0
      %3560 = vmatmul.mubr.bf16.gmra.mrb[0].mxu0 %v3312
      %v3561 = vpop.f32.mrb[0].mxu0
      %v3562 = vpop.f32.mrb[0].mxu0
      %v3563 = vpop.f32.mrb[0].mxu0
      %v3564 = vpop.f32.mrb[0].mxu0
      %3565 = vmatprep.mubr.bf16.mxu0 0
      %3566 = vmatmul.mubr.bf16.gmra.mrb[0].mxu0 %v3315
      %v3567 = vpop.f32.mrb[0].mxu0
      %v3568 = vadd.f32 0.0, %v3567
      %v3569 = vpop.f32.mrb[0].mxu0
      %v3570 = vpop.f32.mrb[0].mxu0
      %v3571 = vadd.f32 0.0, %v3570
      %v3572 = vpop.f32.mrb[0].mxu0
      %3573 = vmatprep.mubr.bf16.mxu0 0
      %3574 = vmatmul.mubr.bf16.gmra.mrb[0].mxu0 %v3318
      %v3575 = vpop.f32.mrb[0].mxu0
      %v3576 = vpop.f32.mrb[0].mxu0
      %v3577 = vpop.f32.mrb[0].mxu0
      %v3578 = vpop.f32.mrb[0].mxu0
      %3579 = vdwg.mxu0
      %v3580 = vadd.f32 %v3248, %v3358
      %v3581 = vadd.f32 %v3249, %v3361
      %v3582 = vadd.f32 %v3250, %v3372
      %v3583 = vadd.f32 %v3251, %v3375
      %v3584 = vadd.f32 %v3252, %v3386
      %v3585 = vadd.f32 %v3253, %v3389
      %v3586 = vadd.f32 %v3254, %v3400
      %v3587 = vadd.f32 %v3255, %v3403
      %v3588 = vadd.f32 %v3256, %v3414
      %v3589 = vadd.f32 %v3257, %v3417
      %v3590 = vadd.f32 %v3258, %v3428
      %v3591 = vadd.f32 %v3259, %v3431
      %v3592 = vadd.f32 %v3260, %v3442
      %v3593 = vadd.f32 %v3261, %v3445
      %v3594 = vadd.f32 %v3262, %v3456
      %v3595 = vadd.f32 %v3263, %v3459
      %v3596 = vadd.f32 %v3264, %v3470
      %v3597 = vadd.f32 %v3265, %v3473
      %v3598 = vadd.f32 %v3266, %v3484
      %v3599 = vadd.f32 %v3267, %v3487
      %v3600 = vadd.f32 %v3268, %v3498
      %v3601 = vadd.f32 %v3269, %v3501
      %v3602 = vadd.f32 %v3270, %v3512
      %v3603 = vadd.f32 %v3271, %v3515
      %v3604 = vadd.f32 %v3272, %v3526
      %v3605 = vadd.f32 %v3273, %v3529
      %v3606 = vadd.f32 %v3274, %v3540
      %v3607 = vadd.f32 %v3275, %v3543
      %v3608 = vadd.f32 %v3276, %v3554
      %v3609 = vadd.f32 %v3277, %v3557
      %v3610 = vadd.f32 %v3278, %v3568
      %v3611 = vadd.f32 %v3279, %v3571
      %v3612 = vpack.c.bf16 %v625, %v624
      %v3613 = vpack.c.bf16 %v627, %v626
      %v3614 = vld [vmem:[%s2 + $0x1c0] sm:$0xf]
      %v3616 = vsel %vm522, %v3612, 0
      %v3619 = vsel %vm522, %v3613, 0
      %v3622 = vsel %vm792, %v3614, 0
      %3624 = vmatprep.subr.bf16.mxu0 0
      %3625 = vmatpush1.bf16.msra.mxu0 %v3622
      %3626 = vmatprep.subr.bf16.mxu0 0
      %3627 = vmatpush1.bf16.msra.mxu0 0
      %3628 = vmatprep.subr.bf16.mxu0 0
      %3629 = vmatpush1.bf16.msra.mxu0 0
      %3630 = vmatprep.subr.bf16.mxu0 0
      %3631 = vmatpush1.bf16.msra.mxu0 0
      %3632 = vmatprep.subr.bf16.mxu0 0
      %3633 = vmatpush1.bf16.msra.mxu0 0
      %3634 = vmatprep.subr.bf16.mxu0 0
      %3635 = vmatpush1.bf16.msra.mxu0 0
      %3636 = vmatprep.subr.bf16.mxu0 0
      %3637 = vmatpush1.bf16.msra.mxu0 0
      %3638 = vmatprep.subr.bf16.mxu0 0
      %3639 = vmatpush1.bf16.msra.mxu0 0
      %3640 = vmatprep.subr.bf16.mxu0 0
      %3641 = vmatpush1.bf16.msra.mxu0 0
      %3642 = vmatprep.subr.bf16.mxu0 0
      %3643 = vmatpush1.bf16.msra.mxu0 0
      %3644 = vmatprep.subr.bf16.mxu0 0
      %3645 = vmatpush1.bf16.msra.mxu0 0
      %3646 = vmatprep.subr.bf16.mxu0 0
      %3647 = vmatpush1.bf16.msra.mxu0 0
      %3648 = vmatprep.subr.bf16.mxu0 0
      %3649 = vmatpush1.bf16.msra.mxu0 0
      %3650 = vmatprep.subr.bf16.mxu0 0
      %3651 = vmatpush1.bf16.msra.mxu0 0
      %3652 = vmatprep.subr.bf16.mxu0 0
      %3653 = vmatpush1.bf16.msra.mxu0 0
      %3654 = vmatprep.subr.bf16.mxu0 0
      %3655 = vmatpush1.bf16.msra.mxu0 0
      %3656 = vmatprep.mubr.bf16.mxu0 0
      %3657 = vmatmul.mubr.bf16.gmra.mrb[0].mxu0 %v709
      %v3658 = vpop.f32.mrb[0].mxu0
      %v3659 = vadd.f32 0.0, %v3658
      %v3660 = vpop.f32.mrb[0].mxu0
      %v3661 = vpop.f32.mrb[0].mxu0
      %v3662 = vadd.f32 0.0, %v3661
      %v3663 = vpop.f32.mrb[0].mxu0
      %3664 = vmatprep.mubr.bf16.mxu0 0
      %3665 = vmatmul.mubr.bf16.gmra.mrb[0].mxu0 %v712
      %v3666 = vpop.f32.mrb[0].mxu0
      %v3667 = vpop.f32.mrb[0].mxu0
      %v3668 = vpop.f32.mrb[0].mxu0
      %v3669 = vpop.f32.mrb[0].mxu0
      %3670 = vmatprep.mubr.bf16.mxu0 0
      %3671 = vmatmul.mubr.bf16.gmra.mrb[0].mxu0 %v715
      %v3672 = vpop.f32.mrb[0].mxu0
      %v3673 = vadd.f32 0.0, %v3672
      %v3674 = vpop.f32.mrb[0].mxu0
      %v3675 = vpop.f32.mrb[0].mxu0
      %v3676 = vadd.f32 0.0, %v3675
      %v3677 = vpop.f32.mrb[0].mxu0
      %3678 = vmatprep.mubr.bf16.mxu0 0
      %3679 = vmatmul.mubr.bf16.gmra.mrb[0].mxu0 %v718
      %v3680 = vpop.f32.mrb[0].mxu0
      %v3681 = vpop.f32.mrb[0].mxu0
      %v3682 = vpop.f32.mrb[0].mxu0
      %v3683 = vpop.f32.mrb[0].mxu0
      %3684 = vmatprep.mubr.bf16.mxu0 0
      %3685 = vmatmul.mubr.bf16.gmra.mrb[0].mxu0 %v721
      %v3686 = vpop.f32.mrb[0].mxu0
      %v3687 = vadd.f32 0.0, %v3686
      %v3688 = vpop.f32.mrb[0].mxu0
      %v3689 = vpop.f32.mrb[0].mxu0
      %v3690 = vadd.f32 0.0, %v3689
      %v3691 = vpop.f32.mrb[0].mxu0
      %3692 = vmatprep.mubr.bf16.mxu0 0
      %3693 = vmatmul.mubr.bf16.gmra.mrb[0].mxu0 %v724
      %v3694 = vpop.f32.mrb[0].mxu0
      %v3695 = vpop.f32.mrb[0].mxu0
      %v3696 = vpop.f32.mrb[0].mxu0
      %v3697 = vpop.f32.mrb[0].mxu0
      %3698 = vmatprep.mubr.bf16.mxu0 0
      %3699 = vmatmul.mubr.bf16.gmra.mrb[0].mxu0 %v727
      %v3700 = vpop.f32.mrb[0].mxu0
      %v3701 = vadd.f32 0.0, %v3700
      %v3702 = vpop.f32.mrb[0].mxu0
      %v3703 = vpop.f32.mrb[0].mxu0
      %v3704 = vadd.f32 0.0, %v3703
      %v3705 = vpop.f32.mrb[0].mxu0
      %3706 = vmatprep.mubr.bf16.mxu0 0
      %3707 = vmatmul.mubr.bf16.gmra.mrb[0].mxu0 %v730
      %v3708 = vpop.f32.mrb[0].mxu0
      %v3709 = vpop.f32.mrb[0].mxu0
      %v3710 = vpop.f32.mrb[0].mxu0
      %v3711 = vpop.f32.mrb[0].mxu0
      %3712 = vmatprep.mubr.bf16.mxu0 0
      %3713 = vmatmul.mubr.bf16.gmra.mrb[0].mxu0 %v733
      %v3714 = vpop.f32.mrb[0].mxu0
      %v3715 = vadd.f32 0.0, %v3714
      %v3716 = vpop.f32.mrb[0].mxu0
      %v3717 = vpop.f32.mrb[0].mxu0
      %v3718 = vadd.f32 0.0, %v3717
      %v3719 = vpop.f32.mrb[0].mxu0
      %3720 = vmatprep.mubr.bf16.mxu0 0
      %3721 = vmatmul.mubr.bf16.gmra.mrb[0].mxu0 %v736
      %v3722 = vpop.f32.mrb[0].mxu0
      %v3723 = vpop.f32.mrb[0].mxu0
      %v3724 = vpop.f32.mrb[0].mxu0
      %v3725 = vpop.f32.mrb[0].mxu0
      %3726 = vmatprep.mubr.bf16.mxu0 0
      %3727 = vmatmul.mubr.bf16.gmra.mrb[0].mxu0 %v739
      %v3728 = vpop.f32.mrb[0].mxu0
      %v3729 = vadd.f32 0.0, %v3728
      %v3730 = vpop.f32.mrb[0].mxu0
      %v3731 = vpop.f32.mrb[0].mxu0
      %v3732 = vadd.f32 0.0, %v3731
      %v3733 = vpop.f32.mrb[0].mxu0
      %3734 = vmatprep.mubr.bf16.mxu0 0
      %3735 = vmatmul.mubr.bf16.gmra.mrb[0].mxu0 %v742
      %v3736 = vpop.f32.mrb[0].mxu0
      %v3737 = vpop.f32.mrb[0].mxu0
      %v3738 = vpop.f32.mrb[0].mxu0
      %v3739 = vpop.f32.mrb[0].mxu0
      %3740 = vmatprep.mubr.bf16.mxu0 0
      %3741 = vmatmul.mubr.bf16.gmra.mrb[0].mxu0 %v745
      %v3742 = vpop.f32.mrb[0].mxu0
      %v3743 = vadd.f32 0.0, %v3742
      %v3744 = vpop.f32.mrb[0].mxu0
      %v3745 = vpop.f32.mrb[0].mxu0
      %v3746 = vadd.f32 0.0, %v3745
      %v3747 = vpop.f32.mrb[0].mxu0
      %3748 = vmatprep.mubr.bf16.mxu0 0
      %3749 = vmatmul.mubr.bf16.gmra.mrb[0].mxu0 %v748
      %v3750 = vpop.f32.mrb[0].mxu0
      %v3751 = vpop.f32.mrb[0].mxu0
      %v3752 = vpop.f32.mrb[0].mxu0
      %v3753 = vpop.f32.mrb[0].mxu0
      %3754 = vmatprep.mubr.bf16.mxu0 0
      %3755 = vmatmul.mubr.bf16.gmra.mrb[0].mxu0 %v751
      %v3756 = vpop.f32.mrb[0].mxu0
      %v3757 = vadd.f32 0.0, %v3756
      %v3758 = vpop.f32.mrb[0].mxu0
      %v3759 = vpop.f32.mrb[0].mxu0
      %v3760 = vadd.f32 0.0, %v3759
      %v3761 = vpop.f32.mrb[0].mxu0
      %3762 = vmatprep.mubr.bf16.mxu0 0
      %3763 = vmatmul.mubr.bf16.gmra.mrb[0].mxu0 %v754
      %v3764 = vpop.f32.mrb[0].mxu0
      %v3765 = vpop.f32.mrb[0].mxu0
      %v3766 = vpop.f32.mrb[0].mxu0
      %v3767 = vpop.f32.mrb[0].mxu0
      %3768 = vmatprep.mubr.bf16.mxu0 0
      %3769 = vmatmul.mubr.bf16.gmra.mrb[0].mxu0 %v757
      %v3770 = vpop.f32.mrb[0].mxu0
      %v3771 = vadd.f32 0.0, %v3770
      %v3772 = vpop.f32.mrb[0].mxu0
      %v3773 = vpop.f32.mrb[0].mxu0
      %v3774 = vadd.f32 0.0, %v3773
      %v3775 = vpop.f32.mrb[0].mxu0
      %3776 = vmatprep.mubr.bf16.mxu0 0
      %3777 = vmatmul.mubr.bf16.gmra.mrb[0].mxu0 %v760
      %v3778 = vpop.f32.mrb[0].mxu0
      %v3779 = vpop.f32.mrb[0].mxu0
      %v3780 = vpop.f32.mrb[0].mxu0
      %v3781 = vpop.f32.mrb[0].mxu0
      %3782 = vmatprep.mubr.bf16.mxu0 0
      %3783 = vmatmul.mubr.bf16.gmra.mrb[0].mxu0 %v763
      %v3784 = vpop.f32.mrb[0].mxu0
      %v3785 = vadd.f32 0.0, %v3784
      %v3786 = vpop.f32.mrb[0].mxu0
      %v3787 = vpop.f32.mrb[0].mxu0
      %v3788 = vadd.f32 0.0, %v3787
      %v3789 = vpop.f32.mrb[0].mxu0
      %3790 = vmatprep.mubr.bf16.mxu0 0
      %3791 = vmatmul.mubr.bf16.gmra.mrb[0].mxu0 %v766
      %v3792 = vpop.f32.mrb[0].mxu0
      %v3793 = vpop.f32.mrb[0].mxu0
      %v3794 = vpop.f32.mrb[0].mxu0
      %v3795 = vpop.f32.mrb[0].mxu0
      %3796 = vmatprep.mubr.bf16.mxu0 0
      %3797 = vmatmul.mubr.bf16.gmra.mrb[0].mxu0 %v769
      %v3798 = vpop.f32.mrb[0].mxu0
      %v3799 = vadd.f32 0.0, %v3798
      %v3800 = vpop.f32.mrb[0].mxu0
      %v3801 = vpop.f32.mrb[0].mxu0
      %v3802 = vadd.f32 0.0, %v3801
      %v3803 = vpop.f32.mrb[0].mxu0
      %3804 = vmatprep.mubr.bf16.mxu0 0
      %3805 = vmatmul.mubr.bf16.gmra.mrb[0].mxu0 %v772
      %v3806 = vpop.f32.mrb[0].mxu0
      %v3807 = vpop.f32.mrb[0].mxu0
      %v3808 = vpop.f32.mrb[0].mxu0
      %v3809 = vpop.f32.mrb[0].mxu0
      %3810 = vmatprep.mubr.bf16.mxu0 0
      %3811 = vmatmul.mubr.bf16.gmra.mrb[0].mxu0 %v775
      %v3812 = vpop.f32.mrb[0].mxu0
      %v3813 = vadd.f32 0.0, %v3812
      %v3814 = vpop.f32.mrb[0].mxu0
      %v3815 = vpop.f32.mrb[0].mxu0
      %v3816 = vadd.f32 0.0, %v3815
      %v3817 = vpop.f32.mrb[0].mxu0
      %3818 = vmatprep.mubr.bf16.mxu0 0
      %3819 = vmatmul.mubr.bf16.gmra.mrb[0].mxu0 %v778
      %v3820 = vpop.f32.mrb[0].mxu0
      %v3821 = vpop.f32.mrb[0].mxu0
      %v3822 = vpop.f32.mrb[0].mxu0
      %v3823 = vpop.f32.mrb[0].mxu0
      %3824 = vmatprep.mubr.bf16.mxu0 0
      %3825 = vmatmul.mubr.bf16.gmra.mrb[0].mxu0 %v781
      %v3826 = vpop.f32.mrb[0].mxu0
      %v3827 = vadd.f32 0.0, %v3826
      %v3828 = vpop.f32.mrb[0].mxu0
      %v3829 = vpop.f32.mrb[0].mxu0
      %v3830 = vadd.f32 0.0, %v3829
      %v3831 = vpop.f32.mrb[0].mxu0
      %3832 = vmatprep.mubr.bf16.mxu0 0
      %3833 = vmatmul.mubr.bf16.gmra.mrb[0].mxu0 %v784
      %v3834 = vpop.f32.mrb[0].mxu0
      %v3835 = vpop.f32.mrb[0].mxu0
      %v3836 = vpop.f32.mrb[0].mxu0
      %v3837 = vpop.f32.mrb[0].mxu0
      %3838 = vmatprep.mubr.bf16.mxu0 0
      %3839 = vmatmul.mubr.bf16.gmra.mrb[0].mxu0 %v787
      %v3840 = vpop.f32.mrb[0].mxu0
      %v3841 = vadd.f32 0.0, %v3840
      %v3842 = vpop.f32.mrb[0].mxu0
      %v3843 = vpop.f32.mrb[0].mxu0
      %v3844 = vadd.f32 0.0, %v3843
      %v3845 = vpop.f32.mrb[0].mxu0
      %3846 = vmatprep.mubr.bf16.mxu0 0
      %3847 = vmatmul.mubr.bf16.gmra.mrb[0].mxu0 %v790
      %v3848 = vpop.f32.mrb[0].mxu0
      %v3849 = vpop.f32.mrb[0].mxu0
      %v3850 = vpop.f32.mrb[0].mxu0
      %v3851 = vpop.f32.mrb[0].mxu0
      %3852 = vmatprep.mubr.bf16.mxu0 0
      %3853 = vmatmul.mubr.bf16.gmra.mrb[0].mxu0 %v2661
      %v3854 = vpop.f32.mrb[0].mxu0
      %v3855 = vadd.f32 0.0, %v3854
      %v3856 = vpop.f32.mrb[0].mxu0
      %v3857 = vpop.f32.mrb[0].mxu0
      %v3858 = vadd.f32 0.0, %v3857
      %v3859 = vpop.f32.mrb[0].mxu0
      %3860 = vmatprep.mubr.bf16.mxu0 0
      %3861 = vmatmul.mubr.bf16.gmra.mrb[0].mxu0 %v2664
      %v3862 = vpop.f32.mrb[0].mxu0
      %v3863 = vpop.f32.mrb[0].mxu0
      %v3864 = vpop.f32.mrb[0].mxu0
      %v3865 = vpop.f32.mrb[0].mxu0
      %3866 = vmatprep.mubr.bf16.mxu0 0
      %3867 = vmatmul.mubr.bf16.gmra.mrb[0].mxu0 %v3616
      %v3868 = vpop.f32.mrb[0].mxu0
      %v3869 = vadd.f32 0.0, %v3868
      %v3870 = vpop.f32.mrb[0].mxu0
      %v3871 = vpop.f32.mrb[0].mxu0
      %v3872 = vadd.f32 0.0, %v3871
      %v3873 = vpop.f32.mrb[0].mxu0
      %3874 = vmatprep.mubr.bf16.mxu0 0
      %3875 = vmatmul.mubr.bf16.gmra.mrb[0].mxu0 %v3619
      %v3876 = vpop.f32.mrb[0].mxu0
      %v3877 = vpop.f32.mrb[0].mxu0
      %v3878 = vpop.f32.mrb[0].mxu0
      %v3879 = vpop.f32.mrb[0].mxu0
      %3880 = vdwg.mxu0
      %v3881 = vadd.f32 %v3580, %v3659
      %v3882 = vadd.f32 %v3581, %v3662
      %v3883 = vadd.f32 %v3582, %v3673
      %v3884 = vadd.f32 %v3583, %v3676
      %v3885 = vadd.f32 %v3584, %v3687
      %v3886 = vadd.f32 %v3585, %v3690
      %v3887 = vadd.f32 %v3586, %v3701
      %v3888 = vadd.f32 %v3587, %v3704
      %v3889 = vadd.f32 %v3588, %v3715
      %v3890 = vadd.f32 %v3589, %v3718
      %v3891 = vadd.f32 %v3590, %v3729
      %v3892 = vadd.f32 %v3591, %v3732
      %v3893 = vadd.f32 %v3592, %v3743
      %v3894 = vadd.f32 %v3593, %v3746
      %v3895 = vadd.f32 %v3594, %v3757
      %v3896 = vadd.f32 %v3595, %v3760
      %v3897 = vadd.f32 %v3596, %v3771
      %v3898 = vadd.f32 %v3597, %v3774
      %v3899 = vadd.f32 %v3598, %v3785
      %v3900 = vadd.f32 %v3599, %v3788
      %v3901 = vadd.f32 %v3600, %v3799
      %v3902 = vadd.f32 %v3601, %v3802
      %v3903 = vadd.f32 %v3602, %v3813
      %v3904 = vadd.f32 %v3603, %v3816
      %v3905 = vadd.f32 %v3604, %v3827
      %v3906 = vadd.f32 %v3605, %v3830
      %v3907 = vadd.f32 %v3606, %v3841
      %v3908 = vadd.f32 %v3607, %v3844
      %v3909 = vadd.f32 %v3608, %v3855
      %v3910 = vadd.f32 %v3609, %v3858
      %v3911 = vadd.f32 %v3610, %v3869
      %v3912 = vadd.f32 %v3611, %v3872
      %v3913 = vpack.c.bf16 %v628, %v628
      %v3914 = vld [vmem:[%s2 + $0x200] sm:$0xf]
      %v3915 = vshll.u32 %v3612, 16
      %v3917 = vrot.slane %v3915, 1
      %v3918 = vsel %vm1708, %v2973, %v3917
      %v3919 = vshrl.u32 %v3612, 16
      %v3921 = vor.u32 %v3919, %v3917
      %v3922 = vshll.u32 %v3613, 16
      %v3924 = vrot.slane %v3922, 1
      %v3925 = vsel %vm1708, %v3921, %v3924
      %v3926 = vshrl.u32 %v3613, 16
      %v3928 = vor.u32 %v3926, %v3924
      %v3930 = vshll.u32 %v3913, 16
      %v3932 = vrot.slane %v3930, 1
      %v3933 = vsel %vm1708, %v3928, %v3932
      %v3935 = vsel %vm522, %v3918, 0
      %v3938 = vsel %vm522, %v3925, 0
      %v3941 = vsel %vm522, %v3933, 0
      %v3944 = vsel %vm792, %v3914, 0
      %3946 = vmatprep.subr.bf16.mxu0 0
      %3947 = vmatpush1.bf16.msra.mxu0 %v3944
      %3948 = vmatprep.subr.bf16.mxu0 0
      %3949 = vmatpush1.bf16.msra.mxu0 0
      %3950 = vmatprep.subr.bf16.mxu0 0
      %3951 = vmatpush1.bf16.msra.mxu0 0
      %3952 = vmatprep.subr.bf16.mxu0 0
      %3953 = vmatpush1.bf16.msra.mxu0 0
      %3954 = vmatprep.subr.bf16.mxu0 0
      %3955 = vmatpush1.bf16.msra.mxu0 0
      %3956 = vmatprep.subr.bf16.mxu0 0
      %3957 = vmatpush1.bf16.msra.mxu0 0
      %3958 = vmatprep.subr.bf16.mxu0 0
      %3959 = vmatpush1.bf16.msra.mxu0 0
      %3960 = vmatprep.subr.bf16.mxu0 0
      %3961 = vmatpush1.bf16.msra.mxu0 0
      %3962 = vmatprep.subr.bf16.mxu0 0
      %3963 = vmatpush1.bf16.msra.mxu0 0
      %3964 = vmatprep.subr.bf16.mxu0 0
      %3965 = vmatpush1.bf16.msra.mxu0 0
      %3966 = vmatprep.subr.bf16.mxu0 0
      %3967 = vmatpush1.bf16.msra.mxu0 0
      %3968 = vmatprep.subr.bf16.mxu0 0
      %3969 = vmatpush1.bf16.msra.mxu0 0
      %3970 = vmatprep.subr.bf16.mxu0 0
      %3971 = vmatpush1.bf16.msra.mxu0 0
      %3972 = vmatprep.subr.bf16.mxu0 0
      %3973 = vmatpush1.bf16.msra.mxu0 0
      %3974 = vmatprep.subr.bf16.mxu0 0
      %3975 = vmatpush1.bf16.msra.mxu0 0
      %3976 = vmatprep.subr.bf16.mxu0 0
      %3977 = vmatpush1.bf16.msra.mxu0 0
      %3978 = vmatprep.mubr.bf16.mxu0 0
      %3979 = vmatmul.mubr.bf16.gmra.mrb[0].mxu0 %v1950
      %v3980 = vpop.f32.mrb[0].mxu0
      %v3981 = vadd.f32 0.0, %v3980
      %v3982 = vpop.f32.mrb[0].mxu0
      %v3983 = vpop.f32.mrb[0].mxu0
      %v3984 = vadd.f32 0.0, %v3983
      %v3985 = vpop.f32.mrb[0].mxu0
      %3986 = vmatprep.mubr.bf16.mxu0 0
      %3987 = vmatmul.mubr.bf16.gmra.mrb[0].mxu0 %v1953
      %v3988 = vpop.f32.mrb[0].mxu0
      %v3989 = vpop.f32.mrb[0].mxu0
      %v3990 = vpop.f32.mrb[0].mxu0
      %v3991 = vpop.f32.mrb[0].mxu0
      %3992 = vmatprep.mubr.bf16.mxu0 0
      %3993 = vmatmul.mubr.bf16.gmra.mrb[0].mxu0 %v1956
      %v3994 = vpop.f32.mrb[0].mxu0
      %v3995 = vadd.f32 0.0, %v3994
      %v3996 = vpop.f32.mrb[0].mxu0
      %v3997 = vpop.f32.mrb[0].mxu0
      %v3998 = vadd.f32 0.0, %v3997
      %v3999 = vpop.f32.mrb[0].mxu0
      %4000 = vmatprep.mubr.bf16.mxu0 0
      %4001 = vmatmul.mubr.bf16.gmra.mrb[0].mxu0 %v1959
      %v4002 = vpop.f32.mrb[0].mxu0
      %v4003 = vpop.f32.mrb[0].mxu0
      %v4004 = vpop.f32.mrb[0].mxu0
      %v4005 = vpop.f32.mrb[0].mxu0
      %4006 = vmatprep.mubr.bf16.mxu0 0
      %4007 = vmatmul.mubr.bf16.gmra.mrb[0].mxu0 %v1962
      %v4008 = vpop.f32.mrb[0].mxu0
      %v4009 = vadd.f32 0.0, %v4008
      %v4010 = vpop.f32.mrb[0].mxu0
      %v4011 = vpop.f32.mrb[0].mxu0
      %v4012 = vadd.f32 0.0, %v4011
      %v4013 = vpop.f32.mrb[0].mxu0
      %4014 = vmatprep.mubr.bf16.mxu0 0
      %4015 = vmatmul.mubr.bf16.gmra.mrb[0].mxu0 %v1965
      %v4016 = vpop.f32.mrb[0].mxu0
      %v4017 = vpop.f32.mrb[0].mxu0
      %v4018 = vpop.f32.mrb[0].mxu0
      %v4019 = vpop.f32.mrb[0].mxu0
      %4020 = vmatprep.mubr.bf16.mxu0 0
      %4021 = vmatmul.mubr.bf16.gmra.mrb[0].mxu0 %v1968
      %v4022 = vpop.f32.mrb[0].mxu0
      %v4023 = vadd.f32 0.0, %v4022
      %v4024 = vpop.f32.mrb[0].mxu0
      %v4025 = vpop.f32.mrb[0].mxu0
      %v4026 = vadd.f32 0.0, %v4025
      %v4027 = vpop.f32.mrb[0].mxu0
      %4028 = vmatprep.mubr.bf16.mxu0 0
      %4029 = vmatmul.mubr.bf16.gmra.mrb[0].mxu0 %v1971
      %v4030 = vpop.f32.mrb[0].mxu0
      %v4031 = vpop.f32.mrb[0].mxu0
      %v4032 = vpop.f32.mrb[0].mxu0
      %v4033 = vpop.f32.mrb[0].mxu0
      %4034 = vmatprep.mubr.bf16.mxu0 0
      %4035 = vmatmul.mubr.bf16.gmra.mrb[0].mxu0 %v1974
      %v4036 = vpop.f32.mrb[0].mxu0
      %v4037 = vadd.f32 0.0, %v4036
      %v4038 = vpop.f32.mrb[0].mxu0
      %v4039 = vpop.f32.mrb[0].mxu0
      %v4040 = vadd.f32 0.0, %v4039
      %v4041 = vpop.f32.mrb[0].mxu0
      %4042 = vmatprep.mubr.bf16.mxu0 0
      %4043 = vmatmul.mubr.bf16.gmra.mrb[0].mxu0 %v1977
      %v4044 = vpop.f32.mrb[0].mxu0
      %v4045 = vpop.f32.mrb[0].mxu0
      %v4046 = vpop.f32.mrb[0].mxu0
      %v4047 = vpop.f32.mrb[0].mxu0
      %4048 = vmatprep.mubr.bf16.mxu0 0
      %4049 = vmatmul.mubr.bf16.gmra.mrb[0].mxu0 %v1980
      %v4050 = vpop.f32.mrb[0].mxu0
      %v4051 = vadd.f32 0.0, %v4050
      %v4052 = vpop.f32.mrb[0].mxu0
      %v4053 = vpop.f32.mrb[0].mxu0
      %v4054 = vadd.f32 0.0, %v4053
      %v4055 = vpop.f32.mrb[0].mxu0
      %4056 = vmatprep.mubr.bf16.mxu0 0
      %4057 = vmatmul.mubr.bf16.gmra.mrb[0].mxu0 %v1983
      %v4058 = vpop.f32.mrb[0].mxu0
      %v4059 = vpop.f32.mrb[0].mxu0
      %v4060 = vpop.f32.mrb[0].mxu0
      %v4061 = vpop.f32.mrb[0].mxu0
      %4062 = vmatprep.mubr.bf16.mxu0 0
      %4063 = vmatmul.mubr.bf16.gmra.mrb[0].mxu0 %v1986
      %v4064 = vpop.f32.mrb[0].mxu0
      %v4065 = vadd.f32 0.0, %v4064
      %v4066 = vpop.f32.mrb[0].mxu0
      %v4067 = vpop.f32.mrb[0].mxu0
      %v4068 = vadd.f32 0.0, %v4067
      %v4069 = vpop.f32.mrb[0].mxu0
      %4070 = vmatprep.mubr.bf16.mxu0 0
      %4071 = vmatmul.mubr.bf16.gmra.mrb[0].mxu0 %v1989
      %v4072 = vpop.f32.mrb[0].mxu0
      %v4073 = vpop.f32.mrb[0].mxu0
      %v4074 = vpop.f32.mrb[0].mxu0
      %v4075 = vpop.f32.mrb[0].mxu0
      %4076 = vmatprep.mubr.bf16.mxu0 0
      %4077 = vmatmul.mubr.bf16.gmra.mrb[0].mxu0 %v1992
      %v4078 = vpop.f32.mrb[0].mxu0
      %v4079 = vadd.f32 0.0, %v4078
      %v4080 = vpop.f32.mrb[0].mxu0
      %v4081 = vpop.f32.mrb[0].mxu0
      %v4082 = vadd.f32 0.0, %v4081
      %v4083 = vpop.f32.mrb[0].mxu0
      %4084 = vmatprep.mubr.bf16.mxu0 0
      %4085 = vmatmul.mubr.bf16.gmra.mrb[0].mxu0 %v1995
      %v4086 = vpop.f32.mrb[0].mxu0
      %v4087 = vpop.f32.mrb[0].mxu0
      %v4088 = vpop.f32.mrb[0].mxu0
      %v4089 = vpop.f32.mrb[0].mxu0
      %4090 = vmatprep.mubr.bf16.mxu0 0
      %4091 = vmatmul.mubr.bf16.gmra.mrb[0].mxu0 %v1998
      %v4092 = vpop.f32.mrb[0].mxu0
      %v4093 = vadd.f32 0.0, %v4092
      %v4094 = vpop.f32.mrb[0].mxu0
      %v4095 = vpop.f32.mrb[0].mxu0
      %v4096 = vadd.f32 0.0, %v4095
      %v4097 = vpop.f32.mrb[0].mxu0
      %4098 = vmatprep.mubr.bf16.mxu0 0
      %4099 = vmatmul.mubr.bf16.gmra.mrb[0].mxu0 %v2001
      %v4100 = vpop.f32.mrb[0].mxu0
      %v4101 = vpop.f32.mrb[0].mxu0
      %v4102 = vpop.f32.mrb[0].mxu0
      %v4103 = vpop.f32.mrb[0].mxu0
      %4104 = vmatprep.mubr.bf16.mxu0 0
      %4105 = vmatmul.mubr.bf16.gmra.mrb[0].mxu0 %v2004
      %v4106 = vpop.f32.mrb[0].mxu0
      %v4107 = vadd.f32 0.0, %v4106
      %v4108 = vpop.f32.mrb[0].mxu0
      %v4109 = vpop.f32.mrb[0].mxu0
      %v4110 = vadd.f32 0.0, %v4109
      %v4111 = vpop.f32.mrb[0].mxu0
      %4112 = vmatprep.mubr.bf16.mxu0 0
      %4113 = vmatmul.mubr.bf16.gmra.mrb[0].mxu0 %v2007
      %v4114 = vpop.f32.mrb[0].mxu0
      %v4115 = vpop.f32.mrb[0].mxu0
      %v4116 = vpop.f32.mrb[0].mxu0
      %v4117 = vpop.f32.mrb[0].mxu0
      %4118 = vmatprep.mubr.bf16.mxu0 0
      %4119 = vmatmul.mubr.bf16.gmra.mrb[0].mxu0 %v2010
      %v4120 = vpop.f32.mrb[0].mxu0
      %v4121 = vadd.f32 0.0, %v4120
      %v4122 = vpop.f32.mrb[0].mxu0
      %v4123 = vpop.f32.mrb[0].mxu0
      %v4124 = vadd.f32 0.0, %v4123
      %v4125 = vpop.f32.mrb[0].mxu0
      %4126 = vmatprep.mubr.bf16.mxu0 0
      %4127 = vmatmul.mubr.bf16.gmra.mrb[0].mxu0 %v2013
      %v4128 = vpop.f32.mrb[0].mxu0
      %v4129 = vpop.f32.mrb[0].mxu0
      %v4130 = vpop.f32.mrb[0].mxu0
      %v4131 = vpop.f32.mrb[0].mxu0
      %4132 = vmatprep.mubr.bf16.mxu0 0
      %4133 = vmatmul.mubr.bf16.gmra.mrb[0].mxu0 %v2016
      %v4134 = vpop.f32.mrb[0].mxu0
      %v4135 = vadd.f32 0.0, %v4134
      %v4136 = vpop.f32.mrb[0].mxu0
      %v4137 = vpop.f32.mrb[0].mxu0
      %v4138 = vadd.f32 0.0, %v4137
      %v4139 = vpop.f32.mrb[0].mxu0
      %4140 = vmatprep.mubr.bf16.mxu0 0
      %4141 = vmatmul.mubr.bf16.gmra.mrb[0].mxu0 %v2019
      %v4142 = vpop.f32.mrb[0].mxu0
      %v4143 = vpop.f32.mrb[0].mxu0
      %v4144 = vpop.f32.mrb[0].mxu0
      %v4145 = vpop.f32.mrb[0].mxu0
      %4146 = vmatprep.mubr.bf16.mxu0 0
      %4147 = vmatmul.mubr.bf16.gmra.mrb[0].mxu0 %v2022
      %v4148 = vpop.f32.mrb[0].mxu0
      %v4149 = vadd.f32 0.0, %v4148
      %v4150 = vpop.f32.mrb[0].mxu0
      %v4151 = vpop.f32.mrb[0].mxu0
      %v4152 = vadd.f32 0.0, %v4151
      %v4153 = vpop.f32.mrb[0].mxu0
      %4154 = vmatprep.mubr.bf16.mxu0 0
      %4155 = vmatmul.mubr.bf16.gmra.mrb[0].mxu0 %v2025
      %v4156 = vpop.f32.mrb[0].mxu0
      %v4157 = vpop.f32.mrb[0].mxu0
      %v4158 = vpop.f32.mrb[0].mxu0
      %v4159 = vpop.f32.mrb[0].mxu0
      %4160 = vmatprep.mubr.bf16.mxu0 0
      %4161 = vmatmul.mubr.bf16.gmra.mrb[0].mxu0 %v2028
      %v4162 = vpop.f32.mrb[0].mxu0
      %v4163 = vadd.f32 0.0, %v4162
      %v4164 = vpop.f32.mrb[0].mxu0
      %v4165 = vpop.f32.mrb[0].mxu0
      %v4166 = vadd.f32 0.0, %v4165
      %v4167 = vpop.f32.mrb[0].mxu0
      %4168 = vmatprep.mubr.bf16.mxu0 0
      %4169 = vmatmul.mubr.bf16.gmra.mrb[0].mxu0 %v2980
      %v4170 = vpop.f32.mrb[0].mxu0
      %v4171 = vpop.f32.mrb[0].mxu0
      %v4172 = vpop.f32.mrb[0].mxu0
      %v4173 = vpop.f32.mrb[0].mxu0
      %4174 = vmatprep.mubr.bf16.mxu0 0
      %4175 = vmatmul.mubr.bf16.gmra.mrb[0].mxu0 %v2983
      %v4176 = vpop.f32.mrb[0].mxu0
      %v4177 = vadd.f32 0.0, %v4176
      %v4178 = vpop.f32.mrb[0].mxu0
      %v4179 = vpop.f32.mrb[0].mxu0
      %v4180 = vadd.f32 0.0, %v4179
      %v4181 = vpop.f32.mrb[0].mxu0
      %4182 = vmatprep.mubr.bf16.mxu0 0
      %4183 = vmatmul.mubr.bf16.gmra.mrb[0].mxu0 %v3935
      %v4184 = vpop.f32.mrb[0].mxu0
      %v4185 = vpop.f32.mrb[0].mxu0
      %v4186 = vpop.f32.mrb[0].mxu0
      %v4187 = vpop.f32.mrb[0].mxu0
      %4188 = vmatprep.mubr.bf16.mxu0 0
      %4189 = vmatmul.mubr.bf16.gmra.mrb[0].mxu0 %v3938
      %v4190 = vpop.f32.mrb[0].mxu0
      %v4191 = vadd.f32 0.0, %v4190
      %v4192 = vpop.f32.mrb[0].mxu0
      %v4193 = vpop.f32.mrb[0].mxu0
      %v4194 = vadd.f32 0.0, %v4193
      %v4195 = vpop.f32.mrb[0].mxu0
      %4196 = vmatprep.mubr.bf16.mxu0 0
      %4197 = vmatmul.mubr.bf16.gmra.mrb[0].mxu0 %v3941
      %v4198 = vpop.f32.mrb[0].mxu0
      %v4199 = vpop.f32.mrb[0].mxu0
      %v4200 = vpop.f32.mrb[0].mxu0
      %v4201 = vpop.f32.mrb[0].mxu0
      %4202 = vdwg.mxu0
      %v4203 = vadd.f32 %v3881, %v3981
      %v4204 = vadd.f32 %v3882, %v3984
      %v4205 = vadd.f32 %v3883, %v3995
      %v4206 = vadd.f32 %v3884, %v3998
      %v4207 = vadd.f32 %v3885, %v4009
      %v4208 = vadd.f32 %v3886, %v4012
      %v4209 = vadd.f32 %v3887, %v4023
      %v4210 = vadd.f32 %v3888, %v4026
      %v4211 = vadd.f32 %v3889, %v4037
      %v4212 = vadd.f32 %v3890, %v4040
      %v4213 = vadd.f32 %v3891, %v4051
      %v4214 = vadd.f32 %v3892, %v4054
      %v4215 = vadd.f32 %v3893, %v4065
      %v4216 = vadd.f32 %v3894, %v4068
      %v4217 = vadd.f32 %v3895, %v4079
      %v4218 = vadd.f32 %v3896, %v4082
      %v4219 = vadd.f32 %v3897, %v4093
      %v4220 = vadd.f32 %v3898, %v4096
      %v4221 = vadd.f32 %v3899, %v4107
      %v4222 = vadd.f32 %v3900, %v4110
      %v4223 = vadd.f32 %v3901, %v4121
      %v4224 = vadd.f32 %v3902, %v4124
      %v4225 = vadd.f32 %v3903, %v4135
      %v4226 = vadd.f32 %v3904, %v4138
      %v4227 = vadd.f32 %v3905, %v4149
      %v4228 = vadd.f32 %v3906, %v4152
      %v4229 = vadd.f32 %v3907, %v4163
      %v4230 = vadd.f32 %v3908, %v4166
      %v4231 = vadd.f32 %v3909, %v4177
      %v4232 = vadd.f32 %v3910, %v4180
      %v4233 = vadd.f32 %v3911, %v4191
      %v4234 = vadd.f32 %v3912, %v4194
      %v4235 = vld [vmem:[%s3] sm:$0x1]
      %v4237 = vlaneseq
      %v4238 = vshrl.u32 %v4237, 7
      %v4239 = vsub.s32 0, %v4238
      %v4240 = vrot.slane %v4235, %v4239
      %v4242 = vadd.f32 %v4203, %v4240
      %v4243 = vadd.f32 %v4204, %v4240
      %v4244 = vadd.f32 %v4205, %v4240
      %v4245 = vadd.f32 %v4206, %v4240
      %v4246 = vadd.f32 %v4207, %v4240
      %v4247 = vadd.f32 %v4208, %v4240
      %v4248 = vadd.f32 %v4209, %v4240
      %v4249 = vadd.f32 %v4210, %v4240
      %v4250 = vadd.f32 %v4211, %v4240
      %v4251 = vadd.f32 %v4212, %v4240
      %v4252 = vadd.f32 %v4213, %v4240
      %v4253 = vadd.f32 %v4214, %v4240
      %v4254 = vadd.f32 %v4215, %v4240
      %v4255 = vadd.f32 %v4216, %v4240
      %v4256 = vadd.f32 %v4217, %v4240
      %v4257 = vadd.f32 %v4218, %v4240
      %v4258 = vadd.f32 %v4219, %v4240
      %v4259 = vadd.f32 %v4220, %v4240
      %v4260 = vadd.f32 %v4221, %v4240
      %v4261 = vadd.f32 %v4222, %v4240
      %v4262 = vadd.f32 %v4223, %v4240
      %v4263 = vadd.f32 %v4224, %v4240
      %v4264 = vadd.f32 %v4225, %v4240
      %v4265 = vadd.f32 %v4226, %v4240
      %v4266 = vadd.f32 %v4227, %v4240
      %v4267 = vadd.f32 %v4228, %v4240
      %v4268 = vadd.f32 %v4229, %v4240
      %v4269 = vadd.f32 %v4230, %v4240
      %v4270 = vadd.f32 %v4231, %v4240
      %v4271 = vadd.f32 %v4232, %v4240
      %v4272 = vadd.f32 %v4233, %v4240
      %v4273 = vadd.f32 %v4234, %v4240
      %v4274 = vmax.f32 %v4242, 0.0
      %v4275 = vmax.f32 %v4243, 0.0
      %v4276 = vmax.f32 %v4244, 0.0
      %v4277 = vmax.f32 %v4245, 0.0
      %v4278 = vmax.f32 %v4246, 0.0
      %v4279 = vmax.f32 %v4247, 0.0
      %v4280 = vmax.f32 %v4248, 0.0
      %v4281 = vmax.f32 %v4249, 0.0
      %v4282 = vmax.f32 %v4250, 0.0
      %v4283 = vmax.f32 %v4251, 0.0
      %v4284 = vmax.f32 %v4252, 0.0
      %v4285 = vmax.f32 %v4253, 0.0
      %v4286 = vmax.f32 %v4254, 0.0
      %v4287 = vmax.f32 %v4255, 0.0
      %v4288 = vmax.f32 %v4256, 0.0
      %v4289 = vmax.f32 %v4257, 0.0
      %v4290 = vmax.f32 %v4258, 0.0
      %v4291 = vmax.f32 %v4259, 0.0
      %v4292 = vmax.f32 %v4260, 0.0
      %v4293 = vmax.f32 %v4261, 0.0
      %v4294 = vmax.f32 %v4262, 0.0
      %v4295 = vmax.f32 %v4263, 0.0
      %v4296 = vmax.f32 %v4264, 0.0
      %v4297 = vmax.f32 %v4265, 0.0
      %v4298 = vmax.f32 %v4266, 0.0
      %v4299 = vmax.f32 %v4267, 0.0
      %v4300 = vmax.f32 %v4268, 0.0
      %v4301 = vmax.f32 %v4269, 0.0
      %v4302 = vmax.f32 %v4270, 0.0
      %v4303 = vmax.f32 %v4271, 0.0
      %v4304 = vmax.f32 %v4272, 0.0
      %v4305 = vmax.f32 %v4273, 0.0
      %v4306 = vld [vmem:[%s320] sm:$0xf]
      %v4307 = vld [vmem:[%s320 + $0x4] sm:$0xf]
      %v4308 = vld [vmem:[%s320 + $0x8] sm:$0xf]
      %v4309 = vld [vmem:[%s320 + $0xc] sm:$0xf]
      %v4310 = vld [vmem:[%s320 + $0x10] sm:$0xf]
      %v4311 = vld [vmem:[%s320 + $0x14] sm:$0xf]
      %v4312 = vld [vmem:[%s320 + $0x18] sm:$0xf]
      %v4313 = vld [vmem:[%s320 + $0x1c] sm:$0xf]
      %v4314 = vld [vmem:[%s320 + $0x20] sm:$0xf]
      %v4315 = vld [vmem:[%s320 + $0x24] sm:$0xf]
      %v4316 = vld [vmem:[%s320 + $0x28] sm:$0xf]
      %v4317 = vld [vmem:[%s320 + $0x2c] sm:$0xf]
      %v4318 = vld [vmem:[%s320 + $0x30] sm:$0xf]
      %v4319 = vld [vmem:[%s320 + $0x34] sm:$0xf]
      %v4320 = vld [vmem:[%s320 + $0x38] sm:$0xf]
      %v4321 = vld [vmem:[%s320 + $0x3c] sm:$0xf]
      %v4322 = vld [vmem:[%s320 + $0x40] sm:$0xf]
      %v4323 = vld [vmem:[%s320 + $0x44] sm:$0xf]
      %v4324 = vld [vmem:[%s320 + $0x48] sm:$0xf]
      %v4325 = vld [vmem:[%s320 + $0x4c] sm:$0xf]
      %v4326 = vld [vmem:[%s320 + $0x50] sm:$0xf]
      %v4327 = vld [vmem:[%s320 + $0x54] sm:$0xf]
      %v4328 = vld [vmem:[%s320 + $0x58] sm:$0xf]
      %v4329 = vld [vmem:[%s320 + $0x5c] sm:$0xf]
      %v4330 = vld [vmem:[%s320 + $0x60] sm:$0xf]
      %v4331 = vld [vmem:[%s320 + $0x64] sm:$0xf]
      %v4332 = vld [vmem:[%s320 + $0x68] sm:$0xf]
      %v4333 = vld [vmem:[%s320 + $0x6c] sm:$0xf]
      %v4334 = vld [vmem:[%s320 + $0x70] sm:$0xf]
      %v4335 = vld [vmem:[%s320 + $0x74] sm:$0xf]
      %v4336 = vld [vmem:[%s320 + $0x78] sm:$0xf]
      %v4337 = vld [vmem:[%s320 + $0x7c] sm:$0xf]
      %v4338 = vunpack.c.l.bf16 %v4306
      %v4339 = vunpack.c.l.bf16 %v4307
      %v4340 = vunpack.c.l.bf16 %v4308
      %v4341 = vunpack.c.l.bf16 %v4309
      %v4342 = vunpack.c.l.bf16 %v4310
      %v4343 = vunpack.c.l.bf16 %v4311
      %v4344 = vunpack.c.l.bf16 %v4312
      %v4345 = vunpack.c.l.bf16 %v4313
      %v4346 = vunpack.c.l.bf16 %v4314
      %v4347 = vunpack.c.l.bf16 %v4315
      %v4348 = vunpack.c.l.bf16 %v4316
      %v4349 = vunpack.c.l.bf16 %v4317
      %v4350 = vunpack.c.l.bf16 %v4318
      %v4351 = vunpack.c.l.bf16 %v4319
      %v4352 = vunpack.c.l.bf16 %v4320
      %v4353 = vunpack.c.l.bf16 %v4321
      %v4354 = vunpack.c.l.bf16 %v4322
      %v4355 = vunpack.c.l.bf16 %v4323
      %v4356 = vunpack.c.l.bf16 %v4324
      %v4357 = vunpack.c.l.bf16 %v4325
      %v4358 = vunpack.c.l.bf16 %v4326
      %v4359 = vunpack.c.l.bf16 %v4327
      %v4360 = vunpack.c.l.bf16 %v4328
      %v4361 = vunpack.c.l.bf16 %v4329
      %v4362 = vunpack.c.l.bf16 %v4330
      %v4363 = vunpack.c.l.bf16 %v4331
      %v4364 = vunpack.c.l.bf16 %v4332
      %v4365 = vunpack.c.l.bf16 %v4333
      %v4366 = vunpack.c.l.bf16 %v4334
      %v4367 = vunpack.c.l.bf16 %v4335
      %v4368 = vunpack.c.l.bf16 %v4336
      %v4369 = vunpack.c.l.bf16 %v4337
      %vm4370 = vcmask 31744
      %4371 = vst.msk [vmem:[%s386 + $0x8] sm:$0xff] %vm4370, %v4338
      %4372 = vst.msk [vmem:[%s386 + $0x10] sm:$0xff] %vm4370, %v4339
      %4373 = vst.msk [vmem:[%s386 + $0x28] sm:$0xff] %vm4370, %v4340
      %4374 = vst.msk [vmem:[%s386 + $0x30] sm:$0xff] %vm4370, %v4341
      %4375 = vst.msk [vmem:[%s386 + $0x48] sm:$0xff] %vm4370, %v4342
      %4376 = vst.msk [vmem:[%s386 + $0x50] sm:$0xff] %vm4370, %v4343
      %4377 = vst.msk [vmem:[%s386 + $0x68] sm:$0xff] %vm4370, %v4344
      %4378 = vst.msk [vmem:[%s386 + $0x70] sm:$0xff] %vm4370, %v4345
      %4379 = vst.msk [vmem:[%s386 + $0x88] sm:$0xff] %vm4370, %v4346
      %4380 = vst.msk [vmem:[%s386 + $0x90] sm:$0xff] %vm4370, %v4347
      %4381 = vst.msk [vmem:[%s386 + $0xa8] sm:$0xff] %vm4370, %v4348
      %4382 = vst.msk [vmem:[%s386 + $0xb0] sm:$0xff] %vm4370, %v4349
      %4383 = vst.msk [vmem:[%s386 + $0xc8] sm:$0xff] %vm4370, %v4350
      %4384 = vst.msk [vmem:[%s386 + $0xd0] sm:$0xff] %vm4370, %v4351
      %4385 = vst.msk [vmem:[%s386 + $0xe8] sm:$0xff] %vm4370, %v4352
      %4386 = vst.msk [vmem:[%s386 + $0xf0] sm:$0xff] %vm4370, %v4353
      %4387 = vst.msk [vmem:[%s386 + $0x108] sm:$0xff] %vm4370, %v4354
      %4388 = vst.msk [vmem:[%s386 + $0x110] sm:$0xff] %vm4370, %v4355
      %4389 = vst.msk [vmem:[%s386 + $0x128] sm:$0xff] %vm4370, %v4356
      %4390 = vst.msk [vmem:[%s386 + $0x130] sm:$0xff] %vm4370, %v4357
      %4391 = vst.msk [vmem:[%s386 + $0x148] sm:$0xff] %vm4370, %v4358
      %4392 = vst.msk [vmem:[%s386 + $0x150] sm:$0xff] %vm4370, %v4359
      %4393 = vst.msk [vmem:[%s386 + $0x168] sm:$0xff] %vm4370, %v4360
      %4394 = vst.msk [vmem:[%s386 + $0x170] sm:$0xff] %vm4370, %v4361
      %4395 = vst.msk [vmem:[%s386 + $0x188] sm:$0xff] %vm4370, %v4362
      %4396 = vst.msk [vmem:[%s386 + $0x190] sm:$0xff] %vm4370, %v4363
      %4397 = vst.msk [vmem:[%s386 + $0x1a8] sm:$0xff] %vm4370, %v4364
      %4398 = vst.msk [vmem:[%s386 + $0x1b0] sm:$0xff] %vm4370, %v4365
      %4399 = vst.msk [vmem:[%s386 + $0x1c8] sm:$0xff] %vm4370, %v4366
      %4400 = vst.msk [vmem:[%s386 + $0x1d0] sm:$0xff] %vm4370, %v4367
      %4401 = vst.msk [vmem:[%s386 + $0x1e8] sm:$0xff] %vm4370, %v4368
      %4402 = vst.msk [vmem:[%s386 + $0x1f0] sm:$0xff] %vm4370, %v4369
      %vm4403 = vcmask 64544
      %4404 = vst.msk [vmem:[%s386 + $0x8] sm:$0xff] %vm4403, %v4274
      %4405 = vst.msk [vmem:[%s386 + $0x10] sm:$0xff] %vm4403, %v4275
      %4406 = vst.msk [vmem:[%s386 + $0x28] sm:$0xff] %vm4403, %v4276
      %4407 = vst.msk [vmem:[%s386 + $0x30] sm:$0xff] %vm4403, %v4277
      %4408 = vst.msk [vmem:[%s386 + $0x48] sm:$0xff] %vm4403, %v4278
      %4409 = vst.msk [vmem:[%s386 + $0x50] sm:$0xff] %vm4403, %v4279
      %4410 = vst.msk [vmem:[%s386 + $0x68] sm:$0xff] %vm4403, %v4280
      %4411 = vst.msk [vmem:[%s386 + $0x70] sm:$0xff] %vm4403, %v4281
      %4412 = vst.msk [vmem:[%s386 + $0x88] sm:$0xff] %vm4403, %v4282
      %4413 = vst.msk [vmem:[%s386 + $0x90] sm:$0xff] %vm4403, %v4283
      %4414 = vst.msk [vmem:[%s386 + $0xa8] sm:$0xff] %vm4403, %v4284
      %4415 = vst.msk [vmem:[%s386 + $0xb0] sm:$0xff] %vm4403, %v4285
      %4416 = vst.msk [vmem:[%s386 + $0xc8] sm:$0xff] %vm4403, %v4286
      %4417 = vst.msk [vmem:[%s386 + $0xd0] sm:$0xff] %vm4403, %v4287
      %4418 = vst.msk [vmem:[%s386 + $0xe8] sm:$0xff] %vm4403, %v4288
      %4419 = vst.msk [vmem:[%s386 + $0xf0] sm:$0xff] %vm4403, %v4289
      %4420 = vst.msk [vmem:[%s386 + $0x108] sm:$0xff] %vm4403, %v4290
      %4421 = vst.msk [vmem:[%s386 + $0x110] sm:$0xff] %vm4403, %v4291
      %4422 = vst.msk [vmem:[%s386 + $0x128] sm:$0xff] %vm4403, %v4292
      %4423 = vst.msk [vmem:[%s386 + $0x130] sm:$0xff] %vm4403, %v4293
      %4424 = vst.msk [vmem:[%s386 + $0x148] sm:$0xff] %vm4403, %v4294
      %4425 = vst.msk [vmem:[%s386 + $0x150] sm:$0xff] %vm4403, %v4295
      %4426 = vst.msk [vmem:[%s386 + $0x168] sm:$0xff] %vm4403, %v4296
      %4427 = vst.msk [vmem:[%s386 + $0x170] sm:$0xff] %vm4403, %v4297
      %4428 = vst.msk [vmem:[%s386 + $0x188] sm:$0xff] %vm4403, %v4298
      %4429 = vst.msk [vmem:[%s386 + $0x190] sm:$0xff] %vm4403, %v4299
      %4430 = vst.msk [vmem:[%s386 + $0x1a8] sm:$0xff] %vm4403, %v4300
      %4431 = vst.msk [vmem:[%s386 + $0x1b0] sm:$0xff] %vm4403, %v4301
      %4432 = vst.msk [vmem:[%s386 + $0x1c8] sm:$0xff] %vm4403, %v4302
      %4433 = vst.msk [vmem:[%s386 + $0x1d0] sm:$0xff] %vm4403, %v4303
      %4434 = vst.msk [vmem:[%s386 + $0x1e8] sm:$0xff] %vm4403, %v4304
      %4435 = vst.msk [vmem:[%s386 + $0x1f0] sm:$0xff] %vm4403, %v4305
      %v4436 = vld [vmem:[#allocation3] sm:$0xff]
      %v4437 = vld [vmem:[#allocation3 + $0x8] sm:$0xff]
      %v4438 = vld [vmem:[#allocation3 + $0x10] sm:$0xff]
      %v4439 = vld [vmem:[#allocation3 + $0x18] sm:$0xff]
      %v4440 = vld [vmem:[#allocation3 + $0x20] sm:$0xff]
      %v4441 = vld [vmem:[#allocation3 + $0x28] sm:$0xff]
      %v4442 = vld [vmem:[#allocation3 + $0x30] sm:$0xff]
      %v4443 = vld [vmem:[#allocation3 + $0x38] sm:$0xff]
      %v4444 = vld [vmem:[#allocation3 + $0x40] sm:$0xff]
      %v4445 = vld [vmem:[#allocation3 + $0x48] sm:$0xff]
      %v4446 = vld [vmem:[#allocation3 + $0x50] sm:$0xff]
      %v4447 = vld [vmem:[#allocation3 + $0x58] sm:$0xff]
      %v4448 = vld [vmem:[#allocation3 + $0x60] sm:$0xff]
      %v4449 = vld [vmem:[#allocation3 + $0x68] sm:$0xff]
      %v4450 = vld [vmem:[#allocation3 + $0x70] sm:$0xff]
      %v4451 = vld [vmem:[#allocation3 + $0x78] sm:$0xff]
      %v4452 = vld [vmem:[#allocation3 + $0x80] sm:$0xff]
      %v4453 = vld [vmem:[#allocation3 + $0x88] sm:$0xff]
      %v4454 = vld [vmem:[#allocation3 + $0x90] sm:$0xff]
      %v4455 = vld [vmem:[#allocation3 + $0x98] sm:$0xff]
      %v4456 = vld [vmem:[#allocation3 + $0xa0] sm:$0xff]
      %v4457 = vld [vmem:[#allocation3 + $0xa8] sm:$0xff]
      %v4458 = vld [vmem:[#allocation3 + $0xb0] sm:$0xff]
      %v4459 = vld [vmem:[#allocation3 + $0xb8] sm:$0xff]
      %v4460 = vld [vmem:[#allocation3 + $0xc0] sm:$0xff]
      %v4461 = vld [vmem:[#allocation3 + $0xc8] sm:$0xff]
      %v4462 = vld [vmem:[#allocation3 + $0xd0] sm:$0xff]
      %v4463 = vld [vmem:[#allocation3 + $0xd8] sm:$0xff]
      %v4464 = vld [vmem:[#allocation3 + $0xe0] sm:$0xff]
      %v4465 = vld [vmem:[#allocation3 + $0xe8] sm:$0xff]
      %v4466 = vld [vmem:[#allocation3 + $0xf0] sm:$0xff]
      %v4467 = vld [vmem:[#allocation3 + $0xf8] sm:$0xff]
      %v4468 = vld [vmem:[#allocation3 + $0x100] sm:$0xff]
      %v4469 = vld [vmem:[#allocation3 + $0x108] sm:$0xff]
      %v4470 = vld [vmem:[#allocation3 + $0x110] sm:$0xff]
      %v4471 = vld [vmem:[#allocation3 + $0x118] sm:$0xff]
      %v4472 = vld [vmem:[#allocation3 + $0x120] sm:$0xff]
      %v4473 = vld [vmem:[#allocation3 + $0x128] sm:$0xff]
      %v4474 = vld [vmem:[#allocation3 + $0x130] sm:$0xff]
      %v4475 = vld [vmem:[#allocation3 + $0x138] sm:$0xff]
      %v4476 = vld [vmem:[#allocation3 + $0x140] sm:$0xff]
      %v4477 = vld [vmem:[#allocation3 + $0x148] sm:$0xff]
      %v4478 = vld [vmem:[#allocation3 + $0x150] sm:$0xff]
      %v4479 = vld [vmem:[#allocation3 + $0x158] sm:$0xff]
      %v4480 = vld [vmem:[#allocation3 + $0x160] sm:$0xff]
      %v4481 = vld [vmem:[#allocation3 + $0x168] sm:$0xff]
      %v4482 = vld [vmem:[#allocation3 + $0x170] sm:$0xff]
      %v4483 = vld [vmem:[#allocation3 + $0x178] sm:$0xff]
      %v4484 = vld [vmem:[#allocation3 + $0x180] sm:$0xff]
      %v4485 = vld [vmem:[#allocation3 + $0x188] sm:$0xff]
      %v4486 = vld [vmem:[#allocation3 + $0x190] sm:$0xff]
      %v4487 = vld [vmem:[#allocation3 + $0x198] sm:$0xff]
      %v4488 = vld [vmem:[#allocation3 + $0x1a0] sm:$0xff]
      %v4489 = vld [vmem:[#allocation3 + $0x1a8] sm:$0xff]
      %v4490 = vld [vmem:[#allocation3 + $0x1b0] sm:$0xff]
      %v4491 = vld [vmem:[#allocation3 + $0x1b8] sm:$0xff]
      %v4492 = vld [vmem:[#allocation3 + $0x1c0] sm:$0xff]
      %v4493 = vld [vmem:[#allocation3 + $0x1c8] sm:$0xff]
      %v4494 = vld [vmem:[#allocation3 + $0x1d0] sm:$0xff]
      %v4495 = vld [vmem:[#allocation3 + $0x1d8] sm:$0xff]
      %v4496 = vld [vmem:[#allocation3 + $0x1e0] sm:$0xff]
      %v4497 = vld [vmem:[#allocation3 + $0x1e8] sm:$0xff]
      %v4498 = vld [vmem:[#allocation3 + $0x1f0] sm:$0xff]
      %v4499 = vld [vmem:[#allocation3 + $0x1f8] sm:$0xff]
      %v4500 = vld [vmem:[#allocation3 + $0x200] sm:$0xff]
      %v4501 = vld [vmem:[#allocation3 + $0x208] sm:$0xff]
      %v4502 = vld [vmem:[#allocation3 + $0x210] sm:$0xff]
      %v4503 = vld [vmem:[#allocation3 + $0x218] sm:$0xff]
      %v4504 = vld [vmem:[#allocation3 + $0x220] sm:$0xff]
      %v4505 = vld [vmem:[#allocation3 + $0x228] sm:$0xff]
      %v4506 = vld [vmem:[#allocation3 + $0x230] sm:$0xff]
      %v4507 = vld [vmem:[#allocation3 + $0x238] sm:$0xff]
      %v4508 = vld [vmem:[#allocation3 + $0x240] sm:$0xff]
      %v4509 = vld [vmem:[#allocation3 + $0x248] sm:$0xff]
      %v4510 = vpack.c.bf16 %v4437, %v4436
      %v4511 = vpack.c.bf16 %v4439, %v4438
      %v4512 = vpack.c.bf16 %v4441, %v4440
      %v4513 = vpack.c.bf16 %v4443, %v4442
      %v4514 = vpack.c.bf16 %v4445, %v4444
      %v4515 = vpack.c.bf16 %v4447, %v4446
      %v4516 = vpack.c.bf16 %v4449, %v4448
      %v4517 = vpack.c.bf16 %v4451, %v4450
      %v4518 = vpack.c.bf16 %v4453, %v4452
      %v4519 = vpack.c.bf16 %v4455, %v4454
      %v4520 = vpack.c.bf16 %v4457, %v4456
      %v4521 = vpack.c.bf16 %v4459, %v4458
      %v4522 = vpack.c.bf16 %v4461, %v4460
      %v4523 = vpack.c.bf16 %v4463, %v4462
      %v4524 = vpack.c.bf16 %v4465, %v4464
      %v4525 = vpack.c.bf16 %v4467, %v4466
      %v4526 = vpack.c.bf16 %v4469, %v4468
      %v4527 = vpack.c.bf16 %v4471, %v4470
      %v4528 = vpack.c.bf16 %v4473, %v4472
      %v4529 = vpack.c.bf16 %v4475, %v4474
      %v4530 = vpack.c.bf16 %v4477, %v4476
      %v4531 = vpack.c.bf16 %v4479, %v4478
      %v4532 = vpack.c.bf16 %v4481, %v4480
      %v4533 = vpack.c.bf16 %v4483, %v4482
      %v4534 = vpack.c.bf16 %v4485, %v4484
      %v4535 = vpack.c.bf16 %v4487, %v4486
      %v4536 = vpack.c.bf16 %v4489, %v4488
      %v4537 = vpack.c.bf16 %v4491, %v4490
      %v4538 = vpack.c.bf16 %v4492, %v4492
      %v4539 = vld [vmem:[%s4] sm:$0xf]
      %v4540 = vpack.c.bf16 %v4438, %v4437
      %v4541 = vpack.c.bf16 %v4440, %v4439
      %v4542 = vpack.c.bf16 %v4442, %v4441
      %v4543 = vpack.c.bf16 %v4444, %v4443
      %v4544 = vpack.c.bf16 %v4446, %v4445
      %v4545 = vpack.c.bf16 %v4448, %v4447
      %v4546 = vpack.c.bf16 %v4450, %v4449
      %v4547 = vpack.c.bf16 %v4452, %v4451
      %v4548 = vpack.c.bf16 %v4454, %v4453
      %v4549 = vpack.c.bf16 %v4456, %v4455
      %v4550 = vpack.c.bf16 %v4458, %v4457
      %v4551 = vpack.c.bf16 %v4460, %v4459
      %v4552 = vpack.c.bf16 %v4462, %v4461
      %v4553 = vpack.c.bf16 %v4464, %v4463
      %v4554 = vpack.c.bf16 %v4466, %v4465
      %v4555 = vpack.c.bf16 %v4468, %v4467
      %v4556 = vpack.c.bf16 %v4470, %v4469
      %v4557 = vpack.c.bf16 %v4472, %v4471
      %v4558 = vpack.c.bf16 %v4474, %v4473
      %v4559 = vpack.c.bf16 %v4476, %v4475
      %v4560 = vpack.c.bf16 %v4478, %v4477
      %v4561 = vpack.c.bf16 %v4480, %v4479
      %v4562 = vpack.c.bf16 %v4482, %v4481
      %v4563 = vpack.c.bf16 %v4484, %v4483
      %v4564 = vpack.c.bf16 %v4486, %v4485
      %v4565 = vpack.c.bf16 %v4488, %v4487
      %v4566 = vpack.c.bf16 %v4490, %v4489
      %v4567 = vpack.c.bf16 %v4492, %v4491
      %v4568 = vpack.c.bf16 %v4493, %v4493
      %v4569 = vld [vmem:[%s4 + $0x40] sm:$0xf]
      %v4571 = vshrl.u32 %v4540, 16
      %v4573 = vshll.u32 %v4540, 16
      %v4575 = vrot.slane %v4573, 1
      %v4576 = vor.u32 %v4571, %v4575
      %v4578 = vshll.u32 %v4541, 16
      %v4580 = vrot.slane %v4578, 1
      %v4581 = vsel %vm1708, %v4576, %v4580
      %v4582 = vshrl.u32 %v4541, 16
      %v4584 = vor.u32 %v4582, %v4580
      %v4586 = vshll.u32 %v4542, 16
      %v4588 = vrot.slane %v4586, 1
      %v4589 = vsel %vm1708, %v4584, %v4588
      %v4590 = vshrl.u32 %v4542, 16
      %v4592 = vor.u32 %v4590, %v4588
      %v4594 = vshll.u32 %v4543, 16
      %v4596 = vrot.slane %v4594, 1
      %v4597 = vsel %vm1708, %v4592, %v4596
      %v4598 = vshrl.u32 %v4543, 16
      %v4600 = vor.u32 %v4598, %v4596
      %v4602 = vshll.u32 %v4544, 16
      %v4604 = vrot.slane %v4602, 1
      %v4605 = vsel %vm1708, %v4600, %v4604
      %v4606 = vshrl.u32 %v4544, 16
      %v4608 = vor.u32 %v4606, %v4604
      %v4610 = vshll.u32 %v4545, 16
      %v4612 = vrot.slane %v4610, 1
      %v4613 = vsel %vm1708, %v4608, %v4612
      %v4614 = vshrl.u32 %v4545, 16
      %v4616 = vor.u32 %v4614, %v4612
      %v4618 = vshll.u32 %v4546, 16
      %v4620 = vrot.slane %v4618, 1
      %v4621 = vsel %vm1708, %v4616, %v4620
      %v4622 = vshrl.u32 %v4546, 16
      %v4624 = vor.u32 %v4622, %v4620
      %v4626 = vshll.u32 %v4547, 16
      %v4628 = vrot.slane %v4626, 1
      %v4629 = vsel %vm1708, %v4624, %v4628
      %v4630 = vshrl.u32 %v4547, 16
      %v4632 = vor.u32 %v4630, %v4628
      %v4634 = vshll.u32 %v4548, 16
      %v4636 = vrot.slane %v4634, 1
      %v4637 = vsel %vm1708, %v4632, %v4636
      %v4638 = vshrl.u32 %v4548, 16
      %v4640 = vor.u32 %v4638, %v4636
      %v4642 = vshll.u32 %v4549, 16
      %v4644 = vrot.slane %v4642, 1
      %v4645 = vsel %vm1708, %v4640, %v4644
      %v4646 = vshrl.u32 %v4549, 16
      %v4648 = vor.u32 %v4646, %v4644
      %v4650 = vshll.u32 %v4550, 16
      %v4652 = vrot.slane %v4650, 1
      %v4653 = vsel %vm1708, %v4648, %v4652
      %v4654 = vshrl.u32 %v4550, 16
      %v4656 = vor.u32 %v4654, %v4652
      %v4658 = vshll.u32 %v4551, 16
      %v4660 = vrot.slane %v4658, 1
      %v4661 = vsel %vm1708, %v4656, %v4660
      %v4662 = vshrl.u32 %v4551, 16
      %v4664 = vor.u32 %v4662, %v4660
      %v4666 = vshll.u32 %v4552, 16
      %v4668 = vrot.slane %v4666, 1
      %v4669 = vsel %vm1708, %v4664, %v4668
      %v4670 = vshrl.u32 %v4552, 16
      %v4672 = vor.u32 %v4670, %v4668
      %v4674 = vshll.u32 %v4553, 16
      %v4676 = vrot.slane %v4674, 1
      %v4677 = vsel %vm1708, %v4672, %v4676
      %v4678 = vshrl.u32 %v4553, 16
      %v4680 = vor.u32 %v4678, %v4676
      %v4682 = vshll.u32 %v4554, 16
      %v4684 = vrot.slane %v4682, 1
      %v4685 = vsel %vm1708, %v4680, %v4684
      %v4686 = vshrl.u32 %v4554, 16
      %v4688 = vor.u32 %v4686, %v4684
      %v4690 = vshll.u32 %v4555, 16
      %v4692 = vrot.slane %v4690, 1
      %v4693 = vsel %vm1708, %v4688, %v4692
      %v4694 = vshrl.u32 %v4555, 16
      %v4696 = vor.u32 %v4694, %v4692
      %v4698 = vshll.u32 %v4556, 16
      %v4700 = vrot.slane %v4698, 1
      %v4701 = vsel %vm1708, %v4696, %v4700
      %v4702 = vshrl.u32 %v4556, 16
      %v4704 = vor.u32 %v4702, %v4700
      %v4706 = vshll.u32 %v4557, 16
      %v4708 = vrot.slane %v4706, 1
      %v4709 = vsel %vm1708, %v4704, %v4708
      %v4710 = vshrl.u32 %v4557, 16
      %v4712 = vor.u32 %v4710, %v4708
      %v4714 = vshll.u32 %v4558, 16
      %v4716 = vrot.slane %v4714, 1
      %v4717 = vsel %vm1708, %v4712, %v4716
      %v4718 = vshrl.u32 %v4558, 16
      %v4720 = vor.u32 %v4718, %v4716
      %v4722 = vshll.u32 %v4559, 16
      %v4724 = vrot.slane %v4722, 1
      %v4725 = vsel %vm1708, %v4720, %v4724
      %v4726 = vshrl.u32 %v4559, 16
      %v4728 = vor.u32 %v4726, %v4724
      %v4730 = vshll.u32 %v4560, 16
      %v4732 = vrot.slane %v4730, 1
      %v4733 = vsel %vm1708, %v4728, %v4732
      %v4734 = vshrl.u32 %v4560, 16
      %v4736 = vor.u32 %v4734, %v4732
      %v4738 = vshll.u32 %v4561, 16
      %v4740 = vrot.slane %v4738, 1
      %v4741 = vsel %vm1708, %v4736, %v4740
      %v4742 = vshrl.u32 %v4561, 16
      %v4744 = vor.u32 %v4742, %v4740
      %v4746 = vshll.u32 %v4562, 16
      %v4748 = vrot.slane %v4746, 1
      %v4749 = vsel %vm1708, %v4744, %v4748
      %v4750 = vshrl.u32 %v4562, 16
      %v4752 = vor.u32 %v4750, %v4748
      %v4754 = vshll.u32 %v4563, 16
      %v4756 = vrot.slane %v4754, 1
      %v4757 = vsel %vm1708, %v4752, %v4756
      %v4758 = vshrl.u32 %v4563, 16
      %v4760 = vor.u32 %v4758, %v4756
      %v4762 = vshll.u32 %v4564, 16
      %v4764 = vrot.slane %v4762, 1
      %v4765 = vsel %vm1708, %v4760, %v4764
      %v4766 = vshrl.u32 %v4564, 16
      %v4768 = vor.u32 %v4766, %v4764
      %v4770 = vshll.u32 %v4565, 16
      %v4772 = vrot.slane %v4770, 1
      %v4773 = vsel %vm1708, %v4768, %v4772
      %v4774 = vshrl.u32 %v4565, 16
      %v4776 = vor.u32 %v4774, %v4772
      %v4778 = vshll.u32 %v4566, 16
      %v4780 = vrot.slane %v4778, 1
      %v4781 = vsel %vm1708, %v4776, %v4780
      %v4782 = vshrl.u32 %v4566, 16
      %v4784 = vor.u32 %v4782, %v4780
      %v4786 = vshll.u32 %v4567, 16
      %v4788 = vrot.slane %v4786, 1
      %v4789 = vsel %vm1708, %v4784, %v4788
      %v4790 = vshrl.u32 %v4567, 16
      %v4792 = vor.u32 %v4790, %v4788
      %v4794 = vshll.u32 %v4568, 16
      %v4796 = vrot.slane %v4794, 1
      %v4797 = vsel %vm1708, %v4792, %v4796
      %v4799 = vsel %vm522, %v4581, 0
      %v4802 = vsel %vm522, %v4589, 0
      %v4805 = vsel %vm522, %v4597, 0
      %v4808 = vsel %vm522, %v4605, 0
      %v4811 = vsel %vm522, %v4613, 0
      %v4814 = vsel %vm522, %v4621, 0
      %v4817 = vsel %vm522, %v4629, 0
      %v4820 = vsel %vm522, %v4637, 0
      %v4823 = vsel %vm522, %v4645, 0
      %v4826 = vsel %vm522, %v4653, 0
      %v4829 = vsel %vm522, %v4661, 0
      %v4832 = vsel %vm522, %v4669, 0
      %v4835 = vsel %vm522, %v4677, 0
      %v4838 = vsel %vm522, %v4685, 0
      %v4841 = vsel %vm522, %v4693, 0
      %v4844 = vsel %vm522, %v4701, 0
      %v4847 = vsel %vm522, %v4709, 0
      %v4850 = vsel %vm522, %v4717, 0
      %v4853 = vsel %vm522, %v4725, 0
      %v4856 = vsel %vm522, %v4733, 0
      %v4859 = vsel %vm522, %v4741, 0
      %v4862 = vsel %vm522, %v4749, 0
      %v4865 = vsel %vm522, %v4757, 0
      %v4868 = vsel %vm522, %v4765, 0
      %v4871 = vsel %vm522, %v4773, 0
      %v4874 = vsel %vm522, %v4781, 0
      %v4877 = vsel %vm522, %v4789, 0
      %v4880 = vsel %vm522, %v4797, 0
      %v4883 = vsel %vm792, %v4569, 0
      %4885 = vmatprep.subr.bf16.mxu0 0
      %4886 = vmatpush1.bf16.msra.mxu0 %v4883
      %4887 = vmatprep.subr.bf16.mxu0 0
      %4888 = vmatpush1.bf16.msra.mxu0 0
      %4889 = vmatprep.subr.bf16.mxu0 0
      %4890 = vmatpush1.bf16.msra.mxu0 0
      %4891 = vmatprep.subr.bf16.mxu0 0
      %4892 = vmatpush1.bf16.msra.mxu0 0
      %4893 = vmatprep.subr.bf16.mxu0 0
      %4894 = vmatpush1.bf16.msra.mxu0 0
      %4895 = vmatprep.subr.bf16.mxu0 0
      %4896 = vmatpush1.bf16.msra.mxu0 0
      %4897 = vmatprep.subr.bf16.mxu0 0
      %4898 = vmatpush1.bf16.msra.mxu0 0
      %4899 = vmatprep.subr.bf16.mxu0 0
      %4900 = vmatpush1.bf16.msra.mxu0 0
      %4901 = vmatprep.subr.bf16.mxu0 0
      %4902 = vmatpush1.bf16.msra.mxu0 0
      %4903 = vmatprep.subr.bf16.mxu0 0
      %4904 = vmatpush1.bf16.msra.mxu0 0
      %4905 = vmatprep.subr.bf16.mxu0 0
      %4906 = vmatpush1.bf16.msra.mxu0 0
      %4907 = vmatprep.subr.bf16.mxu0 0
      %4908 = vmatpush1.bf16.msra.mxu0 0
      %4909 = vmatprep.subr.bf16.mxu0 0
      %4910 = vmatpush1.bf16.msra.mxu0 0
      %4911 = vmatprep.subr.bf16.mxu0 0
      %4912 = vmatpush1.bf16.msra.mxu0 0
      %4913 = vmatprep.subr.bf16.mxu0 0
      %4914 = vmatpush1.bf16.msra.mxu0 0
      %4915 = vmatprep.subr.bf16.mxu0 0
      %4916 = vmatpush1.bf16.msra.mxu0 0
      %4917 = vmatprep.mubr.bf16.mxu0 0
      %4918 = vmatmul.mubr.bf16.gmra.mrb[0].mxu0 %v4799
      %v4919 = vpop.f32.mrb[0].mxu0
      %v4920 = vadd.f32 0.0, %v4919
      %v4921 = vpop.f32.mrb[0].mxu0
      %v4922 = vpop.f32.mrb[0].mxu0
      %v4923 = vadd.f32 0.0, %v4922
      %v4924 = vpop.f32.mrb[0].mxu0
      %4925 = vmatprep.mubr.bf16.mxu0 0
      %4926 = vmatmul.mubr.bf16.gmra.mrb[0].mxu0 %v4802
      %v4927 = vpop.f32.mrb[0].mxu0
      %v4928 = vpop.f32.mrb[0].mxu0
      %v4929 = vpop.f32.mrb[0].mxu0
      %v4930 = vpop.f32.mrb[0].mxu0
      %4931 = vmatprep.mubr.bf16.mxu0 0
      %4932 = vmatmul.mubr.bf16.gmra.mrb[0].mxu0 %v4805
      %v4933 = vpop.f32.mrb[0].mxu0
      %v4934 = vadd.f32 0.0, %v4933
      %v4935 = vpop.f32.mrb[0].mxu0
      %v4936 = vpop.f32.mrb[0].mxu0
      %v4937 = vadd.f32 0.0, %v4936
      %v4938 = vpop.f32.mrb[0].mxu0
      %4939 = vmatprep.mubr.bf16.mxu0 0
      %4940 = vmatmul.mubr.bf16.gmra.mrb[0].mxu0 %v4808
      %v4941 = vpop.f32.mrb[0].mxu0
      %v4942 = vpop.f32.mrb[0].mxu0
      %v4943 = vpop.f32.mrb[0].mxu0
      %v4944 = vpop.f32.mrb[0].mxu0
      %4945 = vmatprep.mubr.bf16.mxu0 0
      %4946 = vmatmul.mubr.bf16.gmra.mrb[0].mxu0 %v4811
      %v4947 = vpop.f32.mrb[0].mxu0
      %v4948 = vadd.f32 0.0, %v4947
      %v4949 = vpop.f32.mrb[0].mxu0
      %v4950 = vpop.f32.mrb[0].mxu0
      %v4951 = vadd.f32 0.0, %v4950
      %v4952 = vpop.f32.mrb[0].mxu0
      %4953 = vmatprep.mubr.bf16.mxu0 0
      %4954 = vmatmul.mubr.bf16.gmra.mrb[0].mxu0 %v4814
      %v4955 = vpop.f32.mrb[0].mxu0
      %v4956 = vpop.f32.mrb[0].mxu0
      %v4957 = vpop.f32.mrb[0].mxu0
      %v4958 = vpop.f32.mrb[0].mxu0
      %4959 = vmatprep.mubr.bf16.mxu0 0
      %4960 = vmatmul.mubr.bf16.gmra.mrb[0].mxu0 %v4817
      %v4961 = vpop.f32.mrb[0].mxu0
      %v4962 = vadd.f32 0.0, %v4961
      %v4963 = vpop.f32.mrb[0].mxu0
      %v4964 = vpop.f32.mrb[0].mxu0
      %v4965 = vadd.f32 0.0, %v4964
      %v4966 = vpop.f32.mrb[0].mxu0
      %4967 = vmatprep.mubr.bf16.mxu0 0
      %4968 = vmatmul.mubr.bf16.gmra.mrb[0].mxu0 %v4820
      %v4969 = vpop.f32.mrb[0].mxu0
      %v4970 = vpop.f32.mrb[0].mxu0
      %v4971 = vpop.f32.mrb[0].mxu0
      %v4972 = vpop.f32.mrb[0].mxu0
      %4973 = vmatprep.mubr.bf16.mxu0 0
      %4974 = vmatmul.mubr.bf16.gmra.mrb[0].mxu0 %v4823
      %v4975 = vpop.f32.mrb[0].mxu0
      %v4976 = vadd.f32 0.0, %v4975
      %v4977 = vpop.f32.mrb[0].mxu0
      %v4978 = vpop.f32.mrb[0].mxu0
      %v4979 = vadd.f32 0.0, %v4978
      %v4980 = vpop.f32.mrb[0].mxu0
      %4981 = vmatprep.mubr.bf16.mxu0 0
      %4982 = vmatmul.mubr.bf16.gmra.mrb[0].mxu0 %v4826
      %v4983 = vpop.f32.mrb[0].mxu0
      %v4984 = vpop.f32.mrb[0].mxu0
      %v4985 = vpop.f32.mrb[0].mxu0
      %v4986 = vpop.f32.mrb[0].mxu0
      %4987 = vmatprep.mubr.bf16.mxu0 0
      %4988 = vmatmul.mubr.bf16.gmra.mrb[0].mxu0 %v4829
      %v4989 = vpop.f32.mrb[0].mxu0
      %v4990 = vadd.f32 0.0, %v4989
      %v4991 = vpop.f32.mrb[0].mxu0
      %v4992 = vpop.f32.mrb[0].mxu0
      %v4993 = vadd.f32 0.0, %v4992
      %v4994 = vpop.f32.mrb[0].mxu0
      %4995 = vmatprep.mubr.bf16.mxu0 0
      %4996 = vmatmul.mubr.bf16.gmra.mrb[0].mxu0 %v4832
      %v4997 = vpop.f32.mrb[0].mxu0
      %v4998 = vpop.f32.mrb[0].mxu0
      %v4999 = vpop.f32.mrb[0].mxu0
      %v5000 = vpop.f32.mrb[0].mxu0
      %5001 = vmatprep.mubr.bf16.mxu0 0
      %5002 = vmatmul.mubr.bf16.gmra.mrb[0].mxu0 %v4835
      %v5003 = vpop.f32.mrb[0].mxu0
      %v5004 = vadd.f32 0.0, %v5003
      %v5005 = vpop.f32.mrb[0].mxu0
      %v5006 = vpop.f32.mrb[0].mxu0
      %v5007 = vadd.f32 0.0, %v5006
      %v5008 = vpop.f32.mrb[0].mxu0
      %5009 = vmatprep.mubr.bf16.mxu0 0
      %5010 = vmatmul.mubr.bf16.gmra.mrb[0].mxu0 %v4838
      %v5011 = vpop.f32.mrb[0].mxu0
      %v5012 = vpop.f32.mrb[0].mxu0
      %v5013 = vpop.f32.mrb[0].mxu0
      %v5014 = vpop.f32.mrb[0].mxu0
      %5015 = vmatprep.mubr.bf16.mxu0 0
      %5016 = vmatmul.mubr.bf16.gmra.mrb[0].mxu0 %v4841
      %v5017 = vpop.f32.mrb[0].mxu0
      %v5018 = vadd.f32 0.0, %v5017
      %v5019 = vpop.f32.mrb[0].mxu0
      %v5020 = vpop.f32.mrb[0].mxu0
      %v5021 = vadd.f32 0.0, %v5020
      %v5022 = vpop.f32.mrb[0].mxu0
      %5023 = vmatprep.mubr.bf16.mxu0 0
      %5024 = vmatmul.mubr.bf16.gmra.mrb[0].mxu0 %v4844
      %v5025 = vpop.f32.mrb[0].mxu0
      %v5026 = vpop.f32.mrb[0].mxu0
      %v5027 = vpop.f32.mrb[0].mxu0
      %v5028 = vpop.f32.mrb[0].mxu0
      %5029 = vmatprep.mubr.bf16.mxu0 0
      %5030 = vmatmul.mubr.bf16.gmra.mrb[0].mxu0 %v4847
      %v5031 = vpop.f32.mrb[0].mxu0
      %v5032 = vadd.f32 0.0, %v5031
      %v5033 = vpop.f32.mrb[0].mxu0
      %v5034 = vpop.f32.mrb[0].mxu0
      %v5035 = vadd.f32 0.0, %v5034
      %v5036 = vpop.f32.mrb[0].mxu0
      %5037 = vmatprep.mubr.bf16.mxu0 0
      %5038 = vmatmul.mubr.bf16.gmra.mrb[0].mxu0 %v4850
      %v5039 = vpop.f32.mrb[0].mxu0
      %v5040 = vpop.f32.mrb[0].mxu0
      %v5041 = vpop.f32.mrb[0].mxu0
      %v5042 = vpop.f32.mrb[0].mxu0
      %5043 = vmatprep.mubr.bf16.mxu0 0
      %5044 = vmatmul.mubr.bf16.gmra.mrb[0].mxu0 %v4853
      %v5045 = vpop.f32.mrb[0].mxu0
      %v5046 = vadd.f32 0.0, %v5045
      %v5047 = vpop.f32.mrb[0].mxu0
      %v5048 = vpop.f32.mrb[0].mxu0
      %v5049 = vadd.f32 0.0, %v5048
      %v5050 = vpop.f32.mrb[0].mxu0
      %5051 = vmatprep.mubr.bf16.mxu0 0
      %5052 = vmatmul.mubr.bf16.gmra.mrb[0].mxu0 %v4856
      %v5053 = vpop.f32.mrb[0].mxu0
      %v5054 = vpop.f32.mrb[0].mxu0
      %v5055 = vpop.f32.mrb[0].mxu0
      %v5056 = vpop.f32.mrb[0].mxu0
      %5057 = vmatprep.mubr.bf16.mxu0 0
      %5058 = vmatmul.mubr.bf16.gmra.mrb[0].mxu0 %v4859
      %v5059 = vpop.f32.mrb[0].mxu0
      %v5060 = vadd.f32 0.0, %v5059
      %v5061 = vpop.f32.mrb[0].mxu0
      %v5062 = vpop.f32.mrb[0].mxu0
      %v5063 = vadd.f32 0.0, %v5062
      %v5064 = vpop.f32.mrb[0].mxu0
      %5065 = vmatprep.mubr.bf16.mxu0 0
      %5066 = vmatmul.mubr.bf16.gmra.mrb[0].mxu0 %v4862
      %v5067 = vpop.f32.mrb[0].mxu0
      %v5068 = vpop.f32.mrb[0].mxu0
      %v5069 = vpop.f32.mrb[0].mxu0
      %v5070 = vpop.f32.mrb[0].mxu0
      %5071 = vmatprep.mubr.bf16.mxu0 0
      %5072 = vmatmul.mubr.bf16.gmra.mrb[0].mxu0 %v4865
      %v5073 = vpop.f32.mrb[0].mxu0
      %v5074 = vadd.f32 0.0, %v5073
      %v5075 = vpop.f32.mrb[0].mxu0
      %v5076 = vpop.f32.mrb[0].mxu0
      %v5077 = vadd.f32 0.0, %v5076
      %v5078 = vpop.f32.mrb[0].mxu0
      %5079 = vmatprep.mubr.bf16.mxu0 0
      %5080 = vmatmul.mubr.bf16.gmra.mrb[0].mxu0 %v4868
      %v5081 = vpop.f32.mrb[0].mxu0
      %v5082 = vpop.f32.mrb[0].mxu0
      %v5083 = vpop.f32.mrb[0].mxu0
      %v5084 = vpop.f32.mrb[0].mxu0
      %5085 = vmatprep.mubr.bf16.mxu0 0
      %5086 = vmatmul.mubr.bf16.gmra.mrb[0].mxu0 %v4871
      %v5087 = vpop.f32.mrb[0].mxu0
      %v5088 = vadd.f32 0.0, %v5087
      %v5089 = vpop.f32.mrb[0].mxu0
      %v5090 = vpop.f32.mrb[0].mxu0
      %v5091 = vadd.f32 0.0, %v5090
      %v5092 = vpop.f32.mrb[0].mxu0
      %5093 = vmatprep.mubr.bf16.mxu0 0
      %5094 = vmatmul.mubr.bf16.gmra.mrb[0].mxu0 %v4874
      %v5095 = vpop.f32.mrb[0].mxu0
      %v5096 = vpop.f32.mrb[0].mxu0
      %v5097 = vpop.f32.mrb[0].mxu0
      %v5098 = vpop.f32.mrb[0].mxu0
      %5099 = vmatprep.mubr.bf16.mxu0 0
      %5100 = vmatmul.mubr.bf16.gmra.mrb[0].mxu0 %v4877
      %v5101 = vpop.f32.mrb[0].mxu0
      %v5102 = vadd.f32 0.0, %v5101
      %v5103 = vpop.f32.mrb[0].mxu0
      %v5104 = vpop.f32.mrb[0].mxu0
      %v5105 = vadd.f32 0.0, %v5104
      %v5106 = vpop.f32.mrb[0].mxu0
      %5107 = vmatprep.mubr.bf16.mxu0 0
      %5108 = vmatmul.mubr.bf16.gmra.mrb[0].mxu0 %v4880
      %v5109 = vpop.f32.mrb[0].mxu0
      %v5110 = vpop.f32.mrb[0].mxu0
      %v5111 = vpop.f32.mrb[0].mxu0
      %v5112 = vpop.f32.mrb[0].mxu0
      %5113 = vdwg.mxu0
      %v5115 = vshrl.u32 %v4510, 16
      %v5117 = vrot.slane %v5115, 3
      %v5118 = vshll.u32 %v4510, 16
      %v5120 = vrot.slane %v5118, 4
      %v5121 = vor.u32 %v5117, %v5120
      %v5123 = vshrl.u32 %v4511, 16
      %v5125 = vrot.slane %v5123, 3
      %v5126 = vshll.u32 %v4511, 16
      %v5128 = vrot.slane %v5126, 4
      %v5129 = vor.u32 %v5125, %v5128
      %v5130 = vsel %vm1053, %v5121, %v5129
      %v5132 = vshrl.u32 %v4512, 16
      %v5134 = vrot.slane %v5132, 3
      %v5135 = vshll.u32 %v4512, 16
      %v5137 = vrot.slane %v5135, 4
      %v5138 = vor.u32 %v5134, %v5137
      %v5139 = vsel %vm1053, %v5129, %v5138
      %v5141 = vshrl.u32 %v4513, 16
      %v5143 = vrot.slane %v5141, 3
      %v5144 = vshll.u32 %v4513, 16
      %v5146 = vrot.slane %v5144, 4
      %v5147 = vor.u32 %v5143, %v5146
      %v5148 = vsel %vm1053, %v5138, %v5147
      %v5150 = vshrl.u32 %v4514, 16
      %v5152 = vrot.slane %v5150, 3
      %v5153 = vshll.u32 %v4514, 16
      %v5155 = vrot.slane %v5153, 4
      %v5156 = vor.u32 %v5152, %v5155
      %v5157 = vsel %vm1053, %v5147, %v5156
      %v5159 = vshrl.u32 %v4515, 16
      %v5161 = vrot.slane %v5159, 3
      %v5162 = vshll.u32 %v4515, 16
      %v5164 = vrot.slane %v5162, 4
      %v5165 = vor.u32 %v5161, %v5164
      %v5166 = vsel %vm1053, %v5156, %v5165
      %v5168 = vshrl.u32 %v4516, 16
      %v5170 = vrot.slane %v5168, 3
      %v5171 = vshll.u32 %v4516, 16
      %v5173 = vrot.slane %v5171, 4
      %v5174 = vor.u32 %v5170, %v5173
      %v5175 = vsel %vm1053, %v5165, %v5174
      %v5177 = vshrl.u32 %v4517, 16
      %v5179 = vrot.slane %v5177, 3
      %v5180 = vshll.u32 %v4517, 16
      %v5182 = vrot.slane %v5180, 4
      %v5183 = vor.u32 %v5179, %v5182
      %v5184 = vsel %vm1053, %v5174, %v5183
      %v5186 = vshrl.u32 %v4518, 16
      %v5188 = vrot.slane %v5186, 3
      %v5189 = vshll.u32 %v4518, 16
      %v5191 = vrot.slane %v5189, 4
      %v5192 = vor.u32 %v5188, %v5191
      %v5193 = vsel %vm1053, %v5183, %v5192
      %v5195 = vshrl.u32 %v4519, 16
      %v5197 = vrot.slane %v5195, 3
      %v5198 = vshll.u32 %v4519, 16
      %v5200 = vrot.slane %v5198, 4
      %v5201 = vor.u32 %v5197, %v5200
      %v5202 = vsel %vm1053, %v5192, %v5201
      %v5204 = vshrl.u32 %v4520, 16
      %v5206 = vrot.slane %v5204, 3
      %v5207 = vshll.u32 %v4520, 16
      %v5209 = vrot.slane %v5207, 4
      %v5210 = vor.u32 %v5206, %v5209
      %v5211 = vsel %vm1053, %v5201, %v5210
      %v5213 = vshrl.u32 %v4521, 16
      %v5215 = vrot.slane %v5213, 3
      %v5216 = vshll.u32 %v4521, 16
      %v5218 = vrot.slane %v5216, 4
      %v5219 = vor.u32 %v5215, %v5218
      %v5220 = vsel %vm1053, %v5210, %v5219
      %v5222 = vshrl.u32 %v4522, 16
      %v5224 = vrot.slane %v5222, 3
      %v5225 = vshll.u32 %v4522, 16
      %v5227 = vrot.slane %v5225, 4
      %v5228 = vor.u32 %v5224, %v5227
      %v5229 = vsel %vm1053, %v5219, %v5228
      %v5231 = vshrl.u32 %v4523, 16
      %v5233 = vrot.slane %v5231, 3
      %v5234 = vshll.u32 %v4523, 16
      %v5236 = vrot.slane %v5234, 4
      %v5237 = vor.u32 %v5233, %v5236
      %v5238 = vsel %vm1053, %v5228, %v5237
      %v5240 = vshrl.u32 %v4524, 16
      %v5242 = vrot.slane %v5240, 3
      %v5243 = vshll.u32 %v4524, 16
      %v5245 = vrot.slane %v5243, 4
      %v5246 = vor.u32 %v5242, %v5245
      %v5247 = vsel %vm1053, %v5237, %v5246
      %v5249 = vshrl.u32 %v4525, 16
      %v5251 = vrot.slane %v5249, 3
      %v5252 = vshll.u32 %v4525, 16
      %v5254 = vrot.slane %v5252, 4
      %v5255 = vor.u32 %v5251, %v5254
      %v5256 = vsel %vm1053, %v5246, %v5255
      %v5258 = vshrl.u32 %v4526, 16
      %v5260 = vrot.slane %v5258, 3
      %v5261 = vshll.u32 %v4526, 16
      %v5263 = vrot.slane %v5261, 4
      %v5264 = vor.u32 %v5260, %v5263
      %v5265 = vsel %vm1053, %v5255, %v5264
      %v5267 = vshrl.u32 %v4527, 16
      %v5269 = vrot.slane %v5267, 3
      %v5270 = vshll.u32 %v4527, 16
      %v5272 = vrot.slane %v5270, 4
      %v5273 = vor.u32 %v5269, %v5272
      %v5274 = vsel %vm1053, %v5264, %v5273
      %v5276 = vshrl.u32 %v4528, 16
      %v5278 = vrot.slane %v5276, 3
      %v5279 = vshll.u32 %v4528, 16
      %v5281 = vrot.slane %v5279, 4
      %v5282 = vor.u32 %v5278, %v5281
      %v5283 = vsel %vm1053, %v5273, %v5282
      %v5285 = vshrl.u32 %v4529, 16
      %v5287 = vrot.slane %v5285, 3
      %v5288 = vshll.u32 %v4529, 16
      %v5290 = vrot.slane %v5288, 4
      %v5291 = vor.u32 %v5287, %v5290
      %v5292 = vsel %vm1053, %v5282, %v5291
      %v5294 = vshrl.u32 %v4530, 16
      %v5296 = vrot.slane %v5294, 3
      %v5297 = vshll.u32 %v4530, 16
      %v5299 = vrot.slane %v5297, 4
      %v5300 = vor.u32 %v5296, %v5299
      %v5301 = vsel %vm1053, %v5291, %v5300
      %v5303 = vshrl.u32 %v4531, 16
      %v5305 = vrot.slane %v5303, 3
      %v5306 = vshll.u32 %v4531, 16
      %v5308 = vrot.slane %v5306, 4
      %v5309 = vor.u32 %v5305, %v5308
      %v5310 = vsel %vm1053, %v5300, %v5309
      %v5312 = vshrl.u32 %v4532, 16
      %v5314 = vrot.slane %v5312, 3
      %v5315 = vshll.u32 %v4532, 16
      %v5317 = vrot.slane %v5315, 4
      %v5318 = vor.u32 %v5314, %v5317
      %v5319 = vsel %vm1053, %v5309, %v5318
      %v5321 = vshrl.u32 %v4533, 16
      %v5323 = vrot.slane %v5321, 3
      %v5324 = vshll.u32 %v4533, 16
      %v5326 = vrot.slane %v5324, 4
      %v5327 = vor.u32 %v5323, %v5326
      %v5328 = vsel %vm1053, %v5318, %v5327
      %v5330 = vshrl.u32 %v4534, 16
      %v5332 = vrot.slane %v5330, 3
      %v5333 = vshll.u32 %v4534, 16
      %v5335 = vrot.slane %v5333, 4
      %v5336 = vor.u32 %v5332, %v5335
      %v5337 = vsel %vm1053, %v5327, %v5336
      %v5339 = vshrl.u32 %v4535, 16
      %v5341 = vrot.slane %v5339, 3
      %v5342 = vshll.u32 %v4535, 16
      %v5344 = vrot.slane %v5342, 4
      %v5345 = vor.u32 %v5341, %v5344
      %v5346 = vsel %vm1053, %v5336, %v5345
      %v5348 = vshrl.u32 %v4536, 16
      %v5350 = vrot.slane %v5348, 3
      %v5351 = vshll.u32 %v4536, 16
      %v5353 = vrot.slane %v5351, 4
      %v5354 = vor.u32 %v5350, %v5353
      %v5355 = vsel %vm1053, %v5345, %v5354
      %v5357 = vshrl.u32 %v4537, 16
      %v5359 = vrot.slane %v5357, 3
      %v5360 = vshll.u32 %v4537, 16
      %v5362 = vrot.slane %v5360, 4
      %v5363 = vor.u32 %v5359, %v5362
      %v5364 = vsel %vm1053, %v5354, %v5363
      %v5366 = vshrl.u32 %v4538, 16
      %v5368 = vrot.slane %v5366, 3
      %v5369 = vshll.u32 %v4538, 16
      %v5371 = vrot.slane %v5369, 4
      %v5372 = vor.u32 %v5368, %v5371
      %v5373 = vsel %vm1053, %v5363, %v5372
      %v5375 = vsel %vm522, %v5130, 0
      %v5378 = vsel %vm522, %v5139, 0
      %v5381 = vsel %vm522, %v5148, 0
      %v5384 = vsel %vm522, %v5157, 0
      %v5387 = vsel %vm522, %v5166, 0
      %v5390 = vsel %vm522, %v5175, 0
      %v5393 = vsel %vm522, %v5184, 0
      %v5396 = vsel %vm522, %v5193, 0
      %v5399 = vsel %vm522, %v5202, 0
      %v5402 = vsel %vm522, %v5211, 0
      %v5405 = vsel %vm522, %v5220, 0
      %v5408 = vsel %vm522, %v5229, 0
      %v5411 = vsel %vm522, %v5238, 0
      %v5414 = vsel %vm522, %v5247, 0
      %v5417 = vsel %vm522, %v5256, 0
      %v5420 = vsel %vm522, %v5265, 0
      %v5423 = vsel %vm522, %v5274, 0
      %v5426 = vsel %vm522, %v5283, 0
      %v5429 = vsel %vm522, %v5292, 0
      %v5432 = vsel %vm522, %v5301, 0
      %v5435 = vsel %vm522, %v5310, 0
      %v5438 = vsel %vm522, %v5319, 0
      %v5441 = vsel %vm522, %v5328, 0
      %v5444 = vsel %vm522, %v5337, 0
      %v5447 = vsel %vm522, %v5346, 0
      %v5450 = vsel %vm522, %v5355, 0
      %v5453 = vsel %vm522, %v5364, 0
      %v5456 = vsel %vm522, %v5373, 0
      %v5459 = vsel %vm792, %v4539, 0
      %5461 = vmatprep.subr.bf16.mxu0 0
      %5462 = vmatpush1.bf16.msra.mxu0 %v5459
      %5463 = vmatprep.subr.bf16.mxu0 0
      %5464 = vmatpush1.bf16.msra.mxu0 0
      %5465 = vmatprep.subr.bf16.mxu0 0
      %5466 = vmatpush1.bf16.msra.mxu0 0
      %5467 = vmatprep.subr.bf16.mxu0 0
      %5468 = vmatpush1.bf16.msra.mxu0 0
      %5469 = vmatprep.subr.bf16.mxu0 0
      %5470 = vmatpush1.bf16.msra.mxu0 0
      %5471 = vmatprep.subr.bf16.mxu0 0
      %5472 = vmatpush1.bf16.msra.mxu0 0
      %5473 = vmatprep.subr.bf16.mxu0 0
      %5474 = vmatpush1.bf16.msra.mxu0 0
      %5475 = vmatprep.subr.bf16.mxu0 0
      %5476 = vmatpush1.bf16.msra.mxu0 0
      %5477 = vmatprep.subr.bf16.mxu0 0
      %5478 = vmatpush1.bf16.msra.mxu0 0
      %5479 = vmatprep.subr.bf16.mxu0 0
      %5480 = vmatpush1.bf16.msra.mxu0 0
      %5481 = vmatprep.subr.bf16.mxu0 0
      %5482 = vmatpush1.bf16.msra.mxu0 0
      %5483 = vmatprep.subr.bf16.mxu0 0
      %5484 = vmatpush1.bf16.msra.mxu0 0
      %5485 = vmatprep.subr.bf16.mxu0 0
      %5486 = vmatpush1.bf16.msra.mxu0 0
      %5487 = vmatprep.subr.bf16.mxu0 0
      %5488 = vmatpush1.bf16.msra.mxu0 0
      %5489 = vmatprep.subr.bf16.mxu0 0
      %5490 = vmatpush1.bf16.msra.mxu0 0
      %5491 = vmatprep.subr.bf16.mxu0 0
      %5492 = vmatpush1.bf16.msra.mxu0 0
      %5493 = vmatprep.mubr.bf16.mxu0 0
      %5494 = vmatmul.mubr.bf16.gmra.mrb[0].mxu0 %v5375
      %v5495 = vpop.f32.mrb[0].mxu0
      %v5496 = vadd.f32 %v4920, %v5495
      %v5497 = vpop.f32.mrb[0].mxu0
      %v5498 = vpop.f32.mrb[0].mxu0
      %v5499 = vadd.f32 %v4923, %v5498
      %v5500 = vpop.f32.mrb[0].mxu0
      %5501 = vmatprep.mubr.bf16.mxu0 0
      %5502 = vmatmul.mubr.bf16.gmra.mrb[0].mxu0 %v5378
      %v5503 = vpop.f32.mrb[0].mxu0
      %v5504 = vpop.f32.mrb[0].mxu0
      %v5505 = vpop.f32.mrb[0].mxu0
      %v5506 = vpop.f32.mrb[0].mxu0
      %5507 = vmatprep.mubr.bf16.mxu0 0
      %5508 = vmatmul.mubr.bf16.gmra.mrb[0].mxu0 %v5381
      %v5509 = vpop.f32.mrb[0].mxu0
      %v5510 = vadd.f32 %v4934, %v5509
      %v5511 = vpop.f32.mrb[0].mxu0
      %v5512 = vpop.f32.mrb[0].mxu0
      %v5513 = vadd.f32 %v4937, %v5512
      %v5514 = vpop.f32.mrb[0].mxu0
      %5515 = vmatprep.mubr.bf16.mxu0 0
      %5516 = vmatmul.mubr.bf16.gmra.mrb[0].mxu0 %v5384
      %v5517 = vpop.f32.mrb[0].mxu0
      %v5518 = vpop.f32.mrb[0].mxu0
      %v5519 = vpop.f32.mrb[0].mxu0
      %v5520 = vpop.f32.mrb[0].mxu0
      %5521 = vmatprep.mubr.bf16.mxu0 0
      %5522 = vmatmul.mubr.bf16.gmra.mrb[0].mxu0 %v5387
      %v5523 = vpop.f32.mrb[0].mxu0
      %v5524 = vadd.f32 %v4948, %v5523
      %v5525 = vpop.f32.mrb[0].mxu0
      %v5526 = vpop.f32.mrb[0].mxu0
      %v5527 = vadd.f32 %v4951, %v5526
      %v5528 = vpop.f32.mrb[0].mxu0
      %5529 = vmatprep.mubr.bf16.mxu0 0
      %5530 = vmatmul.mubr.bf16.gmra.mrb[0].mxu0 %v5390
      %v5531 = vpop.f32.mrb[0].mxu0
      %v5532 = vpop.f32.mrb[0].mxu0
      %v5533 = vpop.f32.mrb[0].mxu0
      %v5534 = vpop.f32.mrb[0].mxu0
      %5535 = vmatprep.mubr.bf16.mxu0 0
      %5536 = vmatmul.mubr.bf16.gmra.mrb[0].mxu0 %v5393
      %v5537 = vpop.f32.mrb[0].mxu0
      %v5538 = vadd.f32 %v4962, %v5537
      %v5539 = vpop.f32.mrb[0].mxu0
      %v5540 = vpop.f32.mrb[0].mxu0
      %v5541 = vadd.f32 %v4965, %v5540
      %v5542 = vpop.f32.mrb[0].mxu0
      %5543 = vmatprep.mubr.bf16.mxu0 0
      %5544 = vmatmul.mubr.bf16.gmra.mrb[0].mxu0 %v5396
      %v5545 = vpop.f32.mrb[0].mxu0
      %v5546 = vpop.f32.mrb[0].mxu0
      %v5547 = vpop.f32.mrb[0].mxu0
      %v5548 = vpop.f32.mrb[0].mxu0
      %5549 = vmatprep.mubr.bf16.mxu0 0
      %5550 = vmatmul.mubr.bf16.gmra.mrb[0].mxu0 %v5399
      %v5551 = vpop.f32.mrb[0].mxu0
      %v5552 = vadd.f32 %v4976, %v5551
      %v5553 = vpop.f32.mrb[0].mxu0
      %v5554 = vpop.f32.mrb[0].mxu0
      %v5555 = vadd.f32 %v4979, %v5554
      %v5556 = vpop.f32.mrb[0].mxu0
      %5557 = vmatprep.mubr.bf16.mxu0 0
      %5558 = vmatmul.mubr.bf16.gmra.mrb[0].mxu0 %v5402
      %v5559 = vpop.f32.mrb[0].mxu0
      %v5560 = vpop.f32.mrb[0].mxu0
      %v5561 = vpop.f32.mrb[0].mxu0
      %v5562 = vpop.f32.mrb[0].mxu0
      %5563 = vmatprep.mubr.bf16.mxu0 0
      %5564 = vmatmul.mubr.bf16.gmra.mrb[0].mxu0 %v5405
      %v5565 = vpop.f32.mrb[0].mxu0
      %v5566 = vadd.f32 %v4990, %v5565
      %v5567 = vpop.f32.mrb[0].mxu0
      %v5568 = vpop.f32.mrb[0].mxu0
      %v5569 = vadd.f32 %v4993, %v5568
      %v5570 = vpop.f32.mrb[0].mxu0
      %5571 = vmatprep.mubr.bf16.mxu0 0
      %5572 = vmatmul.mubr.bf16.gmra.mrb[0].mxu0 %v5408
      %v5573 = vpop.f32.mrb[0].mxu0
      %v5574 = vpop.f32.mrb[0].mxu0
      %v5575 = vpop.f32.mrb[0].mxu0
      %v5576 = vpop.f32.mrb[0].mxu0
      %5577 = vmatprep.mubr.bf16.mxu0 0
      %5578 = vmatmul.mubr.bf16.gmra.mrb[0].mxu0 %v5411
      %v5579 = vpop.f32.mrb[0].mxu0
      %v5580 = vadd.f32 %v5004, %v5579
      %v5581 = vpop.f32.mrb[0].mxu0
      %v5582 = vpop.f32.mrb[0].mxu0
      %v5583 = vadd.f32 %v5007, %v5582
      %v5584 = vpop.f32.mrb[0].mxu0
      %5585 = vmatprep.mubr.bf16.mxu0 0
      %5586 = vmatmul.mubr.bf16.gmra.mrb[0].mxu0 %v5414
      %v5587 = vpop.f32.mrb[0].mxu0
      %v5588 = vpop.f32.mrb[0].mxu0
      %v5589 = vpop.f32.mrb[0].mxu0
      %v5590 = vpop.f32.mrb[0].mxu0
      %5591 = vmatprep.mubr.bf16.mxu0 0
      %5592 = vmatmul.mubr.bf16.gmra.mrb[0].mxu0 %v5417
      %v5593 = vpop.f32.mrb[0].mxu0
      %v5594 = vadd.f32 %v5018, %v5593
      %v5595 = vpop.f32.mrb[0].mxu0
      %v5596 = vpop.f32.mrb[0].mxu0
      %v5597 = vadd.f32 %v5021, %v5596
      %v5598 = vpop.f32.mrb[0].mxu0
      %5599 = vmatprep.mubr.bf16.mxu0 0
      %5600 = vmatmul.mubr.bf16.gmra.mrb[0].mxu0 %v5420
      %v5601 = vpop.f32.mrb[0].mxu0
      %v5602 = vpop.f32.mrb[0].mxu0
      %v5603 = vpop.f32.mrb[0].mxu0
      %v5604 = vpop.f32.mrb[0].mxu0
      %5605 = vmatprep.mubr.bf16.mxu0 0
      %5606 = vmatmul.mubr.bf16.gmra.mrb[0].mxu0 %v5423
      %v5607 = vpop.f32.mrb[0].mxu0
      %v5608 = vadd.f32 %v5032, %v5607
      %v5609 = vpop.f32.mrb[0].mxu0
      %v5610 = vpop.f32.mrb[0].mxu0
      %v5611 = vadd.f32 %v5035, %v5610
      %v5612 = vpop.f32.mrb[0].mxu0
      %5613 = vmatprep.mubr.bf16.mxu0 0
      %5614 = vmatmul.mubr.bf16.gmra.mrb[0].mxu0 %v5426
      %v5615 = vpop.f32.mrb[0].mxu0
      %v5616 = vpop.f32.mrb[0].mxu0
      %v5617 = vpop.f32.mrb[0].mxu0
      %v5618 = vpop.f32.mrb[0].mxu0
      %5619 = vmatprep.mubr.bf16.mxu0 0
      %5620 = vmatmul.mubr.bf16.gmra.mrb[0].mxu0 %v5429
      %v5621 = vpop.f32.mrb[0].mxu0
      %v5622 = vadd.f32 %v5046, %v5621
      %v5623 = vpop.f32.mrb[0].mxu0
      %v5624 = vpop.f32.mrb[0].mxu0
      %v5625 = vadd.f32 %v5049, %v5624
      %v5626 = vpop.f32.mrb[0].mxu0
      %5627 = vmatprep.mubr.bf16.mxu0 0
      %5628 = vmatmul.mubr.bf16.gmra.mrb[0].mxu0 %v5432
      %v5629 = vpop.f32.mrb[0].mxu0
      %v5630 = vpop.f32.mrb[0].mxu0
      %v5631 = vpop.f32.mrb[0].mxu0
      %v5632 = vpop.f32.mrb[0].mxu0
      %5633 = vmatprep.mubr.bf16.mxu0 0
      %5634 = vmatmul.mubr.bf16.gmra.mrb[0].mxu0 %v5435
      %v5635 = vpop.f32.mrb[0].mxu0
      %v5636 = vadd.f32 %v5060, %v5635
      %v5637 = vpop.f32.mrb[0].mxu0
      %v5638 = vpop.f32.mrb[0].mxu0
      %v5639 = vadd.f32 %v5063, %v5638
      %v5640 = vpop.f32.mrb[0].mxu0
      %5641 = vmatprep.mubr.bf16.mxu0 0
      %5642 = vmatmul.mubr.bf16.gmra.mrb[0].mxu0 %v5438
      %v5643 = vpop.f32.mrb[0].mxu0
      %v5644 = vpop.f32.mrb[0].mxu0
      %v5645 = vpop.f32.mrb[0].mxu0
      %v5646 = vpop.f32.mrb[0].mxu0
      %5647 = vmatprep.mubr.bf16.mxu0 0
      %5648 = vmatmul.mubr.bf16.gmra.mrb[0].mxu0 %v5441
      %v5649 = vpop.f32.mrb[0].mxu0
      %v5650 = vadd.f32 %v5074, %v5649
      %v5651 = vpop.f32.mrb[0].mxu0
      %v5652 = vpop.f32.mrb[0].mxu0
      %v5653 = vadd.f32 %v5077, %v5652
      %v5654 = vpop.f32.mrb[0].mxu0
      %5655 = vmatprep.mubr.bf16.mxu0 0
      %5656 = vmatmul.mubr.bf16.gmra.mrb[0].mxu0 %v5444
      %v5657 = vpop.f32.mrb[0].mxu0
      %v5658 = vpop.f32.mrb[0].mxu0
      %v5659 = vpop.f32.mrb[0].mxu0
      %v5660 = vpop.f32.mrb[0].mxu0
      %5661 = vmatprep.mubr.bf16.mxu0 0
      %5662 = vmatmul.mubr.bf16.gmra.mrb[0].mxu0 %v5447
      %v5663 = vpop.f32.mrb[0].mxu0
      %v5664 = vadd.f32 %v5088, %v5663
      %v5665 = vpop.f32.mrb[0].mxu0
      %v5666 = vpop.f32.mrb[0].mxu0
      %v5667 = vadd.f32 %v5091, %v5666
      %v5668 = vpop.f32.mrb[0].mxu0
      %5669 = vmatprep.mubr.bf16.mxu0 0
      %5670 = vmatmul.mubr.bf16.gmra.mrb[0].mxu0 %v5450
      %v5671 = vpop.f32.mrb[0].mxu0
      %v5672 = vpop.f32.mrb[0].mxu0
      %v5673 = vpop.f32.mrb[0].mxu0
      %v5674 = vpop.f32.mrb[0].mxu0
      %5675 = vmatprep.mubr.bf16.mxu0 0
      %5676 = vmatmul.mubr.bf16.gmra.mrb[0].mxu0 %v5453
      %v5677 = vpop.f32.mrb[0].mxu0
      %v5678 = vadd.f32 %v5102, %v5677
      %v5679 = vpop.f32.mrb[0].mxu0
      %v5680 = vpop.f32.mrb[0].mxu0
      %v5681 = vadd.f32 %v5105, %v5680
      %v5682 = vpop.f32.mrb[0].mxu0
      %5683 = vmatprep.mubr.bf16.mxu0 0
      %5684 = vmatmul.mubr.bf16.gmra.mrb[0].mxu0 %v5456
      %v5685 = vpop.f32.mrb[0].mxu0
      %v5686 = vpop.f32.mrb[0].mxu0
      %v5687 = vpop.f32.mrb[0].mxu0
      %v5688 = vpop.f32.mrb[0].mxu0
      %5689 = vdwg.mxu0
      %v5690 = vld [vmem:[%s4 + $0x80] sm:$0xf]
      %vm5691 = vsmask.f32 6400
      %v5692 = vrot.slane %v4571, 1
      %v5693 = vrot.slane %v4573, 2
      %v5694 = vor.u32 %v5692, %v5693
      %v5695 = vrot.slane %v4582, 1
      %v5696 = vrot.slane %v4578, 2
      %v5697 = vor.u32 %v5695, %v5696
      %v5698 = vsel %vm5691, %v5694, %v5697
      %v5699 = vrot.slane %v4590, 1
      %v5700 = vrot.slane %v4586, 2
      %v5701 = vor.u32 %v5699, %v5700
      %v5702 = vsel %vm5691, %v5697, %v5701
      %v5703 = vrot.slane %v4598, 1
      %v5704 = vrot.slane %v4594, 2
      %v5705 = vor.u32 %v5703, %v5704
      %v5706 = vsel %vm5691, %v5701, %v5705
      %v5707 = vrot.slane %v4606, 1
      %v5708 = vrot.slane %v4602, 2
      %v5709 = vor.u32 %v5707, %v5708
      %v5710 = vsel %vm5691, %v5705, %v5709
      %v5711 = vrot.slane %v4614, 1
      %v5712 = vrot.slane %v4610, 2
      %v5713 = vor.u32 %v5711, %v5712
      %v5714 = vsel %vm5691, %v5709, %v5713
      %v5715 = vrot.slane %v4622, 1
      %v5716 = vrot.slane %v4618, 2
      %v5717 = vor.u32 %v5715, %v5716
      %v5718 = vsel %vm5691, %v5713, %v5717
      %v5719 = vrot.slane %v4630, 1
      %v5720 = vrot.slane %v4626, 2
      %v5721 = vor.u32 %v5719, %v5720
      %v5722 = vsel %vm5691, %v5717, %v5721
      %v5723 = vrot.slane %v4638, 1
      %v5724 = vrot.slane %v4634, 2
      %v5725 = vor.u32 %v5723, %v5724
      %v5726 = vsel %vm5691, %v5721, %v5725
      %v5727 = vrot.slane %v4646, 1
      %v5728 = vrot.slane %v4642, 2
      %v5729 = vor.u32 %v5727, %v5728
      %v5730 = vsel %vm5691, %v5725, %v5729
      %v5731 = vrot.slane %v4654, 1
      %v5732 = vrot.slane %v4650, 2
      %v5733 = vor.u32 %v5731, %v5732
      %v5734 = vsel %vm5691, %v5729, %v5733
      %v5735 = vrot.slane %v4662, 1
      %v5736 = vrot.slane %v4658, 2
      %v5737 = vor.u32 %v5735, %v5736
      %v5738 = vsel %vm5691, %v5733, %v5737
      %v5739 = vrot.slane %v4670, 1
      %v5740 = vrot.slane %v4666, 2
      %v5741 = vor.u32 %v5739, %v5740
      %v5742 = vsel %vm5691, %v5737, %v5741
      %v5743 = vrot.slane %v4678, 1
      %v5744 = vrot.slane %v4674, 2
      %v5745 = vor.u32 %v5743, %v5744
      %v5746 = vsel %vm5691, %v5741, %v5745
      %v5747 = vrot.slane %v4686, 1
      %v5748 = vrot.slane %v4682, 2
      %v5749 = vor.u32 %v5747, %v5748
      %v5750 = vsel %vm5691, %v5745, %v5749
      %v5751 = vrot.slane %v4694, 1
      %v5752 = vrot.slane %v4690, 2
      %v5753 = vor.u32 %v5751, %v5752
      %v5754 = vsel %vm5691, %v5749, %v5753
      %v5755 = vrot.slane %v4702, 1
      %v5756 = vrot.slane %v4698, 2
      %v5757 = vor.u32 %v5755, %v5756
      %v5758 = vsel %vm5691, %v5753, %v5757
      %v5759 = vrot.slane %v4710, 1
      %v5760 = vrot.slane %v4706, 2
      %v5761 = vor.u32 %v5759, %v5760
      %v5762 = vsel %vm5691, %v5757, %v5761
      %v5763 = vrot.slane %v4718, 1
      %v5764 = vrot.slane %v4714, 2
      %v5765 = vor.u32 %v5763, %v5764
      %v5766 = vsel %vm5691, %v5761, %v5765
      %v5767 = vrot.slane %v4726, 1
      %v5768 = vrot.slane %v4722, 2
      %v5769 = vor.u32 %v5767, %v5768
      %v5770 = vsel %vm5691, %v5765, %v5769
      %v5771 = vrot.slane %v4734, 1
      %v5772 = vrot.slane %v4730, 2
      %v5773 = vor.u32 %v5771, %v5772
      %v5774 = vsel %vm5691, %v5769, %v5773
      %v5775 = vrot.slane %v4742, 1
      %v5776 = vrot.slane %v4738, 2
      %v5777 = vor.u32 %v5775, %v5776
      %v5778 = vsel %vm5691, %v5773, %v5777
      %v5779 = vrot.slane %v4750, 1
      %v5780 = vrot.slane %v4746, 2
      %v5781 = vor.u32 %v5779, %v5780
      %v5782 = vsel %vm5691, %v5777, %v5781
      %v5783 = vrot.slane %v4758, 1
      %v5784 = vrot.slane %v4754, 2
      %v5785 = vor.u32 %v5783, %v5784
      %v5786 = vsel %vm5691, %v5781, %v5785
      %v5787 = vrot.slane %v4766, 1
      %v5788 = vrot.slane %v4762, 2
      %v5789 = vor.u32 %v5787, %v5788
      %v5790 = vsel %vm5691, %v5785, %v5789
      %v5791 = vrot.slane %v4774, 1
      %v5792 = vrot.slane %v4770, 2
      %v5793 = vor.u32 %v5791, %v5792
      %v5794 = vsel %vm5691, %v5789, %v5793
      %v5795 = vrot.slane %v4782, 1
      %v5796 = vrot.slane %v4778, 2
      %v5797 = vor.u32 %v5795, %v5796
      %v5798 = vsel %vm5691, %v5793, %v5797
      %v5799 = vrot.slane %v4790, 1
      %v5800 = vrot.slane %v4786, 2
      %v5801 = vor.u32 %v5799, %v5800
      %v5802 = vsel %vm5691, %v5797, %v5801
      %v5803 = vshrl.u32 %v4568, 16
      %v5805 = vrot.slane %v5803, 1
      %v5806 = vrot.slane %v4794, 2
      %v5807 = vor.u32 %v5805, %v5806
      %v5808 = vsel %vm5691, %v5801, %v5807
      %v5810 = vsel %vm522, %v5698, 0
      %v5813 = vsel %vm522, %v5702, 0
      %v5816 = vsel %vm522, %v5706, 0
      %v5819 = vsel %vm522, %v5710, 0
      %v5822 = vsel %vm522, %v5714, 0
      %v5825 = vsel %vm522, %v5718, 0
      %v5828 = vsel %vm522, %v5722, 0
      %v5831 = vsel %vm522, %v5726, 0
      %v5834 = vsel %vm522, %v5730, 0
      %v5837 = vsel %vm522, %v5734, 0
      %v5840 = vsel %vm522, %v5738, 0
      %v5843 = vsel %vm522, %v5742, 0
      %v5846 = vsel %vm522, %v5746, 0
      %v5849 = vsel %vm522, %v5750, 0
      %v5852 = vsel %vm522, %v5754, 0
      %v5855 = vsel %vm522, %v5758, 0
      %v5858 = vsel %vm522, %v5762, 0
      %v5861 = vsel %vm522, %v5766, 0
      %v5864 = vsel %vm522, %v5770, 0
      %v5867 = vsel %vm522, %v5774, 0
      %v5870 = vsel %vm522, %v5778, 0
      %v5873 = vsel %vm522, %v5782, 0
      %v5876 = vsel %vm522, %v5786, 0
      %v5879 = vsel %vm522, %v5790, 0
      %v5882 = vsel %vm522, %v5794, 0
      %v5885 = vsel %vm522, %v5798, 0
      %v5888 = vsel %vm522, %v5802, 0
      %v5891 = vsel %vm522, %v5808, 0
      %v5894 = vsel %vm792, %v5690, 0
      %5896 = vmatprep.subr.bf16.mxu0 0
      %5897 = vmatpush1.bf16.msra.mxu0 %v5894
      %5898 = vmatprep.subr.bf16.mxu0 0
      %5899 = vmatpush1.bf16.msra.mxu0 0
      %5900 = vmatprep.subr.bf16.mxu0 0
      %5901 = vmatpush1.bf16.msra.mxu0 0
      %5902 = vmatprep.subr.bf16.mxu0 0
      %5903 = vmatpush1.bf16.msra.mxu0 0
      %5904 = vmatprep.subr.bf16.mxu0 0
      %5905 = vmatpush1.bf16.msra.mxu0 0
      %5906 = vmatprep.subr.bf16.mxu0 0
      %5907 = vmatpush1.bf16.msra.mxu0 0
      %5908 = vmatprep.subr.bf16.mxu0 0
      %5909 = vmatpush1.bf16.msra.mxu0 0
      %5910 = vmatprep.subr.bf16.mxu0 0
      %5911 = vmatpush1.bf16.msra.mxu0 0
      %5912 = vmatprep.subr.bf16.mxu0 0
      %5913 = vmatpush1.bf16.msra.mxu0 0
      %5914 = vmatprep.subr.bf16.mxu0 0
      %5915 = vmatpush1.bf16.msra.mxu0 0
      %5916 = vmatprep.subr.bf16.mxu0 0
      %5917 = vmatpush1.bf16.msra.mxu0 0
      %5918 = vmatprep.subr.bf16.mxu0 0
      %5919 = vmatpush1.bf16.msra.mxu0 0
      %5920 = vmatprep.subr.bf16.mxu0 0
      %5921 = vmatpush1.bf16.msra.mxu0 0
      %5922 = vmatprep.subr.bf16.mxu0 0
      %5923 = vmatpush1.bf16.msra.mxu0 0
      %5924 = vmatprep.subr.bf16.mxu0 0
      %5925 = vmatpush1.bf16.msra.mxu0 0
      %5926 = vmatprep.subr.bf16.mxu0 0
      %5927 = vmatpush1.bf16.msra.mxu0 0
      %5928 = vmatprep.mubr.bf16.mxu0 0
      %5929 = vmatmul.mubr.bf16.gmra.mrb[0].mxu0 %v5810
      %v5930 = vpop.f32.mrb[0].mxu0
      %v5931 = vadd.f32 0.0, %v5930
      %v5932 = vpop.f32.mrb[0].mxu0
      %v5933 = vpop.f32.mrb[0].mxu0
      %v5934 = vadd.f32 0.0, %v5933
      %v5935 = vpop.f32.mrb[0].mxu0
      %5936 = vmatprep.mubr.bf16.mxu0 0
      %5937 = vmatmul.mubr.bf16.gmra.mrb[0].mxu0 %v5813
      %v5938 = vpop.f32.mrb[0].mxu0
      %v5939 = vpop.f32.mrb[0].mxu0
      %v5940 = vpop.f32.mrb[0].mxu0
      %v5941 = vpop.f32.mrb[0].mxu0
      %5942 = vmatprep.mubr.bf16.mxu0 0
      %5943 = vmatmul.mubr.bf16.gmra.mrb[0].mxu0 %v5816
      %v5944 = vpop.f32.mrb[0].mxu0
      %v5945 = vadd.f32 0.0, %v5944
      %v5946 = vpop.f32.mrb[0].mxu0
      %v5947 = vpop.f32.mrb[0].mxu0
      %v5948 = vadd.f32 0.0, %v5947
      %v5949 = vpop.f32.mrb[0].mxu0
      %5950 = vmatprep.mubr.bf16.mxu0 0
      %5951 = vmatmul.mubr.bf16.gmra.mrb[0].mxu0 %v5819
      %v5952 = vpop.f32.mrb[0].mxu0
      %v5953 = vpop.f32.mrb[0].mxu0
      %v5954 = vpop.f32.mrb[0].mxu0
      %v5955 = vpop.f32.mrb[0].mxu0
      %5956 = vmatprep.mubr.bf16.mxu0 0
      %5957 = vmatmul.mubr.bf16.gmra.mrb[0].mxu0 %v5822
      %v5958 = vpop.f32.mrb[0].mxu0
      %v5959 = vadd.f32 0.0, %v5958
      %v5960 = vpop.f32.mrb[0].mxu0
      %v5961 = vpop.f32.mrb[0].mxu0
      %v5962 = vadd.f32 0.0, %v5961
      %v5963 = vpop.f32.mrb[0].mxu0
      %5964 = vmatprep.mubr.bf16.mxu0 0
      %5965 = vmatmul.mubr.bf16.gmra.mrb[0].mxu0 %v5825
      %v5966 = vpop.f32.mrb[0].mxu0
      %v5967 = vpop.f32.mrb[0].mxu0
      %v5968 = vpop.f32.mrb[0].mxu0
      %v5969 = vpop.f32.mrb[0].mxu0
      %5970 = vmatprep.mubr.bf16.mxu0 0
      %5971 = vmatmul.mubr.bf16.gmra.mrb[0].mxu0 %v5828
      %v5972 = vpop.f32.mrb[0].mxu0
      %v5973 = vadd.f32 0.0, %v5972
      %v5974 = vpop.f32.mrb[0].mxu0
      %v5975 = vpop.f32.mrb[0].mxu0
      %v5976 = vadd.f32 0.0, %v5975
      %v5977 = vpop.f32.mrb[0].mxu0
      %5978 = vmatprep.mubr.bf16.mxu0 0
      %5979 = vmatmul.mubr.bf16.gmra.mrb[0].mxu0 %v5831
      %v5980 = vpop.f32.mrb[0].mxu0
      %v5981 = vpop.f32.mrb[0].mxu0
      %v5982 = vpop.f32.mrb[0].mxu0
      %v5983 = vpop.f32.mrb[0].mxu0
      %5984 = vmatprep.mubr.bf16.mxu0 0
      %5985 = vmatmul.mubr.bf16.gmra.mrb[0].mxu0 %v5834
      %v5986 = vpop.f32.mrb[0].mxu0
      %v5987 = vadd.f32 0.0, %v5986
      %v5988 = vpop.f32.mrb[0].mxu0
      %v5989 = vpop.f32.mrb[0].mxu0
      %v5990 = vadd.f32 0.0, %v5989
      %v5991 = vpop.f32.mrb[0].mxu0
      %5992 = vmatprep.mubr.bf16.mxu0 0
      %5993 = vmatmul.mubr.bf16.gmra.mrb[0].mxu0 %v5837
      %v5994 = vpop.f32.mrb[0].mxu0
      %v5995 = vpop.f32.mrb[0].mxu0
      %v5996 = vpop.f32.mrb[0].mxu0
      %v5997 = vpop.f32.mrb[0].mxu0
      %5998 = vmatprep.mubr.bf16.mxu0 0
      %5999 = vmatmul.mubr.bf16.gmra.mrb[0].mxu0 %v5840
      %v6000 = vpop.f32.mrb[0].mxu0
      %v6001 = vadd.f32 0.0, %v6000
      %v6002 = vpop.f32.mrb[0].mxu0
      %v6003 = vpop.f32.mrb[0].mxu0
      %v6004 = vadd.f32 0.0, %v6003
      %v6005 = vpop.f32.mrb[0].mxu0
      %6006 = vmatprep.mubr.bf16.mxu0 0
      %6007 = vmatmul.mubr.bf16.gmra.mrb[0].mxu0 %v5843
      %v6008 = vpop.f32.mrb[0].mxu0
      %v6009 = vpop.f32.mrb[0].mxu0
      %v6010 = vpop.f32.mrb[0].mxu0
      %v6011 = vpop.f32.mrb[0].mxu0
      %6012 = vmatprep.mubr.bf16.mxu0 0
      %6013 = vmatmul.mubr.bf16.gmra.mrb[0].mxu0 %v5846
      %v6014 = vpop.f32.mrb[0].mxu0
      %v6015 = vadd.f32 0.0, %v6014
      %v6016 = vpop.f32.mrb[0].mxu0
      %v6017 = vpop.f32.mrb[0].mxu0
      %v6018 = vadd.f32 0.0, %v6017
      %v6019 = vpop.f32.mrb[0].mxu0
      %6020 = vmatprep.mubr.bf16.mxu0 0
      %6021 = vmatmul.mubr.bf16.gmra.mrb[0].mxu0 %v5849
      %v6022 = vpop.f32.mrb[0].mxu0
      %v6023 = vpop.f32.mrb[0].mxu0
      %v6024 = vpop.f32.mrb[0].mxu0
      %v6025 = vpop.f32.mrb[0].mxu0
      %6026 = vmatprep.mubr.bf16.mxu0 0
      %6027 = vmatmul.mubr.bf16.gmra.mrb[0].mxu0 %v5852
      %v6028 = vpop.f32.mrb[0].mxu0
      %v6029 = vadd.f32 0.0, %v6028
      %v6030 = vpop.f32.mrb[0].mxu0
      %v6031 = vpop.f32.mrb[0].mxu0
      %v6032 = vadd.f32 0.0, %v6031
      %v6033 = vpop.f32.mrb[0].mxu0
      %6034 = vmatprep.mubr.bf16.mxu0 0
      %6035 = vmatmul.mubr.bf16.gmra.mrb[0].mxu0 %v5855
      %v6036 = vpop.f32.mrb[0].mxu0
      %v6037 = vpop.f32.mrb[0].mxu0
      %v6038 = vpop.f32.mrb[0].mxu0
      %v6039 = vpop.f32.mrb[0].mxu0
      %6040 = vmatprep.mubr.bf16.mxu0 0
      %6041 = vmatmul.mubr.bf16.gmra.mrb[0].mxu0 %v5858
      %v6042 = vpop.f32.mrb[0].mxu0
      %v6043 = vadd.f32 0.0, %v6042
      %v6044 = vpop.f32.mrb[0].mxu0
      %v6045 = vpop.f32.mrb[0].mxu0
      %v6046 = vadd.f32 0.0, %v6045
      %v6047 = vpop.f32.mrb[0].mxu0
      %6048 = vmatprep.mubr.bf16.mxu0 0
      %6049 = vmatmul.mubr.bf16.gmra.mrb[0].mxu0 %v5861
      %v6050 = vpop.f32.mrb[0].mxu0
      %v6051 = vpop.f32.mrb[0].mxu0
      %v6052 = vpop.f32.mrb[0].mxu0
      %v6053 = vpop.f32.mrb[0].mxu0
      %6054 = vmatprep.mubr.bf16.mxu0 0
      %6055 = vmatmul.mubr.bf16.gmra.mrb[0].mxu0 %v5864
      %v6056 = vpop.f32.mrb[0].mxu0
      %v6057 = vadd.f32 0.0, %v6056
      %v6058 = vpop.f32.mrb[0].mxu0
      %v6059 = vpop.f32.mrb[0].mxu0
      %v6060 = vadd.f32 0.0, %v6059
      %v6061 = vpop.f32.mrb[0].mxu0
      %6062 = vmatprep.mubr.bf16.mxu0 0
      %6063 = vmatmul.mubr.bf16.gmra.mrb[0].mxu0 %v5867
      %v6064 = vpop.f32.mrb[0].mxu0
      %v6065 = vpop.f32.mrb[0].mxu0
      %v6066 = vpop.f32.mrb[0].mxu0
      %v6067 = vpop.f32.mrb[0].mxu0
      %6068 = vmatprep.mubr.bf16.mxu0 0
      %6069 = vmatmul.mubr.bf16.gmra.mrb[0].mxu0 %v5870
      %v6070 = vpop.f32.mrb[0].mxu0
      %v6071 = vadd.f32 0.0, %v6070
      %v6072 = vpop.f32.mrb[0].mxu0
      %v6073 = vpop.f32.mrb[0].mxu0
      %v6074 = vadd.f32 0.0, %v6073
      %v6075 = vpop.f32.mrb[0].mxu0
      %6076 = vmatprep.mubr.bf16.mxu0 0
      %6077 = vmatmul.mubr.bf16.gmra.mrb[0].mxu0 %v5873
      %v6078 = vpop.f32.mrb[0].mxu0
      %v6079 = vpop.f32.mrb[0].mxu0
      %v6080 = vpop.f32.mrb[0].mxu0
      %v6081 = vpop.f32.mrb[0].mxu0
      %6082 = vmatprep.mubr.bf16.mxu0 0
      %6083 = vmatmul.mubr.bf16.gmra.mrb[0].mxu0 %v5876
      %v6084 = vpop.f32.mrb[0].mxu0
      %v6085 = vadd.f32 0.0, %v6084
      %v6086 = vpop.f32.mrb[0].mxu0
      %v6087 = vpop.f32.mrb[0].mxu0
      %v6088 = vadd.f32 0.0, %v6087
      %v6089 = vpop.f32.mrb[0].mxu0
      %6090 = vmatprep.mubr.bf16.mxu0 0
      %6091 = vmatmul.mubr.bf16.gmra.mrb[0].mxu0 %v5879
      %v6092 = vpop.f32.mrb[0].mxu0
      %v6093 = vpop.f32.mrb[0].mxu0
      %v6094 = vpop.f32.mrb[0].mxu0
      %v6095 = vpop.f32.mrb[0].mxu0
      %6096 = vmatprep.mubr.bf16.mxu0 0
      %6097 = vmatmul.mubr.bf16.gmra.mrb[0].mxu0 %v5882
      %v6098 = vpop.f32.mrb[0].mxu0
      %v6099 = vadd.f32 0.0, %v6098
      %v6100 = vpop.f32.mrb[0].mxu0
      %v6101 = vpop.f32.mrb[0].mxu0
      %v6102 = vadd.f32 0.0, %v6101
      %v6103 = vpop.f32.mrb[0].mxu0
      %6104 = vmatprep.mubr.bf16.mxu0 0
      %6105 = vmatmul.mubr.bf16.gmra.mrb[0].mxu0 %v5885
      %v6106 = vpop.f32.mrb[0].mxu0
      %v6107 = vpop.f32.mrb[0].mxu0
      %v6108 = vpop.f32.mrb[0].mxu0
      %v6109 = vpop.f32.mrb[0].mxu0
      %6110 = vmatprep.mubr.bf16.mxu0 0
      %6111 = vmatmul.mubr.bf16.gmra.mrb[0].mxu0 %v5888
      %v6112 = vpop.f32.mrb[0].mxu0
      %v6113 = vadd.f32 0.0, %v6112
      %v6114 = vpop.f32.mrb[0].mxu0
      %v6115 = vpop.f32.mrb[0].mxu0
      %v6116 = vadd.f32 0.0, %v6115
      %v6117 = vpop.f32.mrb[0].mxu0
      %6118 = vmatprep.mubr.bf16.mxu0 0
      %6119 = vmatmul.mubr.bf16.gmra.mrb[0].mxu0 %v5891
      %v6120 = vpop.f32.mrb[0].mxu0
      %v6121 = vpop.f32.mrb[0].mxu0
      %v6122 = vpop.f32.mrb[0].mxu0
      %v6123 = vpop.f32.mrb[0].mxu0
      %6124 = vdwg.mxu0
      %v6125 = vadd.f32 %v5496, %v5931
      %v6126 = vadd.f32 %v5499, %v5934
      %v6127 = vadd.f32 %v5510, %v5945
      %v6128 = vadd.f32 %v5513, %v5948
      %v6129 = vadd.f32 %v5524, %v5959
      %v6130 = vadd.f32 %v5527, %v5962
      %v6131 = vadd.f32 %v5538, %v5973
      %v6132 = vadd.f32 %v5541, %v5976
      %v6133 = vadd.f32 %v5552, %v5987
      %v6134 = vadd.f32 %v5555, %v5990
      %v6135 = vadd.f32 %v5566, %v6001
      %v6136 = vadd.f32 %v5569, %v6004
      %v6137 = vadd.f32 %v5580, %v6015
      %v6138 = vadd.f32 %v5583, %v6018
      %v6139 = vadd.f32 %v5594, %v6029
      %v6140 = vadd.f32 %v5597, %v6032
      %v6141 = vadd.f32 %v5608, %v6043
      %v6142 = vadd.f32 %v5611, %v6046
      %v6143 = vadd.f32 %v5622, %v6057
      %v6144 = vadd.f32 %v5625, %v6060
      %v6145 = vadd.f32 %v5636, %v6071
      %v6146 = vadd.f32 %v5639, %v6074
      %v6147 = vadd.f32 %v5650, %v6085
      %v6148 = vadd.f32 %v5653, %v6088
      %v6149 = vadd.f32 %v5664, %v6099
      %v6150 = vadd.f32 %v5667, %v6102
      %v6151 = vadd.f32 %v5678, %v6113
      %v6152 = vadd.f32 %v5681, %v6116
      %v6153 = vpack.c.bf16 %v4493, %v4492
      %v6154 = vpack.c.bf16 %v4495, %v4494
      %v6155 = vpack.c.bf16 %v4497, %v4496
      %v6156 = vpack.c.bf16 %v4499, %v4498
      %v6157 = vpack.c.bf16 %v4500, %v4500
      %v6158 = vld [vmem:[%s4 + $0xc0] sm:$0xf]
      %v6160 = vshrl.u32 %v6153, 16
      %v6162 = vrot.slane %v6160, 3
      %v6163 = vshll.u32 %v6153, 16
      %v6165 = vrot.slane %v6163, 4
      %v6166 = vor.u32 %v6162, %v6165
      %v6167 = vsel %vm1053, %v5363, %v6166
      %v6169 = vshrl.u32 %v6154, 16
      %v6171 = vrot.slane %v6169, 3
      %v6172 = vshll.u32 %v6154, 16
      %v6174 = vrot.slane %v6172, 4
      %v6175 = vor.u32 %v6171, %v6174
      %v6176 = vsel %vm1053, %v6166, %v6175
      %v6178 = vshrl.u32 %v6155, 16
      %v6180 = vrot.slane %v6178, 3
      %v6181 = vshll.u32 %v6155, 16
      %v6183 = vrot.slane %v6181, 4
      %v6184 = vor.u32 %v6180, %v6183
      %v6185 = vsel %vm1053, %v6175, %v6184
      %v6187 = vshrl.u32 %v6156, 16
      %v6189 = vrot.slane %v6187, 3
      %v6190 = vshll.u32 %v6156, 16
      %v6192 = vrot.slane %v6190, 4
      %v6193 = vor.u32 %v6189, %v6192
      %v6194 = vsel %vm1053, %v6184, %v6193
      %v6196 = vshrl.u32 %v6157, 16
      %v6198 = vrot.slane %v6196, 3
      %v6199 = vshll.u32 %v6157, 16
      %v6201 = vrot.slane %v6199, 4
      %v6202 = vor.u32 %v6198, %v6201
      %v6203 = vsel %vm1053, %v6193, %v6202
      %v6205 = vsel %vm522, %v6167, 0
      %v6208 = vsel %vm522, %v6176, 0
      %v6211 = vsel %vm522, %v6185, 0
      %v6214 = vsel %vm522, %v6194, 0
      %v6217 = vsel %vm522, %v6203, 0
      %v6220 = vsel %vm792, %v6158, 0
      %6222 = vmatprep.subr.bf16.mxu0 0
      %6223 = vmatpush1.bf16.msra.mxu0 %v6220
      %6224 = vmatprep.subr.bf16.mxu0 0
      %6225 = vmatpush1.bf16.msra.mxu0 0
      %6226 = vmatprep.subr.bf16.mxu0 0
      %6227 = vmatpush1.bf16.msra.mxu0 0
      %6228 = vmatprep.subr.bf16.mxu0 0
      %6229 = vmatpush1.bf16.msra.mxu0 0
      %6230 = vmatprep.subr.bf16.mxu0 0
      %6231 = vmatpush1.bf16.msra.mxu0 0
      %6232 = vmatprep.subr.bf16.mxu0 0
      %6233 = vmatpush1.bf16.msra.mxu0 0
      %6234 = vmatprep.subr.bf16.mxu0 0
      %6235 = vmatpush1.bf16.msra.mxu0 0
      %6236 = vmatprep.subr.bf16.mxu0 0
      %6237 = vmatpush1.bf16.msra.mxu0 0
      %6238 = vmatprep.subr.bf16.mxu0 0
      %6239 = vmatpush1.bf16.msra.mxu0 0
      %6240 = vmatprep.subr.bf16.mxu0 0
      %6241 = vmatpush1.bf16.msra.mxu0 0
      %6242 = vmatprep.subr.bf16.mxu0 0
      %6243 = vmatpush1.bf16.msra.mxu0 0
      %6244 = vmatprep.subr.bf16.mxu0 0
      %6245 = vmatpush1.bf16.msra.mxu0 0
      %6246 = vmatprep.subr.bf16.mxu0 0
      %6247 = vmatpush1.bf16.msra.mxu0 0
      %6248 = vmatprep.subr.bf16.mxu0 0
      %6249 = vmatpush1.bf16.msra.mxu0 0
      %6250 = vmatprep.subr.bf16.mxu0 0
      %6251 = vmatpush1.bf16.msra.mxu0 0
      %6252 = vmatprep.subr.bf16.mxu0 0
      %6253 = vmatpush1.bf16.msra.mxu0 0
      %6254 = vmatprep.mubr.bf16.mxu0 0
      %6255 = vmatmul.mubr.bf16.gmra.mrb[0].mxu0 %v5387
      %v6256 = vpop.f32.mrb[0].mxu0
      %v6257 = vadd.f32 0.0, %v6256
      %v6258 = vpop.f32.mrb[0].mxu0
      %v6259 = vpop.f32.mrb[0].mxu0
      %v6260 = vadd.f32 0.0, %v6259
      %v6261 = vpop.f32.mrb[0].mxu0
      %6262 = vmatprep.mubr.bf16.mxu0 0
      %6263 = vmatmul.mubr.bf16.gmra.mrb[0].mxu0 %v5390
      %v6264 = vpop.f32.mrb[0].mxu0
      %v6265 = vpop.f32.mrb[0].mxu0
      %v6266 = vpop.f32.mrb[0].mxu0
      %v6267 = vpop.f32.mrb[0].mxu0
      %6268 = vmatprep.mubr.bf16.mxu0 0
      %6269 = vmatmul.mubr.bf16.gmra.mrb[0].mxu0 %v5393
      %v6270 = vpop.f32.mrb[0].mxu0
      %v6271 = vadd.f32 0.0, %v6270
      %v6272 = vpop.f32.mrb[0].mxu0
      %v6273 = vpop.f32.mrb[0].mxu0
      %v6274 = vadd.f32 0.0, %v6273
      %v6275 = vpop.f32.mrb[0].mxu0
      %6276 = vmatprep.mubr.bf16.mxu0 0
      %6277 = vmatmul.mubr.bf16.gmra.mrb[0].mxu0 %v5396
      %v6278 = vpop.f32.mrb[0].mxu0
      %v6279 = vpop.f32.mrb[0].mxu0
      %v6280 = vpop.f32.mrb[0].mxu0
      %v6281 = vpop.f32.mrb[0].mxu0
      %6282 = vmatprep.mubr.bf16.mxu0 0
      %6283 = vmatmul.mubr.bf16.gmra.mrb[0].mxu0 %v5399
      %v6284 = vpop.f32.mrb[0].mxu0
      %v6285 = vadd.f32 0.0, %v6284
      %v6286 = vpop.f32.mrb[0].mxu0
      %v6287 = vpop.f32.mrb[0].mxu0
      %v6288 = vadd.f32 0.0, %v6287
      %v6289 = vpop.f32.mrb[0].mxu0
      %6290 = vmatprep.mubr.bf16.mxu0 0
      %6291 = vmatmul.mubr.bf16.gmra.mrb[0].mxu0 %v5402
      %v6292 = vpop.f32.mrb[0].mxu0
      %v6293 = vpop.f32.mrb[0].mxu0
      %v6294 = vpop.f32.mrb[0].mxu0
      %v6295 = vpop.f32.mrb[0].mxu0
      %6296 = vmatprep.mubr.bf16.mxu0 0
      %6297 = vmatmul.mubr.bf16.gmra.mrb[0].mxu0 %v5405
      %v6298 = vpop.f32.mrb[0].mxu0
      %v6299 = vadd.f32 0.0, %v6298
      %v6300 = vpop.f32.mrb[0].mxu0
      %v6301 = vpop.f32.mrb[0].mxu0
      %v6302 = vadd.f32 0.0, %v6301
      %v6303 = vpop.f32.mrb[0].mxu0
      %6304 = vmatprep.mubr.bf16.mxu0 0
      %6305 = vmatmul.mubr.bf16.gmra.mrb[0].mxu0 %v5408
      %v6306 = vpop.f32.mrb[0].mxu0
      %v6307 = vpop.f32.mrb[0].mxu0
      %v6308 = vpop.f32.mrb[0].mxu0
      %v6309 = vpop.f32.mrb[0].mxu0
      %6310 = vmatprep.mubr.bf16.mxu0 0
      %6311 = vmatmul.mubr.bf16.gmra.mrb[0].mxu0 %v5411
      %v6312 = vpop.f32.mrb[0].mxu0
      %v6313 = vadd.f32 0.0, %v6312
      %v6314 = vpop.f32.mrb[0].mxu0
      %v6315 = vpop.f32.mrb[0].mxu0
      %v6316 = vadd.f32 0.0, %v6315
      %v6317 = vpop.f32.mrb[0].mxu0
      %6318 = vmatprep.mubr.bf16.mxu0 0
      %6319 = vmatmul.mubr.bf16.gmra.mrb[0].mxu0 %v5414
      %v6320 = vpop.f32.mrb[0].mxu0
      %v6321 = vpop.f32.mrb[0].mxu0
      %v6322 = vpop.f32.mrb[0].mxu0
      %v6323 = vpop.f32.mrb[0].mxu0
      %6324 = vmatprep.mubr.bf16.mxu0 0
      %6325 = vmatmul.mubr.bf16.gmra.mrb[0].mxu0 %v5417
      %v6326 = vpop.f32.mrb[0].mxu0
      %v6327 = vadd.f32 0.0, %v6326
      %v6328 = vpop.f32.mrb[0].mxu0
      %v6329 = vpop.f32.mrb[0].mxu0
      %v6330 = vadd.f32 0.0, %v6329
      %v6331 = vpop.f32.mrb[0].mxu0
      %6332 = vmatprep.mubr.bf16.mxu0 0
      %6333 = vmatmul.mubr.bf16.gmra.mrb[0].mxu0 %v5420
      %v6334 = vpop.f32.mrb[0].mxu0
      %v6335 = vpop.f32.mrb[0].mxu0
      %v6336 = vpop.f32.mrb[0].mxu0
      %v6337 = vpop.f32.mrb[0].mxu0
      %6338 = vmatprep.mubr.bf16.mxu0 0
      %6339 = vmatmul.mubr.bf16.gmra.mrb[0].mxu0 %v5423
      %v6340 = vpop.f32.mrb[0].mxu0
      %v6341 = vadd.f32 0.0, %v6340
      %v6342 = vpop.f32.mrb[0].mxu0
      %v6343 = vpop.f32.mrb[0].mxu0
      %v6344 = vadd.f32 0.0, %v6343
      %v6345 = vpop.f32.mrb[0].mxu0
      %6346 = vmatprep.mubr.bf16.mxu0 0
      %6347 = vmatmul.mubr.bf16.gmra.mrb[0].mxu0 %v5426
      %v6348 = vpop.f32.mrb[0].mxu0
      %v6349 = vpop.f32.mrb[0].mxu0
      %v6350 = vpop.f32.mrb[0].mxu0
      %v6351 = vpop.f32.mrb[0].mxu0
      %6352 = vmatprep.mubr.bf16.mxu0 0
      %6353 = vmatmul.mubr.bf16.gmra.mrb[0].mxu0 %v5429
      %v6354 = vpop.f32.mrb[0].mxu0
      %v6355 = vadd.f32 0.0, %v6354
      %v6356 = vpop.f32.mrb[0].mxu0
      %v6357 = vpop.f32.mrb[0].mxu0
      %v6358 = vadd.f32 0.0, %v6357
      %v6359 = vpop.f32.mrb[0].mxu0
      %6360 = vmatprep.mubr.bf16.mxu0 0
      %6361 = vmatmul.mubr.bf16.gmra.mrb[0].mxu0 %v5432
      %v6362 = vpop.f32.mrb[0].mxu0
      %v6363 = vpop.f32.mrb[0].mxu0
      %v6364 = vpop.f32.mrb[0].mxu0
      %v6365 = vpop.f32.mrb[0].mxu0
      %6366 = vmatprep.mubr.bf16.mxu0 0
      %6367 = vmatmul.mubr.bf16.gmra.mrb[0].mxu0 %v5435
      %v6368 = vpop.f32.mrb[0].mxu0
      %v6369 = vadd.f32 0.0, %v6368
      %v6370 = vpop.f32.mrb[0].mxu0
      %v6371 = vpop.f32.mrb[0].mxu0
      %v6372 = vadd.f32 0.0, %v6371
      %v6373 = vpop.f32.mrb[0].mxu0
      %6374 = vmatprep.mubr.bf16.mxu0 0
      %6375 = vmatmul.mubr.bf16.gmra.mrb[0].mxu0 %v5438
      %v6376 = vpop.f32.mrb[0].mxu0
      %v6377 = vpop.f32.mrb[0].mxu0
      %v6378 = vpop.f32.mrb[0].mxu0
      %v6379 = vpop.f32.mrb[0].mxu0
      %6380 = vmatprep.mubr.bf16.mxu0 0
      %6381 = vmatmul.mubr.bf16.gmra.mrb[0].mxu0 %v5441
      %v6382 = vpop.f32.mrb[0].mxu0
      %v6383 = vadd.f32 0.0, %v6382
      %v6384 = vpop.f32.mrb[0].mxu0
      %v6385 = vpop.f32.mrb[0].mxu0
      %v6386 = vadd.f32 0.0, %v6385
      %v6387 = vpop.f32.mrb[0].mxu0
      %6388 = vmatprep.mubr.bf16.mxu0 0
      %6389 = vmatmul.mubr.bf16.gmra.mrb[0].mxu0 %v5444
      %v6390 = vpop.f32.mrb[0].mxu0
      %v6391 = vpop.f32.mrb[0].mxu0
      %v6392 = vpop.f32.mrb[0].mxu0
      %v6393 = vpop.f32.mrb[0].mxu0
      %6394 = vmatprep.mubr.bf16.mxu0 0
      %6395 = vmatmul.mubr.bf16.gmra.mrb[0].mxu0 %v5447
      %v6396 = vpop.f32.mrb[0].mxu0
      %v6397 = vadd.f32 0.0, %v6396
      %v6398 = vpop.f32.mrb[0].mxu0
      %v6399 = vpop.f32.mrb[0].mxu0
      %v6400 = vadd.f32 0.0, %v6399
      %v6401 = vpop.f32.mrb[0].mxu0
      %6402 = vmatprep.mubr.bf16.mxu0 0
      %6403 = vmatmul.mubr.bf16.gmra.mrb[0].mxu0 %v5450
      %v6404 = vpop.f32.mrb[0].mxu0
      %v6405 = vpop.f32.mrb[0].mxu0
      %v6406 = vpop.f32.mrb[0].mxu0
      %v6407 = vpop.f32.mrb[0].mxu0
      %6408 = vmatprep.mubr.bf16.mxu0 0
      %6409 = vmatmul.mubr.bf16.gmra.mrb[0].mxu0 %v5453
      %v6410 = vpop.f32.mrb[0].mxu0
      %v6411 = vadd.f32 0.0, %v6410
      %v6412 = vpop.f32.mrb[0].mxu0
      %v6413 = vpop.f32.mrb[0].mxu0
      %v6414 = vadd.f32 0.0, %v6413
      %v6415 = vpop.f32.mrb[0].mxu0
      %6416 = vmatprep.mubr.bf16.mxu0 0
      %6417 = vmatmul.mubr.bf16.gmra.mrb[0].mxu0 %v6205
      %v6418 = vpop.f32.mrb[0].mxu0
      %v6419 = vpop.f32.mrb[0].mxu0
      %v6420 = vpop.f32.mrb[0].mxu0
      %v6421 = vpop.f32.mrb[0].mxu0
      %6422 = vmatprep.mubr.bf16.mxu0 0
      %6423 = vmatmul.mubr.bf16.gmra.mrb[0].mxu0 %v6208
      %v6424 = vpop.f32.mrb[0].mxu0
      %v6425 = vadd.f32 0.0, %v6424
      %v6426 = vpop.f32.mrb[0].mxu0
      %v6427 = vpop.f32.mrb[0].mxu0
      %v6428 = vadd.f32 0.0, %v6427
      %v6429 = vpop.f32.mrb[0].mxu0
      %6430 = vmatprep.mubr.bf16.mxu0 0
      %6431 = vmatmul.mubr.bf16.gmra.mrb[0].mxu0 %v6211
      %v6432 = vpop.f32.mrb[0].mxu0
      %v6433 = vpop.f32.mrb[0].mxu0
      %v6434 = vpop.f32.mrb[0].mxu0
      %v6435 = vpop.f32.mrb[0].mxu0
      %6436 = vmatprep.mubr.bf16.mxu0 0
      %6437 = vmatmul.mubr.bf16.gmra.mrb[0].mxu0 %v6214
      %v6438 = vpop.f32.mrb[0].mxu0
      %v6439 = vadd.f32 0.0, %v6438
      %v6440 = vpop.f32.mrb[0].mxu0
      %v6441 = vpop.f32.mrb[0].mxu0
      %v6442 = vadd.f32 0.0, %v6441
      %v6443 = vpop.f32.mrb[0].mxu0
      %6444 = vmatprep.mubr.bf16.mxu0 0
      %6445 = vmatmul.mubr.bf16.gmra.mrb[0].mxu0 %v6217
      %v6446 = vpop.f32.mrb[0].mxu0
      %v6447 = vpop.f32.mrb[0].mxu0
      %v6448 = vpop.f32.mrb[0].mxu0
      %v6449 = vpop.f32.mrb[0].mxu0
      %6450 = vdwg.mxu0
      %v6451 = vadd.f32 %v6125, %v6257
      %v6452 = vadd.f32 %v6126, %v6260
      %v6453 = vadd.f32 %v6127, %v6271
      %v6454 = vadd.f32 %v6128, %v6274
      %v6455 = vadd.f32 %v6129, %v6285
      %v6456 = vadd.f32 %v6130, %v6288
      %v6457 = vadd.f32 %v6131, %v6299
      %v6458 = vadd.f32 %v6132, %v6302
      %v6459 = vadd.f32 %v6133, %v6313
      %v6460 = vadd.f32 %v6134, %v6316
      %v6461 = vadd.f32 %v6135, %v6327
      %v6462 = vadd.f32 %v6136, %v6330
      %v6463 = vadd.f32 %v6137, %v6341
      %v6464 = vadd.f32 %v6138, %v6344
      %v6465 = vadd.f32 %v6139, %v6355
      %v6466 = vadd.f32 %v6140, %v6358
      %v6467 = vadd.f32 %v6141, %v6369
      %v6468 = vadd.f32 %v6142, %v6372
      %v6469 = vadd.f32 %v6143, %v6383
      %v6470 = vadd.f32 %v6144, %v6386
      %v6471 = vadd.f32 %v6145, %v6397
      %v6472 = vadd.f32 %v6146, %v6400
      %v6473 = vadd.f32 %v6147, %v6411
      %v6474 = vadd.f32 %v6148, %v6414
      %v6475 = vadd.f32 %v6149, %v6425
      %v6476 = vadd.f32 %v6150, %v6428
      %v6477 = vadd.f32 %v6151, %v6439
      %v6478 = vadd.f32 %v6152, %v6442
      %v6479 = vpack.c.bf16 %v4494, %v4493
      %v6480 = vpack.c.bf16 %v4496, %v4495
      %v6481 = vpack.c.bf16 %v4498, %v4497
      %v6482 = vpack.c.bf16 %v4500, %v4499
      %v6483 = vpack.c.bf16 %v4501, %v4501
      %v6484 = vld [vmem:[%s4 + $0x100] sm:$0xf]
      %v6486 = vshll.u32 %v6479, 16
      %v6488 = vrot.slane %v6486, 1
      %v6489 = vsel %vm1708, %v4792, %v6488
      %v6490 = vshrl.u32 %v6479, 16
      %v6492 = vor.u32 %v6490, %v6488
      %v6494 = vshll.u32 %v6480, 16
      %v6496 = vrot.slane %v6494, 1
      %v6497 = vsel %vm1708, %v6492, %v6496
      %v6498 = vshrl.u32 %v6480, 16
      %v6500 = vor.u32 %v6498, %v6496
      %v6502 = vshll.u32 %v6481, 16
      %v6504 = vrot.slane %v6502, 1
      %v6505 = vsel %vm1708, %v6500, %v6504
      %v6506 = vshrl.u32 %v6481, 16
      %v6508 = vor.u32 %v6506, %v6504
      %v6510 = vshll.u32 %v6482, 16
      %v6512 = vrot.slane %v6510, 1
      %v6513 = vsel %vm1708, %v6508, %v6512
      %v6514 = vshrl.u32 %v6482, 16
      %v6516 = vor.u32 %v6514, %v6512
      %v6518 = vshll.u32 %v6483, 16
      %v6520 = vrot.slane %v6518, 1
      %v6521 = vsel %vm1708, %v6516, %v6520
      %v6523 = vsel %vm522, %v6489, 0
      %v6526 = vsel %vm522, %v6497, 0
      %v6529 = vsel %vm522, %v6505, 0
      %v6532 = vsel %vm522, %v6513, 0
      %v6535 = vsel %vm522, %v6521, 0
      %v6538 = vsel %vm792, %v6484, 0
      %6540 = vmatprep.subr.bf16.mxu0 0
      %6541 = vmatpush1.bf16.msra.mxu0 %v6538
      %6542 = vmatprep.subr.bf16.mxu0 0
      %6543 = vmatpush1.bf16.msra.mxu0 0
      %6544 = vmatprep.subr.bf16.mxu0 0
      %6545 = vmatpush1.bf16.msra.mxu0 0
      %6546 = vmatprep.subr.bf16.mxu0 0
      %6547 = vmatpush1.bf16.msra.mxu0 0
      %6548 = vmatprep.subr.bf16.mxu0 0
      %6549 = vmatpush1.bf16.msra.mxu0 0
      %6550 = vmatprep.subr.bf16.mxu0 0
      %6551 = vmatpush1.bf16.msra.mxu0 0
      %6552 = vmatprep.subr.bf16.mxu0 0
      %6553 = vmatpush1.bf16.msra.mxu0 0
      %6554 = vmatprep.subr.bf16.mxu0 0
      %6555 = vmatpush1.bf16.msra.mxu0 0
      %6556 = vmatprep.subr.bf16.mxu0 0
      %6557 = vmatpush1.bf16.msra.mxu0 0
      %6558 = vmatprep.subr.bf16.mxu0 0
      %6559 = vmatpush1.bf16.msra.mxu0 0
      %6560 = vmatprep.subr.bf16.mxu0 0
      %6561 = vmatpush1.bf16.msra.mxu0 0
      %6562 = vmatprep.subr.bf16.mxu0 0
      %6563 = vmatpush1.bf16.msra.mxu0 0
      %6564 = vmatprep.subr.bf16.mxu0 0
      %6565 = vmatpush1.bf16.msra.mxu0 0
      %6566 = vmatprep.subr.bf16.mxu0 0
      %6567 = vmatpush1.bf16.msra.mxu0 0
      %6568 = vmatprep.subr.bf16.mxu0 0
      %6569 = vmatpush1.bf16.msra.mxu0 0
      %6570 = vmatprep.subr.bf16.mxu0 0
      %6571 = vmatpush1.bf16.msra.mxu0 0
      %6572 = vmatprep.mubr.bf16.mxu0 0
      %6573 = vmatmul.mubr.bf16.gmra.mrb[0].mxu0 %v4811
      %v6574 = vpop.f32.mrb[0].mxu0
      %v6575 = vadd.f32 0.0, %v6574
      %v6576 = vpop.f32.mrb[0].mxu0
      %v6577 = vpop.f32.mrb[0].mxu0
      %v6578 = vadd.f32 0.0, %v6577
      %v6579 = vpop.f32.mrb[0].mxu0
      %6580 = vmatprep.mubr.bf16.mxu0 0
      %6581 = vmatmul.mubr.bf16.gmra.mrb[0].mxu0 %v4814
      %v6582 = vpop.f32.mrb[0].mxu0
      %v6583 = vpop.f32.mrb[0].mxu0
      %v6584 = vpop.f32.mrb[0].mxu0
      %v6585 = vpop.f32.mrb[0].mxu0
      %6586 = vmatprep.mubr.bf16.mxu0 0
      %6587 = vmatmul.mubr.bf16.gmra.mrb[0].mxu0 %v4817
      %v6588 = vpop.f32.mrb[0].mxu0
      %v6589 = vadd.f32 0.0, %v6588
      %v6590 = vpop.f32.mrb[0].mxu0
      %v6591 = vpop.f32.mrb[0].mxu0
      %v6592 = vadd.f32 0.0, %v6591
      %v6593 = vpop.f32.mrb[0].mxu0
      %6594 = vmatprep.mubr.bf16.mxu0 0
      %6595 = vmatmul.mubr.bf16.gmra.mrb[0].mxu0 %v4820
      %v6596 = vpop.f32.mrb[0].mxu0
      %v6597 = vpop.f32.mrb[0].mxu0
      %v6598 = vpop.f32.mrb[0].mxu0
      %v6599 = vpop.f32.mrb[0].mxu0
      %6600 = vmatprep.mubr.bf16.mxu0 0
      %6601 = vmatmul.mubr.bf16.gmra.mrb[0].mxu0 %v4823
      %v6602 = vpop.f32.mrb[0].mxu0
      %v6603 = vadd.f32 0.0, %v6602
      %v6604 = vpop.f32.mrb[0].mxu0
      %v6605 = vpop.f32.mrb[0].mxu0
      %v6606 = vadd.f32 0.0, %v6605
      %v6607 = vpop.f32.mrb[0].mxu0
      %6608 = vmatprep.mubr.bf16.mxu0 0
      %6609 = vmatmul.mubr.bf16.gmra.mrb[0].mxu0 %v4826
      %v6610 = vpop.f32.mrb[0].mxu0
      %v6611 = vpop.f32.mrb[0].mxu0
      %v6612 = vpop.f32.mrb[0].mxu0
      %v6613 = vpop.f32.mrb[0].mxu0
      %6614 = vmatprep.mubr.bf16.mxu0 0
      %6615 = vmatmul.mubr.bf16.gmra.mrb[0].mxu0 %v4829
      %v6616 = vpop.f32.mrb[0].mxu0
      %v6617 = vadd.f32 0.0, %v6616
      %v6618 = vpop.f32.mrb[0].mxu0
      %v6619 = vpop.f32.mrb[0].mxu0
      %v6620 = vadd.f32 0.0, %v6619
      %v6621 = vpop.f32.mrb[0].mxu0
      %6622 = vmatprep.mubr.bf16.mxu0 0
      %6623 = vmatmul.mubr.bf16.gmra.mrb[0].mxu0 %v4832
      %v6624 = vpop.f32.mrb[0].mxu0
      %v6625 = vpop.f32.mrb[0].mxu0
      %v6626 = vpop.f32.mrb[0].mxu0
      %v6627 = vpop.f32.mrb[0].mxu0
      %6628 = vmatprep.mubr.bf16.mxu0 0
      %6629 = vmatmul.mubr.bf16.gmra.mrb[0].mxu0 %v4835
      %v6630 = vpop.f32.mrb[0].mxu0
      %v6631 = vadd.f32 0.0, %v6630
      %v6632 = vpop.f32.mrb[0].mxu0
      %v6633 = vpop.f32.mrb[0].mxu0
      %v6634 = vadd.f32 0.0, %v6633
      %v6635 = vpop.f32.mrb[0].mxu0
      %6636 = vmatprep.mubr.bf16.mxu0 0
      %6637 = vmatmul.mubr.bf16.gmra.mrb[0].mxu0 %v4838
      %v6638 = vpop.f32.mrb[0].mxu0
      %v6639 = vpop.f32.mrb[0].mxu0
      %v6640 = vpop.f32.mrb[0].mxu0
      %v6641 = vpop.f32.mrb[0].mxu0
      %6642 = vmatprep.mubr.bf16.mxu0 0
      %6643 = vmatmul.mubr.bf16.gmra.mrb[0].mxu0 %v4841
      %v6644 = vpop.f32.mrb[0].mxu0
      %v6645 = vadd.f32 0.0, %v6644
      %v6646 = vpop.f32.mrb[0].mxu0
      %v6647 = vpop.f32.mrb[0].mxu0
      %v6648 = vadd.f32 0.0, %v6647
      %v6649 = vpop.f32.mrb[0].mxu0
      %6650 = vmatprep.mubr.bf16.mxu0 0
      %6651 = vmatmul.mubr.bf16.gmra.mrb[0].mxu0 %v4844
      %v6652 = vpop.f32.mrb[0].mxu0
      %v6653 = vpop.f32.mrb[0].mxu0
      %v6654 = vpop.f32.mrb[0].mxu0
      %v6655 = vpop.f32.mrb[0].mxu0
      %6656 = vmatprep.mubr.bf16.mxu0 0
      %6657 = vmatmul.mubr.bf16.gmra.mrb[0].mxu0 %v4847
      %v6658 = vpop.f32.mrb[0].mxu0
      %v6659 = vadd.f32 0.0, %v6658
      %v6660 = vpop.f32.mrb[0].mxu0
      %v6661 = vpop.f32.mrb[0].mxu0
      %v6662 = vadd.f32 0.0, %v6661
      %v6663 = vpop.f32.mrb[0].mxu0
      %6664 = vmatprep.mubr.bf16.mxu0 0
      %6665 = vmatmul.mubr.bf16.gmra.mrb[0].mxu0 %v4850
      %v6666 = vpop.f32.mrb[0].mxu0
      %v6667 = vpop.f32.mrb[0].mxu0
      %v6668 = vpop.f32.mrb[0].mxu0
      %v6669 = vpop.f32.mrb[0].mxu0
      %6670 = vmatprep.mubr.bf16.mxu0 0
      %6671 = vmatmul.mubr.bf16.gmra.mrb[0].mxu0 %v4853
      %v6672 = vpop.f32.mrb[0].mxu0
      %v6673 = vadd.f32 0.0, %v6672
      %v6674 = vpop.f32.mrb[0].mxu0
      %v6675 = vpop.f32.mrb[0].mxu0
      %v6676 = vadd.f32 0.0, %v6675
      %v6677 = vpop.f32.mrb[0].mxu0
      %6678 = vmatprep.mubr.bf16.mxu0 0
      %6679 = vmatmul.mubr.bf16.gmra.mrb[0].mxu0 %v4856
      %v6680 = vpop.f32.mrb[0].mxu0
      %v6681 = vpop.f32.mrb[0].mxu0
      %v6682 = vpop.f32.mrb[0].mxu0
      %v6683 = vpop.f32.mrb[0].mxu0
      %6684 = vmatprep.mubr.bf16.mxu0 0
      %6685 = vmatmul.mubr.bf16.gmra.mrb[0].mxu0 %v4859
      %v6686 = vpop.f32.mrb[0].mxu0
      %v6687 = vadd.f32 0.0, %v6686
      %v6688 = vpop.f32.mrb[0].mxu0
      %v6689 = vpop.f32.mrb[0].mxu0
      %v6690 = vadd.f32 0.0, %v6689
      %v6691 = vpop.f32.mrb[0].mxu0
      %6692 = vmatprep.mubr.bf16.mxu0 0
      %6693 = vmatmul.mubr.bf16.gmra.mrb[0].mxu0 %v4862
      %v6694 = vpop.f32.mrb[0].mxu0
      %v6695 = vpop.f32.mrb[0].mxu0
      %v6696 = vpop.f32.mrb[0].mxu0
      %v6697 = vpop.f32.mrb[0].mxu0
      %6698 = vmatprep.mubr.bf16.mxu0 0
      %6699 = vmatmul.mubr.bf16.gmra.mrb[0].mxu0 %v4865
      %v6700 = vpop.f32.mrb[0].mxu0
      %v6701 = vadd.f32 0.0, %v6700
      %v6702 = vpop.f32.mrb[0].mxu0
      %v6703 = vpop.f32.mrb[0].mxu0
      %v6704 = vadd.f32 0.0, %v6703
      %v6705 = vpop.f32.mrb[0].mxu0
      %6706 = vmatprep.mubr.bf16.mxu0 0
      %6707 = vmatmul.mubr.bf16.gmra.mrb[0].mxu0 %v4868
      %v6708 = vpop.f32.mrb[0].mxu0
      %v6709 = vpop.f32.mrb[0].mxu0
      %v6710 = vpop.f32.mrb[0].mxu0
      %v6711 = vpop.f32.mrb[0].mxu0
      %6712 = vmatprep.mubr.bf16.mxu0 0
      %6713 = vmatmul.mubr.bf16.gmra.mrb[0].mxu0 %v4871
      %v6714 = vpop.f32.mrb[0].mxu0
      %v6715 = vadd.f32 0.0, %v6714
      %v6716 = vpop.f32.mrb[0].mxu0
      %v6717 = vpop.f32.mrb[0].mxu0
      %v6718 = vadd.f32 0.0, %v6717
      %v6719 = vpop.f32.mrb[0].mxu0
      %6720 = vmatprep.mubr.bf16.mxu0 0
      %6721 = vmatmul.mubr.bf16.gmra.mrb[0].mxu0 %v4874
      %v6722 = vpop.f32.mrb[0].mxu0
      %v6723 = vpop.f32.mrb[0].mxu0
      %v6724 = vpop.f32.mrb[0].mxu0
      %v6725 = vpop.f32.mrb[0].mxu0
      %6726 = vmatprep.mubr.bf16.mxu0 0
      %6727 = vmatmul.mubr.bf16.gmra.mrb[0].mxu0 %v4877
      %v6728 = vpop.f32.mrb[0].mxu0
      %v6729 = vadd.f32 0.0, %v6728
      %v6730 = vpop.f32.mrb[0].mxu0
      %v6731 = vpop.f32.mrb[0].mxu0
      %v6732 = vadd.f32 0.0, %v6731
      %v6733 = vpop.f32.mrb[0].mxu0
      %6734 = vmatprep.mubr.bf16.mxu0 0
      %6735 = vmatmul.mubr.bf16.gmra.mrb[0].mxu0 %v6523
      %v6736 = vpop.f32.mrb[0].mxu0
      %v6737 = vpop.f32.mrb[0].mxu0
      %v6738 = vpop.f32.mrb[0].mxu0
      %v6739 = vpop.f32.mrb[0].mxu0
      %6740 = vmatprep.mubr.bf16.mxu0 0
      %6741 = vmatmul.mubr.bf16.gmra.mrb[0].mxu0 %v6526
      %v6742 = vpop.f32.mrb[0].mxu0
      %v6743 = vadd.f32 0.0, %v6742
      %v6744 = vpop.f32.mrb[0].mxu0
      %v6745 = vpop.f32.mrb[0].mxu0
      %v6746 = vadd.f32 0.0, %v6745
      %v6747 = vpop.f32.mrb[0].mxu0
      %6748 = vmatprep.mubr.bf16.mxu0 0
      %6749 = vmatmul.mubr.bf16.gmra.mrb[0].mxu0 %v6529
      %v6750 = vpop.f32.mrb[0].mxu0
      %v6751 = vpop.f32.mrb[0].mxu0
      %v6752 = vpop.f32.mrb[0].mxu0
      %v6753 = vpop.f32.mrb[0].mxu0
      %6754 = vmatprep.mubr.bf16.mxu0 0
      %6755 = vmatmul.mubr.bf16.gmra.mrb[0].mxu0 %v6532
      %v6756 = vpop.f32.mrb[0].mxu0
      %v6757 = vadd.f32 0.0, %v6756
      %v6758 = vpop.f32.mrb[0].mxu0
      %v6759 = vpop.f32.mrb[0].mxu0
      %v6760 = vadd.f32 0.0, %v6759
      %v6761 = vpop.f32.mrb[0].mxu0
      %6762 = vmatprep.mubr.bf16.mxu0 0
      %6763 = vmatmul.mubr.bf16.gmra.mrb[0].mxu0 %v6535
      %v6764 = vpop.f32.mrb[0].mxu0
      %v6765 = vpop.f32.mrb[0].mxu0
      %v6766 = vpop.f32.mrb[0].mxu0
      %v6767 = vpop.f32.mrb[0].mxu0
      %6768 = vdwg.mxu0
      %v6769 = vadd.f32 %v6451, %v6575
      %v6770 = vadd.f32 %v6452, %v6578
      %v6771 = vadd.f32 %v6453, %v6589
      %v6772 = vadd.f32 %v6454, %v6592
      %v6773 = vadd.f32 %v6455, %v6603
      %v6774 = vadd.f32 %v6456, %v6606
      %v6775 = vadd.f32 %v6457, %v6617
      %v6776 = vadd.f32 %v6458, %v6620
      %v6777 = vadd.f32 %v6459, %v6631
      %v6778 = vadd.f32 %v6460, %v6634
      %v6779 = vadd.f32 %v6461, %v6645
      %v6780 = vadd.f32 %v6462, %v6648
      %v6781 = vadd.f32 %v6463, %v6659
      %v6782 = vadd.f32 %v6464, %v6662
      %v6783 = vadd.f32 %v6465, %v6673
      %v6784 = vadd.f32 %v6466, %v6676
      %v6785 = vadd.f32 %v6467, %v6687
      %v6786 = vadd.f32 %v6468, %v6690
      %v6787 = vadd.f32 %v6469, %v6701
      %v6788 = vadd.f32 %v6470, %v6704
      %v6789 = vadd.f32 %v6471, %v6715
      %v6790 = vadd.f32 %v6472, %v6718
      %v6791 = vadd.f32 %v6473, %v6729
      %v6792 = vadd.f32 %v6474, %v6732
      %v6793 = vadd.f32 %v6475, %v6743
      %v6794 = vadd.f32 %v6476, %v6746
      %v6795 = vadd.f32 %v6477, %v6757
      %v6796 = vadd.f32 %v6478, %v6760
      %v6797 = vld [vmem:[%s4 + $0x140] sm:$0xf]
      %v6798 = vrot.slane %v6490, 1
      %v6799 = vrot.slane %v6486, 2
      %v6800 = vor.u32 %v6798, %v6799
      %v6801 = vsel %vm5691, %v5801, %v6800
      %v6802 = vrot.slane %v6498, 1
      %v6803 = vrot.slane %v6494, 2
      %v6804 = vor.u32 %v6802, %v6803
      %v6805 = vsel %vm5691, %v6800, %v6804
      %v6806 = vrot.slane %v6506, 1
      %v6807 = vrot.slane %v6502, 2
      %v6808 = vor.u32 %v6806, %v6807
      %v6809 = vsel %vm5691, %v6804, %v6808
      %v6810 = vrot.slane %v6514, 1
      %v6811 = vrot.slane %v6510, 2
      %v6812 = vor.u32 %v6810, %v6811
      %v6813 = vsel %vm5691, %v6808, %v6812
      %v6814 = vshrl.u32 %v6483, 16
      %v6816 = vrot.slane %v6814, 1
      %v6817 = vrot.slane %v6518, 2
      %v6818 = vor.u32 %v6816, %v6817
      %v6819 = vsel %vm5691, %v6812, %v6818
      %v6821 = vsel %vm522, %v6801, 0
      %v6824 = vsel %vm522, %v6805, 0
      %v6827 = vsel %vm522, %v6809, 0
      %v6830 = vsel %vm522, %v6813, 0
      %v6833 = vsel %vm522, %v6819, 0
      %v6836 = vsel %vm792, %v6797, 0
      %6838 = vmatprep.subr.bf16.mxu0 0
      %6839 = vmatpush1.bf16.msra.mxu0 %v6836
      %6840 = vmatprep.subr.bf16.mxu0 0
      %6841 = vmatpush1.bf16.msra.mxu0 0
      %6842 = vmatprep.subr.bf16.mxu0 0
      %6843 = vmatpush1.bf16.msra.mxu0 0
      %6844 = vmatprep.subr.bf16.mxu0 0
      %6845 = vmatpush1.bf16.msra.mxu0 0
      %6846 = vmatprep.subr.bf16.mxu0 0
      %6847 = vmatpush1.bf16.msra.mxu0 0
      %6848 = vmatprep.subr.bf16.mxu0 0
      %6849 = vmatpush1.bf16.msra.mxu0 0
      %6850 = vmatprep.subr.bf16.mxu0 0
      %6851 = vmatpush1.bf16.msra.mxu0 0
      %6852 = vmatprep.subr.bf16.mxu0 0
      %6853 = vmatpush1.bf16.msra.mxu0 0
      %6854 = vmatprep.subr.bf16.mxu0 0
      %6855 = vmatpush1.bf16.msra.mxu0 0
      %6856 = vmatprep.subr.bf16.mxu0 0
      %6857 = vmatpush1.bf16.msra.mxu0 0
      %6858 = vmatprep.subr.bf16.mxu0 0
      %6859 = vmatpush1.bf16.msra.mxu0 0
      %6860 = vmatprep.subr.bf16.mxu0 0
      %6861 = vmatpush1.bf16.msra.mxu0 0
      %6862 = vmatprep.subr.bf16.mxu0 0
      %6863 = vmatpush1.bf16.msra.mxu0 0
      %6864 = vmatprep.subr.bf16.mxu0 0
      %6865 = vmatpush1.bf16.msra.mxu0 0
      %6866 = vmatprep.subr.bf16.mxu0 0
      %6867 = vmatpush1.bf16.msra.mxu0 0
      %6868 = vmatprep.subr.bf16.mxu0 0
      %6869 = vmatpush1.bf16.msra.mxu0 0
      %6870 = vmatprep.mubr.bf16.mxu0 0
      %6871 = vmatmul.mubr.bf16.gmra.mrb[0].mxu0 %v5822
      %v6872 = vpop.f32.mrb[0].mxu0
      %v6873 = vadd.f32 0.0, %v6872
      %v6874 = vpop.f32.mrb[0].mxu0
      %v6875 = vpop.f32.mrb[0].mxu0
      %v6876 = vadd.f32 0.0, %v6875
      %v6877 = vpop.f32.mrb[0].mxu0
      %6878 = vmatprep.mubr.bf16.mxu0 0
      %6879 = vmatmul.mubr.bf16.gmra.mrb[0].mxu0 %v5825
      %v6880 = vpop.f32.mrb[0].mxu0
      %v6881 = vpop.f32.mrb[0].mxu0
      %v6882 = vpop.f32.mrb[0].mxu0
      %v6883 = vpop.f32.mrb[0].mxu0
      %6884 = vmatprep.mubr.bf16.mxu0 0
      %6885 = vmatmul.mubr.bf16.gmra.mrb[0].mxu0 %v5828
      %v6886 = vpop.f32.mrb[0].mxu0
      %v6887 = vadd.f32 0.0, %v6886
      %v6888 = vpop.f32.mrb[0].mxu0
      %v6889 = vpop.f32.mrb[0].mxu0
      %v6890 = vadd.f32 0.0, %v6889
      %v6891 = vpop.f32.mrb[0].mxu0
      %6892 = vmatprep.mubr.bf16.mxu0 0
      %6893 = vmatmul.mubr.bf16.gmra.mrb[0].mxu0 %v5831
      %v6894 = vpop.f32.mrb[0].mxu0
      %v6895 = vpop.f32.mrb[0].mxu0
      %v6896 = vpop.f32.mrb[0].mxu0
      %v6897 = vpop.f32.mrb[0].mxu0
      %6898 = vmatprep.mubr.bf16.mxu0 0
      %6899 = vmatmul.mubr.bf16.gmra.mrb[0].mxu0 %v5834
      %v6900 = vpop.f32.mrb[0].mxu0
      %v6901 = vadd.f32 0.0, %v6900
      %v6902 = vpop.f32.mrb[0].mxu0
      %v6903 = vpop.f32.mrb[0].mxu0
      %v6904 = vadd.f32 0.0, %v6903
      %v6905 = vpop.f32.mrb[0].mxu0
      %6906 = vmatprep.mubr.bf16.mxu0 0
      %6907 = vmatmul.mubr.bf16.gmra.mrb[0].mxu0 %v5837
      %v6908 = vpop.f32.mrb[0].mxu0
      %v6909 = vpop.f32.mrb[0].mxu0
      %v6910 = vpop.f32.mrb[0].mxu0
      %v6911 = vpop.f32.mrb[0].mxu0
      %6912 = vmatprep.mubr.bf16.mxu0 0
      %6913 = vmatmul.mubr.bf16.gmra.mrb[0].mxu0 %v5840
      %v6914 = vpop.f32.mrb[0].mxu0
      %v6915 = vadd.f32 0.0, %v6914
      %v6916 = vpop.f32.mrb[0].mxu0
      %v6917 = vpop.f32.mrb[0].mxu0
      %v6918 = vadd.f32 0.0, %v6917
      %v6919 = vpop.f32.mrb[0].mxu0
      %6920 = vmatprep.mubr.bf16.mxu0 0
      %6921 = vmatmul.mubr.bf16.gmra.mrb[0].mxu0 %v5843
      %v6922 = vpop.f32.mrb[0].mxu0
      %v6923 = vpop.f32.mrb[0].mxu0
      %v6924 = vpop.f32.mrb[0].mxu0
      %v6925 = vpop.f32.mrb[0].mxu0
      %6926 = vmatprep.mubr.bf16.mxu0 0
      %6927 = vmatmul.mubr.bf16.gmra.mrb[0].mxu0 %v5846
      %v6928 = vpop.f32.mrb[0].mxu0
      %v6929 = vadd.f32 0.0, %v6928
      %v6930 = vpop.f32.mrb[0].mxu0
      %v6931 = vpop.f32.mrb[0].mxu0
      %v6932 = vadd.f32 0.0, %v6931
      %v6933 = vpop.f32.mrb[0].mxu0
      %6934 = vmatprep.mubr.bf16.mxu0 0
      %6935 = vmatmul.mubr.bf16.gmra.mrb[0].mxu0 %v5849
      %v6936 = vpop.f32.mrb[0].mxu0
      %v6937 = vpop.f32.mrb[0].mxu0
      %v6938 = vpop.f32.mrb[0].mxu0
      %v6939 = vpop.f32.mrb[0].mxu0
      %6940 = vmatprep.mubr.bf16.mxu0 0
      %6941 = vmatmul.mubr.bf16.gmra.mrb[0].mxu0 %v5852
      %v6942 = vpop.f32.mrb[0].mxu0
      %v6943 = vadd.f32 0.0, %v6942
      %v6944 = vpop.f32.mrb[0].mxu0
      %v6945 = vpop.f32.mrb[0].mxu0
      %v6946 = vadd.f32 0.0, %v6945
      %v6947 = vpop.f32.mrb[0].mxu0
      %6948 = vmatprep.mubr.bf16.mxu0 0
      %6949 = vmatmul.mubr.bf16.gmra.mrb[0].mxu0 %v5855
      %v6950 = vpop.f32.mrb[0].mxu0
      %v6951 = vpop.f32.mrb[0].mxu0
      %v6952 = vpop.f32.mrb[0].mxu0
      %v6953 = vpop.f32.mrb[0].mxu0
      %6954 = vmatprep.mubr.bf16.mxu0 0
      %6955 = vmatmul.mubr.bf16.gmra.mrb[0].mxu0 %v5858
      %v6956 = vpop.f32.mrb[0].mxu0
      %v6957 = vadd.f32 0.0, %v6956
      %v6958 = vpop.f32.mrb[0].mxu0
      %v6959 = vpop.f32.mrb[0].mxu0
      %v6960 = vadd.f32 0.0, %v6959
      %v6961 = vpop.f32.mrb[0].mxu0
      %6962 = vmatprep.mubr.bf16.mxu0 0
      %6963 = vmatmul.mubr.bf16.gmra.mrb[0].mxu0 %v5861
      %v6964 = vpop.f32.mrb[0].mxu0
      %v6965 = vpop.f32.mrb[0].mxu0
      %v6966 = vpop.f32.mrb[0].mxu0
      %v6967 = vpop.f32.mrb[0].mxu0
      %6968 = vmatprep.mubr.bf16.mxu0 0
      %6969 = vmatmul.mubr.bf16.gmra.mrb[0].mxu0 %v5864
      %v6970 = vpop.f32.mrb[0].mxu0
      %v6971 = vadd.f32 0.0, %v6970
      %v6972 = vpop.f32.mrb[0].mxu0
      %v6973 = vpop.f32.mrb[0].mxu0
      %v6974 = vadd.f32 0.0, %v6973
      %v6975 = vpop.f32.mrb[0].mxu0
      %6976 = vmatprep.mubr.bf16.mxu0 0
      %6977 = vmatmul.mubr.bf16.gmra.mrb[0].mxu0 %v5867
      %v6978 = vpop.f32.mrb[0].mxu0
      %v6979 = vpop.f32.mrb[0].mxu0
      %v6980 = vpop.f32.mrb[0].mxu0
      %v6981 = vpop.f32.mrb[0].mxu0
      %6982 = vmatprep.mubr.bf16.mxu0 0
      %6983 = vmatmul.mubr.bf16.gmra.mrb[0].mxu0 %v5870
      %v6984 = vpop.f32.mrb[0].mxu0
      %v6985 = vadd.f32 0.0, %v6984
      %v6986 = vpop.f32.mrb[0].mxu0
      %v6987 = vpop.f32.mrb[0].mxu0
      %v6988 = vadd.f32 0.0, %v6987
      %v6989 = vpop.f32.mrb[0].mxu0
      %6990 = vmatprep.mubr.bf16.mxu0 0
      %6991 = vmatmul.mubr.bf16.gmra.mrb[0].mxu0 %v5873
      %v6992 = vpop.f32.mrb[0].mxu0
      %v6993 = vpop.f32.mrb[0].mxu0
      %v6994 = vpop.f32.mrb[0].mxu0
      %v6995 = vpop.f32.mrb[0].mxu0
      %6996 = vmatprep.mubr.bf16.mxu0 0
      %6997 = vmatmul.mubr.bf16.gmra.mrb[0].mxu0 %v5876
      %v6998 = vpop.f32.mrb[0].mxu0
      %v6999 = vadd.f32 0.0, %v6998
      %v7000 = vpop.f32.mrb[0].mxu0
      %v7001 = vpop.f32.mrb[0].mxu0
      %v7002 = vadd.f32 0.0, %v7001
      %v7003 = vpop.f32.mrb[0].mxu0
      %7004 = vmatprep.mubr.bf16.mxu0 0
      %7005 = vmatmul.mubr.bf16.gmra.mrb[0].mxu0 %v5879
      %v7006 = vpop.f32.mrb[0].mxu0
      %v7007 = vpop.f32.mrb[0].mxu0
      %v7008 = vpop.f32.mrb[0].mxu0
      %v7009 = vpop.f32.mrb[0].mxu0
      %7010 = vmatprep.mubr.bf16.mxu0 0
      %7011 = vmatmul.mubr.bf16.gmra.mrb[0].mxu0 %v5882
      %v7012 = vpop.f32.mrb[0].mxu0
      %v7013 = vadd.f32 0.0, %v7012
      %v7014 = vpop.f32.mrb[0].mxu0
      %v7015 = vpop.f32.mrb[0].mxu0
      %v7016 = vadd.f32 0.0, %v7015
      %v7017 = vpop.f32.mrb[0].mxu0
      %7018 = vmatprep.mubr.bf16.mxu0 0
      %7019 = vmatmul.mubr.bf16.gmra.mrb[0].mxu0 %v5885
      %v7020 = vpop.f32.mrb[0].mxu0
      %v7021 = vpop.f32.mrb[0].mxu0
      %v7022 = vpop.f32.mrb[0].mxu0
      %v7023 = vpop.f32.mrb[0].mxu0
      %7024 = vmatprep.mubr.bf16.mxu0 0
      %7025 = vmatmul.mubr.bf16.gmra.mrb[0].mxu0 %v5888
      %v7026 = vpop.f32.mrb[0].mxu0
      %v7027 = vadd.f32 0.0, %v7026
      %v7028 = vpop.f32.mrb[0].mxu0
      %v7029 = vpop.f32.mrb[0].mxu0
      %v7030 = vadd.f32 0.0, %v7029
      %v7031 = vpop.f32.mrb[0].mxu0
      %7032 = vmatprep.mubr.bf16.mxu0 0
      %7033 = vmatmul.mubr.bf16.gmra.mrb[0].mxu0 %v6821
      %v7034 = vpop.f32.mrb[0].mxu0
      %v7035 = vpop.f32.mrb[0].mxu0
      %v7036 = vpop.f32.mrb[0].mxu0
      %v7037 = vpop.f32.mrb[0].mxu0
      %7038 = vmatprep.mubr.bf16.mxu0 0
      %7039 = vmatmul.mubr.bf16.gmra.mrb[0].mxu0 %v6824
      %v7040 = vpop.f32.mrb[0].mxu0
      %v7041 = vadd.f32 0.0, %v7040
      %v7042 = vpop.f32.mrb[0].mxu0
      %v7043 = vpop.f32.mrb[0].mxu0
      %v7044 = vadd.f32 0.0, %v7043
      %v7045 = vpop.f32.mrb[0].mxu0
      %7046 = vmatprep.mubr.bf16.mxu0 0
      %7047 = vmatmul.mubr.bf16.gmra.mrb[0].mxu0 %v6827
      %v7048 = vpop.f32.mrb[0].mxu0
      %v7049 = vpop.f32.mrb[0].mxu0
      %v7050 = vpop.f32.mrb[0].mxu0
      %v7051 = vpop.f32.mrb[0].mxu0
      %7052 = vmatprep.mubr.bf16.mxu0 0
      %7053 = vmatmul.mubr.bf16.gmra.mrb[0].mxu0 %v6830
      %v7054 = vpop.f32.mrb[0].mxu0
      %v7055 = vadd.f32 0.0, %v7054
      %v7056 = vpop.f32.mrb[0].mxu0
      %v7057 = vpop.f32.mrb[0].mxu0
      %v7058 = vadd.f32 0.0, %v7057
      %v7059 = vpop.f32.mrb[0].mxu0
      %7060 = vmatprep.mubr.bf16.mxu0 0
      %7061 = vmatmul.mubr.bf16.gmra.mrb[0].mxu0 %v6833
      %v7062 = vpop.f32.mrb[0].mxu0
      %v7063 = vpop.f32.mrb[0].mxu0
      %v7064 = vpop.f32.mrb[0].mxu0
      %v7065 = vpop.f32.mrb[0].mxu0
      %7066 = vdwg.mxu0
      %v7067 = vadd.f32 %v6769, %v6873
      %v7068 = vadd.f32 %v6770, %v6876
      %v7069 = vadd.f32 %v6771, %v6887
      %v7070 = vadd.f32 %v6772, %v6890
      %v7071 = vadd.f32 %v6773, %v6901
      %v7072 = vadd.f32 %v6774, %v6904
      %v7073 = vadd.f32 %v6775, %v6915
      %v7074 = vadd.f32 %v6776, %v6918
      %v7075 = vadd.f32 %v6777, %v6929
      %v7076 = vadd.f32 %v6778, %v6932
      %v7077 = vadd.f32 %v6779, %v6943
      %v7078 = vadd.f32 %v6780, %v6946
      %v7079 = vadd.f32 %v6781, %v6957
      %v7080 = vadd.f32 %v6782, %v6960
      %v7081 = vadd.f32 %v6783, %v6971
      %v7082 = vadd.f32 %v6784, %v6974
      %v7083 = vadd.f32 %v6785, %v6985
      %v7084 = vadd.f32 %v6786, %v6988
      %v7085 = vadd.f32 %v6787, %v6999
      %v7086 = vadd.f32 %v6788, %v7002
      %v7087 = vadd.f32 %v6789, %v7013
      %v7088 = vadd.f32 %v6790, %v7016
      %v7089 = vadd.f32 %v6791, %v7027
      %v7090 = vadd.f32 %v6792, %v7030
      %v7091 = vadd.f32 %v6793, %v7041
      %v7092 = vadd.f32 %v6794, %v7044
      %v7093 = vadd.f32 %v6795, %v7055
      %v7094 = vadd.f32 %v6796, %v7058
      %v7095 = vpack.c.bf16 %v4501, %v4500
      %v7096 = vpack.c.bf16 %v4503, %v4502
      %v7097 = vpack.c.bf16 %v4505, %v4504
      %v7098 = vpack.c.bf16 %v4507, %v4506
      %v7099 = vpack.c.bf16 %v4508, %v4508
      %v7100 = vld [vmem:[%s4 + $0x180] sm:$0xf]
      %v7102 = vshrl.u32 %v7095, 16
      %v7104 = vrot.slane %v7102, 3
      %v7105 = vshll.u32 %v7095, 16
      %v7107 = vrot.slane %v7105, 4
      %v7108 = vor.u32 %v7104, %v7107
      %v7109 = vsel %vm1053, %v6193, %v7108
      %v7111 = vshrl.u32 %v7096, 16
      %v7113 = vrot.slane %v7111, 3
      %v7114 = vshll.u32 %v7096, 16
      %v7116 = vrot.slane %v7114, 4
      %v7117 = vor.u32 %v7113, %v7116
      %v7118 = vsel %vm1053, %v7108, %v7117
      %v7120 = vshrl.u32 %v7097, 16
      %v7122 = vrot.slane %v7120, 3
      %v7123 = vshll.u32 %v7097, 16
      %v7125 = vrot.slane %v7123, 4
      %v7126 = vor.u32 %v7122, %v7125
      %v7127 = vsel %vm1053, %v7117, %v7126
      %v7129 = vshrl.u32 %v7098, 16
      %v7131 = vrot.slane %v7129, 3
      %v7132 = vshll.u32 %v7098, 16
      %v7134 = vrot.slane %v7132, 4
      %v7135 = vor.u32 %v7131, %v7134
      %v7136 = vsel %vm1053, %v7126, %v7135
      %v7138 = vshrl.u32 %v7099, 16
      %v7140 = vrot.slane %v7138, 3
      %v7141 = vshll.u32 %v7099, 16
      %v7143 = vrot.slane %v7141, 4
      %v7144 = vor.u32 %v7140, %v7143
      %v7145 = vsel %vm1053, %v7135, %v7144
      %v7147 = vsel %vm522, %v7109, 0
      %v7150 = vsel %vm522, %v7118, 0
      %v7153 = vsel %vm522, %v7127, 0
      %v7156 = vsel %vm522, %v7136, 0
      %v7159 = vsel %vm522, %v7145, 0
      %v7162 = vsel %vm792, %v7100, 0
      %7164 = vmatprep.subr.bf16.mxu0 0
      %7165 = vmatpush1.bf16.msra.mxu0 %v7162
      %7166 = vmatprep.subr.bf16.mxu0 0
      %7167 = vmatpush1.bf16.msra.mxu0 0
      %7168 = vmatprep.subr.bf16.mxu0 0
      %7169 = vmatpush1.bf16.msra.mxu0 0
      %7170 = vmatprep.subr.bf16.mxu0 0
      %7171 = vmatpush1.bf16.msra.mxu0 0
      %7172 = vmatprep.subr.bf16.mxu0 0
      %7173 = vmatpush1.bf16.msra.mxu0 0
      %7174 = vmatprep.subr.bf16.mxu0 0
      %7175 = vmatpush1.bf16.msra.mxu0 0
      %7176 = vmatprep.subr.bf16.mxu0 0
      %7177 = vmatpush1.bf16.msra.mxu0 0
      %7178 = vmatprep.subr.bf16.mxu0 0
      %7179 = vmatpush1.bf16.msra.mxu0 0
      %7180 = vmatprep.subr.bf16.mxu0 0
      %7181 = vmatpush1.bf16.msra.mxu0 0
      %7182 = vmatprep.subr.bf16.mxu0 0
      %7183 = vmatpush1.bf16.msra.mxu0 0
      %7184 = vmatprep.subr.bf16.mxu0 0
      %7185 = vmatpush1.bf16.msra.mxu0 0
      %7186 = vmatprep.subr.bf16.mxu0 0
      %7187 = vmatpush1.bf16.msra.mxu0 0
      %7188 = vmatprep.subr.bf16.mxu0 0
      %7189 = vmatpush1.bf16.msra.mxu0 0
      %7190 = vmatprep.subr.bf16.mxu0 0
      %7191 = vmatpush1.bf16.msra.mxu0 0
      %7192 = vmatprep.subr.bf16.mxu0 0
      %7193 = vmatpush1.bf16.msra.mxu0 0
      %7194 = vmatprep.subr.bf16.mxu0 0
      %7195 = vmatpush1.bf16.msra.mxu0 0
      %7196 = vmatprep.mubr.bf16.mxu0 0
      %7197 = vmatmul.mubr.bf16.gmra.mrb[0].mxu0 %v5399
      %v7198 = vpop.f32.mrb[0].mxu0
      %v7199 = vadd.f32 0.0, %v7198
      %v7200 = vpop.f32.mrb[0].mxu0
      %v7201 = vpop.f32.mrb[0].mxu0
      %v7202 = vadd.f32 0.0, %v7201
      %v7203 = vpop.f32.mrb[0].mxu0
      %7204 = vmatprep.mubr.bf16.mxu0 0
      %7205 = vmatmul.mubr.bf16.gmra.mrb[0].mxu0 %v5402
      %v7206 = vpop.f32.mrb[0].mxu0
      %v7207 = vpop.f32.mrb[0].mxu0
      %v7208 = vpop.f32.mrb[0].mxu0
      %v7209 = vpop.f32.mrb[0].mxu0
      %7210 = vmatprep.mubr.bf16.mxu0 0
      %7211 = vmatmul.mubr.bf16.gmra.mrb[0].mxu0 %v5405
      %v7212 = vpop.f32.mrb[0].mxu0
      %v7213 = vadd.f32 0.0, %v7212
      %v7214 = vpop.f32.mrb[0].mxu0
      %v7215 = vpop.f32.mrb[0].mxu0
      %v7216 = vadd.f32 0.0, %v7215
      %v7217 = vpop.f32.mrb[0].mxu0
      %7218 = vmatprep.mubr.bf16.mxu0 0
      %7219 = vmatmul.mubr.bf16.gmra.mrb[0].mxu0 %v5408
      %v7220 = vpop.f32.mrb[0].mxu0
      %v7221 = vpop.f32.mrb[0].mxu0
      %v7222 = vpop.f32.mrb[0].mxu0
      %v7223 = vpop.f32.mrb[0].mxu0
      %7224 = vmatprep.mubr.bf16.mxu0 0
      %7225 = vmatmul.mubr.bf16.gmra.mrb[0].mxu0 %v5411
      %v7226 = vpop.f32.mrb[0].mxu0
      %v7227 = vadd.f32 0.0, %v7226
      %v7228 = vpop.f32.mrb[0].mxu0
      %v7229 = vpop.f32.mrb[0].mxu0
      %v7230 = vadd.f32 0.0, %v7229
      %v7231 = vpop.f32.mrb[0].mxu0
      %7232 = vmatprep.mubr.bf16.mxu0 0
      %7233 = vmatmul.mubr.bf16.gmra.mrb[0].mxu0 %v5414
      %v7234 = vpop.f32.mrb[0].mxu0
      %v7235 = vpop.f32.mrb[0].mxu0
      %v7236 = vpop.f32.mrb[0].mxu0
      %v7237 = vpop.f32.mrb[0].mxu0
      %7238 = vmatprep.mubr.bf16.mxu0 0
      %7239 = vmatmul.mubr.bf16.gmra.mrb[0].mxu0 %v5417
      %v7240 = vpop.f32.mrb[0].mxu0
      %v7241 = vadd.f32 0.0, %v7240
      %v7242 = vpop.f32.mrb[0].mxu0
      %v7243 = vpop.f32.mrb[0].mxu0
      %v7244 = vadd.f32 0.0, %v7243
      %v7245 = vpop.f32.mrb[0].mxu0
      %7246 = vmatprep.mubr.bf16.mxu0 0
      %7247 = vmatmul.mubr.bf16.gmra.mrb[0].mxu0 %v5420
      %v7248 = vpop.f32.mrb[0].mxu0
      %v7249 = vpop.f32.mrb[0].mxu0
      %v7250 = vpop.f32.mrb[0].mxu0
      %v7251 = vpop.f32.mrb[0].mxu0
      %7252 = vmatprep.mubr.bf16.mxu0 0
      %7253 = vmatmul.mubr.bf16.gmra.mrb[0].mxu0 %v5423
      %v7254 = vpop.f32.mrb[0].mxu0
      %v7255 = vadd.f32 0.0, %v7254
      %v7256 = vpop.f32.mrb[0].mxu0
      %v7257 = vpop.f32.mrb[0].mxu0
      %v7258 = vadd.f32 0.0, %v7257
      %v7259 = vpop.f32.mrb[0].mxu0
      %7260 = vmatprep.mubr.bf16.mxu0 0
      %7261 = vmatmul.mubr.bf16.gmra.mrb[0].mxu0 %v5426
      %v7262 = vpop.f32.mrb[0].mxu0
      %v7263 = vpop.f32.mrb[0].mxu0
      %v7264 = vpop.f32.mrb[0].mxu0
      %v7265 = vpop.f32.mrb[0].mxu0
      %7266 = vmatprep.mubr.bf16.mxu0 0
      %7267 = vmatmul.mubr.bf16.gmra.mrb[0].mxu0 %v5429
      %v7268 = vpop.f32.mrb[0].mxu0
      %v7269 = vadd.f32 0.0, %v7268
      %v7270 = vpop.f32.mrb[0].mxu0
      %v7271 = vpop.f32.mrb[0].mxu0
      %v7272 = vadd.f32 0.0, %v7271
      %v7273 = vpop.f32.mrb[0].mxu0
      %7274 = vmatprep.mubr.bf16.mxu0 0
      %7275 = vmatmul.mubr.bf16.gmra.mrb[0].mxu0 %v5432
      %v7276 = vpop.f32.mrb[0].mxu0
      %v7277 = vpop.f32.mrb[0].mxu0
      %v7278 = vpop.f32.mrb[0].mxu0
      %v7279 = vpop.f32.mrb[0].mxu0
      %7280 = vmatprep.mubr.bf16.mxu0 0
      %7281 = vmatmul.mubr.bf16.gmra.mrb[0].mxu0 %v5435
      %v7282 = vpop.f32.mrb[0].mxu0
      %v7283 = vadd.f32 0.0, %v7282
      %v7284 = vpop.f32.mrb[0].mxu0
      %v7285 = vpop.f32.mrb[0].mxu0
      %v7286 = vadd.f32 0.0, %v7285
      %v7287 = vpop.f32.mrb[0].mxu0
      %7288 = vmatprep.mubr.bf16.mxu0 0
      %7289 = vmatmul.mubr.bf16.gmra.mrb[0].mxu0 %v5438
      %v7290 = vpop.f32.mrb[0].mxu0
      %v7291 = vpop.f32.mrb[0].mxu0
      %v7292 = vpop.f32.mrb[0].mxu0
      %v7293 = vpop.f32.mrb[0].mxu0
      %7294 = vmatprep.mubr.bf16.mxu0 0
      %7295 = vmatmul.mubr.bf16.gmra.mrb[0].mxu0 %v5441
      %v7296 = vpop.f32.mrb[0].mxu0
      %v7297 = vadd.f32 0.0, %v7296
      %v7298 = vpop.f32.mrb[0].mxu0
      %v7299 = vpop.f32.mrb[0].mxu0
      %v7300 = vadd.f32 0.0, %v7299
      %v7301 = vpop.f32.mrb[0].mxu0
      %7302 = vmatprep.mubr.bf16.mxu0 0
      %7303 = vmatmul.mubr.bf16.gmra.mrb[0].mxu0 %v5444
      %v7304 = vpop.f32.mrb[0].mxu0
      %v7305 = vpop.f32.mrb[0].mxu0
      %v7306 = vpop.f32.mrb[0].mxu0
      %v7307 = vpop.f32.mrb[0].mxu0
      %7308 = vmatprep.mubr.bf16.mxu0 0
      %7309 = vmatmul.mubr.bf16.gmra.mrb[0].mxu0 %v5447
      %v7310 = vpop.f32.mrb[0].mxu0
      %v7311 = vadd.f32 0.0, %v7310
      %v7312 = vpop.f32.mrb[0].mxu0
      %v7313 = vpop.f32.mrb[0].mxu0
      %v7314 = vadd.f32 0.0, %v7313
      %v7315 = vpop.f32.mrb[0].mxu0
      %7316 = vmatprep.mubr.bf16.mxu0 0
      %7317 = vmatmul.mubr.bf16.gmra.mrb[0].mxu0 %v5450
      %v7318 = vpop.f32.mrb[0].mxu0
      %v7319 = vpop.f32.mrb[0].mxu0
      %v7320 = vpop.f32.mrb[0].mxu0
      %v7321 = vpop.f32.mrb[0].mxu0
      %7322 = vmatprep.mubr.bf16.mxu0 0
      %7323 = vmatmul.mubr.bf16.gmra.mrb[0].mxu0 %v5453
      %v7324 = vpop.f32.mrb[0].mxu0
      %v7325 = vadd.f32 0.0, %v7324
      %v7326 = vpop.f32.mrb[0].mxu0
      %v7327 = vpop.f32.mrb[0].mxu0
      %v7328 = vadd.f32 0.0, %v7327
      %v7329 = vpop.f32.mrb[0].mxu0
      %7330 = vmatprep.mubr.bf16.mxu0 0
      %7331 = vmatmul.mubr.bf16.gmra.mrb[0].mxu0 %v6205
      %v7332 = vpop.f32.mrb[0].mxu0
      %v7333 = vpop.f32.mrb[0].mxu0
      %v7334 = vpop.f32.mrb[0].mxu0
      %v7335 = vpop.f32.mrb[0].mxu0
      %7336 = vmatprep.mubr.bf16.mxu0 0
      %7337 = vmatmul.mubr.bf16.gmra.mrb[0].mxu0 %v6208
      %v7338 = vpop.f32.mrb[0].mxu0
      %v7339 = vadd.f32 0.0, %v7338
      %v7340 = vpop.f32.mrb[0].mxu0
      %v7341 = vpop.f32.mrb[0].mxu0
      %v7342 = vadd.f32 0.0, %v7341
      %v7343 = vpop.f32.mrb[0].mxu0
      %7344 = vmatprep.mubr.bf16.mxu0 0
      %7345 = vmatmul.mubr.bf16.gmra.mrb[0].mxu0 %v6211
      %v7346 = vpop.f32.mrb[0].mxu0
      %v7347 = vpop.f32.mrb[0].mxu0
      %v7348 = vpop.f32.mrb[0].mxu0
      %v7349 = vpop.f32.mrb[0].mxu0
      %7350 = vmatprep.mubr.bf16.mxu0 0
      %7351 = vmatmul.mubr.bf16.gmra.mrb[0].mxu0 %v6214
      %v7352 = vpop.f32.mrb[0].mxu0
      %v7353 = vadd.f32 0.0, %v7352
      %v7354 = vpop.f32.mrb[0].mxu0
      %v7355 = vpop.f32.mrb[0].mxu0
      %v7356 = vadd.f32 0.0, %v7355
      %v7357 = vpop.f32.mrb[0].mxu0
      %7358 = vmatprep.mubr.bf16.mxu0 0
      %7359 = vmatmul.mubr.bf16.gmra.mrb[0].mxu0 %v7147
      %v7360 = vpop.f32.mrb[0].mxu0
      %v7361 = vpop.f32.mrb[0].mxu0
      %v7362 = vpop.f32.mrb[0].mxu0
      %v7363 = vpop.f32.mrb[0].mxu0
      %7364 = vmatprep.mubr.bf16.mxu0 0
      %7365 = vmatmul.mubr.bf16.gmra.mrb[0].mxu0 %v7150
      %v7366 = vpop.f32.mrb[0].mxu0
      %v7367 = vadd.f32 0.0, %v7366
      %v7368 = vpop.f32.mrb[0].mxu0
      %v7369 = vpop.f32.mrb[0].mxu0
      %v7370 = vadd.f32 0.0, %v7369
      %v7371 = vpop.f32.mrb[0].mxu0
      %7372 = vmatprep.mubr.bf16.mxu0 0
      %7373 = vmatmul.mubr.bf16.gmra.mrb[0].mxu0 %v7153
      %v7374 = vpop.f32.mrb[0].mxu0
      %v7375 = vpop.f32.mrb[0].mxu0
      %v7376 = vpop.f32.mrb[0].mxu0
      %v7377 = vpop.f32.mrb[0].mxu0
      %7378 = vmatprep.mubr.bf16.mxu0 0
      %7379 = vmatmul.mubr.bf16.gmra.mrb[0].mxu0 %v7156
      %v7380 = vpop.f32.mrb[0].mxu0
      %v7381 = vadd.f32 0.0, %v7380
      %v7382 = vpop.f32.mrb[0].mxu0
      %v7383 = vpop.f32.mrb[0].mxu0
      %v7384 = vadd.f32 0.0, %v7383
      %v7385 = vpop.f32.mrb[0].mxu0
      %7386 = vmatprep.mubr.bf16.mxu0 0
      %7387 = vmatmul.mubr.bf16.gmra.mrb[0].mxu0 %v7159
      %v7388 = vpop.f32.mrb[0].mxu0
      %v7389 = vpop.f32.mrb[0].mxu0
      %v7390 = vpop.f32.mrb[0].mxu0
      %v7391 = vpop.f32.mrb[0].mxu0
      %7392 = vdwg.mxu0
      %v7393 = vadd.f32 %v7067, %v7199
      %v7394 = vadd.f32 %v7068, %v7202
      %v7395 = vadd.f32 %v7069, %v7213
      %v7396 = vadd.f32 %v7070, %v7216
      %v7397 = vadd.f32 %v7071, %v7227
      %v7398 = vadd.f32 %v7072, %v7230
      %v7399 = vadd.f32 %v7073, %v7241
      %v7400 = vadd.f32 %v7074, %v7244
      %v7401 = vadd.f32 %v7075, %v7255
      %v7402 = vadd.f32 %v7076, %v7258
      %v7403 = vadd.f32 %v7077, %v7269
      %v7404 = vadd.f32 %v7078, %v7272
      %v7405 = vadd.f32 %v7079, %v7283
      %v7406 = vadd.f32 %v7080, %v7286
      %v7407 = vadd.f32 %v7081, %v7297
      %v7408 = vadd.f32 %v7082, %v7300
      %v7409 = vadd.f32 %v7083, %v7311
      %v7410 = vadd.f32 %v7084, %v7314
      %v7411 = vadd.f32 %v7085, %v7325
      %v7412 = vadd.f32 %v7086, %v7328
      %v7413 = vadd.f32 %v7087, %v7339
      %v7414 = vadd.f32 %v7088, %v7342
      %v7415 = vadd.f32 %v7089, %v7353
      %v7416 = vadd.f32 %v7090, %v7356
      %v7417 = vadd.f32 %v7091, %v7367
      %v7418 = vadd.f32 %v7092, %v7370
      %v7419 = vadd.f32 %v7093, %v7381
      %v7420 = vadd.f32 %v7094, %v7384
      %v7421 = vpack.c.bf16 %v4502, %v4501
      %v7422 = vpack.c.bf16 %v4504, %v4503
      %v7423 = vpack.c.bf16 %v4506, %v4505
      %v7424 = vpack.c.bf16 %v4508, %v4507
      %v7425 = vpack.c.bf16 %v4509, %v4509
      %v7426 = vld [vmem:[%s4 + $0x1c0] sm:$0xf]
      %v7428 = vshll.u32 %v7421, 16
      %v7430 = vrot.slane %v7428, 1
      %v7431 = vsel %vm1708, %v6516, %v7430
      %v7432 = vshrl.u32 %v7421, 16
      %v7434 = vor.u32 %v7432, %v7430
      %v7436 = vshll.u32 %v7422, 16
      %v7438 = vrot.slane %v7436, 1
      %v7439 = vsel %vm1708, %v7434, %v7438
      %v7440 = vshrl.u32 %v7422, 16
      %v7442 = vor.u32 %v7440, %v7438
      %v7444 = vshll.u32 %v7423, 16
      %v7446 = vrot.slane %v7444, 1
      %v7447 = vsel %vm1708, %v7442, %v7446
      %v7448 = vshrl.u32 %v7423, 16
      %v7450 = vor.u32 %v7448, %v7446
      %v7452 = vshll.u32 %v7424, 16
      %v7454 = vrot.slane %v7452, 1
      %v7455 = vsel %vm1708, %v7450, %v7454
      %v7456 = vshrl.u32 %v7424, 16
      %v7458 = vor.u32 %v7456, %v7454
      %v7460 = vshll.u32 %v7425, 16
      %v7462 = vrot.slane %v7460, 1
      %v7463 = vsel %vm1708, %v7458, %v7462
      %v7465 = vsel %vm522, %v7431, 0
      %v7468 = vsel %vm522, %v7439, 0
      %v7471 = vsel %vm522, %v7447, 0
      %v7474 = vsel %vm522, %v7455, 0
      %v7477 = vsel %vm522, %v7463, 0
      %v7480 = vsel %vm792, %v7426, 0
      %7482 = vmatprep.subr.bf16.mxu0 0
      %7483 = vmatpush1.bf16.msra.mxu0 %v7480
      %7484 = vmatprep.subr.bf16.mxu0 0
      %7485 = vmatpush1.bf16.msra.mxu0 0
      %7486 = vmatprep.subr.bf16.mxu0 0
      %7487 = vmatpush1.bf16.msra.mxu0 0
      %7488 = vmatprep.subr.bf16.mxu0 0
      %7489 = vmatpush1.bf16.msra.mxu0 0
      %7490 = vmatprep.subr.bf16.mxu0 0
      %7491 = vmatpush1.bf16.msra.mxu0 0
      %7492 = vmatprep.subr.bf16.mxu0 0
      %7493 = vmatpush1.bf16.msra.mxu0 0
      %7494 = vmatprep.subr.bf16.mxu0 0
      %7495 = vmatpush1.bf16.msra.mxu0 0
      %7496 = vmatprep.subr.bf16.mxu0 0
      %7497 = vmatpush1.bf16.msra.mxu0 0
      %7498 = vmatprep.subr.bf16.mxu0 0
      %7499 = vmatpush1.bf16.msra.mxu0 0
      %7500 = vmatprep.subr.bf16.mxu0 0
      %7501 = vmatpush1.bf16.msra.mxu0 0
      %7502 = vmatprep.subr.bf16.mxu0 0
      %7503 = vmatpush1.bf16.msra.mxu0 0
      %7504 = vmatprep.subr.bf16.mxu0 0
      %7505 = vmatpush1.bf16.msra.mxu0 0
      %7506 = vmatprep.subr.bf16.mxu0 0
      %7507 = vmatpush1.bf16.msra.mxu0 0
      %7508 = vmatprep.subr.bf16.mxu0 0
      %7509 = vmatpush1.bf16.msra.mxu0 0
      %7510 = vmatprep.subr.bf16.mxu0 0
      %7511 = vmatpush1.bf16.msra.mxu0 0
      %7512 = vmatprep.subr.bf16.mxu0 0
      %7513 = vmatpush1.bf16.msra.mxu0 0
      %7514 = vmatprep.mubr.bf16.mxu0 0
      %7515 = vmatmul.mubr.bf16.gmra.mrb[0].mxu0 %v4823
      %v7516 = vpop.f32.mrb[0].mxu0
      %v7517 = vadd.f32 0.0, %v7516
      %v7518 = vpop.f32.mrb[0].mxu0
      %v7519 = vpop.f32.mrb[0].mxu0
      %v7520 = vadd.f32 0.0, %v7519
      %v7521 = vpop.f32.mrb[0].mxu0
      %7522 = vmatprep.mubr.bf16.mxu0 0
      %7523 = vmatmul.mubr.bf16.gmra.mrb[0].mxu0 %v4826
      %v7524 = vpop.f32.mrb[0].mxu0
      %v7525 = vpop.f32.mrb[0].mxu0
      %v7526 = vpop.f32.mrb[0].mxu0
      %v7527 = vpop.f32.mrb[0].mxu0
      %7528 = vmatprep.mubr.bf16.mxu0 0
      %7529 = vmatmul.mubr.bf16.gmra.mrb[0].mxu0 %v4829
      %v7530 = vpop.f32.mrb[0].mxu0
      %v7531 = vadd.f32 0.0, %v7530
      %v7532 = vpop.f32.mrb[0].mxu0
      %v7533 = vpop.f32.mrb[0].mxu0
      %v7534 = vadd.f32 0.0, %v7533
      %v7535 = vpop.f32.mrb[0].mxu0
      %7536 = vmatprep.mubr.bf16.mxu0 0
      %7537 = vmatmul.mubr.bf16.gmra.mrb[0].mxu0 %v4832
      %v7538 = vpop.f32.mrb[0].mxu0
      %v7539 = vpop.f32.mrb[0].mxu0
      %v7540 = vpop.f32.mrb[0].mxu0
      %v7541 = vpop.f32.mrb[0].mxu0
      %7542 = vmatprep.mubr.bf16.mxu0 0
      %7543 = vmatmul.mubr.bf16.gmra.mrb[0].mxu0 %v4835
      %v7544 = vpop.f32.mrb[0].mxu0
      %v7545 = vadd.f32 0.0, %v7544
      %v7546 = vpop.f32.mrb[0].mxu0
      %v7547 = vpop.f32.mrb[0].mxu0
      %v7548 = vadd.f32 0.0, %v7547
      %v7549 = vpop.f32.mrb[0].mxu0
      %7550 = vmatprep.mubr.bf16.mxu0 0
      %7551 = vmatmul.mubr.bf16.gmra.mrb[0].mxu0 %v4838
      %v7552 = vpop.f32.mrb[0].mxu0
      %v7553 = vpop.f32.mrb[0].mxu0
      %v7554 = vpop.f32.mrb[0].mxu0
      %v7555 = vpop.f32.mrb[0].mxu0
      %7556 = vmatprep.mubr.bf16.mxu0 0
      %7557 = vmatmul.mubr.bf16.gmra.mrb[0].mxu0 %v4841
      %v7558 = vpop.f32.mrb[0].mxu0
      %v7559 = vadd.f32 0.0, %v7558
      %v7560 = vpop.f32.mrb[0].mxu0
      %v7561 = vpop.f32.mrb[0].mxu0
      %v7562 = vadd.f32 0.0, %v7561
      %v7563 = vpop.f32.mrb[0].mxu0
      %7564 = vmatprep.mubr.bf16.mxu0 0
      %7565 = vmatmul.mubr.bf16.gmra.mrb[0].mxu0 %v4844
      %v7566 = vpop.f32.mrb[0].mxu0
      %v7567 = vpop.f32.mrb[0].mxu0
      %v7568 = vpop.f32.mrb[0].mxu0
      %v7569 = vpop.f32.mrb[0].mxu0
      %7570 = vmatprep.mubr.bf16.mxu0 0
      %7571 = vmatmul.mubr.bf16.gmra.mrb[0].mxu0 %v4847
      %v7572 = vpop.f32.mrb[0].mxu0
      %v7573 = vadd.f32 0.0, %v7572
      %v7574 = vpop.f32.mrb[0].mxu0
      %v7575 = vpop.f32.mrb[0].mxu0
      %v7576 = vadd.f32 0.0, %v7575
      %v7577 = vpop.f32.mrb[0].mxu0
      %7578 = vmatprep.mubr.bf16.mxu0 0
      %7579 = vmatmul.mubr.bf16.gmra.mrb[0].mxu0 %v4850
      %v7580 = vpop.f32.mrb[0].mxu0
      %v7581 = vpop.f32.mrb[0].mxu0
      %v7582 = vpop.f32.mrb[0].mxu0
      %v7583 = vpop.f32.mrb[0].mxu0
      %7584 = vmatprep.mubr.bf16.mxu0 0
      %7585 = vmatmul.mubr.bf16.gmra.mrb[0].mxu0 %v4853
      %v7586 = vpop.f32.mrb[0].mxu0
      %v7587 = vadd.f32 0.0, %v7586
      %v7588 = vpop.f32.mrb[0].mxu0
      %v7589 = vpop.f32.mrb[0].mxu0
      %v7590 = vadd.f32 0.0, %v7589
      %v7591 = vpop.f32.mrb[0].mxu0
      %7592 = vmatprep.mubr.bf16.mxu0 0
      %7593 = vmatmul.mubr.bf16.gmra.mrb[0].mxu0 %v4856
      %v7594 = vpop.f32.mrb[0].mxu0
      %v7595 = vpop.f32.mrb[0].mxu0
      %v7596 = vpop.f32.mrb[0].mxu0
      %v7597 = vpop.f32.mrb[0].mxu0
      %7598 = vmatprep.mubr.bf16.mxu0 0
      %7599 = vmatmul.mubr.bf16.gmra.mrb[0].mxu0 %v4859
      %v7600 = vpop.f32.mrb[0].mxu0
      %v7601 = vadd.f32 0.0, %v7600
      %v7602 = vpop.f32.mrb[0].mxu0
      %v7603 = vpop.f32.mrb[0].mxu0
      %v7604 = vadd.f32 0.0, %v7603
      %v7605 = vpop.f32.mrb[0].mxu0
      %7606 = vmatprep.mubr.bf16.mxu0 0
      %7607 = vmatmul.mubr.bf16.gmra.mrb[0].mxu0 %v4862
      %v7608 = vpop.f32.mrb[0].mxu0
      %v7609 = vpop.f32.mrb[0].mxu0
      %v7610 = vpop.f32.mrb[0].mxu0
      %v7611 = vpop.f32.mrb[0].mxu0
      %7612 = vmatprep.mubr.bf16.mxu0 0
      %7613 = vmatmul.mubr.bf16.gmra.mrb[0].mxu0 %v4865
      %v7614 = vpop.f32.mrb[0].mxu0
      %v7615 = vadd.f32 0.0, %v7614
      %v7616 = vpop.f32.mrb[0].mxu0
      %v7617 = vpop.f32.mrb[0].mxu0
      %v7618 = vadd.f32 0.0, %v7617
      %v7619 = vpop.f32.mrb[0].mxu0
      %7620 = vmatprep.mubr.bf16.mxu0 0
      %7621 = vmatmul.mubr.bf16.gmra.mrb[0].mxu0 %v4868
      %v7622 = vpop.f32.mrb[0].mxu0
      %v7623 = vpop.f32.mrb[0].mxu0
      %v7624 = vpop.f32.mrb[0].mxu0
      %v7625 = vpop.f32.mrb[0].mxu0
      %7626 = vmatprep.mubr.bf16.mxu0 0
      %7627 = vmatmul.mubr.bf16.gmra.mrb[0].mxu0 %v4871
      %v7628 = vpop.f32.mrb[0].mxu0
      %v7629 = vadd.f32 0.0, %v7628
      %v7630 = vpop.f32.mrb[0].mxu0
      %v7631 = vpop.f32.mrb[0].mxu0
      %v7632 = vadd.f32 0.0, %v7631
      %v7633 = vpop.f32.mrb[0].mxu0
      %7634 = vmatprep.mubr.bf16.mxu0 0
      %7635 = vmatmul.mubr.bf16.gmra.mrb[0].mxu0 %v4874
      %v7636 = vpop.f32.mrb[0].mxu0
      %v7637 = vpop.f32.mrb[0].mxu0
      %v7638 = vpop.f32.mrb[0].mxu0
      %v7639 = vpop.f32.mrb[0].mxu0
      %7640 = vmatprep.mubr.bf16.mxu0 0
      %7641 = vmatmul.mubr.bf16.gmra.mrb[0].mxu0 %v4877
      %v7642 = vpop.f32.mrb[0].mxu0
      %v7643 = vadd.f32 0.0, %v7642
      %v7644 = vpop.f32.mrb[0].mxu0
      %v7645 = vpop.f32.mrb[0].mxu0
      %v7646 = vadd.f32 0.0, %v7645
      %v7647 = vpop.f32.mrb[0].mxu0
      %7648 = vmatprep.mubr.bf16.mxu0 0
      %7649 = vmatmul.mubr.bf16.gmra.mrb[0].mxu0 %v6523
      %v7650 = vpop.f32.mrb[0].mxu0
      %v7651 = vpop.f32.mrb[0].mxu0
      %v7652 = vpop.f32.mrb[0].mxu0
      %v7653 = vpop.f32.mrb[0].mxu0
      %7654 = vmatprep.mubr.bf16.mxu0 0
      %7655 = vmatmul.mubr.bf16.gmra.mrb[0].mxu0 %v6526
      %v7656 = vpop.f32.mrb[0].mxu0
      %v7657 = vadd.f32 0.0, %v7656
      %v7658 = vpop.f32.mrb[0].mxu0
      %v7659 = vpop.f32.mrb[0].mxu0
      %v7660 = vadd.f32 0.0, %v7659
      %v7661 = vpop.f32.mrb[0].mxu0
      %7662 = vmatprep.mubr.bf16.mxu0 0
      %7663 = vmatmul.mubr.bf16.gmra.mrb[0].mxu0 %v6529
      %v7664 = vpop.f32.mrb[0].mxu0
      %v7665 = vpop.f32.mrb[0].mxu0
      %v7666 = vpop.f32.mrb[0].mxu0
      %v7667 = vpop.f32.mrb[0].mxu0
      %7668 = vmatprep.mubr.bf16.mxu0 0
      %7669 = vmatmul.mubr.bf16.gmra.mrb[0].mxu0 %v6532
      %v7670 = vpop.f32.mrb[0].mxu0
      %v7671 = vadd.f32 0.0, %v7670
      %v7672 = vpop.f32.mrb[0].mxu0
      %v7673 = vpop.f32.mrb[0].mxu0
      %v7674 = vadd.f32 0.0, %v7673
      %v7675 = vpop.f32.mrb[0].mxu0
      %7676 = vmatprep.mubr.bf16.mxu0 0
      %7677 = vmatmul.mubr.bf16.gmra.mrb[0].mxu0 %v7465
      %v7678 = vpop.f32.mrb[0].mxu0
      %v7679 = vpop.f32.mrb[0].mxu0
      %v7680 = vpop.f32.mrb[0].mxu0
      %v7681 = vpop.f32.mrb[0].mxu0
      %7682 = vmatprep.mubr.bf16.mxu0 0
      %7683 = vmatmul.mubr.bf16.gmra.mrb[0].mxu0 %v7468
      %v7684 = vpop.f32.mrb[0].mxu0
      %v7685 = vadd.f32 0.0, %v7684
      %v7686 = vpop.f32.mrb[0].mxu0
      %v7687 = vpop.f32.mrb[0].mxu0
      %v7688 = vadd.f32 0.0, %v7687
      %v7689 = vpop.f32.mrb[0].mxu0
      %7690 = vmatprep.mubr.bf16.mxu0 0
      %7691 = vmatmul.mubr.bf16.gmra.mrb[0].mxu0 %v7471
      %v7692 = vpop.f32.mrb[0].mxu0
      %v7693 = vpop.f32.mrb[0].mxu0
      %v7694 = vpop.f32.mrb[0].mxu0
      %v7695 = vpop.f32.mrb[0].mxu0
      %7696 = vmatprep.mubr.bf16.mxu0 0
      %7697 = vmatmul.mubr.bf16.gmra.mrb[0].mxu0 %v7474
      %v7698 = vpop.f32.mrb[0].mxu0
      %v7699 = vadd.f32 0.0, %v7698
      %v7700 = vpop.f32.mrb[0].mxu0
      %v7701 = vpop.f32.mrb[0].mxu0
      %v7702 = vadd.f32 0.0, %v7701
      %v7703 = vpop.f32.mrb[0].mxu0
      %7704 = vmatprep.mubr.bf16.mxu0 0
      %7705 = vmatmul.mubr.bf16.gmra.mrb[0].mxu0 %v7477
      %v7706 = vpop.f32.mrb[0].mxu0
      %v7707 = vpop.f32.mrb[0].mxu0
      %v7708 = vpop.f32.mrb[0].mxu0
      %v7709 = vpop.f32.mrb[0].mxu0
      %7710 = vdwg.mxu0
      %v7711 = vadd.f32 %v7393, %v7517
      %v7712 = vadd.f32 %v7394, %v7520
      %v7713 = vadd.f32 %v7395, %v7531
      %v7714 = vadd.f32 %v7396, %v7534
      %v7715 = vadd.f32 %v7397, %v7545
      %v7716 = vadd.f32 %v7398, %v7548
      %v7717 = vadd.f32 %v7399, %v7559
      %v7718 = vadd.f32 %v7400, %v7562
      %v7719 = vadd.f32 %v7401, %v7573
      %v7720 = vadd.f32 %v7402, %v7576
      %v7721 = vadd.f32 %v7403, %v7587
      %v7722 = vadd.f32 %v7404, %v7590
      %v7723 = vadd.f32 %v7405, %v7601
      %v7724 = vadd.f32 %v7406, %v7604
      %v7725 = vadd.f32 %v7407, %v7615
      %v7726 = vadd.f32 %v7408, %v7618
      %v7727 = vadd.f32 %v7409, %v7629
      %v7728 = vadd.f32 %v7410, %v7632
      %v7729 = vadd.f32 %v7411, %v7643
      %v7730 = vadd.f32 %v7412, %v7646
      %v7731 = vadd.f32 %v7413, %v7657
      %v7732 = vadd.f32 %v7414, %v7660
      %v7733 = vadd.f32 %v7415, %v7671
      %v7734 = vadd.f32 %v7416, %v7674
      %v7735 = vadd.f32 %v7417, %v7685
      %v7736 = vadd.f32 %v7418, %v7688
      %v7737 = vadd.f32 %v7419, %v7699
      %v7738 = vadd.f32 %v7420, %v7702
      %v7739 = vld [vmem:[%s4 + $0x200] sm:$0xf]
      %v7740 = vrot.slane %v7432, 1
      %v7741 = vrot.slane %v7428, 2
      %v7742 = vor.u32 %v7740, %v7741
      %v7743 = vsel %vm5691, %v6812, %v7742
      %v7744 = vrot.slane %v7440, 1
      %v7745 = vrot.slane %v7436, 2
      %v7746 = vor.u32 %v7744, %v7745
      %v7747 = vsel %vm5691, %v7742, %v7746
      %v7748 = vrot.slane %v7448, 1
      %v7749 = vrot.slane %v7444, 2
      %v7750 = vor.u32 %v7748, %v7749
      %v7751 = vsel %vm5691, %v7746, %v7750
      %v7752 = vrot.slane %v7456, 1
      %v7753 = vrot.slane %v7452, 2
      %v7754 = vor.u32 %v7752, %v7753
      %v7755 = vsel %vm5691, %v7750, %v7754
      %v7756 = vshrl.u32 %v7425, 16
      %v7758 = vrot.slane %v7756, 1
      %v7759 = vrot.slane %v7460, 2
      %v7760 = vor.u32 %v7758, %v7759
      %v7761 = vsel %vm5691, %v7754, %v7760
      %v7763 = vsel %vm522, %v7743, 0
      %v7766 = vsel %vm522, %v7747, 0
      %v7769 = vsel %vm522, %v7751, 0
      %v7772 = vsel %vm522, %v7755, 0
      %v7775 = vsel %vm522, %v7761, 0
      %v7778 = vsel %vm792, %v7739, 0
      %7780 = vmatprep.subr.bf16.mxu0 0
      %7781 = vmatpush1.bf16.msra.mxu0 %v7778
      %7782 = vmatprep.subr.bf16.mxu0 0
      %7783 = vmatpush1.bf16.msra.mxu0 0
      %7784 = vmatprep.subr.bf16.mxu0 0
      %7785 = vmatpush1.bf16.msra.mxu0 0
      %7786 = vmatprep.subr.bf16.mxu0 0
      %7787 = vmatpush1.bf16.msra.mxu0 0
      %7788 = vmatprep.subr.bf16.mxu0 0
      %7789 = vmatpush1.bf16.msra.mxu0 0
      %7790 = vmatprep.subr.bf16.mxu0 0
      %7791 = vmatpush1.bf16.msra.mxu0 0
      %7792 = vmatprep.subr.bf16.mxu0 0
      %7793 = vmatpush1.bf16.msra.mxu0 0
      %7794 = vmatprep.subr.bf16.mxu0 0
      %7795 = vmatpush1.bf16.msra.mxu0 0
      %7796 = vmatprep.subr.bf16.mxu0 0
      %7797 = vmatpush1.bf16.msra.mxu0 0
      %7798 = vmatprep.subr.bf16.mxu0 0
      %7799 = vmatpush1.bf16.msra.mxu0 0
      %7800 = vmatprep.subr.bf16.mxu0 0
      %7801 = vmatpush1.bf16.msra.mxu0 0
      %7802 = vmatprep.subr.bf16.mxu0 0
      %7803 = vmatpush1.bf16.msra.mxu0 0
      %7804 = vmatprep.subr.bf16.mxu0 0
      %7805 = vmatpush1.bf16.msra.mxu0 0
      %7806 = vmatprep.subr.bf16.mxu0 0
      %7807 = vmatpush1.bf16.msra.mxu0 0
      %7808 = vmatprep.subr.bf16.mxu0 0
      %7809 = vmatpush1.bf16.msra.mxu0 0
      %7810 = vmatprep.subr.bf16.mxu0 0
      %7811 = vmatpush1.bf16.msra.mxu0 0
      %7812 = vmatprep.mubr.bf16.mxu0 0
      %7813 = vmatmul.mubr.bf16.gmra.mrb[0].mxu0 %v5834
      %v7814 = vpop.f32.mrb[0].mxu0
      %v7815 = vadd.f32 0.0, %v7814
      %v7816 = vpop.f32.mrb[0].mxu0
      %v7817 = vpop.f32.mrb[0].mxu0
      %v7818 = vadd.f32 0.0, %v7817
      %v7819 = vpop.f32.mrb[0].mxu0
      %7820 = vmatprep.mubr.bf16.mxu0 0
      %7821 = vmatmul.mubr.bf16.gmra.mrb[0].mxu0 %v5837
      %v7822 = vpop.f32.mrb[0].mxu0
      %v7823 = vpop.f32.mrb[0].mxu0
      %v7824 = vpop.f32.mrb[0].mxu0
      %v7825 = vpop.f32.mrb[0].mxu0
      %7826 = vmatprep.mubr.bf16.mxu0 0
      %7827 = vmatmul.mubr.bf16.gmra.mrb[0].mxu0 %v5840
      %v7828 = vpop.f32.mrb[0].mxu0
      %v7829 = vadd.f32 0.0, %v7828
      %v7830 = vpop.f32.mrb[0].mxu0
      %v7831 = vpop.f32.mrb[0].mxu0
      %v7832 = vadd.f32 0.0, %v7831
      %v7833 = vpop.f32.mrb[0].mxu0
      %7834 = vmatprep.mubr.bf16.mxu0 0
      %7835 = vmatmul.mubr.bf16.gmra.mrb[0].mxu0 %v5843
      %v7836 = vpop.f32.mrb[0].mxu0
      %v7837 = vpop.f32.mrb[0].mxu0
      %v7838 = vpop.f32.mrb[0].mxu0
      %v7839 = vpop.f32.mrb[0].mxu0
      %7840 = vmatprep.mubr.bf16.mxu0 0
      %7841 = vmatmul.mubr.bf16.gmra.mrb[0].mxu0 %v5846
      %v7842 = vpop.f32.mrb[0].mxu0
      %v7843 = vadd.f32 0.0, %v7842
      %v7844 = vpop.f32.mrb[0].mxu0
      %v7845 = vpop.f32.mrb[0].mxu0
      %v7846 = vadd.f32 0.0, %v7845
      %v7847 = vpop.f32.mrb[0].mxu0
      %7848 = vmatprep.mubr.bf16.mxu0 0
      %7849 = vmatmul.mubr.bf16.gmra.mrb[0].mxu0 %v5849
      %v7850 = vpop.f32.mrb[0].mxu0
      %v7851 = vpop.f32.mrb[0].mxu0
      %v7852 = vpop.f32.mrb[0].mxu0
      %v7853 = vpop.f32.mrb[0].mxu0
      %7854 = vmatprep.mubr.bf16.mxu0 0
      %7855 = vmatmul.mubr.bf16.gmra.mrb[0].mxu0 %v5852
      %v7856 = vpop.f32.mrb[0].mxu0
      %v7857 = vadd.f32 0.0, %v7856
      %v7858 = vpop.f32.mrb[0].mxu0
      %v7859 = vpop.f32.mrb[0].mxu0
      %v7860 = vadd.f32 0.0, %v7859
      %v7861 = vpop.f32.mrb[0].mxu0
      %7862 = vmatprep.mubr.bf16.mxu0 0
      %7863 = vmatmul.mubr.bf16.gmra.mrb[0].mxu0 %v5855
      %v7864 = vpop.f32.mrb[0].mxu0
      %v7865 = vpop.f32.mrb[0].mxu0
      %v7866 = vpop.f32.mrb[0].mxu0
      %v7867 = vpop.f32.mrb[0].mxu0
      %7868 = vmatprep.mubr.bf16.mxu0 0
      %7869 = vmatmul.mubr.bf16.gmra.mrb[0].mxu0 %v5858
      %v7870 = vpop.f32.mrb[0].mxu0
      %v7871 = vadd.f32 0.0, %v7870
      %v7872 = vpop.f32.mrb[0].mxu0
      %v7873 = vpop.f32.mrb[0].mxu0
      %v7874 = vadd.f32 0.0, %v7873
      %v7875 = vpop.f32.mrb[0].mxu0
      %7876 = vmatprep.mubr.bf16.mxu0 0
      %7877 = vmatmul.mubr.bf16.gmra.mrb[0].mxu0 %v5861
      %v7878 = vpop.f32.mrb[0].mxu0
      %v7879 = vpop.f32.mrb[0].mxu0
      %v7880 = vpop.f32.mrb[0].mxu0
      %v7881 = vpop.f32.mrb[0].mxu0
      %7882 = vmatprep.mubr.bf16.mxu0 0
      %7883 = vmatmul.mubr.bf16.gmra.mrb[0].mxu0 %v5864
      %v7884 = vpop.f32.mrb[0].mxu0
      %v7885 = vadd.f32 0.0, %v7884
      %v7886 = vpop.f32.mrb[0].mxu0
      %v7887 = vpop.f32.mrb[0].mxu0
      %v7888 = vadd.f32 0.0, %v7887
      %v7889 = vpop.f32.mrb[0].mxu0
      %7890 = vmatprep.mubr.bf16.mxu0 0
      %7891 = vmatmul.mubr.bf16.gmra.mrb[0].mxu0 %v5867
      %v7892 = vpop.f32.mrb[0].mxu0
      %v7893 = vpop.f32.mrb[0].mxu0
      %v7894 = vpop.f32.mrb[0].mxu0
      %v7895 = vpop.f32.mrb[0].mxu0
      %7896 = vmatprep.mubr.bf16.mxu0 0
      %7897 = vmatmul.mubr.bf16.gmra.mrb[0].mxu0 %v5870
      %v7898 = vpop.f32.mrb[0].mxu0
      %v7899 = vadd.f32 0.0, %v7898
      %v7900 = vpop.f32.mrb[0].mxu0
      %v7901 = vpop.f32.mrb[0].mxu0
      %v7902 = vadd.f32 0.0, %v7901
      %v7903 = vpop.f32.mrb[0].mxu0
      %7904 = vmatprep.mubr.bf16.mxu0 0
      %7905 = vmatmul.mubr.bf16.gmra.mrb[0].mxu0 %v5873
      %v7906 = vpop.f32.mrb[0].mxu0
      %v7907 = vpop.f32.mrb[0].mxu0
      %v7908 = vpop.f32.mrb[0].mxu0
      %v7909 = vpop.f32.mrb[0].mxu0
      %7910 = vmatprep.mubr.bf16.mxu0 0
      %7911 = vmatmul.mubr.bf16.gmra.mrb[0].mxu0 %v5876
      %v7912 = vpop.f32.mrb[0].mxu0
      %v7913 = vadd.f32 0.0, %v7912
      %v7914 = vpop.f32.mrb[0].mxu0
      %v7915 = vpop.f32.mrb[0].mxu0
      %v7916 = vadd.f32 0.0, %v7915
      %v7917 = vpop.f32.mrb[0].mxu0
      %7918 = vmatprep.mubr.bf16.mxu0 0
      %7919 = vmatmul.mubr.bf16.gmra.mrb[0].mxu0 %v5879
      %v7920 = vpop.f32.mrb[0].mxu0
      %v7921 = vpop.f32.mrb[0].mxu0
      %v7922 = vpop.f32.mrb[0].mxu0
      %v7923 = vpop.f32.mrb[0].mxu0
      %7924 = vmatprep.mubr.bf16.mxu0 0
      %7925 = vmatmul.mubr.bf16.gmra.mrb[0].mxu0 %v5882
      %v7926 = vpop.f32.mrb[0].mxu0
      %v7927 = vadd.f32 0.0, %v7926
      %v7928 = vpop.f32.mrb[0].mxu0
      %v7929 = vpop.f32.mrb[0].mxu0
      %v7930 = vadd.f32 0.0, %v7929
      %v7931 = vpop.f32.mrb[0].mxu0
      %7932 = vmatprep.mubr.bf16.mxu0 0
      %7933 = vmatmul.mubr.bf16.gmra.mrb[0].mxu0 %v5885
      %v7934 = vpop.f32.mrb[0].mxu0
      %v7935 = vpop.f32.mrb[0].mxu0
      %v7936 = vpop.f32.mrb[0].mxu0
      %v7937 = vpop.f32.mrb[0].mxu0
      %7938 = vmatprep.mubr.bf16.mxu0 0
      %7939 = vmatmul.mubr.bf16.gmra.mrb[0].mxu0 %v5888
      %v7940 = vpop.f32.mrb[0].mxu0
      %v7941 = vadd.f32 0.0, %v7940
      %v7942 = vpop.f32.mrb[0].mxu0
      %v7943 = vpop.f32.mrb[0].mxu0
      %v7944 = vadd.f32 0.0, %v7943
      %v7945 = vpop.f32.mrb[0].mxu0
      %7946 = vmatprep.mubr.bf16.mxu0 0
      %7947 = vmatmul.mubr.bf16.gmra.mrb[0].mxu0 %v6821
      %v7948 = vpop.f32.mrb[0].mxu0
      %v7949 = vpop.f32.mrb[0].mxu0
      %v7950 = vpop.f32.mrb[0].mxu0
      %v7951 = vpop.f32.mrb[0].mxu0
      %7952 = vmatprep.mubr.bf16.mxu0 0
      %7953 = vmatmul.mubr.bf16.gmra.mrb[0].mxu0 %v6824
      %v7954 = vpop.f32.mrb[0].mxu0
      %v7955 = vadd.f32 0.0, %v7954
      %v7956 = vpop.f32.mrb[0].mxu0
      %v7957 = vpop.f32.mrb[0].mxu0
      %v7958 = vadd.f32 0.0, %v7957
      %v7959 = vpop.f32.mrb[0].mxu0
      %7960 = vmatprep.mubr.bf16.mxu0 0
      %7961 = vmatmul.mubr.bf16.gmra.mrb[0].mxu0 %v6827
      %v7962 = vpop.f32.mrb[0].mxu0
      %v7963 = vpop.f32.mrb[0].mxu0
      %v7964 = vpop.f32.mrb[0].mxu0
      %v7965 = vpop.f32.mrb[0].mxu0
      %7966 = vmatprep.mubr.bf16.mxu0 0
      %7967 = vmatmul.mubr.bf16.gmra.mrb[0].mxu0 %v6830
      %v7968 = vpop.f32.mrb[0].mxu0
      %v7969 = vadd.f32 0.0, %v7968
      %v7970 = vpop.f32.mrb[0].mxu0
      %v7971 = vpop.f32.mrb[0].mxu0
      %v7972 = vadd.f32 0.0, %v7971
      %v7973 = vpop.f32.mrb[0].mxu0
      %7974 = vmatprep.mubr.bf16.mxu0 0
      %7975 = vmatmul.mubr.bf16.gmra.mrb[0].mxu0 %v7763
      %v7976 = vpop.f32.mrb[0].mxu0
      %v7977 = vpop.f32.mrb[0].mxu0
      %v7978 = vpop.f32.mrb[0].mxu0
      %v7979 = vpop.f32.mrb[0].mxu0
      %7980 = vmatprep.mubr.bf16.mxu0 0
      %7981 = vmatmul.mubr.bf16.gmra.mrb[0].mxu0 %v7766
      %v7982 = vpop.f32.mrb[0].mxu0
      %v7983 = vadd.f32 0.0, %v7982
      %v7984 = vpop.f32.mrb[0].mxu0
      %v7985 = vpop.f32.mrb[0].mxu0
      %v7986 = vadd.f32 0.0, %v7985
      %v7987 = vpop.f32.mrb[0].mxu0
      %7988 = vmatprep.mubr.bf16.mxu0 0
      %7989 = vmatmul.mubr.bf16.gmra.mrb[0].mxu0 %v7769
      %v7990 = vpop.f32.mrb[0].mxu0
      %v7991 = vpop.f32.mrb[0].mxu0
      %v7992 = vpop.f32.mrb[0].mxu0
      %v7993 = vpop.f32.mrb[0].mxu0
      %7994 = vmatprep.mubr.bf16.mxu0 0
      %7995 = vmatmul.mubr.bf16.gmra.mrb[0].mxu0 %v7772
      %v7996 = vpop.f32.mrb[0].mxu0
      %v7997 = vadd.f32 0.0, %v7996
      %v7998 = vpop.f32.mrb[0].mxu0
      %v7999 = vpop.f32.mrb[0].mxu0
      %v8000 = vadd.f32 0.0, %v7999
      %v8001 = vpop.f32.mrb[0].mxu0
      %8002 = vmatprep.mubr.bf16.mxu0 0
      %8003 = vmatmul.mubr.bf16.gmra.mrb[0].mxu0 %v7775
      %v8004 = vpop.f32.mrb[0].mxu0
      %v8005 = vpop.f32.mrb[0].mxu0
      %v8006 = vpop.f32.mrb[0].mxu0
      %v8007 = vpop.f32.mrb[0].mxu0
      %8008 = vdwg.mxu0
      %v8009 = vadd.f32 %v7711, %v7815
      %v8010 = vadd.f32 %v7712, %v7818
      %v8011 = vadd.f32 %v7713, %v7829
      %v8012 = vadd.f32 %v7714, %v7832
      %v8013 = vadd.f32 %v7715, %v7843
      %v8014 = vadd.f32 %v7716, %v7846
      %v8015 = vadd.f32 %v7717, %v7857
      %v8016 = vadd.f32 %v7718, %v7860
      %v8017 = vadd.f32 %v7719, %v7871
      %v8018 = vadd.f32 %v7720, %v7874
      %v8019 = vadd.f32 %v7721, %v7885
      %v8020 = vadd.f32 %v7722, %v7888
      %v8021 = vadd.f32 %v7723, %v7899
      %v8022 = vadd.f32 %v7724, %v7902
      %v8023 = vadd.f32 %v7725, %v7913
      %v8024 = vadd.f32 %v7726, %v7916
      %v8025 = vadd.f32 %v7727, %v7927
      %v8026 = vadd.f32 %v7728, %v7930
      %v8027 = vadd.f32 %v7729, %v7941
      %v8028 = vadd.f32 %v7730, %v7944
      %v8029 = vadd.f32 %v7731, %v7955
      %v8030 = vadd.f32 %v7732, %v7958
      %v8031 = vadd.f32 %v7733, %v7969
      %v8032 = vadd.f32 %v7734, %v7972
      %v8033 = vadd.f32 %v7735, %v7983
      %v8034 = vadd.f32 %v7736, %v7986
      %v8035 = vadd.f32 %v7737, %v7997
      %v8036 = vadd.f32 %v7738, %v8000
      %v8037 = vld [vmem:[%s5] sm:$0x1]
      %v8039 = vlaneseq
      %v8040 = vshrl.u32 %v8039, 7
      %v8041 = vsub.s32 0, %v8040
      %v8042 = vrot.slane %v8037, %v8041
      %v8044 = vadd.f32 %v8009, %v8042
      %v8045 = vadd.f32 %v8010, %v8042
      %v8046 = vadd.f32 %v8011, %v8042
      %v8047 = vadd.f32 %v8012, %v8042
      %v8048 = vadd.f32 %v8013, %v8042
      %v8049 = vadd.f32 %v8014, %v8042
      %v8050 = vadd.f32 %v8015, %v8042
      %v8051 = vadd.f32 %v8016, %v8042
      %v8052 = vadd.f32 %v8017, %v8042
      %v8053 = vadd.f32 %v8018, %v8042
      %v8054 = vadd.f32 %v8019, %v8042
      %v8055 = vadd.f32 %v8020, %v8042
      %v8056 = vadd.f32 %v8021, %v8042
      %v8057 = vadd.f32 %v8022, %v8042
      %v8058 = vadd.f32 %v8023, %v8042
      %v8059 = vadd.f32 %v8024, %v8042
      %v8060 = vadd.f32 %v8025, %v8042
      %v8061 = vadd.f32 %v8026, %v8042
      %v8062 = vadd.f32 %v8027, %v8042
      %v8063 = vadd.f32 %v8028, %v8042
      %v8064 = vadd.f32 %v8029, %v8042
      %v8065 = vadd.f32 %v8030, %v8042
      %v8066 = vadd.f32 %v8031, %v8042
      %v8067 = vadd.f32 %v8032, %v8042
      %v8068 = vadd.f32 %v8033, %v8042
      %v8069 = vadd.f32 %v8034, %v8042
      %v8070 = vadd.f32 %v8035, %v8042
      %v8071 = vadd.f32 %v8036, %v8042
      %v8072 = vmax.f32 %v8044, 0.0
      %v8073 = vmax.f32 %v8045, 0.0
      %v8074 = vmax.f32 %v8046, 0.0
      %v8075 = vmax.f32 %v8047, 0.0
      %v8076 = vmax.f32 %v8048, 0.0
      %v8077 = vmax.f32 %v8049, 0.0
      %v8078 = vmax.f32 %v8050, 0.0
      %v8079 = vmax.f32 %v8051, 0.0
      %v8080 = vmax.f32 %v8052, 0.0
      %v8081 = vmax.f32 %v8053, 0.0
      %v8082 = vmax.f32 %v8054, 0.0
      %v8083 = vmax.f32 %v8055, 0.0
      %v8084 = vmax.f32 %v8056, 0.0
      %v8085 = vmax.f32 %v8057, 0.0
      %v8086 = vmax.f32 %v8058, 0.0
      %v8087 = vmax.f32 %v8059, 0.0
      %v8088 = vmax.f32 %v8060, 0.0
      %v8089 = vmax.f32 %v8061, 0.0
      %v8090 = vmax.f32 %v8062, 0.0
      %v8091 = vmax.f32 %v8063, 0.0
      %v8092 = vmax.f32 %v8064, 0.0
      %v8093 = vmax.f32 %v8065, 0.0
      %v8094 = vmax.f32 %v8066, 0.0
      %v8095 = vmax.f32 %v8067, 0.0
      %v8096 = vmax.f32 %v8068, 0.0
      %v8097 = vmax.f32 %v8069, 0.0
      %v8098 = vmax.f32 %v8070, 0.0
      %v8099 = vmax.f32 %v8071, 0.0
      %8100 = vst.msk [vmem:[%s429 + $0x8] sm:$0xff] %vm4370, %v8072
      %vm8101 = vcmask 29696
      %8102 = vst.msk [vmem:[%s429 + $0x10] sm:$0x3f] %vm8101, %v8073
      %8103 = vst.msk [vmem:[%s429 + $0x20] sm:$0xff] %vm4370, %v8074
      %8104 = vst.msk [vmem:[%s429 + $0x28] sm:$0x3f] %vm8101, %v8075
      %8105 = vst.msk [vmem:[%s429 + $0x38] sm:$0xff] %vm4370, %v8076
      %8106 = vst.msk [vmem:[%s429 + $0x40] sm:$0x3f] %vm8101, %v8077
      %8107 = vst.msk [vmem:[%s429 + $0x50] sm:$0xff] %vm4370, %v8078
      %8108 = vst.msk [vmem:[%s429 + $0x58] sm:$0x3f] %vm8101, %v8079
      %8109 = vst.msk [vmem:[%s429 + $0x68] sm:$0xff] %vm4370, %v8080
      %8110 = vst.msk [vmem:[%s429 + $0x70] sm:$0x3f] %vm8101, %v8081
      %8111 = vst.msk [vmem:[%s429 + $0x80] sm:$0xff] %vm4370, %v8082
      %8112 = vst.msk [vmem:[%s429 + $0x88] sm:$0x3f] %vm8101, %v8083
      %8113 = vst.msk [vmem:[%s429 + $0x98] sm:$0xff] %vm4370, %v8084
      %8114 = vst.msk [vmem:[%s429 + $0xa0] sm:$0x3f] %vm8101, %v8085
      %8115 = vst.msk [vmem:[%s429 + $0xb0] sm:$0xff] %vm4370, %v8086
      %8116 = vst.msk [vmem:[%s429 + $0xb8] sm:$0x3f] %vm8101, %v8087
      %8117 = vst.msk [vmem:[%s429 + $0xc8] sm:$0xff] %vm4370, %v8088
      %8118 = vst.msk [vmem:[%s429 + $0xd0] sm:$0x3f] %vm8101, %v8089
      %8119 = vst.msk [vmem:[%s429 + $0xe0] sm:$0xff] %vm4370, %v8090
      %8120 = vst.msk [vmem:[%s429 + $0xe8] sm:$0x3f] %vm8101, %v8091
      %8121 = vst.msk [vmem:[%s429 + $0xf8] sm:$0xff] %vm4370, %v8092
      %8122 = vst.msk [vmem:[%s429 + $0x100] sm:$0x3f] %vm8101, %v8093
      %8123 = vst.msk [vmem:[%s429 + $0x110] sm:$0xff] %vm4370, %v8094
      %8124 = vst.msk [vmem:[%s429 + $0x118] sm:$0x3f] %vm8101, %v8095
      %8125 = vst.msk [vmem:[%s429 + $0x128] sm:$0xff] %vm4370, %v8096
      %8126 = vst.msk [vmem:[%s429 + $0x130] sm:$0x3f] %vm8101, %v8097
      %8127 = vst.msk [vmem:[%s429 + $0x140] sm:$0xff] %vm4370, %v8098
      %8128 = vst.msk [vmem:[%s429 + $0x148] sm:$0x3f] %vm8101, %v8099
      %v8129 = vld [vmem:[#allocation4] sm:$0xff]
      %v8130 = vld [vmem:[#allocation4 + $0x8] sm:$0xff]
      %v8131 = vld [vmem:[#allocation4 + $0x10] sm:$0xff]
      %v8132 = vld [vmem:[#allocation4 + $0x18] sm:$0xff]
      %v8133 = vld [vmem:[#allocation4 + $0x20] sm:$0xff]
      %v8134 = vld [vmem:[#allocation4 + $0x28] sm:$0xff]
      %v8135 = vld [vmem:[#allocation4 + $0x30] sm:$0xff]
      %v8136 = vld [vmem:[#allocation4 + $0x38] sm:$0xff]
      %v8137 = vld [vmem:[#allocation4 + $0x40] sm:$0xff]
      %v8138 = vld [vmem:[#allocation4 + $0x48] sm:$0xff]
      %v8139 = vld [vmem:[#allocation4 + $0x50] sm:$0xff]
      %v8140 = vld [vmem:[#allocation4 + $0x58] sm:$0xff]
      %v8141 = vld [vmem:[#allocation4 + $0x60] sm:$0xff]
      %v8142 = vld [vmem:[#allocation4 + $0x68] sm:$0xff]
      %v8143 = vld [vmem:[#allocation4 + $0x70] sm:$0xff]
      %v8144 = vld [vmem:[#allocation4 + $0x78] sm:$0xff]
      %v8145 = vld [vmem:[#allocation4 + $0x80] sm:$0xff]
      %v8146 = vld [vmem:[#allocation4 + $0x88] sm:$0xff]
      %v8147 = vld [vmem:[#allocation4 + $0x90] sm:$0xff]
      %v8148 = vld [vmem:[#allocation4 + $0x98] sm:$0xff]
      %v8149 = vld [vmem:[#allocation4 + $0xa0] sm:$0xff]
      %v8150 = vld [vmem:[#allocation4 + $0xa8] sm:$0xff]
      %v8151 = vld [vmem:[#allocation4 + $0xb0] sm:$0xff]
      %v8152 = vld [vmem:[#allocation4 + $0xb8] sm:$0xff]
      %v8153 = vld [vmem:[#allocation4 + $0xc0] sm:$0xff]
      %v8154 = vld [vmem:[#allocation4 + $0xc8] sm:$0xff]
      %v8155 = vld [vmem:[#allocation4 + $0xd0] sm:$0xff]
      %v8156 = vld [vmem:[#allocation4 + $0xd8] sm:$0xff]
      %v8157 = vld [vmem:[#allocation4 + $0xe0] sm:$0xff]
      %v8158 = vld [vmem:[#allocation4 + $0xe8] sm:$0xff]
      %v8159 = vld [vmem:[#allocation4 + $0xf0] sm:$0xff]
      %v8160 = vld [vmem:[#allocation4 + $0xf8] sm:$0xff]
      %v8161 = vld [vmem:[#allocation4 + $0x100] sm:$0xff]
      %v8162 = vld [vmem:[#allocation4 + $0x108] sm:$0xff]
      %v8163 = vld [vmem:[#allocation4 + $0x110] sm:$0xff]
      %v8164 = vld [vmem:[#allocation4 + $0x118] sm:$0xff]
      %v8165 = vld [vmem:[#allocation4 + $0x120] sm:$0xff]
      %v8166 = vld [vmem:[#allocation4 + $0x128] sm:$0xff]
      %v8167 = vld [vmem:[#allocation4 + $0x130] sm:$0xff]
      %v8168 = vld [vmem:[#allocation4 + $0x138] sm:$0xff]
      %v8169 = vld [vmem:[#allocation4 + $0x140] sm:$0xff]
      %v8170 = vld [vmem:[#allocation4 + $0x148] sm:$0xff]
      %v8171 = vld [vmem:[#allocation4 + $0x150] sm:$0xff]
      %v8172 = vld [vmem:[#allocation4 + $0x158] sm:$0xff]
      %v8173 = vld [vmem:[#allocation4 + $0x160] sm:$0xff]
      %v8174 = vld [vmem:[#allocation4 + $0x168] sm:$0xff]
      %v8175 = vld [vmem:[#allocation4 + $0x170] sm:$0xff]
      %v8176 = vld [vmem:[#allocation4 + $0x178] sm:$0xff]
      %v8177 = vld [vmem:[#allocation4 + $0x180] sm:$0xff]
      %v8178 = vld [vmem:[#allocation4 + $0x188] sm:$0xff]
      %v8179 = vpack.c.bf16 %v8130, %v8129
      %v8180 = vpack.c.bf16 %v8132, %v8131
      %v8181 = vpack.c.bf16 %v8134, %v8133
      %v8182 = vpack.c.bf16 %v8136, %v8135
      %v8183 = vpack.c.bf16 %v8138, %v8137
      %v8184 = vpack.c.bf16 %v8140, %v8139
      %v8185 = vpack.c.bf16 %v8142, %v8141
      %v8186 = vpack.c.bf16 %v8144, %v8143
      %v8187 = vpack.c.bf16 %v8146, %v8145
      %v8188 = vpack.c.bf16 %v8148, %v8147
      %v8189 = vpack.c.bf16 %v8150, %v8149
      %v8190 = vpack.c.bf16 %v8152, %v8151
      %v8191 = vpack.c.bf16 %v8154, %v8153
      %v8192 = vpack.c.bf16 %v8156, %v8155
      %v8193 = vpack.c.bf16 %v8158, %v8157
      %v8194 = vpack.c.bf16 %v8160, %v8159
      %v8195 = vpack.c.bf16 %v8162, %v8161
      %v8196 = vpack.c.bf16 %v8164, %v8163
      %v8197 = vpack.c.bf16 %v8165, %v8165
      %v8198 = vld [vmem:[%s6] sm:$0x3]
      %v8199 = vpack.c.bf16 %v8131, %v8130
      %v8200 = vpack.c.bf16 %v8133, %v8132
      %v8201 = vpack.c.bf16 %v8135, %v8134
      %v8202 = vpack.c.bf16 %v8137, %v8136
      %v8203 = vpack.c.bf16 %v8139, %v8138
      %v8204 = vpack.c.bf16 %v8141, %v8140
      %v8205 = vpack.c.bf16 %v8143, %v8142
      %v8206 = vpack.c.bf16 %v8145, %v8144
      %v8207 = vpack.c.bf16 %v8147, %v8146
      %v8208 = vpack.c.bf16 %v8149, %v8148
      %v8209 = vpack.c.bf16 %v8151, %v8150
      %v8210 = vpack.c.bf16 %v8153, %v8152
      %v8211 = vpack.c.bf16 %v8155, %v8154
      %v8212 = vpack.c.bf16 %v8157, %v8156
      %v8213 = vpack.c.bf16 %v8159, %v8158
      %v8214 = vpack.c.bf16 %v8161, %v8160
      %v8215 = vpack.c.bf16 %v8163, %v8162
      %v8216 = vpack.c.bf16 %v8165, %v8164
      %v8217 = vpack.c.bf16 %v8166, %v8166
      %v8218 = vld [vmem:[%s6 + $0x40] sm:$0x3]
      %v8220 = vshrl.u32 %v8199, 16
      %v8222 = vshll.u32 %v8199, 16
      %v8224 = vrot.slane %v8222, 1
      %v8225 = vor.u32 %v8220, %v8224
      %v8227 = vshll.u32 %v8200, 16
      %v8229 = vrot.slane %v8227, 1
      %v8230 = vsel %vm1708, %v8225, %v8229
      %v8231 = vshrl.u32 %v8200, 16
      %v8233 = vor.u32 %v8231, %v8229
      %v8235 = vshll.u32 %v8201, 16
      %v8237 = vrot.slane %v8235, 1
      %v8238 = vsel %vm1708, %v8233, %v8237
      %v8239 = vshrl.u32 %v8201, 16
      %v8241 = vor.u32 %v8239, %v8237
      %v8243 = vshll.u32 %v8202, 16
      %v8245 = vrot.slane %v8243, 1
      %v8246 = vsel %vm1708, %v8241, %v8245
      %v8247 = vshrl.u32 %v8202, 16
      %v8249 = vor.u32 %v8247, %v8245
      %v8251 = vshll.u32 %v8203, 16
      %v8253 = vrot.slane %v8251, 1
      %v8254 = vsel %vm1708, %v8249, %v8253
      %v8255 = vshrl.u32 %v8203, 16
      %v8257 = vor.u32 %v8255, %v8253
      %v8259 = vshll.u32 %v8204, 16
      %v8261 = vrot.slane %v8259, 1
      %v8262 = vsel %vm1708, %v8257, %v8261
      %v8263 = vshrl.u32 %v8204, 16
      %v8265 = vor.u32 %v8263, %v8261
      %v8267 = vshll.u32 %v8205, 16
      %v8269 = vrot.slane %v8267, 1
      %v8270 = vsel %vm1708, %v8265, %v8269
      %v8271 = vshrl.u32 %v8205, 16
      %v8273 = vor.u32 %v8271, %v8269
      %v8275 = vshll.u32 %v8206, 16
      %v8277 = vrot.slane %v8275, 1
      %v8278 = vsel %vm1708, %v8273, %v8277
      %v8279 = vshrl.u32 %v8206, 16
      %v8281 = vor.u32 %v8279, %v8277
      %v8283 = vshll.u32 %v8207, 16
      %v8285 = vrot.slane %v8283, 1
      %v8286 = vsel %vm1708, %v8281, %v8285
      %v8287 = vshrl.u32 %v8207, 16
      %v8289 = vor.u32 %v8287, %v8285
      %v8291 = vshll.u32 %v8208, 16
      %v8293 = vrot.slane %v8291, 1
      %v8294 = vsel %vm1708, %v8289, %v8293
      %v8295 = vshrl.u32 %v8208, 16
      %v8297 = vor.u32 %v8295, %v8293
      %v8299 = vshll.u32 %v8209, 16
      %v8301 = vrot.slane %v8299, 1
      %v8302 = vsel %vm1708, %v8297, %v8301
      %v8303 = vshrl.u32 %v8209, 16
      %v8305 = vor.u32 %v8303, %v8301
      %v8307 = vshll.u32 %v8210, 16
      %v8309 = vrot.slane %v8307, 1
      %v8310 = vsel %vm1708, %v8305, %v8309
      %v8311 = vshrl.u32 %v8210, 16
      %v8313 = vor.u32 %v8311, %v8309
      %v8315 = vshll.u32 %v8211, 16
      %v8317 = vrot.slane %v8315, 1
      %v8318 = vsel %vm1708, %v8313, %v8317
      %v8319 = vshrl.u32 %v8211, 16
      %v8321 = vor.u32 %v8319, %v8317
      %v8323 = vshll.u32 %v8212, 16
      %v8325 = vrot.slane %v8323, 1
      %v8326 = vsel %vm1708, %v8321, %v8325
      %v8327 = vshrl.u32 %v8212, 16
      %v8329 = vor.u32 %v8327, %v8325
      %v8331 = vshll.u32 %v8213, 16
      %v8333 = vrot.slane %v8331, 1
      %v8334 = vsel %vm1708, %v8329, %v8333
      %v8335 = vshrl.u32 %v8213, 16
      %v8337 = vor.u32 %v8335, %v8333
      %v8339 = vshll.u32 %v8214, 16
      %v8341 = vrot.slane %v8339, 1
      %v8342 = vsel %vm1708, %v8337, %v8341
      %v8343 = vshrl.u32 %v8214, 16
      %v8345 = vor.u32 %v8343, %v8341
      %v8347 = vshll.u32 %v8215, 16
      %v8349 = vrot.slane %v8347, 1
      %v8350 = vsel %vm1708, %v8345, %v8349
      %v8351 = vshrl.u32 %v8215, 16
      %v8353 = vor.u32 %v8351, %v8349
      %v8355 = vshll.u32 %v8216, 16
      %v8357 = vrot.slane %v8355, 1
      %v8358 = vsel %vm1708, %v8353, %v8357
      %v8359 = vshrl.u32 %v8216, 16
      %v8361 = vor.u32 %v8359, %v8357
      %v8363 = vshll.u32 %v8217, 16
      %v8365 = vrot.slane %v8363, 1
      %v8366 = vsel %vm1708, %v8361, %v8365
      %v8368 = vsel %vm4370, %v8230, 0
      %v8371 = vsel %vm4370, %v8238, 0
      %v8374 = vsel %vm4370, %v8246, 0
      %v8377 = vsel %vm4370, %v8254, 0
      %v8380 = vsel %vm4370, %v8262, 0
      %v8383 = vsel %vm4370, %v8270, 0
      %v8386 = vsel %vm4370, %v8278, 0
      %v8389 = vsel %vm4370, %v8286, 0
      %v8392 = vsel %vm4370, %v8294, 0
      %v8395 = vsel %vm4370, %v8302, 0
      %v8398 = vsel %vm4370, %v8310, 0
      %v8401 = vsel %vm4370, %v8318, 0
      %v8404 = vsel %vm4370, %v8326, 0
      %v8407 = vsel %vm4370, %v8334, 0
      %v8410 = vsel %vm4370, %v8342, 0
      %v8413 = vsel %vm4370, %v8350, 0
      %v8416 = vsel %vm4370, %v8358, 0
      %v8419 = vsel %vm4370, %v8366, 0
      %vm8421 = vcmask 1041408
      %v8423 = vsel %vm8421, %v8218, 0
      %8425 = vmatprep.subr.bf16.mxu0 0
      %8426 = vmatpush1.bf16.msra.mxu0 %v8423
      %8427 = vmatprep.subr.bf16.mxu0 0
      %8428 = vmatpush1.bf16.msra.mxu0 0
      %8429 = vmatprep.subr.bf16.mxu0 0
      %8430 = vmatpush1.bf16.msra.mxu0 0
      %8431 = vmatprep.subr.bf16.mxu0 0
      %8432 = vmatpush1.bf16.msra.mxu0 0
      %8433 = vmatprep.subr.bf16.mxu0 0
      %8434 = vmatpush1.bf16.msra.mxu0 0
      %8435 = vmatprep.subr.bf16.mxu0 0
      %8436 = vmatpush1.bf16.msra.mxu0 0
      %8437 = vmatprep.subr.bf16.mxu0 0
      %8438 = vmatpush1.bf16.msra.mxu0 0
      %8439 = vmatprep.subr.bf16.mxu0 0
      %8440 = vmatpush1.bf16.msra.mxu0 0
      %8441 = vmatprep.subr.bf16.mxu0 0
      %8442 = vmatpush1.bf16.msra.mxu0 0
      %8443 = vmatprep.subr.bf16.mxu0 0
      %8444 = vmatpush1.bf16.msra.mxu0 0
      %8445 = vmatprep.subr.bf16.mxu0 0
      %8446 = vmatpush1.bf16.msra.mxu0 0
      %8447 = vmatprep.subr.bf16.mxu0 0
      %8448 = vmatpush1.bf16.msra.mxu0 0
      %8449 = vmatprep.subr.bf16.mxu0 0
      %8450 = vmatpush1.bf16.msra.mxu0 0
      %8451 = vmatprep.subr.bf16.mxu0 0
      %8452 = vmatpush1.bf16.msra.mxu0 0
      %8453 = vmatprep.subr.bf16.mxu0 0
      %8454 = vmatpush1.bf16.msra.mxu0 0
      %8455 = vmatprep.subr.bf16.mxu0 0
      %8456 = vmatpush1.bf16.msra.mxu0 0
      %8457 = vmatprep.mubr.bf16.mxu0 0
      %8458 = vmatmul.mubr.bf16.gmra.mrb[0].mxu0 %v8368
      %v8459 = vpop.f32.mrb[0].mxu0
      %v8460 = vadd.f32 0.0, %v8459
      %v8461 = vpop.f32.mrb[0].mxu0
      %v8462 = vpop.f32.mrb[0].mxu0
      %v8463 = vadd.f32 0.0, %v8462
      %v8464 = vpop.f32.mrb[0].mxu0
      %8465 = vmatprep.mubr.bf16.mxu0 0
      %8466 = vmatmul.mubr.bf16.gmra.mrb[0].mxu0 %v8371
      %v8467 = vpop.f32.mrb[0].mxu0
      %v8468 = vpop.f32.mrb[0].mxu0
      %v8469 = vpop.f32.mrb[0].mxu0
      %v8470 = vadd.f32 0.0, %v8469
      %v8471 = vpop.f32.mrb[0].mxu0
      %8472 = vmatprep.mubr.bf16.mxu0 0
      %8473 = vmatmul.mubr.bf16.gmra.mrb[0].mxu0 %v8374
      %v8474 = vpop.f32.mrb[0].mxu0
      %v8475 = vadd.f32 0.0, %v8474
      %v8476 = vpop.f32.mrb[0].mxu0
      %v8477 = vpop.f32.mrb[0].mxu0
      %v8478 = vpop.f32.mrb[0].mxu0
      %8479 = vmatprep.mubr.bf16.mxu0 0
      %8480 = vmatmul.mubr.bf16.gmra.mrb[0].mxu0 %v8377
      %v8481 = vpop.f32.mrb[0].mxu0
      %v8482 = vadd.f32 0.0, %v8481
      %v8483 = vpop.f32.mrb[0].mxu0
      %v8484 = vpop.f32.mrb[0].mxu0
      %v8485 = vadd.f32 0.0, %v8484
      %v8486 = vpop.f32.mrb[0].mxu0
      %8487 = vmatprep.mubr.bf16.mxu0 0
      %8488 = vmatmul.mubr.bf16.gmra.mrb[0].mxu0 %v8380
      %v8489 = vpop.f32.mrb[0].mxu0
      %v8490 = vpop.f32.mrb[0].mxu0
      %v8491 = vpop.f32.mrb[0].mxu0
      %v8492 = vadd.f32 0.0, %v8491
      %v8493 = vpop.f32.mrb[0].mxu0
      %8494 = vmatprep.mubr.bf16.mxu0 0
      %8495 = vmatmul.mubr.bf16.gmra.mrb[0].mxu0 %v8383
      %v8496 = vpop.f32.mrb[0].mxu0
      %v8497 = vadd.f32 0.0, %v8496
      %v8498 = vpop.f32.mrb[0].mxu0
      %v8499 = vpop.f32.mrb[0].mxu0
      %v8500 = vpop.f32.mrb[0].mxu0
      %8501 = vmatprep.mubr.bf16.mxu0 0
      %8502 = vmatmul.mubr.bf16.gmra.mrb[0].mxu0 %v8386
      %v8503 = vpop.f32.mrb[0].mxu0
      %v8504 = vadd.f32 0.0, %v8503
      %v8505 = vpop.f32.mrb[0].mxu0
      %v8506 = vpop.f32.mrb[0].mxu0
      %v8507 = vadd.f32 0.0, %v8506
      %v8508 = vpop.f32.mrb[0].mxu0
      %8509 = vmatprep.mubr.bf16.mxu0 0
      %8510 = vmatmul.mubr.bf16.gmra.mrb[0].mxu0 %v8389
      %v8511 = vpop.f32.mrb[0].mxu0
      %v8512 = vpop.f32.mrb[0].mxu0
      %v8513 = vpop.f32.mrb[0].mxu0
      %v8514 = vadd.f32 0.0, %v8513
      %v8515 = vpop.f32.mrb[0].mxu0
      %8516 = vmatprep.mubr.bf16.mxu0 0
      %8517 = vmatmul.mubr.bf16.gmra.mrb[0].mxu0 %v8392
      %v8518 = vpop.f32.mrb[0].mxu0
      %v8519 = vadd.f32 0.0, %v8518
      %v8520 = vpop.f32.mrb[0].mxu0
      %v8521 = vpop.f32.mrb[0].mxu0
      %v8522 = vpop.f32.mrb[0].mxu0
      %8523 = vmatprep.mubr.bf16.mxu0 0
      %8524 = vmatmul.mubr.bf16.gmra.mrb[0].mxu0 %v8395
      %v8525 = vpop.f32.mrb[0].mxu0
      %v8526 = vadd.f32 0.0, %v8525
      %v8527 = vpop.f32.mrb[0].mxu0
      %v8528 = vpop.f32.mrb[0].mxu0
      %v8529 = vadd.f32 0.0, %v8528
      %v8530 = vpop.f32.mrb[0].mxu0
      %8531 = vmatprep.mubr.bf16.mxu0 0
      %8532 = vmatmul.mubr.bf16.gmra.mrb[0].mxu0 %v8398
      %v8533 = vpop.f32.mrb[0].mxu0
      %v8534 = vpop.f32.mrb[0].mxu0
      %v8535 = vpop.f32.mrb[0].mxu0
      %v8536 = vadd.f32 0.0, %v8535
      %v8537 = vpop.f32.mrb[0].mxu0
      %8538 = vmatprep.mubr.bf16.mxu0 0
      %8539 = vmatmul.mubr.bf16.gmra.mrb[0].mxu0 %v8401
      %v8540 = vpop.f32.mrb[0].mxu0
      %v8541 = vadd.f32 0.0, %v8540
      %v8542 = vpop.f32.mrb[0].mxu0
      %v8543 = vpop.f32.mrb[0].mxu0
      %v8544 = vpop.f32.mrb[0].mxu0
      %8545 = vmatprep.mubr.bf16.mxu0 0
      %8546 = vmatmul.mubr.bf16.gmra.mrb[0].mxu0 %v8404
      %v8547 = vpop.f32.mrb[0].mxu0
      %v8548 = vadd.f32 0.0, %v8547
      %v8549 = vpop.f32.mrb[0].mxu0
      %v8550 = vpop.f32.mrb[0].mxu0
      %v8551 = vadd.f32 0.0, %v8550
      %v8552 = vpop.f32.mrb[0].mxu0
      %8553 = vmatprep.mubr.bf16.mxu0 0
      %8554 = vmatmul.mubr.bf16.gmra.mrb[0].mxu0 %v8407
      %v8555 = vpop.f32.mrb[0].mxu0
      %v8556 = vpop.f32.mrb[0].mxu0
      %v8557 = vpop.f32.mrb[0].mxu0
      %v8558 = vadd.f32 0.0, %v8557
      %v8559 = vpop.f32.mrb[0].mxu0
      %8560 = vmatprep.mubr.bf16.mxu0 0
      %8561 = vmatmul.mubr.bf16.gmra.mrb[0].mxu0 %v8410
      %v8562 = vpop.f32.mrb[0].mxu0
      %v8563 = vadd.f32 0.0, %v8562
      %v8564 = vpop.f32.mrb[0].mxu0
      %v8565 = vpop.f32.mrb[0].mxu0
      %v8566 = vpop.f32.mrb[0].mxu0
      %8567 = vmatprep.mubr.bf16.mxu0 0
      %8568 = vmatmul.mubr.bf16.gmra.mrb[0].mxu0 %v8413
      %v8569 = vpop.f32.mrb[0].mxu0
      %v8570 = vadd.f32 0.0, %v8569
      %v8571 = vpop.f32.mrb[0].mxu0
      %v8572 = vpop.f32.mrb[0].mxu0
      %v8573 = vadd.f32 0.0, %v8572
      %v8574 = vpop.f32.mrb[0].mxu0
      %8575 = vmatprep.mubr.bf16.mxu0 0
      %8576 = vmatmul.mubr.bf16.gmra.mrb[0].mxu0 %v8416
      %v8577 = vpop.f32.mrb[0].mxu0
      %v8578 = vpop.f32.mrb[0].mxu0
      %v8579 = vpop.f32.mrb[0].mxu0
      %v8580 = vadd.f32 0.0, %v8579
      %v8581 = vpop.f32.mrb[0].mxu0
      %8582 = vmatprep.mubr.bf16.mxu0 0
      %8583 = vmatmul.mubr.bf16.gmra.mrb[0].mxu0 %v8419
      %v8584 = vpop.f32.mrb[0].mxu0
      %v8585 = vadd.f32 0.0, %v8584
      %v8586 = vpop.f32.mrb[0].mxu0
      %v8587 = vpop.f32.mrb[0].mxu0
      %v8588 = vpop.f32.mrb[0].mxu0
      %8589 = vdwg.mxu0
      %v8591 = vshrl.u32 %v8179, 16
      %v8593 = vrot.slane %v8591, 3
      %v8594 = vshll.u32 %v8179, 16
      %v8596 = vrot.slane %v8594, 4
      %v8597 = vor.u32 %v8593, %v8596
      %v8599 = vshrl.u32 %v8180, 16
      %v8601 = vrot.slane %v8599, 3
      %v8602 = vshll.u32 %v8180, 16
      %v8604 = vrot.slane %v8602, 4
      %v8605 = vor.u32 %v8601, %v8604
      %v8606 = vsel %vm1053, %v8597, %v8605
      %v8608 = vshrl.u32 %v8181, 16
      %v8610 = vrot.slane %v8608, 3
      %v8611 = vshll.u32 %v8181, 16
      %v8613 = vrot.slane %v8611, 4
      %v8614 = vor.u32 %v8610, %v8613
      %v8615 = vsel %vm1053, %v8605, %v8614
      %v8617 = vshrl.u32 %v8182, 16
      %v8619 = vrot.slane %v8617, 3
      %v8620 = vshll.u32 %v8182, 16
      %v8622 = vrot.slane %v8620, 4
      %v8623 = vor.u32 %v8619, %v8622
      %v8624 = vsel %vm1053, %v8614, %v8623
      %v8626 = vshrl.u32 %v8183, 16
      %v8628 = vrot.slane %v8626, 3
      %v8629 = vshll.u32 %v8183, 16
      %v8631 = vrot.slane %v8629, 4
      %v8632 = vor.u32 %v8628, %v8631
      %v8633 = vsel %vm1053, %v8623, %v8632
      %v8635 = vshrl.u32 %v8184, 16
      %v8637 = vrot.slane %v8635, 3
      %v8638 = vshll.u32 %v8184, 16
      %v8640 = vrot.slane %v8638, 4
      %v8641 = vor.u32 %v8637, %v8640
      %v8642 = vsel %vm1053, %v8632, %v8641
      %v8644 = vshrl.u32 %v8185, 16
      %v8646 = vrot.slane %v8644, 3
      %v8647 = vshll.u32 %v8185, 16
      %v8649 = vrot.slane %v8647, 4
      %v8650 = vor.u32 %v8646, %v8649
      %v8651 = vsel %vm1053, %v8641, %v8650
      %v8653 = vshrl.u32 %v8186, 16
      %v8655 = vrot.slane %v8653, 3
      %v8656 = vshll.u32 %v8186, 16
      %v8658 = vrot.slane %v8656, 4
      %v8659 = vor.u32 %v8655, %v8658
      %v8660 = vsel %vm1053, %v8650, %v8659
      %v8662 = vshrl.u32 %v8187, 16
      %v8664 = vrot.slane %v8662, 3
      %v8665 = vshll.u32 %v8187, 16
      %v8667 = vrot.slane %v8665, 4
      %v8668 = vor.u32 %v8664, %v8667
      %v8669 = vsel %vm1053, %v8659, %v8668
      %v8671 = vshrl.u32 %v8188, 16
      %v8673 = vrot.slane %v8671, 3
      %v8674 = vshll.u32 %v8188, 16
      %v8676 = vrot.slane %v8674, 4
      %v8677 = vor.u32 %v8673, %v8676
      %v8678 = vsel %vm1053, %v8668, %v8677
      %v8680 = vshrl.u32 %v8189, 16
      %v8682 = vrot.slane %v8680, 3
      %v8683 = vshll.u32 %v8189, 16
      %v8685 = vrot.slane %v8683, 4
      %v8686 = vor.u32 %v8682, %v8685
      %v8687 = vsel %vm1053, %v8677, %v8686
      %v8689 = vshrl.u32 %v8190, 16
      %v8691 = vrot.slane %v8689, 3
      %v8692 = vshll.u32 %v8190, 16
      %v8694 = vrot.slane %v8692, 4
      %v8695 = vor.u32 %v8691, %v8694
      %v8696 = vsel %vm1053, %v8686, %v8695
      %v8698 = vshrl.u32 %v8191, 16
      %v8700 = vrot.slane %v8698, 3
      %v8701 = vshll.u32 %v8191, 16
      %v8703 = vrot.slane %v8701, 4
      %v8704 = vor.u32 %v8700, %v8703
      %v8705 = vsel %vm1053, %v8695, %v8704
      %v8707 = vshrl.u32 %v8192, 16
      %v8709 = vrot.slane %v8707, 3
      %v8710 = vshll.u32 %v8192, 16
      %v8712 = vrot.slane %v8710, 4
      %v8713 = vor.u32 %v8709, %v8712
      %v8714 = vsel %vm1053, %v8704, %v8713
      %v8716 = vshrl.u32 %v8193, 16
      %v8718 = vrot.slane %v8716, 3
      %v8719 = vshll.u32 %v8193, 16
      %v8721 = vrot.slane %v8719, 4
      %v8722 = vor.u32 %v8718, %v8721
      %v8723 = vsel %vm1053, %v8713, %v8722
      %v8725 = vshrl.u32 %v8194, 16
      %v8727 = vrot.slane %v8725, 3
      %v8728 = vshll.u32 %v8194, 16
      %v8730 = vrot.slane %v8728, 4
      %v8731 = vor.u32 %v8727, %v8730
      %v8732 = vsel %vm1053, %v8722, %v8731
      %v8734 = vshrl.u32 %v8195, 16
      %v8736 = vrot.slane %v8734, 3
      %v8737 = vshll.u32 %v8195, 16
      %v8739 = vrot.slane %v8737, 4
      %v8740 = vor.u32 %v8736, %v8739
      %v8741 = vsel %vm1053, %v8731, %v8740
      %v8743 = vshrl.u32 %v8196, 16
      %v8745 = vrot.slane %v8743, 3
      %v8746 = vshll.u32 %v8196, 16
      %v8748 = vrot.slane %v8746, 4
      %v8749 = vor.u32 %v8745, %v8748
      %v8750 = vsel %vm1053, %v8740, %v8749
      %v8752 = vshrl.u32 %v8197, 16
      %v8754 = vrot.slane %v8752, 3
      %v8755 = vshll.u32 %v8197, 16
      %v8757 = vrot.slane %v8755, 4
      %v8758 = vor.u32 %v8754, %v8757
      %v8759 = vsel %vm1053, %v8749, %v8758
      %v8761 = vsel %vm4370, %v8606, 0
      %v8764 = vsel %vm4370, %v8615, 0
      %v8767 = vsel %vm4370, %v8624, 0
      %v8770 = vsel %vm4370, %v8633, 0
      %v8773 = vsel %vm4370, %v8642, 0
      %v8776 = vsel %vm4370, %v8651, 0
      %v8779 = vsel %vm4370, %v8660, 0
      %v8782 = vsel %vm4370, %v8669, 0
      %v8785 = vsel %vm4370, %v8678, 0
      %v8788 = vsel %vm4370, %v8687, 0
      %v8791 = vsel %vm4370, %v8696, 0
      %v8794 = vsel %vm4370, %v8705, 0
      %v8797 = vsel %vm4370, %v8714, 0
      %v8800 = vsel %vm4370, %v8723, 0
      %v8803 = vsel %vm4370, %v8732, 0
      %v8806 = vsel %vm4370, %v8741, 0
      %v8809 = vsel %vm4370, %v8750, 0
      %v8812 = vsel %vm4370, %v8759, 0
      %v8815 = vsel %vm8421, %v8198, 0
      %8817 = vmatprep.subr.bf16.mxu0 0
      %8818 = vmatpush1.bf16.msra.mxu0 %v8815
      %8819 = vmatprep.subr.bf16.mxu0 0
      %8820 = vmatpush1.bf16.msra.mxu0 0
      %8821 = vmatprep.subr.bf16.mxu0 0
      %8822 = vmatpush1.bf16.msra.mxu0 0
      %8823 = vmatprep.subr.bf16.mxu0 0
      %8824 = vmatpush1.bf16.msra.mxu0 0
      %8825 = vmatprep.subr.bf16.mxu0 0
      %8826 = vmatpush1.bf16.msra.mxu0 0
      %8827 = vmatprep.subr.bf16.mxu0 0
      %8828 = vmatpush1.bf16.msra.mxu0 0
      %8829 = vmatprep.subr.bf16.mxu0 0
      %8830 = vmatpush1.bf16.msra.mxu0 0
      %8831 = vmatprep.subr.bf16.mxu0 0
      %8832 = vmatpush1.bf16.msra.mxu0 0
      %8833 = vmatprep.subr.bf16.mxu0 0
      %8834 = vmatpush1.bf16.msra.mxu0 0
      %8835 = vmatprep.subr.bf16.mxu0 0
      %8836 = vmatpush1.bf16.msra.mxu0 0
      %8837 = vmatprep.subr.bf16.mxu0 0
      %8838 = vmatpush1.bf16.msra.mxu0 0
      %8839 = vmatprep.subr.bf16.mxu0 0
      %8840 = vmatpush1.bf16.msra.mxu0 0
      %8841 = vmatprep.subr.bf16.mxu0 0
      %8842 = vmatpush1.bf16.msra.mxu0 0
      %8843 = vmatprep.subr.bf16.mxu0 0
      %8844 = vmatpush1.bf16.msra.mxu0 0
      %8845 = vmatprep.subr.bf16.mxu0 0
      %8846 = vmatpush1.bf16.msra.mxu0 0
      %8847 = vmatprep.subr.bf16.mxu0 0
      %8848 = vmatpush1.bf16.msra.mxu0 0
      %8849 = vmatprep.mubr.bf16.mxu0 0
      %8850 = vmatmul.mubr.bf16.gmra.mrb[0].mxu0 %v8761
      %v8851 = vpop.f32.mrb[0].mxu0
      %v8852 = vadd.f32 %v8460, %v8851
      %v8853 = vpop.f32.mrb[0].mxu0
      %v8854 = vpop.f32.mrb[0].mxu0
      %v8855 = vadd.f32 %v8463, %v8854
      %v8856 = vpop.f32.mrb[0].mxu0
      %8857 = vmatprep.mubr.bf16.mxu0 0
      %8858 = vmatmul.mubr.bf16.gmra.mrb[0].mxu0 %v8764
      %v8859 = vpop.f32.mrb[0].mxu0
      %v8860 = vpop.f32.mrb[0].mxu0
      %v8861 = vpop.f32.mrb[0].mxu0
      %v8862 = vadd.f32 %v8470, %v8861
      %v8863 = vpop.f32.mrb[0].mxu0
      %8864 = vmatprep.mubr.bf16.mxu0 0
      %8865 = vmatmul.mubr.bf16.gmra.mrb[0].mxu0 %v8767
      %v8866 = vpop.f32.mrb[0].mxu0
      %v8867 = vadd.f32 %v8475, %v8866
      %v8868 = vpop.f32.mrb[0].mxu0
      %v8869 = vpop.f32.mrb[0].mxu0
      %v8870 = vpop.f32.mrb[0].mxu0
      %8871 = vmatprep.mubr.bf16.mxu0 0
      %8872 = vmatmul.mubr.bf16.gmra.mrb[0].mxu0 %v8770
      %v8873 = vpop.f32.mrb[0].mxu0
      %v8874 = vadd.f32 %v8482, %v8873
      %v8875 = vpop.f32.mrb[0].mxu0
      %v8876 = vpop.f32.mrb[0].mxu0
      %v8877 = vadd.f32 %v8485, %v8876
      %v8878 = vpop.f32.mrb[0].mxu0
      %8879 = vmatprep.mubr.bf16.mxu0 0
      %8880 = vmatmul.mubr.bf16.gmra.mrb[0].mxu0 %v8773
      %v8881 = vpop.f32.mrb[0].mxu0
      %v8882 = vpop.f32.mrb[0].mxu0
      %v8883 = vpop.f32.mrb[0].mxu0
      %v8884 = vadd.f32 %v8492, %v8883
      %v8885 = vpop.f32.mrb[0].mxu0
      %8886 = vmatprep.mubr.bf16.mxu0 0
      %8887 = vmatmul.mubr.bf16.gmra.mrb[0].mxu0 %v8776
      %v8888 = vpop.f32.mrb[0].mxu0
      %v8889 = vadd.f32 %v8497, %v8888
      %v8890 = vpop.f32.mrb[0].mxu0
      %v8891 = vpop.f32.mrb[0].mxu0
      %v8892 = vpop.f32.mrb[0].mxu0
      %8893 = vmatprep.mubr.bf16.mxu0 0
      %8894 = vmatmul.mubr.bf16.gmra.mrb[0].mxu0 %v8779
      %v8895 = vpop.f32.mrb[0].mxu0
      %v8896 = vadd.f32 %v8504, %v8895
      %v8897 = vpop.f32.mrb[0].mxu0
      %v8898 = vpop.f32.mrb[0].mxu0
      %v8899 = vadd.f32 %v8507, %v8898
      %v8900 = vpop.f32.mrb[0].mxu0
      %8901 = vmatprep.mubr.bf16.mxu0 0
      %8902 = vmatmul.mubr.bf16.gmra.mrb[0].mxu0 %v8782
      %v8903 = vpop.f32.mrb[0].mxu0
      %v8904 = vpop.f32.mrb[0].mxu0
      %v8905 = vpop.f32.mrb[0].mxu0
      %v8906 = vadd.f32 %v8514, %v8905
      %v8907 = vpop.f32.mrb[0].mxu0
      %8908 = vmatprep.mubr.bf16.mxu0 0
      %8909 = vmatmul.mubr.bf16.gmra.mrb[0].mxu0 %v8785
      %v8910 = vpop.f32.mrb[0].mxu0
      %v8911 = vadd.f32 %v8519, %v8910
      %v8912 = vpop.f32.mrb[0].mxu0
      %v8913 = vpop.f32.mrb[0].mxu0
      %v8914 = vpop.f32.mrb[0].mxu0
      %8915 = vmatprep.mubr.bf16.mxu0 0
      %8916 = vmatmul.mubr.bf16.gmra.mrb[0].mxu0 %v8788
      %v8917 = vpop.f32.mrb[0].mxu0
      %v8918 = vadd.f32 %v8526, %v8917
      %v8919 = vpop.f32.mrb[0].mxu0
      %v8920 = vpop.f32.mrb[0].mxu0
      %v8921 = vadd.f32 %v8529, %v8920
      %v8922 = vpop.f32.mrb[0].mxu0
      %8923 = vmatprep.mubr.bf16.mxu0 0
      %8924 = vmatmul.mubr.bf16.gmra.mrb[0].mxu0 %v8791
      %v8925 = vpop.f32.mrb[0].mxu0
      %v8926 = vpop.f32.mrb[0].mxu0
      %v8927 = vpop.f32.mrb[0].mxu0
      %v8928 = vadd.f32 %v8536, %v8927
      %v8929 = vpop.f32.mrb[0].mxu0
      %8930 = vmatprep.mubr.bf16.mxu0 0
      %8931 = vmatmul.mubr.bf16.gmra.mrb[0].mxu0 %v8794
      %v8932 = vpop.f32.mrb[0].mxu0
      %v8933 = vadd.f32 %v8541, %v8932
      %v8934 = vpop.f32.mrb[0].mxu0
      %v8935 = vpop.f32.mrb[0].mxu0
      %v8936 = vpop.f32.mrb[0].mxu0
      %8937 = vmatprep.mubr.bf16.mxu0 0
      %8938 = vmatmul.mubr.bf16.gmra.mrb[0].mxu0 %v8797
      %v8939 = vpop.f32.mrb[0].mxu0
      %v8940 = vadd.f32 %v8548, %v8939
      %v8941 = vpop.f32.mrb[0].mxu0
      %v8942 = vpop.f32.mrb[0].mxu0
      %v8943 = vadd.f32 %v8551, %v8942
      %v8944 = vpop.f32.mrb[0].mxu0
      %8945 = vmatprep.mubr.bf16.mxu0 0
      %8946 = vmatmul.mubr.bf16.gmra.mrb[0].mxu0 %v8800
      %v8947 = vpop.f32.mrb[0].mxu0
      %v8948 = vpop.f32.mrb[0].mxu0
      %v8949 = vpop.f32.mrb[0].mxu0
      %v8950 = vadd.f32 %v8558, %v8949
      %v8951 = vpop.f32.mrb[0].mxu0
      %8952 = vmatprep.mubr.bf16.mxu0 0
      %8953 = vmatmul.mubr.bf16.gmra.mrb[0].mxu0 %v8803
      %v8954 = vpop.f32.mrb[0].mxu0
      %v8955 = vadd.f32 %v8563, %v8954
      %v8956 = vpop.f32.mrb[0].mxu0
      %v8957 = vpop.f32.mrb[0].mxu0
      %v8958 = vpop.f32.mrb[0].mxu0
      %8959 = vmatprep.mubr.bf16.mxu0 0
      %8960 = vmatmul.mubr.bf16.gmra.mrb[0].mxu0 %v8806
      %v8961 = vpop.f32.mrb[0].mxu0
      %v8962 = vadd.f32 %v8570, %v8961
      %v8963 = vpop.f32.mrb[0].mxu0
      %v8964 = vpop.f32.mrb[0].mxu0
      %v8965 = vadd.f32 %v8573, %v8964
      %v8966 = vpop.f32.mrb[0].mxu0
      %8967 = vmatprep.mubr.bf16.mxu0 0
      %8968 = vmatmul.mubr.bf16.gmra.mrb[0].mxu0 %v8809
      %v8969 = vpop.f32.mrb[0].mxu0
      %v8970 = vpop.f32.mrb[0].mxu0
      %v8971 = vpop.f32.mrb[0].mxu0
      %v8972 = vadd.f32 %v8580, %v8971
      %v8973 = vpop.f32.mrb[0].mxu0
      %8974 = vmatprep.mubr.bf16.mxu0 0
      %8975 = vmatmul.mubr.bf16.gmra.mrb[0].mxu0 %v8812
      %v8976 = vpop.f32.mrb[0].mxu0
      %v8977 = vadd.f32 %v8585, %v8976
      %v8978 = vpop.f32.mrb[0].mxu0
      %v8979 = vpop.f32.mrb[0].mxu0
      %v8980 = vpop.f32.mrb[0].mxu0
      %8981 = vdwg.mxu0
      %v8982 = vld [vmem:[%s6 + $0x80] sm:$0x3]
      %v8983 = vrot.slane %v8220, 1
      %v8984 = vrot.slane %v8222, 2
      %v8985 = vor.u32 %v8983, %v8984
      %v8986 = vrot.slane %v8231, 1
      %v8987 = vrot.slane %v8227, 2
      %v8988 = vor.u32 %v8986, %v8987
      %v8989 = vsel %vm5691, %v8985, %v8988
      %v8990 = vrot.slane %v8239, 1
      %v8991 = vrot.slane %v8235, 2
      %v8992 = vor.u32 %v8990, %v8991
      %v8993 = vsel %vm5691, %v8988, %v8992
      %v8994 = vrot.slane %v8247, 1
      %v8995 = vrot.slane %v8243, 2
      %v8996 = vor.u32 %v8994, %v8995
      %v8997 = vsel %vm5691, %v8992, %v8996
      %v8998 = vrot.slane %v8255, 1
      %v8999 = vrot.slane %v8251, 2
      %v9000 = vor.u32 %v8998, %v8999
      %v9001 = vsel %vm5691, %v8996, %v9000
      %v9002 = vrot.slane %v8263, 1
      %v9003 = vrot.slane %v8259, 2
      %v9004 = vor.u32 %v9002, %v9003
      %v9005 = vsel %vm5691, %v9000, %v9004
      %v9006 = vrot.slane %v8271, 1
      %v9007 = vrot.slane %v8267, 2
      %v9008 = vor.u32 %v9006, %v9007
      %v9009 = vsel %vm5691, %v9004, %v9008
      %v9010 = vrot.slane %v8279, 1
      %v9011 = vrot.slane %v8275, 2
      %v9012 = vor.u32 %v9010, %v9011
      %v9013 = vsel %vm5691, %v9008, %v9012
      %v9014 = vrot.slane %v8287, 1
      %v9015 = vrot.slane %v8283, 2
      %v9016 = vor.u32 %v9014, %v9015
      %v9017 = vsel %vm5691, %v9012, %v9016
      %v9018 = vrot.slane %v8295, 1
      %v9019 = vrot.slane %v8291, 2
      %v9020 = vor.u32 %v9018, %v9019
      %v9021 = vsel %vm5691, %v9016, %v9020
      %v9022 = vrot.slane %v8303, 1
      %v9023 = vrot.slane %v8299, 2
      %v9024 = vor.u32 %v9022, %v9023
      %v9025 = vsel %vm5691, %v9020, %v9024
      %v9026 = vrot.slane %v8311, 1
      %v9027 = vrot.slane %v8307, 2
      %v9028 = vor.u32 %v9026, %v9027
      %v9029 = vsel %vm5691, %v9024, %v9028
      %v9030 = vrot.slane %v8319, 1
      %v9031 = vrot.slane %v8315, 2
      %v9032 = vor.u32 %v9030, %v9031
      %v9033 = vsel %vm5691, %v9028, %v9032
      %v9034 = vrot.slane %v8327, 1
      %v9035 = vrot.slane %v8323, 2
      %v9036 = vor.u32 %v9034, %v9035
      %v9037 = vsel %vm5691, %v9032, %v9036
      %v9038 = vrot.slane %v8335, 1
      %v9039 = vrot.slane %v8331, 2
      %v9040 = vor.u32 %v9038, %v9039
      %v9041 = vsel %vm5691, %v9036, %v9040
      %v9042 = vrot.slane %v8343, 1
      %v9043 = vrot.slane %v8339, 2
      %v9044 = vor.u32 %v9042, %v9043
      %v9045 = vsel %vm5691, %v9040, %v9044
      %v9046 = vrot.slane %v8351, 1
      %v9047 = vrot.slane %v8347, 2
      %v9048 = vor.u32 %v9046, %v9047
      %v9049 = vsel %vm5691, %v9044, %v9048
      %v9050 = vrot.slane %v8359, 1
      %v9051 = vrot.slane %v8355, 2
      %v9052 = vor.u32 %v9050, %v9051
      %v9053 = vsel %vm5691, %v9048, %v9052
      %v9054 = vshrl.u32 %v8217, 16
      %v9056 = vrot.slane %v9054, 1
      %v9057 = vrot.slane %v8363, 2
      %v9058 = vor.u32 %v9056, %v9057
      %v9059 = vsel %vm5691, %v9052, %v9058
      %v9061 = vsel %vm4370, %v8989, 0
      %v9064 = vsel %vm4370, %v8993, 0
      %v9067 = vsel %vm4370, %v8997, 0
      %v9070 = vsel %vm4370, %v9001, 0
      %v9073 = vsel %vm4370, %v9005, 0
      %v9076 = vsel %vm4370, %v9009, 0
      %v9079 = vsel %vm4370, %v9013, 0
      %v9082 = vsel %vm4370, %v9017, 0
      %v9085 = vsel %vm4370, %v9021, 0
      %v9088 = vsel %vm4370, %v9025, 0
      %v9091 = vsel %vm4370, %v9029, 0
      %v9094 = vsel %vm4370, %v9033, 0
      %v9097 = vsel %vm4370, %v9037, 0
      %v9100 = vsel %vm4370, %v9041, 0
      %v9103 = vsel %vm4370, %v9045, 0
      %v9106 = vsel %vm4370, %v9049, 0
      %v9109 = vsel %vm4370, %v9053, 0
      %v9112 = vsel %vm4370, %v9059, 0
      %v9115 = vsel %vm8421, %v8982, 0
      %9117 = vmatprep.subr.bf16.mxu0 0
      %9118 = vmatpush1.bf16.msra.mxu0 %v9115
      %9119 = vmatprep.subr.bf16.mxu0 0
      %9120 = vmatpush1.bf16.msra.mxu0 0
      %9121 = vmatprep.subr.bf16.mxu0 0
      %9122 = vmatpush1.bf16.msra.mxu0 0
      %9123 = vmatprep.subr.bf16.mxu0 0
      %9124 = vmatpush1.bf16.msra.mxu0 0
      %9125 = vmatprep.subr.bf16.mxu0 0
      %9126 = vmatpush1.bf16.msra.mxu0 0
      %9127 = vmatprep.subr.bf16.mxu0 0
      %9128 = vmatpush1.bf16.msra.mxu0 0
      %9129 = vmatprep.subr.bf16.mxu0 0
      %9130 = vmatpush1.bf16.msra.mxu0 0
      %9131 = vmatprep.subr.bf16.mxu0 0
      %9132 = vmatpush1.bf16.msra.mxu0 0
      %9133 = vmatprep.subr.bf16.mxu0 0
      %9134 = vmatpush1.bf16.msra.mxu0 0
      %9135 = vmatprep.subr.bf16.mxu0 0
      %9136 = vmatpush1.bf16.msra.mxu0 0
      %9137 = vmatprep.subr.bf16.mxu0 0
      %9138 = vmatpush1.bf16.msra.mxu0 0
      %9139 = vmatprep.subr.bf16.mxu0 0
      %9140 = vmatpush1.bf16.msra.mxu0 0
      %9141 = vmatprep.subr.bf16.mxu0 0
      %9142 = vmatpush1.bf16.msra.mxu0 0
      %9143 = vmatprep.subr.bf16.mxu0 0
      %9144 = vmatpush1.bf16.msra.mxu0 0
      %9145 = vmatprep.subr.bf16.mxu0 0
      %9146 = vmatpush1.bf16.msra.mxu0 0
      %9147 = vmatprep.subr.bf16.mxu0 0
      %9148 = vmatpush1.bf16.msra.mxu0 0
      %9149 = vmatprep.mubr.bf16.mxu0 0
      %9150 = vmatmul.mubr.bf16.gmra.mrb[0].mxu0 %v9061
      %v9151 = vpop.f32.mrb[0].mxu0
      %v9152 = vadd.f32 0.0, %v9151
      %v9153 = vpop.f32.mrb[0].mxu0
      %v9154 = vpop.f32.mrb[0].mxu0
      %v9155 = vadd.f32 0.0, %v9154
      %v9156 = vpop.f32.mrb[0].mxu0
      %9157 = vmatprep.mubr.bf16.mxu0 0
      %9158 = vmatmul.mubr.bf16.gmra.mrb[0].mxu0 %v9064
      %v9159 = vpop.f32.mrb[0].mxu0
      %v9160 = vpop.f32.mrb[0].mxu0
      %v9161 = vpop.f32.mrb[0].mxu0
      %v9162 = vadd.f32 0.0, %v9161
      %v9163 = vpop.f32.mrb[0].mxu0
      %9164 = vmatprep.mubr.bf16.mxu0 0
      %9165 = vmatmul.mubr.bf16.gmra.mrb[0].mxu0 %v9067
      %v9166 = vpop.f32.mrb[0].mxu0
      %v9167 = vadd.f32 0.0, %v9166
      %v9168 = vpop.f32.mrb[0].mxu0
      %v9169 = vpop.f32.mrb[0].mxu0
      %v9170 = vpop.f32.mrb[0].mxu0
      %9171 = vmatprep.mubr.bf16.mxu0 0
      %9172 = vmatmul.mubr.bf16.gmra.mrb[0].mxu0 %v9070
      %v9173 = vpop.f32.mrb[0].mxu0
      %v9174 = vadd.f32 0.0, %v9173
      %v9175 = vpop.f32.mrb[0].mxu0
      %v9176 = vpop.f32.mrb[0].mxu0
      %v9177 = vadd.f32 0.0, %v9176
      %v9178 = vpop.f32.mrb[0].mxu0
      %9179 = vmatprep.mubr.bf16.mxu0 0
      %9180 = vmatmul.mubr.bf16.gmra.mrb[0].mxu0 %v9073
      %v9181 = vpop.f32.mrb[0].mxu0
      %v9182 = vpop.f32.mrb[0].mxu0
      %v9183 = vpop.f32.mrb[0].mxu0
      %v9184 = vadd.f32 0.0, %v9183
      %v9185 = vpop.f32.mrb[0].mxu0
      %9186 = vmatprep.mubr.bf16.mxu0 0
      %9187 = vmatmul.mubr.bf16.gmra.mrb[0].mxu0 %v9076
      %v9188 = vpop.f32.mrb[0].mxu0
      %v9189 = vadd.f32 0.0, %v9188
      %v9190 = vpop.f32.mrb[0].mxu0
      %v9191 = vpop.f32.mrb[0].mxu0
      %v9192 = vpop.f32.mrb[0].mxu0
      %9193 = vmatprep.mubr.bf16.mxu0 0
      %9194 = vmatmul.mubr.bf16.gmra.mrb[0].mxu0 %v9079
      %v9195 = vpop.f32.mrb[0].mxu0
      %v9196 = vadd.f32 0.0, %v9195
      %v9197 = vpop.f32.mrb[0].mxu0
      %v9198 = vpop.f32.mrb[0].mxu0
      %v9199 = vadd.f32 0.0, %v9198
      %v9200 = vpop.f32.mrb[0].mxu0
      %9201 = vmatprep.mubr.bf16.mxu0 0
      %9202 = vmatmul.mubr.bf16.gmra.mrb[0].mxu0 %v9082
      %v9203 = vpop.f32.mrb[0].mxu0
      %v9204 = vpop.f32.mrb[0].mxu0
      %v9205 = vpop.f32.mrb[0].mxu0
      %v9206 = vadd.f32 0.0, %v9205
      %v9207 = vpop.f32.mrb[0].mxu0
      %9208 = vmatprep.mubr.bf16.mxu0 0
      %9209 = vmatmul.mubr.bf16.gmra.mrb[0].mxu0 %v9085
      %v9210 = vpop.f32.mrb[0].mxu0
      %v9211 = vadd.f32 0.0, %v9210
      %v9212 = vpop.f32.mrb[0].mxu0
      %v9213 = vpop.f32.mrb[0].mxu0
      %v9214 = vpop.f32.mrb[0].mxu0
      %9215 = vmatprep.mubr.bf16.mxu0 0
      %9216 = vmatmul.mubr.bf16.gmra.mrb[0].mxu0 %v9088
      %v9217 = vpop.f32.mrb[0].mxu0
      %v9218 = vadd.f32 0.0, %v9217
      %v9219 = vpop.f32.mrb[0].mxu0
      %v9220 = vpop.f32.mrb[0].mxu0
      %v9221 = vadd.f32 0.0, %v9220
      %v9222 = vpop.f32.mrb[0].mxu0
      %9223 = vmatprep.mubr.bf16.mxu0 0
      %9224 = vmatmul.mubr.bf16.gmra.mrb[0].mxu0 %v9091
      %v9225 = vpop.f32.mrb[0].mxu0
      %v9226 = vpop.f32.mrb[0].mxu0
      %v9227 = vpop.f32.mrb[0].mxu0
      %v9228 = vadd.f32 0.0, %v9227
      %v9229 = vpop.f32.mrb[0].mxu0
      %9230 = vmatprep.mubr.bf16.mxu0 0
      %9231 = vmatmul.mubr.bf16.gmra.mrb[0].mxu0 %v9094
      %v9232 = vpop.f32.mrb[0].mxu0
      %v9233 = vadd.f32 0.0, %v9232
      %v9234 = vpop.f32.mrb[0].mxu0
      %v9235 = vpop.f32.mrb[0].mxu0
      %v9236 = vpop.f32.mrb[0].mxu0
      %9237 = vmatprep.mubr.bf16.mxu0 0
      %9238 = vmatmul.mubr.bf16.gmra.mrb[0].mxu0 %v9097
      %v9239 = vpop.f32.mrb[0].mxu0
      %v9240 = vadd.f32 0.0, %v9239
      %v9241 = vpop.f32.mrb[0].mxu0
      %v9242 = vpop.f32.mrb[0].mxu0
      %v9243 = vadd.f32 0.0, %v9242
      %v9244 = vpop.f32.mrb[0].mxu0
      %9245 = vmatprep.mubr.bf16.mxu0 0
      %9246 = vmatmul.mubr.bf16.gmra.mrb[0].mxu0 %v9100
      %v9247 = vpop.f32.mrb[0].mxu0
      %v9248 = vpop.f32.mrb[0].mxu0
      %v9249 = vpop.f32.mrb[0].mxu0
      %v9250 = vadd.f32 0.0, %v9249
      %v9251 = vpop.f32.mrb[0].mxu0
      %9252 = vmatprep.mubr.bf16.mxu0 0
      %9253 = vmatmul.mubr.bf16.gmra.mrb[0].mxu0 %v9103
      %v9254 = vpop.f32.mrb[0].mxu0
      %v9255 = vadd.f32 0.0, %v9254
      %v9256 = vpop.f32.mrb[0].mxu0
      %v9257 = vpop.f32.mrb[0].mxu0
      %v9258 = vpop.f32.mrb[0].mxu0
      %9259 = vmatprep.mubr.bf16.mxu0 0
      %9260 = vmatmul.mubr.bf16.gmra.mrb[0].mxu0 %v9106
      %v9261 = vpop.f32.mrb[0].mxu0
      %v9262 = vadd.f32 0.0, %v9261
      %v9263 = vpop.f32.mrb[0].mxu0
      %v9264 = vpop.f32.mrb[0].mxu0
      %v9265 = vadd.f32 0.0, %v9264
      %v9266 = vpop.f32.mrb[0].mxu0
      %9267 = vmatprep.mubr.bf16.mxu0 0
      %9268 = vmatmul.mubr.bf16.gmra.mrb[0].mxu0 %v9109
      %v9269 = vpop.f32.mrb[0].mxu0
      %v9270 = vpop.f32.mrb[0].mxu0
      %v9271 = vpop.f32.mrb[0].mxu0
      %v9272 = vadd.f32 0.0, %v9271
      %v9273 = vpop.f32.mrb[0].mxu0
      %9274 = vmatprep.mubr.bf16.mxu0 0
      %9275 = vmatmul.mubr.bf16.gmra.mrb[0].mxu0 %v9112
      %v9276 = vpop.f32.mrb[0].mxu0
      %v9277 = vadd.f32 0.0, %v9276
      %v9278 = vpop.f32.mrb[0].mxu0
      %v9279 = vpop.f32.mrb[0].mxu0
      %v9280 = vpop.f32.mrb[0].mxu0
      %9281 = vdwg.mxu0
      %v9282 = vadd.f32 %v8852, %v9152
      %v9283 = vadd.f32 %v8855, %v9155
      %v9284 = vadd.f32 %v8862, %v9162
      %v9285 = vadd.f32 %v8867, %v9167
      %v9286 = vadd.f32 %v8874, %v9174
      %v9287 = vadd.f32 %v8877, %v9177
      %v9288 = vadd.f32 %v8884, %v9184
      %v9289 = vadd.f32 %v8889, %v9189
      %v9290 = vadd.f32 %v8896, %v9196
      %v9291 = vadd.f32 %v8899, %v9199
      %v9292 = vadd.f32 %v8906, %v9206
      %v9293 = vadd.f32 %v8911, %v9211
      %v9294 = vadd.f32 %v8918, %v9218
      %v9295 = vadd.f32 %v8921, %v9221
      %v9296 = vadd.f32 %v8928, %v9228
      %v9297 = vadd.f32 %v8933, %v9233
      %v9298 = vadd.f32 %v8940, %v9240
      %v9299 = vadd.f32 %v8943, %v9243
      %v9300 = vadd.f32 %v8950, %v9250
      %v9301 = vadd.f32 %v8955, %v9255
      %v9302 = vadd.f32 %v8962, %v9262
      %v9303 = vadd.f32 %v8965, %v9265
      %v9304 = vadd.f32 %v8972, %v9272
      %v9305 = vadd.f32 %v8977, %v9277
      %v9306 = vpack.c.bf16 %v8166, %v8165
      %v9307 = vpack.c.bf16 %v8168, %v8167
      %v9308 = vpack.c.bf16 %v8170, %v8169
      %v9309 = vpack.c.bf16 %v8171, %v8171
      %v9310 = vld [vmem:[%s6 + $0xc0] sm:$0x3]
      %v9312 = vshrl.u32 %v9306, 16
      %v9314 = vrot.slane %v9312, 3
      %v9315 = vshll.u32 %v9306, 16
      %v9317 = vrot.slane %v9315, 4
      %v9318 = vor.u32 %v9314, %v9317
      %v9319 = vsel %vm1053, %v8749, %v9318
      %v9321 = vshrl.u32 %v9307, 16
      %v9323 = vrot.slane %v9321, 3
      %v9324 = vshll.u32 %v9307, 16
      %v9326 = vrot.slane %v9324, 4
      %v9327 = vor.u32 %v9323, %v9326
      %v9328 = vsel %vm1053, %v9318, %v9327
      %v9330 = vshrl.u32 %v9308, 16
      %v9332 = vrot.slane %v9330, 3
      %v9333 = vshll.u32 %v9308, 16
      %v9335 = vrot.slane %v9333, 4
      %v9336 = vor.u32 %v9332, %v9335
      %v9337 = vsel %vm1053, %v9327, %v9336
      %v9339 = vshrl.u32 %v9309, 16
      %v9341 = vrot.slane %v9339, 3
      %v9342 = vshll.u32 %v9309, 16
      %v9344 = vrot.slane %v9342, 4
      %v9345 = vor.u32 %v9341, %v9344
      %v9346 = vsel %vm1053, %v9336, %v9345
      %v9348 = vsel %vm4370, %v9319, 0
      %v9351 = vsel %vm4370, %v9328, 0
      %v9354 = vsel %vm4370, %v9337, 0
      %v9357 = vsel %vm4370, %v9346, 0
      %v9360 = vsel %vm8421, %v9310, 0
      %9362 = vmatprep.subr.bf16.mxu0 0
      %9363 = vmatpush1.bf16.msra.mxu0 %v9360
      %9364 = vmatprep.subr.bf16.mxu0 0
      %9365 = vmatpush1.bf16.msra.mxu0 0
      %9366 = vmatprep.subr.bf16.mxu0 0
      %9367 = vmatpush1.bf16.msra.mxu0 0
      %9368 = vmatprep.subr.bf16.mxu0 0
      %9369 = vmatpush1.bf16.msra.mxu0 0
      %9370 = vmatprep.subr.bf16.mxu0 0
      %9371 = vmatpush1.bf16.msra.mxu0 0
      %9372 = vmatprep.subr.bf16.mxu0 0
      %9373 = vmatpush1.bf16.msra.mxu0 0
      %9374 = vmatprep.subr.bf16.mxu0 0
      %9375 = vmatpush1.bf16.msra.mxu0 0
      %9376 = vmatprep.subr.bf16.mxu0 0
      %9377 = vmatpush1.bf16.msra.mxu0 0
      %9378 = vmatprep.subr.bf16.mxu0 0
      %9379 = vmatpush1.bf16.msra.mxu0 0
      %9380 = vmatprep.subr.bf16.mxu0 0
      %9381 = vmatpush1.bf16.msra.mxu0 0
      %9382 = vmatprep.subr.bf16.mxu0 0
      %9383 = vmatpush1.bf16.msra.mxu0 0
      %9384 = vmatprep.subr.bf16.mxu0 0
      %9385 = vmatpush1.bf16.msra.mxu0 0
      %9386 = vmatprep.subr.bf16.mxu0 0
      %9387 = vmatpush1.bf16.msra.mxu0 0
      %9388 = vmatprep.subr.bf16.mxu0 0
      %9389 = vmatpush1.bf16.msra.mxu0 0
      %9390 = vmatprep.subr.bf16.mxu0 0
      %9391 = vmatpush1.bf16.msra.mxu0 0
      %9392 = vmatprep.subr.bf16.mxu0 0
      %9393 = vmatpush1.bf16.msra.mxu0 0
      %9394 = vmatprep.mubr.bf16.mxu0 0
      %9395 = vmatmul.mubr.bf16.gmra.mrb[0].mxu0 %v8770
      %v9396 = vpop.f32.mrb[0].mxu0
      %v9397 = vadd.f32 0.0, %v9396
      %v9398 = vpop.f32.mrb[0].mxu0
      %v9399 = vpop.f32.mrb[0].mxu0
      %v9400 = vadd.f32 0.0, %v9399
      %v9401 = vpop.f32.mrb[0].mxu0
      %9402 = vmatprep.mubr.bf16.mxu0 0
      %9403 = vmatmul.mubr.bf16.gmra.mrb[0].mxu0 %v8773
      %v9404 = vpop.f32.mrb[0].mxu0
      %v9405 = vpop.f32.mrb[0].mxu0
      %v9406 = vpop.f32.mrb[0].mxu0
      %v9407 = vadd.f32 0.0, %v9406
      %v9408 = vpop.f32.mrb[0].mxu0
      %9409 = vmatprep.mubr.bf16.mxu0 0
      %9410 = vmatmul.mubr.bf16.gmra.mrb[0].mxu0 %v8776
      %v9411 = vpop.f32.mrb[0].mxu0
      %v9412 = vadd.f32 0.0, %v9411
      %v9413 = vpop.f32.mrb[0].mxu0
      %v9414 = vpop.f32.mrb[0].mxu0
      %v9415 = vpop.f32.mrb[0].mxu0
      %9416 = vmatprep.mubr.bf16.mxu0 0
      %9417 = vmatmul.mubr.bf16.gmra.mrb[0].mxu0 %v8779
      %v9418 = vpop.f32.mrb[0].mxu0
      %v9419 = vadd.f32 0.0, %v9418
      %v9420 = vpop.f32.mrb[0].mxu0
      %v9421 = vpop.f32.mrb[0].mxu0
      %v9422 = vadd.f32 0.0, %v9421
      %v9423 = vpop.f32.mrb[0].mxu0
      %9424 = vmatprep.mubr.bf16.mxu0 0
      %9425 = vmatmul.mubr.bf16.gmra.mrb[0].mxu0 %v8782
      %v9426 = vpop.f32.mrb[0].mxu0
      %v9427 = vpop.f32.mrb[0].mxu0
      %v9428 = vpop.f32.mrb[0].mxu0
      %v9429 = vadd.f32 0.0, %v9428
      %v9430 = vpop.f32.mrb[0].mxu0
      %9431 = vmatprep.mubr.bf16.mxu0 0
      %9432 = vmatmul.mubr.bf16.gmra.mrb[0].mxu0 %v8785
      %v9433 = vpop.f32.mrb[0].mxu0
      %v9434 = vadd.f32 0.0, %v9433
      %v9435 = vpop.f32.mrb[0].mxu0
      %v9436 = vpop.f32.mrb[0].mxu0
      %v9437 = vpop.f32.mrb[0].mxu0
      %9438 = vmatprep.mubr.bf16.mxu0 0
      %9439 = vmatmul.mubr.bf16.gmra.mrb[0].mxu0 %v8788
      %v9440 = vpop.f32.mrb[0].mxu0
      %v9441 = vadd.f32 0.0, %v9440
      %v9442 = vpop.f32.mrb[0].mxu0
      %v9443 = vpop.f32.mrb[0].mxu0
      %v9444 = vadd.f32 0.0, %v9443
      %v9445 = vpop.f32.mrb[0].mxu0
      %9446 = vmatprep.mubr.bf16.mxu0 0
      %9447 = vmatmul.mubr.bf16.gmra.mrb[0].mxu0 %v8791
      %v9448 = vpop.f32.mrb[0].mxu0
      %v9449 = vpop.f32.mrb[0].mxu0
      %v9450 = vpop.f32.mrb[0].mxu0
      %v9451 = vadd.f32 0.0, %v9450
      %v9452 = vpop.f32.mrb[0].mxu0
      %9453 = vmatprep.mubr.bf16.mxu0 0
      %9454 = vmatmul.mubr.bf16.gmra.mrb[0].mxu0 %v8794
      %v9455 = vpop.f32.mrb[0].mxu0
      %v9456 = vadd.f32 0.0, %v9455
      %v9457 = vpop.f32.mrb[0].mxu0
      %v9458 = vpop.f32.mrb[0].mxu0
      %v9459 = vpop.f32.mrb[0].mxu0
      %9460 = vmatprep.mubr.bf16.mxu0 0
      %9461 = vmatmul.mubr.bf16.gmra.mrb[0].mxu0 %v8797
      %v9462 = vpop.f32.mrb[0].mxu0
      %v9463 = vadd.f32 0.0, %v9462
      %v9464 = vpop.f32.mrb[0].mxu0
      %v9465 = vpop.f32.mrb[0].mxu0
      %v9466 = vadd.f32 0.0, %v9465
      %v9467 = vpop.f32.mrb[0].mxu0
      %9468 = vmatprep.mubr.bf16.mxu0 0
      %9469 = vmatmul.mubr.bf16.gmra.mrb[0].mxu0 %v8800
      %v9470 = vpop.f32.mrb[0].mxu0
      %v9471 = vpop.f32.mrb[0].mxu0
      %v9472 = vpop.f32.mrb[0].mxu0
      %v9473 = vadd.f32 0.0, %v9472
      %v9474 = vpop.f32.mrb[0].mxu0
      %9475 = vmatprep.mubr.bf16.mxu0 0
      %9476 = vmatmul.mubr.bf16.gmra.mrb[0].mxu0 %v8803
      %v9477 = vpop.f32.mrb[0].mxu0
      %v9478 = vadd.f32 0.0, %v9477
      %v9479 = vpop.f32.mrb[0].mxu0
      %v9480 = vpop.f32.mrb[0].mxu0
      %v9481 = vpop.f32.mrb[0].mxu0
      %9482 = vmatprep.mubr.bf16.mxu0 0
      %9483 = vmatmul.mubr.bf16.gmra.mrb[0].mxu0 %v8806
      %v9484 = vpop.f32.mrb[0].mxu0
      %v9485 = vadd.f32 0.0, %v9484
      %v9486 = vpop.f32.mrb[0].mxu0
      %v9487 = vpop.f32.mrb[0].mxu0
      %v9488 = vadd.f32 0.0, %v9487
      %v9489 = vpop.f32.mrb[0].mxu0
      %9490 = vmatprep.mubr.bf16.mxu0 0
      %9491 = vmatmul.mubr.bf16.gmra.mrb[0].mxu0 %v8809
      %v9492 = vpop.f32.mrb[0].mxu0
      %v9493 = vpop.f32.mrb[0].mxu0
      %v9494 = vpop.f32.mrb[0].mxu0
      %v9495 = vadd.f32 0.0, %v9494
      %v9496 = vpop.f32.mrb[0].mxu0
      %9497 = vmatprep.mubr.bf16.mxu0 0
      %9498 = vmatmul.mubr.bf16.gmra.mrb[0].mxu0 %v9348
      %v9499 = vpop.f32.mrb[0].mxu0
      %v9500 = vadd.f32 0.0, %v9499
      %v9501 = vpop.f32.mrb[0].mxu0
      %v9502 = vpop.f32.mrb[0].mxu0
      %v9503 = vpop.f32.mrb[0].mxu0
      %9504 = vmatprep.mubr.bf16.mxu0 0
      %9505 = vmatmul.mubr.bf16.gmra.mrb[0].mxu0 %v9351
      %v9506 = vpop.f32.mrb[0].mxu0
      %v9507 = vadd.f32 0.0, %v9506
      %v9508 = vpop.f32.mrb[0].mxu0
      %v9509 = vpop.f32.mrb[0].mxu0
      %v9510 = vadd.f32 0.0, %v9509
      %v9511 = vpop.f32.mrb[0].mxu0
      %9512 = vmatprep.mubr.bf16.mxu0 0
      %9513 = vmatmul.mubr.bf16.gmra.mrb[0].mxu0 %v9354
      %v9514 = vpop.f32.mrb[0].mxu0
      %v9515 = vpop.f32.mrb[0].mxu0
      %v9516 = vpop.f32.mrb[0].mxu0
      %v9517 = vadd.f32 0.0, %v9516
      %v9518 = vpop.f32.mrb[0].mxu0
      %9519 = vmatprep.mubr.bf16.mxu0 0
      %9520 = vmatmul.mubr.bf16.gmra.mrb[0].mxu0 %v9357
      %v9521 = vpop.f32.mrb[0].mxu0
      %v9522 = vadd.f32 0.0, %v9521
      %v9523 = vpop.f32.mrb[0].mxu0
      %v9524 = vpop.f32.mrb[0].mxu0
      %v9525 = vpop.f32.mrb[0].mxu0
      %9526 = vdwg.mxu0
      %v9527 = vadd.f32 %v9282, %v9397
      %v9528 = vadd.f32 %v9283, %v9400
      %v9529 = vadd.f32 %v9284, %v9407
      %v9530 = vadd.f32 %v9285, %v9412
      %v9531 = vadd.f32 %v9286, %v9419
      %v9532 = vadd.f32 %v9287, %v9422
      %v9533 = vadd.f32 %v9288, %v9429
      %v9534 = vadd.f32 %v9289, %v9434
      %v9535 = vadd.f32 %v9290, %v9441
      %v9536 = vadd.f32 %v9291, %v9444
      %v9537 = vadd.f32 %v9292, %v9451
      %v9538 = vadd.f32 %v9293, %v9456
      %v9539 = vadd.f32 %v9294, %v9463
      %v9540 = vadd.f32 %v9295, %v9466
      %v9541 = vadd.f32 %v9296, %v9473
      %v9542 = vadd.f32 %v9297, %v9478
      %v9543 = vadd.f32 %v9298, %v9485
      %v9544 = vadd.f32 %v9299, %v9488
      %v9545 = vadd.f32 %v9300, %v9495
      %v9546 = vadd.f32 %v9301, %v9500
      %v9547 = vadd.f32 %v9302, %v9507
      %v9548 = vadd.f32 %v9303, %v9510
      %v9549 = vadd.f32 %v9304, %v9517
      %v9550 = vadd.f32 %v9305, %v9522
      %v9551 = vpack.c.bf16 %v8167, %v8166
      %v9552 = vpack.c.bf16 %v8169, %v8168
      %v9553 = vpack.c.bf16 %v8171, %v8170
      %v9554 = vpack.c.bf16 %v8172, %v8172
      %v9555 = vld [vmem:[%s6 + $0x100] sm:$0x3]
      %v9557 = vshll.u32 %v9551, 16
      %v9559 = vrot.slane %v9557, 1
      %v9560 = vsel %vm1708, %v8361, %v9559
      %v9561 = vshrl.u32 %v9551, 16
      %v9563 = vor.u32 %v9561, %v9559
      %v9565 = vshll.u32 %v9552, 16
      %v9567 = vrot.slane %v9565, 1
      %v9568 = vsel %vm1708, %v9563, %v9567
      %v9569 = vshrl.u32 %v9552, 16
      %v9571 = vor.u32 %v9569, %v9567
      %v9573 = vshll.u32 %v9553, 16
      %v9575 = vrot.slane %v9573, 1
      %v9576 = vsel %vm1708, %v9571, %v9575
      %v9577 = vshrl.u32 %v9553, 16
      %v9579 = vor.u32 %v9577, %v9575
      %v9581 = vshll.u32 %v9554, 16
      %v9583 = vrot.slane %v9581, 1
      %v9584 = vsel %vm1708, %v9579, %v9583
      %v9586 = vsel %vm4370, %v9560, 0
      %v9589 = vsel %vm4370, %v9568, 0
      %v9592 = vsel %vm4370, %v9576, 0
      %v9595 = vsel %vm4370, %v9584, 0
      %v9598 = vsel %vm8421, %v9555, 0
      %9600 = vmatprep.subr.bf16.mxu0 0
      %9601 = vmatpush1.bf16.msra.mxu0 %v9598
      %9602 = vmatprep.subr.bf16.mxu0 0
      %9603 = vmatpush1.bf16.msra.mxu0 0
      %9604 = vmatprep.subr.bf16.mxu0 0
      %9605 = vmatpush1.bf16.msra.mxu0 0
      %9606 = vmatprep.subr.bf16.mxu0 0
      %9607 = vmatpush1.bf16.msra.mxu0 0
      %9608 = vmatprep.subr.bf16.mxu0 0
      %9609 = vmatpush1.bf16.msra.mxu0 0
      %9610 = vmatprep.subr.bf16.mxu0 0
      %9611 = vmatpush1.bf16.msra.mxu0 0
      %9612 = vmatprep.subr.bf16.mxu0 0
      %9613 = vmatpush1.bf16.msra.mxu0 0
      %9614 = vmatprep.subr.bf16.mxu0 0
      %9615 = vmatpush1.bf16.msra.mxu0 0
      %9616 = vmatprep.subr.bf16.mxu0 0
      %9617 = vmatpush1.bf16.msra.mxu0 0
      %9618 = vmatprep.subr.bf16.mxu0 0
      %9619 = vmatpush1.bf16.msra.mxu0 0
      %9620 = vmatprep.subr.bf16.mxu0 0
      %9621 = vmatpush1.bf16.msra.mxu0 0
      %9622 = vmatprep.subr.bf16.mxu0 0
      %9623 = vmatpush1.bf16.msra.mxu0 0
      %9624 = vmatprep.subr.bf16.mxu0 0
      %9625 = vmatpush1.bf16.msra.mxu0 0
      %9626 = vmatprep.subr.bf16.mxu0 0
      %9627 = vmatpush1.bf16.msra.mxu0 0
      %9628 = vmatprep.subr.bf16.mxu0 0
      %9629 = vmatpush1.bf16.msra.mxu0 0
      %9630 = vmatprep.subr.bf16.mxu0 0
      %9631 = vmatpush1.bf16.msra.mxu0 0
      %9632 = vmatprep.mubr.bf16.mxu0 0
      %9633 = vmatmul.mubr.bf16.gmra.mrb[0].mxu0 %v8377
      %v9634 = vpop.f32.mrb[0].mxu0
      %v9635 = vadd.f32 0.0, %v9634
      %v9636 = vpop.f32.mrb[0].mxu0
      %v9637 = vpop.f32.mrb[0].mxu0
      %v9638 = vadd.f32 0.0, %v9637
      %v9639 = vpop.f32.mrb[0].mxu0
      %9640 = vmatprep.mubr.bf16.mxu0 0
      %9641 = vmatmul.mubr.bf16.gmra.mrb[0].mxu0 %v8380
      %v9642 = vpop.f32.mrb[0].mxu0
      %v9643 = vpop.f32.mrb[0].mxu0
      %v9644 = vpop.f32.mrb[0].mxu0
      %v9645 = vadd.f32 0.0, %v9644
      %v9646 = vpop.f32.mrb[0].mxu0
      %9647 = vmatprep.mubr.bf16.mxu0 0
      %9648 = vmatmul.mubr.bf16.gmra.mrb[0].mxu0 %v8383
      %v9649 = vpop.f32.mrb[0].mxu0
      %v9650 = vadd.f32 0.0, %v9649
      %v9651 = vpop.f32.mrb[0].mxu0
      %v9652 = vpop.f32.mrb[0].mxu0
      %v9653 = vpop.f32.mrb[0].mxu0
      %9654 = vmatprep.mubr.bf16.mxu0 0
      %9655 = vmatmul.mubr.bf16.gmra.mrb[0].mxu0 %v8386
      %v9656 = vpop.f32.mrb[0].mxu0
      %v9657 = vadd.f32 0.0, %v9656
      %v9658 = vpop.f32.mrb[0].mxu0
      %v9659 = vpop.f32.mrb[0].mxu0
      %v9660 = vadd.f32 0.0, %v9659
      %v9661 = vpop.f32.mrb[0].mxu0
      %9662 = vmatprep.mubr.bf16.mxu0 0
      %9663 = vmatmul.mubr.bf16.gmra.mrb[0].mxu0 %v8389
      %v9664 = vpop.f32.mrb[0].mxu0
      %v9665 = vpop.f32.mrb[0].mxu0
      %v9666 = vpop.f32.mrb[0].mxu0
      %v9667 = vadd.f32 0.0, %v9666
      %v9668 = vpop.f32.mrb[0].mxu0
      %9669 = vmatprep.mubr.bf16.mxu0 0
      %9670 = vmatmul.mubr.bf16.gmra.mrb[0].mxu0 %v8392
      %v9671 = vpop.f32.mrb[0].mxu0
      %v9672 = vadd.f32 0.0, %v9671
      %v9673 = vpop.f32.mrb[0].mxu0
      %v9674 = vpop.f32.mrb[0].mxu0
      %v9675 = vpop.f32.mrb[0].mxu0
      %9676 = vmatprep.mubr.bf16.mxu0 0
      %9677 = vmatmul.mubr.bf16.gmra.mrb[0].mxu0 %v8395
      %v9678 = vpop.f32.mrb[0].mxu0
      %v9679 = vadd.f32 0.0, %v9678
      %v9680 = vpop.f32.mrb[0].mxu0
      %v9681 = vpop.f32.mrb[0].mxu0
      %v9682 = vadd.f32 0.0, %v9681
      %v9683 = vpop.f32.mrb[0].mxu0
      %9684 = vmatprep.mubr.bf16.mxu0 0
      %9685 = vmatmul.mubr.bf16.gmra.mrb[0].mxu0 %v8398
      %v9686 = vpop.f32.mrb[0].mxu0
      %v9687 = vpop.f32.mrb[0].mxu0
      %v9688 = vpop.f32.mrb[0].mxu0
      %v9689 = vadd.f32 0.0, %v9688
      %v9690 = vpop.f32.mrb[0].mxu0
      %9691 = vmatprep.mubr.bf16.mxu0 0
      %9692 = vmatmul.mubr.bf16.gmra.mrb[0].mxu0 %v8401
      %v9693 = vpop.f32.mrb[0].mxu0
      %v9694 = vadd.f32 0.0, %v9693
      %v9695 = vpop.f32.mrb[0].mxu0
      %v9696 = vpop.f32.mrb[0].mxu0
      %v9697 = vpop.f32.mrb[0].mxu0
      %9698 = vmatprep.mubr.bf16.mxu0 0
      %9699 = vmatmul.mubr.bf16.gmra.mrb[0].mxu0 %v8404
      %v9700 = vpop.f32.mrb[0].mxu0
      %v9701 = vadd.f32 0.0, %v9700
      %v9702 = vpop.f32.mrb[0].mxu0
      %v9703 = vpop.f32.mrb[0].mxu0
      %v9704 = vadd.f32 0.0, %v9703
      %v9705 = vpop.f32.mrb[0].mxu0
      %9706 = vmatprep.mubr.bf16.mxu0 0
      %9707 = vmatmul.mubr.bf16.gmra.mrb[0].mxu0 %v8407
      %v9708 = vpop.f32.mrb[0].mxu0
      %v9709 = vpop.f32.mrb[0].mxu0
      %v9710 = vpop.f32.mrb[0].mxu0
      %v9711 = vadd.f32 0.0, %v9710
      %v9712 = vpop.f32.mrb[0].mxu0
      %9713 = vmatprep.mubr.bf16.mxu0 0
      %9714 = vmatmul.mubr.bf16.gmra.mrb[0].mxu0 %v8410
      %v9715 = vpop.f32.mrb[0].mxu0
      %v9716 = vadd.f32 0.0, %v9715
      %v9717 = vpop.f32.mrb[0].mxu0
      %v9718 = vpop.f32.mrb[0].mxu0
      %v9719 = vpop.f32.mrb[0].mxu0
      %9720 = vmatprep.mubr.bf16.mxu0 0
      %9721 = vmatmul.mubr.bf16.gmra.mrb[0].mxu0 %v8413
      %v9722 = vpop.f32.mrb[0].mxu0
      %v9723 = vadd.f32 0.0, %v9722
      %v9724 = vpop.f32.mrb[0].mxu0
      %v9725 = vpop.f32.mrb[0].mxu0
      %v9726 = vadd.f32 0.0, %v9725
      %v9727 = vpop.f32.mrb[0].mxu0
      %9728 = vmatprep.mubr.bf16.mxu0 0
      %9729 = vmatmul.mubr.bf16.gmra.mrb[0].mxu0 %v8416
      %v9730 = vpop.f32.mrb[0].mxu0
      %v9731 = vpop.f32.mrb[0].mxu0
      %v9732 = vpop.f32.mrb[0].mxu0
      %v9733 = vadd.f32 0.0, %v9732
      %v9734 = vpop.f32.mrb[0].mxu0
      %9735 = vmatprep.mubr.bf16.mxu0 0
      %9736 = vmatmul.mubr.bf16.gmra.mrb[0].mxu0 %v9586
      %v9737 = vpop.f32.mrb[0].mxu0
      %v9738 = vadd.f32 0.0, %v9737
      %v9739 = vpop.f32.mrb[0].mxu0
      %v9740 = vpop.f32.mrb[0].mxu0
      %v9741 = vpop.f32.mrb[0].mxu0
      %9742 = vmatprep.mubr.bf16.mxu0 0
      %9743 = vmatmul.mubr.bf16.gmra.mrb[0].mxu0 %v9589
      %v9744 = vpop.f32.mrb[0].mxu0
      %v9745 = vadd.f32 0.0, %v9744
      %v9746 = vpop.f32.mrb[0].mxu0
      %v9747 = vpop.f32.mrb[0].mxu0
      %v9748 = vadd.f32 0.0, %v9747
      %v9749 = vpop.f32.mrb[0].mxu0
      %9750 = vmatprep.mubr.bf16.mxu0 0
      %9751 = vmatmul.mubr.bf16.gmra.mrb[0].mxu0 %v9592
      %v9752 = vpop.f32.mrb[0].mxu0
      %v9753 = vpop.f32.mrb[0].mxu0
      %v9754 = vpop.f32.mrb[0].mxu0
      %v9755 = vadd.f32 0.0, %v9754
      %v9756 = vpop.f32.mrb[0].mxu0
      %9757 = vmatprep.mubr.bf16.mxu0 0
      %9758 = vmatmul.mubr.bf16.gmra.mrb[0].mxu0 %v9595
      %v9759 = vpop.f32.mrb[0].mxu0
      %v9760 = vadd.f32 0.0, %v9759
      %v9761 = vpop.f32.mrb[0].mxu0
      %v9762 = vpop.f32.mrb[0].mxu0
      %v9763 = vpop.f32.mrb[0].mxu0
      %9764 = vdwg.mxu0
      %v9765 = vadd.f32 %v9527, %v9635
      %v9766 = vadd.f32 %v9528, %v9638
      %v9767 = vadd.f32 %v9529, %v9645
      %v9768 = vadd.f32 %v9530, %v9650
      %v9769 = vadd.f32 %v9531, %v9657
      %v9770 = vadd.f32 %v9532, %v9660
      %v9771 = vadd.f32 %v9533, %v9667
      %v9772 = vadd.f32 %v9534, %v9672
      %v9773 = vadd.f32 %v9535, %v9679
      %v9774 = vadd.f32 %v9536, %v9682
      %v9775 = vadd.f32 %v9537, %v9689
      %v9776 = vadd.f32 %v9538, %v9694
      %v9777 = vadd.f32 %v9539, %v9701
      %v9778 = vadd.f32 %v9540, %v9704
      %v9779 = vadd.f32 %v9541, %v9711
      %v9780 = vadd.f32 %v9542, %v9716
      %v9781 = vadd.f32 %v9543, %v9723
      %v9782 = vadd.f32 %v9544, %v9726
      %v9783 = vadd.f32 %v9545, %v9733
      %v9784 = vadd.f32 %v9546, %v9738
      %v9785 = vadd.f32 %v9547, %v9745
      %v9786 = vadd.f32 %v9548, %v9748
      %v9787 = vadd.f32 %v9549, %v9755
      %v9788 = vadd.f32 %v9550, %v9760
      %v9789 = vld [vmem:[%s6 + $0x140] sm:$0x3]
      %v9790 = vrot.slane %v9561, 1
      %v9791 = vrot.slane %v9557, 2
      %v9792 = vor.u32 %v9790, %v9791
      %v9793 = vsel %vm5691, %v9052, %v9792
      %v9794 = vrot.slane %v9569, 1
      %v9795 = vrot.slane %v9565, 2
      %v9796 = vor.u32 %v9794, %v9795
      %v9797 = vsel %vm5691, %v9792, %v9796
      %v9798 = vrot.slane %v9577, 1
      %v9799 = vrot.slane %v9573, 2
      %v9800 = vor.u32 %v9798, %v9799
      %v9801 = vsel %vm5691, %v9796, %v9800
      %v9802 = vshrl.u32 %v9554, 16
      %v9804 = vrot.slane %v9802, 1
      %v9805 = vrot.slane %v9581, 2
      %v9806 = vor.u32 %v9804, %v9805
      %v9807 = vsel %vm5691, %v9800, %v9806
      %v9809 = vsel %vm4370, %v9793, 0
      %v9812 = vsel %vm4370, %v9797, 0
      %v9815 = vsel %vm4370, %v9801, 0
      %v9818 = vsel %vm4370, %v9807, 0
      %v9821 = vsel %vm8421, %v9789, 0
      %9823 = vmatprep.subr.bf16.mxu0 0
      %9824 = vmatpush1.bf16.msra.mxu0 %v9821
      %9825 = vmatprep.subr.bf16.mxu0 0
      %9826 = vmatpush1.bf16.msra.mxu0 0
      %9827 = vmatprep.subr.bf16.mxu0 0
      %9828 = vmatpush1.bf16.msra.mxu0 0
      %9829 = vmatprep.subr.bf16.mxu0 0
      %9830 = vmatpush1.bf16.msra.mxu0 0
      %9831 = vmatprep.subr.bf16.mxu0 0
      %9832 = vmatpush1.bf16.msra.mxu0 0
      %9833 = vmatprep.subr.bf16.mxu0 0
      %9834 = vmatpush1.bf16.msra.mxu0 0
      %9835 = vmatprep.subr.bf16.mxu0 0
      %9836 = vmatpush1.bf16.msra.mxu0 0
      %9837 = vmatprep.subr.bf16.mxu0 0
      %9838 = vmatpush1.bf16.msra.mxu0 0
      %9839 = vmatprep.subr.bf16.mxu0 0
      %9840 = vmatpush1.bf16.msra.mxu0 0
      %9841 = vmatprep.subr.bf16.mxu0 0
      %9842 = vmatpush1.bf16.msra.mxu0 0
      %9843 = vmatprep.subr.bf16.mxu0 0
      %9844 = vmatpush1.bf16.msra.mxu0 0
      %9845 = vmatprep.subr.bf16.mxu0 0
      %9846 = vmatpush1.bf16.msra.mxu0 0
      %9847 = vmatprep.subr.bf16.mxu0 0
      %9848 = vmatpush1.bf16.msra.mxu0 0
      %9849 = vmatprep.subr.bf16.mxu0 0
      %9850 = vmatpush1.bf16.msra.mxu0 0
      %9851 = vmatprep.subr.bf16.mxu0 0
      %9852 = vmatpush1.bf16.msra.mxu0 0
      %9853 = vmatprep.subr.bf16.mxu0 0
      %9854 = vmatpush1.bf16.msra.mxu0 0
      %9855 = vmatprep.mubr.bf16.mxu0 0
      %9856 = vmatmul.mubr.bf16.gmra.mrb[0].mxu0 %v9070
      %v9857 = vpop.f32.mrb[0].mxu0
      %v9858 = vadd.f32 0.0, %v9857
      %v9859 = vpop.f32.mrb[0].mxu0
      %v9860 = vpop.f32.mrb[0].mxu0
      %v9861 = vadd.f32 0.0, %v9860
      %v9862 = vpop.f32.mrb[0].mxu0
      %9863 = vmatprep.mubr.bf16.mxu0 0
      %9864 = vmatmul.mubr.bf16.gmra.mrb[0].mxu0 %v9073
      %v9865 = vpop.f32.mrb[0].mxu0
      %v9866 = vpop.f32.mrb[0].mxu0
      %v9867 = vpop.f32.mrb[0].mxu0
      %v9868 = vadd.f32 0.0, %v9867
      %v9869 = vpop.f32.mrb[0].mxu0
      %9870 = vmatprep.mubr.bf16.mxu0 0
      %9871 = vmatmul.mubr.bf16.gmra.mrb[0].mxu0 %v9076
      %v9872 = vpop.f32.mrb[0].mxu0
      %v9873 = vadd.f32 0.0, %v9872
      %v9874 = vpop.f32.mrb[0].mxu0
      %v9875 = vpop.f32.mrb[0].mxu0
      %v9876 = vpop.f32.mrb[0].mxu0
      %9877 = vmatprep.mubr.bf16.mxu0 0
      %9878 = vmatmul.mubr.bf16.gmra.mrb[0].mxu0 %v9079
      %v9879 = vpop.f32.mrb[0].mxu0
      %v9880 = vadd.f32 0.0, %v9879
      %v9881 = vpop.f32.mrb[0].mxu0
      %v9882 = vpop.f32.mrb[0].mxu0
      %v9883 = vadd.f32 0.0, %v9882
      %v9884 = vpop.f32.mrb[0].mxu0
      %9885 = vmatprep.mubr.bf16.mxu0 0
      %9886 = vmatmul.mubr.bf16.gmra.mrb[0].mxu0 %v9082
      %v9887 = vpop.f32.mrb[0].mxu0
      %v9888 = vpop.f32.mrb[0].mxu0
      %v9889 = vpop.f32.mrb[0].mxu0
      %v9890 = vadd.f32 0.0, %v9889
      %v9891 = vpop.f32.mrb[0].mxu0
      %9892 = vmatprep.mubr.bf16.mxu0 0
      %9893 = vmatmul.mubr.bf16.gmra.mrb[0].mxu0 %v9085
      %v9894 = vpop.f32.mrb[0].mxu0
      %v9895 = vadd.f32 0.0, %v9894
      %v9896 = vpop.f32.mrb[0].mxu0
      %v9897 = vpop.f32.mrb[0].mxu0
      %v9898 = vpop.f32.mrb[0].mxu0
      %9899 = vmatprep.mubr.bf16.mxu0 0
      %9900 = vmatmul.mubr.bf16.gmra.mrb[0].mxu0 %v9088
      %v9901 = vpop.f32.mrb[0].mxu0
      %v9902 = vadd.f32 0.0, %v9901
      %v9903 = vpop.f32.mrb[0].mxu0
      %v9904 = vpop.f32.mrb[0].mxu0
      %v9905 = vadd.f32 0.0, %v9904
      %v9906 = vpop.f32.mrb[0].mxu0
      %9907 = vmatprep.mubr.bf16.mxu0 0
      %9908 = vmatmul.mubr.bf16.gmra.mrb[0].mxu0 %v9091
      %v9909 = vpop.f32.mrb[0].mxu0
      %v9910 = vpop.f32.mrb[0].mxu0
      %v9911 = vpop.f32.mrb[0].mxu0
      %v9912 = vadd.f32 0.0, %v9911
      %v9913 = vpop.f32.mrb[0].mxu0
      %9914 = vmatprep.mubr.bf16.mxu0 0
      %9915 = vmatmul.mubr.bf16.gmra.mrb[0].mxu0 %v9094
      %v9916 = vpop.f32.mrb[0].mxu0
      %v9917 = vadd.f32 0.0, %v9916
      %v9918 = vpop.f32.mrb[0].mxu0
      %v9919 = vpop.f32.mrb[0].mxu0
      %v9920 = vpop.f32.mrb[0].mxu0
      %9921 = vmatprep.mubr.bf16.mxu0 0
      %9922 = vmatmul.mubr.bf16.gmra.mrb[0].mxu0 %v9097
      %v9923 = vpop.f32.mrb[0].mxu0
      %v9924 = vadd.f32 0.0, %v9923
      %v9925 = vpop.f32.mrb[0].mxu0
      %v9926 = vpop.f32.mrb[0].mxu0
      %v9927 = vadd.f32 0.0, %v9926
      %v9928 = vpop.f32.mrb[0].mxu0
      %9929 = vmatprep.mubr.bf16.mxu0 0
      %9930 = vmatmul.mubr.bf16.gmra.mrb[0].mxu0 %v9100
      %v9931 = vpop.f32.mrb[0].mxu0
      %v9932 = vpop.f32.mrb[0].mxu0
      %v9933 = vpop.f32.mrb[0].mxu0
      %v9934 = vadd.f32 0.0, %v9933
      %v9935 = vpop.f32.mrb[0].mxu0
      %9936 = vmatprep.mubr.bf16.mxu0 0
      %9937 = vmatmul.mubr.bf16.gmra.mrb[0].mxu0 %v9103
      %v9938 = vpop.f32.mrb[0].mxu0
      %v9939 = vadd.f32 0.0, %v9938
      %v9940 = vpop.f32.mrb[0].mxu0
      %v9941 = vpop.f32.mrb[0].mxu0
      %v9942 = vpop.f32.mrb[0].mxu0
      %9943 = vmatprep.mubr.bf16.mxu0 0
      %9944 = vmatmul.mubr.bf16.gmra.mrb[0].mxu0 %v9106
      %v9945 = vpop.f32.mrb[0].mxu0
      %v9946 = vadd.f32 0.0, %v9945
      %v9947 = vpop.f32.mrb[0].mxu0
      %v9948 = vpop.f32.mrb[0].mxu0
      %v9949 = vadd.f32 0.0, %v9948
      %v9950 = vpop.f32.mrb[0].mxu0
      %9951 = vmatprep.mubr.bf16.mxu0 0
      %9952 = vmatmul.mubr.bf16.gmra.mrb[0].mxu0 %v9109
      %v9953 = vpop.f32.mrb[0].mxu0
      %v9954 = vpop.f32.mrb[0].mxu0
      %v9955 = vpop.f32.mrb[0].mxu0
      %v9956 = vadd.f32 0.0, %v9955
      %v9957 = vpop.f32.mrb[0].mxu0
      %9958 = vmatprep.mubr.bf16.mxu0 0
      %9959 = vmatmul.mubr.bf16.gmra.mrb[0].mxu0 %v9809
      %v9960 = vpop.f32.mrb[0].mxu0
      %v9961 = vadd.f32 0.0, %v9960
      %v9962 = vpop.f32.mrb[0].mxu0
      %v9963 = vpop.f32.mrb[0].mxu0
      %v9964 = vpop.f32.mrb[0].mxu0
      %9965 = vmatprep.mubr.bf16.mxu0 0
      %9966 = vmatmul.mubr.bf16.gmra.mrb[0].mxu0 %v9812
      %v9967 = vpop.f32.mrb[0].mxu0
      %v9968 = vadd.f32 0.0, %v9967
      %v9969 = vpop.f32.mrb[0].mxu0
      %v9970 = vpop.f32.mrb[0].mxu0
      %v9971 = vadd.f32 0.0, %v9970
      %v9972 = vpop.f32.mrb[0].mxu0
      %9973 = vmatprep.mubr.bf16.mxu0 0
      %9974 = vmatmul.mubr.bf16.gmra.mrb[0].mxu0 %v9815
      %v9975 = vpop.f32.mrb[0].mxu0
      %v9976 = vpop.f32.mrb[0].mxu0
      %v9977 = vpop.f32.mrb[0].mxu0
      %v9978 = vadd.f32 0.0, %v9977
      %v9979 = vpop.f32.mrb[0].mxu0
      %9980 = vmatprep.mubr.bf16.mxu0 0
      %9981 = vmatmul.mubr.bf16.gmra.mrb[0].mxu0 %v9818
      %v9982 = vpop.f32.mrb[0].mxu0
      %v9983 = vadd.f32 0.0, %v9982
      %v9984 = vpop.f32.mrb[0].mxu0
      %v9985 = vpop.f32.mrb[0].mxu0
      %v9986 = vpop.f32.mrb[0].mxu0
      %9987 = vdwg.mxu0
      %v9988 = vadd.f32 %v9765, %v9858
      %v9989 = vadd.f32 %v9766, %v9861
      %v9990 = vadd.f32 %v9767, %v9868
      %v9991 = vadd.f32 %v9768, %v9873
      %v9992 = vadd.f32 %v9769, %v9880
      %v9993 = vadd.f32 %v9770, %v9883
      %v9994 = vadd.f32 %v9771, %v9890
      %v9995 = vadd.f32 %v9772, %v9895
      %v9996 = vadd.f32 %v9773, %v9902
      %v9997 = vadd.f32 %v9774, %v9905
      %v9998 = vadd.f32 %v9775, %v9912
      %v9999 = vadd.f32 %v9776, %v9917
      %v10000 = vadd.f32 %v9777, %v9924
      %v10001 = vadd.f32 %v9778, %v9927
      %v10002 = vadd.f32 %v9779, %v9934
      %v10003 = vadd.f32 %v9780, %v9939
      %v10004 = vadd.f32 %v9781, %v9946
      %v10005 = vadd.f32 %v9782, %v9949
      %v10006 = vadd.f32 %v9783, %v9956
      %v10007 = vadd.f32 %v9784, %v9961
      %v10008 = vadd.f32 %v9785, %v9968
      %v10009 = vadd.f32 %v9786, %v9971
      %v10010 = vadd.f32 %v9787, %v9978
      %v10011 = vadd.f32 %v9788, %v9983
      %v10012 = vpack.c.bf16 %v8172, %v8171
      %v10013 = vpack.c.bf16 %v8174, %v8173
      %v10014 = vpack.c.bf16 %v8176, %v8175
      %v10015 = vpack.c.bf16 %v8177, %v8177
      %v10016 = vld [vmem:[%s6 + $0x180] sm:$0x3]
      %v10018 = vshrl.u32 %v10012, 16
      %v10020 = vrot.slane %v10018, 3
      %v10021 = vshll.u32 %v10012, 16
      %v10023 = vrot.slane %v10021, 4
      %v10024 = vor.u32 %v10020, %v10023
      %v10025 = vsel %vm1053, %v9336, %v10024
      %v10027 = vshrl.u32 %v10013, 16
      %v10029 = vrot.slane %v10027, 3
      %v10030 = vshll.u32 %v10013, 16
      %v10032 = vrot.slane %v10030, 4
      %v10033 = vor.u32 %v10029, %v10032
      %v10034 = vsel %vm1053, %v10024, %v10033
      %v10036 = vshrl.u32 %v10014, 16
      %v10038 = vrot.slane %v10036, 3
      %v10039 = vshll.u32 %v10014, 16
      %v10041 = vrot.slane %v10039, 4
      %v10042 = vor.u32 %v10038, %v10041
      %v10043 = vsel %vm1053, %v10033, %v10042
      %v10045 = vshrl.u32 %v10015, 16
      %v10047 = vrot.slane %v10045, 3
      %v10048 = vshll.u32 %v10015, 16
      %v10050 = vrot.slane %v10048, 4
      %v10051 = vor.u32 %v10047, %v10050
      %v10052 = vsel %vm1053, %v10042, %v10051
      %v10054 = vsel %vm4370, %v10025, 0
      %v10057 = vsel %vm4370, %v10034, 0
      %v10060 = vsel %vm4370, %v10043, 0
      %v10063 = vsel %vm4370, %v10052, 0
      %v10066 = vsel %vm8421, %v10016, 0
      %10068 = vmatprep.subr.bf16.mxu0 0
      %10069 = vmatpush1.bf16.msra.mxu0 %v10066
      %10070 = vmatprep.subr.bf16.mxu0 0
      %10071 = vmatpush1.bf16.msra.mxu0 0
      %10072 = vmatprep.subr.bf16.mxu0 0
      %10073 = vmatpush1.bf16.msra.mxu0 0
      %10074 = vmatprep.subr.bf16.mxu0 0
      %10075 = vmatpush1.bf16.msra.mxu0 0
      %10076 = vmatprep.subr.bf16.mxu0 0
      %10077 = vmatpush1.bf16.msra.mxu0 0
      %10078 = vmatprep.subr.bf16.mxu0 0
      %10079 = vmatpush1.bf16.msra.mxu0 0
      %10080 = vmatprep.subr.bf16.mxu0 0
      %10081 = vmatpush1.bf16.msra.mxu0 0
      %10082 = vmatprep.subr.bf16.mxu0 0
      %10083 = vmatpush1.bf16.msra.mxu0 0
      %10084 = vmatprep.subr.bf16.mxu0 0
      %10085 = vmatpush1.bf16.msra.mxu0 0
      %10086 = vmatprep.subr.bf16.mxu0 0
      %10087 = vmatpush1.bf16.msra.mxu0 0
      %10088 = vmatprep.subr.bf16.mxu0 0
      %10089 = vmatpush1.bf16.msra.mxu0 0
      %10090 = vmatprep.subr.bf16.mxu0 0
      %10091 = vmatpush1.bf16.msra.mxu0 0
      %10092 = vmatprep.subr.bf16.mxu0 0
      %10093 = vmatpush1.bf16.msra.mxu0 0
      %10094 = vmatprep.subr.bf16.mxu0 0
      %10095 = vmatpush1.bf16.msra.mxu0 0
      %10096 = vmatprep.subr.bf16.mxu0 0
      %10097 = vmatpush1.bf16.msra.mxu0 0
      %10098 = vmatprep.subr.bf16.mxu0 0
      %10099 = vmatpush1.bf16.msra.mxu0 0
      %10100 = vmatprep.mubr.bf16.mxu0 0
      %10101 = vmatmul.mubr.bf16.gmra.mrb[0].mxu0 %v8779
      %v10102 = vpop.f32.mrb[0].mxu0
      %v10103 = vadd.f32 0.0, %v10102
      %v10104 = vpop.f32.mrb[0].mxu0
      %v10105 = vpop.f32.mrb[0].mxu0
      %v10106 = vadd.f32 0.0, %v10105
      %v10107 = vpop.f32.mrb[0].mxu0
      %10108 = vmatprep.mubr.bf16.mxu0 0
      %10109 = vmatmul.mubr.bf16.gmra.mrb[0].mxu0 %v8782
      %v10110 = vpop.f32.mrb[0].mxu0
      %v10111 = vpop.f32.mrb[0].mxu0
      %v10112 = vpop.f32.mrb[0].mxu0
      %v10113 = vadd.f32 0.0, %v10112
      %v10114 = vpop.f32.mrb[0].mxu0
      %10115 = vmatprep.mubr.bf16.mxu0 0
      %10116 = vmatmul.mubr.bf16.gmra.mrb[0].mxu0 %v8785
      %v10117 = vpop.f32.mrb[0].mxu0
      %v10118 = vadd.f32 0.0, %v10117
      %v10119 = vpop.f32.mrb[0].mxu0
      %v10120 = vpop.f32.mrb[0].mxu0
      %v10121 = vpop.f32.mrb[0].mxu0
      %10122 = vmatprep.mubr.bf16.mxu0 0
      %10123 = vmatmul.mubr.bf16.gmra.mrb[0].mxu0 %v8788
      %v10124 = vpop.f32.mrb[0].mxu0
      %v10125 = vadd.f32 0.0, %v10124
      %v10126 = vpop.f32.mrb[0].mxu0
      %v10127 = vpop.f32.mrb[0].mxu0
      %v10128 = vadd.f32 0.0, %v10127
      %v10129 = vpop.f32.mrb[0].mxu0
      %10130 = vmatprep.mubr.bf16.mxu0 0
      %10131 = vmatmul.mubr.bf16.gmra.mrb[0].mxu0 %v8791
      %v10132 = vpop.f32.mrb[0].mxu0
      %v10133 = vpop.f32.mrb[0].mxu0
      %v10134 = vpop.f32.mrb[0].mxu0
      %v10135 = vadd.f32 0.0, %v10134
      %v10136 = vpop.f32.mrb[0].mxu0
      %10137 = vmatprep.mubr.bf16.mxu0 0
      %10138 = vmatmul.mubr.bf16.gmra.mrb[0].mxu0 %v8794
      %v10139 = vpop.f32.mrb[0].mxu0
      %v10140 = vadd.f32 0.0, %v10139
      %v10141 = vpop.f32.mrb[0].mxu0
      %v10142 = vpop.f32.mrb[0].mxu0
      %v10143 = vpop.f32.mrb[0].mxu0
      %10144 = vmatprep.mubr.bf16.mxu0 0
      %10145 = vmatmul.mubr.bf16.gmra.mrb[0].mxu0 %v8797
      %v10146 = vpop.f32.mrb[0].mxu0
      %v10147 = vadd.f32 0.0, %v10146
      %v10148 = vpop.f32.mrb[0].mxu0
      %v10149 = vpop.f32.mrb[0].mxu0
      %v10150 = vadd.f32 0.0, %v10149
      %v10151 = vpop.f32.mrb[0].mxu0
      %10152 = vmatprep.mubr.bf16.mxu0 0
      %10153 = vmatmul.mubr.bf16.gmra.mrb[0].mxu0 %v8800
      %v10154 = vpop.f32.mrb[0].mxu0
      %v10155 = vpop.f32.mrb[0].mxu0
      %v10156 = vpop.f32.mrb[0].mxu0
      %v10157 = vadd.f32 0.0, %v10156
      %v10158 = vpop.f32.mrb[0].mxu0
      %10159 = vmatprep.mubr.bf16.mxu0 0
      %10160 = vmatmul.mubr.bf16.gmra.mrb[0].mxu0 %v8803
      %v10161 = vpop.f32.mrb[0].mxu0
      %v10162 = vadd.f32 0.0, %v10161
      %v10163 = vpop.f32.mrb[0].mxu0
      %v10164 = vpop.f32.mrb[0].mxu0
      %v10165 = vpop.f32.mrb[0].mxu0
      %10166 = vmatprep.mubr.bf16.mxu0 0
      %10167 = vmatmul.mubr.bf16.gmra.mrb[0].mxu0 %v8806
      %v10168 = vpop.f32.mrb[0].mxu0
      %v10169 = vadd.f32 0.0, %v10168
      %v10170 = vpop.f32.mrb[0].mxu0
      %v10171 = vpop.f32.mrb[0].mxu0
      %v10172 = vadd.f32 0.0, %v10171
      %v10173 = vpop.f32.mrb[0].mxu0
      %10174 = vmatprep.mubr.bf16.mxu0 0
      %10175 = vmatmul.mubr.bf16.gmra.mrb[0].mxu0 %v8809
      %v10176 = vpop.f32.mrb[0].mxu0
      %v10177 = vpop.f32.mrb[0].mxu0
      %v10178 = vpop.f32.mrb[0].mxu0
      %v10179 = vadd.f32 0.0, %v10178
      %v10180 = vpop.f32.mrb[0].mxu0
      %10181 = vmatprep.mubr.bf16.mxu0 0
      %10182 = vmatmul.mubr.bf16.gmra.mrb[0].mxu0 %v9348
      %v10183 = vpop.f32.mrb[0].mxu0
      %v10184 = vadd.f32 0.0, %v10183
      %v10185 = vpop.f32.mrb[0].mxu0
      %v10186 = vpop.f32.mrb[0].mxu0
      %v10187 = vpop.f32.mrb[0].mxu0
      %10188 = vmatprep.mubr.bf16.mxu0 0
      %10189 = vmatmul.mubr.bf16.gmra.mrb[0].mxu0 %v9351
      %v10190 = vpop.f32.mrb[0].mxu0
      %v10191 = vadd.f32 0.0, %v10190
      %v10192 = vpop.f32.mrb[0].mxu0
      %v10193 = vpop.f32.mrb[0].mxu0
      %v10194 = vadd.f32 0.0, %v10193
      %v10195 = vpop.f32.mrb[0].mxu0
      %10196 = vmatprep.mubr.bf16.mxu0 0
      %10197 = vmatmul.mubr.bf16.gmra.mrb[0].mxu0 %v9354
      %v10198 = vpop.f32.mrb[0].mxu0
      %v10199 = vpop.f32.mrb[0].mxu0
      %v10200 = vpop.f32.mrb[0].mxu0
      %v10201 = vadd.f32 0.0, %v10200
      %v10202 = vpop.f32.mrb[0].mxu0
      %10203 = vmatprep.mubr.bf16.mxu0 0
      %10204 = vmatmul.mubr.bf16.gmra.mrb[0].mxu0 %v10054
      %v10205 = vpop.f32.mrb[0].mxu0
      %v10206 = vadd.f32 0.0, %v10205
      %v10207 = vpop.f32.mrb[0].mxu0
      %v10208 = vpop.f32.mrb[0].mxu0
      %v10209 = vpop.f32.mrb[0].mxu0
      %10210 = vmatprep.mubr.bf16.mxu0 0
      %10211 = vmatmul.mubr.bf16.gmra.mrb[0].mxu0 %v10057
      %v10212 = vpop.f32.mrb[0].mxu0
      %v10213 = vadd.f32 0.0, %v10212
      %v10214 = vpop.f32.mrb[0].mxu0
      %v10215 = vpop.f32.mrb[0].mxu0
      %v10216 = vadd.f32 0.0, %v10215
      %v10217 = vpop.f32.mrb[0].mxu0
      %10218 = vmatprep.mubr.bf16.mxu0 0
      %10219 = vmatmul.mubr.bf16.gmra.mrb[0].mxu0 %v10060
      %v10220 = vpop.f32.mrb[0].mxu0
      %v10221 = vpop.f32.mrb[0].mxu0
      %v10222 = vpop.f32.mrb[0].mxu0
      %v10223 = vadd.f32 0.0, %v10222
      %v10224 = vpop.f32.mrb[0].mxu0
      %10225 = vmatprep.mubr.bf16.mxu0 0
      %10226 = vmatmul.mubr.bf16.gmra.mrb[0].mxu0 %v10063
      %v10227 = vpop.f32.mrb[0].mxu0
      %v10228 = vadd.f32 0.0, %v10227
      %v10229 = vpop.f32.mrb[0].mxu0
      %v10230 = vpop.f32.mrb[0].mxu0
      %v10231 = vpop.f32.mrb[0].mxu0
      %10232 = vdwg.mxu0
      %v10233 = vadd.f32 %v9988, %v10103
      %v10234 = vadd.f32 %v9989, %v10106
      %v10235 = vadd.f32 %v9990, %v10113
      %v10236 = vadd.f32 %v9991, %v10118
      %v10237 = vadd.f32 %v9992, %v10125
      %v10238 = vadd.f32 %v9993, %v10128
      %v10239 = vadd.f32 %v9994, %v10135
      %v10240 = vadd.f32 %v9995, %v10140
      %v10241 = vadd.f32 %v9996, %v10147
      %v10242 = vadd.f32 %v9997, %v10150
      %v10243 = vadd.f32 %v9998, %v10157
      %v10244 = vadd.f32 %v9999, %v10162
      %v10245 = vadd.f32 %v10000, %v10169
      %v10246 = vadd.f32 %v10001, %v10172
      %v10247 = vadd.f32 %v10002, %v10179
      %v10248 = vadd.f32 %v10003, %v10184
      %v10249 = vadd.f32 %v10004, %v10191
      %v10250 = vadd.f32 %v10005, %v10194
      %v10251 = vadd.f32 %v10006, %v10201
      %v10252 = vadd.f32 %v10007, %v10206
      %v10253 = vadd.f32 %v10008, %v10213
      %v10254 = vadd.f32 %v10009, %v10216
      %v10255 = vadd.f32 %v10010, %v10223
      %v10256 = vadd.f32 %v10011, %v10228
      %v10257 = vpack.c.bf16 %v8173, %v8172
      %v10258 = vpack.c.bf16 %v8175, %v8174
      %v10259 = vpack.c.bf16 %v8177, %v8176
      %v10260 = vpack.c.bf16 %v8178, %v8178
      %v10261 = vld [vmem:[%s6 + $0x1c0] sm:$0x3]
      %v10263 = vshll.u32 %v10257, 16
      %v10265 = vrot.slane %v10263, 1
      %v10266 = vsel %vm1708, %v9579, %v10265
      %v10267 = vshrl.u32 %v10257, 16
      %v10269 = vor.u32 %v10267, %v10265
      %v10271 = vshll.u32 %v10258, 16
      %v10273 = vrot.slane %v10271, 1
      %v10274 = vsel %vm1708, %v10269, %v10273
      %v10275 = vshrl.u32 %v10258, 16
      %v10277 = vor.u32 %v10275, %v10273
      %v10279 = vshll.u32 %v10259, 16
      %v10281 = vrot.slane %v10279, 1
      %v10282 = vsel %vm1708, %v10277, %v10281
      %v10283 = vshrl.u32 %v10259, 16
      %v10285 = vor.u32 %v10283, %v10281
      %v10287 = vshll.u32 %v10260, 16
      %v10289 = vrot.slane %v10287, 1
      %v10290 = vsel %vm1708, %v10285, %v10289
      %v10292 = vsel %vm4370, %v10266, 0
      %v10295 = vsel %vm4370, %v10274, 0
      %v10298 = vsel %vm4370, %v10282, 0
      %v10301 = vsel %vm4370, %v10290, 0
      %v10304 = vsel %vm8421, %v10261, 0
      %10306 = vmatprep.subr.bf16.mxu0 0
      %10307 = vmatpush1.bf16.msra.mxu0 %v10304
      %10308 = vmatprep.subr.bf16.mxu0 0
      %10309 = vmatpush1.bf16.msra.mxu0 0
      %10310 = vmatprep.subr.bf16.mxu0 0
      %10311 = vmatpush1.bf16.msra.mxu0 0
      %10312 = vmatprep.subr.bf16.mxu0 0
      %10313 = vmatpush1.bf16.msra.mxu0 0
      %10314 = vmatprep.subr.bf16.mxu0 0
      %10315 = vmatpush1.bf16.msra.mxu0 0
      %10316 = vmatprep.subr.bf16.mxu0 0
      %10317 = vmatpush1.bf16.msra.mxu0 0
      %10318 = vmatprep.subr.bf16.mxu0 0
      %10319 = vmatpush1.bf16.msra.mxu0 0
      %10320 = vmatprep.subr.bf16.mxu0 0
      %10321 = vmatpush1.bf16.msra.mxu0 0
      %10322 = vmatprep.subr.bf16.mxu0 0
      %10323 = vmatpush1.bf16.msra.mxu0 0
      %10324 = vmatprep.subr.bf16.mxu0 0
      %10325 = vmatpush1.bf16.msra.mxu0 0
      %10326 = vmatprep.subr.bf16.mxu0 0
      %10327 = vmatpush1.bf16.msra.mxu0 0
      %10328 = vmatprep.subr.bf16.mxu0 0
      %10329 = vmatpush1.bf16.msra.mxu0 0
      %10330 = vmatprep.subr.bf16.mxu0 0
      %10331 = vmatpush1.bf16.msra.mxu0 0
      %10332 = vmatprep.subr.bf16.mxu0 0
      %10333 = vmatpush1.bf16.msra.mxu0 0
      %10334 = vmatprep.subr.bf16.mxu0 0
      %10335 = vmatpush1.bf16.msra.mxu0 0
      %10336 = vmatprep.subr.bf16.mxu0 0
      %10337 = vmatpush1.bf16.msra.mxu0 0
      %10338 = vmatprep.mubr.bf16.mxu0 0
      %10339 = vmatmul.mubr.bf16.gmra.mrb[0].mxu0 %v8386
      %v10340 = vpop.f32.mrb[0].mxu0
      %v10341 = vadd.f32 0.0, %v10340
      %v10342 = vpop.f32.mrb[0].mxu0
      %v10343 = vpop.f32.mrb[0].mxu0
      %v10344 = vadd.f32 0.0, %v10343
      %v10345 = vpop.f32.mrb[0].mxu0
      %10346 = vmatprep.mubr.bf16.mxu0 0
      %10347 = vmatmul.mubr.bf16.gmra.mrb[0].mxu0 %v8389
      %v10348 = vpop.f32.mrb[0].mxu0
      %v10349 = vpop.f32.mrb[0].mxu0
      %v10350 = vpop.f32.mrb[0].mxu0
      %v10351 = vadd.f32 0.0, %v10350
      %v10352 = vpop.f32.mrb[0].mxu0
      %10353 = vmatprep.mubr.bf16.mxu0 0
      %10354 = vmatmul.mubr.bf16.gmra.mrb[0].mxu0 %v8392
      %v10355 = vpop.f32.mrb[0].mxu0
      %v10356 = vadd.f32 0.0, %v10355
      %v10357 = vpop.f32.mrb[0].mxu0
      %v10358 = vpop.f32.mrb[0].mxu0
      %v10359 = vpop.f32.mrb[0].mxu0
      %10360 = vmatprep.mubr.bf16.mxu0 0
      %10361 = vmatmul.mubr.bf16.gmra.mrb[0].mxu0 %v8395
      %v10362 = vpop.f32.mrb[0].mxu0
      %v10363 = vadd.f32 0.0, %v10362
      %v10364 = vpop.f32.mrb[0].mxu0
      %v10365 = vpop.f32.mrb[0].mxu0
      %v10366 = vadd.f32 0.0, %v10365
      %v10367 = vpop.f32.mrb[0].mxu0
      %10368 = vmatprep.mubr.bf16.mxu0 0
      %10369 = vmatmul.mubr.bf16.gmra.mrb[0].mxu0 %v8398
      %v10370 = vpop.f32.mrb[0].mxu0
      %v10371 = vpop.f32.mrb[0].mxu0
      %v10372 = vpop.f32.mrb[0].mxu0
      %v10373 = vadd.f32 0.0, %v10372
      %v10374 = vpop.f32.mrb[0].mxu0
      %10375 = vmatprep.mubr.bf16.mxu0 0
      %10376 = vmatmul.mubr.bf16.gmra.mrb[0].mxu0 %v8401
      %v10377 = vpop.f32.mrb[0].mxu0
      %v10378 = vadd.f32 0.0, %v10377
      %v10379 = vpop.f32.mrb[0].mxu0
      %v10380 = vpop.f32.mrb[0].mxu0
      %v10381 = vpop.f32.mrb[0].mxu0
      %10382 = vmatprep.mubr.bf16.mxu0 0
      %10383 = vmatmul.mubr.bf16.gmra.mrb[0].mxu0 %v8404
      %v10384 = vpop.f32.mrb[0].mxu0
      %v10385 = vadd.f32 0.0, %v10384
      %v10386 = vpop.f32.mrb[0].mxu0
      %v10387 = vpop.f32.mrb[0].mxu0
      %v10388 = vadd.f32 0.0, %v10387
      %v10389 = vpop.f32.mrb[0].mxu0
      %10390 = vmatprep.mubr.bf16.mxu0 0
      %10391 = vmatmul.mubr.bf16.gmra.mrb[0].mxu0 %v8407
      %v10392 = vpop.f32.mrb[0].mxu0
      %v10393 = vpop.f32.mrb[0].mxu0
      %v10394 = vpop.f32.mrb[0].mxu0
      %v10395 = vadd.f32 0.0, %v10394
      %v10396 = vpop.f32.mrb[0].mxu0
      %10397 = vmatprep.mubr.bf16.mxu0 0
      %10398 = vmatmul.mubr.bf16.gmra.mrb[0].mxu0 %v8410
      %v10399 = vpop.f32.mrb[0].mxu0
      %v10400 = vadd.f32 0.0, %v10399
      %v10401 = vpop.f32.mrb[0].mxu0
      %v10402 = vpop.f32.mrb[0].mxu0
      %v10403 = vpop.f32.mrb[0].mxu0
      %10404 = vmatprep.mubr.bf16.mxu0 0
      %10405 = vmatmul.mubr.bf16.gmra.mrb[0].mxu0 %v8413
      %v10406 = vpop.f32.mrb[0].mxu0
      %v10407 = vadd.f32 0.0, %v10406
      %v10408 = vpop.f32.mrb[0].mxu0
      %v10409 = vpop.f32.mrb[0].mxu0
      %v10410 = vadd.f32 0.0, %v10409
      %v10411 = vpop.f32.mrb[0].mxu0
      %10412 = vmatprep.mubr.bf16.mxu0 0
      %10413 = vmatmul.mubr.bf16.gmra.mrb[0].mxu0 %v8416
      %v10414 = vpop.f32.mrb[0].mxu0
      %v10415 = vpop.f32.mrb[0].mxu0
      %v10416 = vpop.f32.mrb[0].mxu0
      %v10417 = vadd.f32 0.0, %v10416
      %v10418 = vpop.f32.mrb[0].mxu0
      %10419 = vmatprep.mubr.bf16.mxu0 0
      %10420 = vmatmul.mubr.bf16.gmra.mrb[0].mxu0 %v9586
      %v10421 = vpop.f32.mrb[0].mxu0
      %v10422 = vadd.f32 0.0, %v10421
      %v10423 = vpop.f32.mrb[0].mxu0
      %v10424 = vpop.f32.mrb[0].mxu0
      %v10425 = vpop.f32.mrb[0].mxu0
      %10426 = vmatprep.mubr.bf16.mxu0 0
      %10427 = vmatmul.mubr.bf16.gmra.mrb[0].mxu0 %v9589
      %v10428 = vpop.f32.mrb[0].mxu0
      %v10429 = vadd.f32 0.0, %v10428
      %v10430 = vpop.f32.mrb[0].mxu0
      %v10431 = vpop.f32.mrb[0].mxu0
      %v10432 = vadd.f32 0.0, %v10431
      %v10433 = vpop.f32.mrb[0].mxu0
      %10434 = vmatprep.mubr.bf16.mxu0 0
      %10435 = vmatmul.mubr.bf16.gmra.mrb[0].mxu0 %v9592
      %v10436 = vpop.f32.mrb[0].mxu0
      %v10437 = vpop.f32.mrb[0].mxu0
      %v10438 = vpop.f32.mrb[0].mxu0
      %v10439 = vadd.f32 0.0, %v10438
      %v10440 = vpop.f32.mrb[0].mxu0
      %10441 = vmatprep.mubr.bf16.mxu0 0
      %10442 = vmatmul.mubr.bf16.gmra.mrb[0].mxu0 %v10292
      %v10443 = vpop.f32.mrb[0].mxu0
      %v10444 = vadd.f32 0.0, %v10443
      %v10445 = vpop.f32.mrb[0].mxu0
      %v10446 = vpop.f32.mrb[0].mxu0
      %v10447 = vpop.f32.mrb[0].mxu0
      %10448 = vmatprep.mubr.bf16.mxu0 0
      %10449 = vmatmul.mubr.bf16.gmra.mrb[0].mxu0 %v10295
      %v10450 = vpop.f32.mrb[0].mxu0
      %v10451 = vadd.f32 0.0, %v10450
      %v10452 = vpop.f32.mrb[0].mxu0
      %v10453 = vpop.f32.mrb[0].mxu0
      %v10454 = vadd.f32 0.0, %v10453
      %v10455 = vpop.f32.mrb[0].mxu0
      %10456 = vmatprep.mubr.bf16.mxu0 0
      %10457 = vmatmul.mubr.bf16.gmra.mrb[0].mxu0 %v10298
      %v10458 = vpop.f32.mrb[0].mxu0
      %v10459 = vpop.f32.mrb[0].mxu0
      %v10460 = vpop.f32.mrb[0].mxu0
      %v10461 = vadd.f32 0.0, %v10460
      %v10462 = vpop.f32.mrb[0].mxu0
      %10463 = vmatprep.mubr.bf16.mxu0 0
      %10464 = vmatmul.mubr.bf16.gmra.mrb[0].mxu0 %v10301
      %v10465 = vpop.f32.mrb[0].mxu0
      %v10466 = vadd.f32 0.0, %v10465
      %v10467 = vpop.f32.mrb[0].mxu0
      %v10468 = vpop.f32.mrb[0].mxu0
      %v10469 = vpop.f32.mrb[0].mxu0
      %10470 = vdwg.mxu0
      %v10471 = vadd.f32 %v10233, %v10341
      %v10472 = vadd.f32 %v10234, %v10344
      %v10473 = vadd.f32 %v10235, %v10351
      %v10474 = vadd.f32 %v10236, %v10356
      %v10475 = vadd.f32 %v10237, %v10363
      %v10476 = vadd.f32 %v10238, %v10366
      %v10477 = vadd.f32 %v10239, %v10373
      %v10478 = vadd.f32 %v10240, %v10378
      %v10479 = vadd.f32 %v10241, %v10385
      %v10480 = vadd.f32 %v10242, %v10388
      %v10481 = vadd.f32 %v10243, %v10395
      %v10482 = vadd.f32 %v10244, %v10400
      %v10483 = vadd.f32 %v10245, %v10407
      %v10484 = vadd.f32 %v10246, %v10410
      %v10485 = vadd.f32 %v10247, %v10417
      %v10486 = vadd.f32 %v10248, %v10422
      %v10487 = vadd.f32 %v10249, %v10429
      %v10488 = vadd.f32 %v10250, %v10432
      %v10489 = vadd.f32 %v10251, %v10439
      %v10490 = vadd.f32 %v10252, %v10444
      %v10491 = vadd.f32 %v10253, %v10451
      %v10492 = vadd.f32 %v10254, %v10454
      %v10493 = vadd.f32 %v10255, %v10461
      %v10494 = vadd.f32 %v10256, %v10466
      %v10495 = vld [vmem:[%s6 + $0x200] sm:$0x3]
      %v10496 = vrot.slane %v10267, 1
      %v10497 = vrot.slane %v10263, 2
      %v10498 = vor.u32 %v10496, %v10497
      %v10499 = vsel %vm5691, %v9800, %v10498
      %v10500 = vrot.slane %v10275, 1
      %v10501 = vrot.slane %v10271, 2
      %v10502 = vor.u32 %v10500, %v10501
      %v10503 = vsel %vm5691, %v10498, %v10502
      %v10504 = vrot.slane %v10283, 1
      %v10505 = vrot.slane %v10279, 2
      %v10506 = vor.u32 %v10504, %v10505
      %v10507 = vsel %vm5691, %v10502, %v10506
      %v10508 = vshrl.u32 %v10260, 16
      %v10510 = vrot.slane %v10508, 1
      %v10511 = vrot.slane %v10287, 2
      %v10512 = vor.u32 %v10510, %v10511
      %v10513 = vsel %vm5691, %v10506, %v10512
      %v10515 = vsel %vm4370, %v10499, 0
      %v10518 = vsel %vm4370, %v10503, 0
      %v10521 = vsel %vm4370, %v10507, 0
      %v10524 = vsel %vm4370, %v10513, 0
      %v10527 = vsel %vm8421, %v10495, 0
      %10529 = vmatprep.subr.bf16.mxu0 0
      %10530 = vmatpush1.bf16.msra.mxu0 %v10527
      %10531 = vmatprep.subr.bf16.mxu0 0
      %10532 = vmatpush1.bf16.msra.mxu0 0
      %10533 = vmatprep.subr.bf16.mxu0 0
      %10534 = vmatpush1.bf16.msra.mxu0 0
      %10535 = vmatprep.subr.bf16.mxu0 0
      %10536 = vmatpush1.bf16.msra.mxu0 0
      %10537 = vmatprep.subr.bf16.mxu0 0
      %10538 = vmatpush1.bf16.msra.mxu0 0
      %10539 = vmatprep.subr.bf16.mxu0 0
      %10540 = vmatpush1.bf16.msra.mxu0 0
      %10541 = vmatprep.subr.bf16.mxu0 0
      %10542 = vmatpush1.bf16.msra.mxu0 0
      %10543 = vmatprep.subr.bf16.mxu0 0
      %10544 = vmatpush1.bf16.msra.mxu0 0
      %10545 = vmatprep.subr.bf16.mxu0 0
      %10546 = vmatpush1.bf16.msra.mxu0 0
      %10547 = vmatprep.subr.bf16.mxu0 0
      %10548 = vmatpush1.bf16.msra.mxu0 0
      %10549 = vmatprep.subr.bf16.mxu0 0
      %10550 = vmatpush1.bf16.msra.mxu0 0
      %10551 = vmatprep.subr.bf16.mxu0 0
      %10552 = vmatpush1.bf16.msra.mxu0 0
      %10553 = vmatprep.subr.bf16.mxu0 0
      %10554 = vmatpush1.bf16.msra.mxu0 0
      %10555 = vmatprep.subr.bf16.mxu0 0
      %10556 = vmatpush1.bf16.msra.mxu0 0
      %10557 = vmatprep.subr.bf16.mxu0 0
      %10558 = vmatpush1.bf16.msra.mxu0 0
      %10559 = vmatprep.subr.bf16.mxu0 0
      %10560 = vmatpush1.bf16.msra.mxu0 0
      %10561 = vmatprep.mubr.bf16.mxu0 0
      %10562 = vmatmul.mubr.bf16.gmra.mrb[0].mxu0 %v9079
      %v10563 = vpop.f32.mrb[0].mxu0
      %v10564 = vadd.f32 0.0, %v10563
      %v10565 = vpop.f32.mrb[0].mxu0
      %v10566 = vpop.f32.mrb[0].mxu0
      %v10567 = vadd.f32 0.0, %v10566
      %v10568 = vpop.f32.mrb[0].mxu0
      %10569 = vmatprep.mubr.bf16.mxu0 0
      %10570 = vmatmul.mubr.bf16.gmra.mrb[0].mxu0 %v9082
      %v10571 = vpop.f32.mrb[0].mxu0
      %v10572 = vpop.f32.mrb[0].mxu0
      %v10573 = vpop.f32.mrb[0].mxu0
      %v10574 = vadd.f32 0.0, %v10573
      %v10575 = vpop.f32.mrb[0].mxu0
      %10576 = vmatprep.mubr.bf16.mxu0 0
      %10577 = vmatmul.mubr.bf16.gmra.mrb[0].mxu0 %v9085
      %v10578 = vpop.f32.mrb[0].mxu0
      %v10579 = vadd.f32 0.0, %v10578
      %v10580 = vpop.f32.mrb[0].mxu0
      %v10581 = vpop.f32.mrb[0].mxu0
      %v10582 = vpop.f32.mrb[0].mxu0
      %10583 = vmatprep.mubr.bf16.mxu0 0
      %10584 = vmatmul.mubr.bf16.gmra.mrb[0].mxu0 %v9088
      %v10585 = vpop.f32.mrb[0].mxu0
      %v10586 = vadd.f32 0.0, %v10585
      %v10587 = vpop.f32.mrb[0].mxu0
      %v10588 = vpop.f32.mrb[0].mxu0
      %v10589 = vadd.f32 0.0, %v10588
      %v10590 = vpop.f32.mrb[0].mxu0
      %10591 = vmatprep.mubr.bf16.mxu0 0
      %10592 = vmatmul.mubr.bf16.gmra.mrb[0].mxu0 %v9091
      %v10593 = vpop.f32.mrb[0].mxu0
      %v10594 = vpop.f32.mrb[0].mxu0
      %v10595 = vpop.f32.mrb[0].mxu0
      %v10596 = vadd.f32 0.0, %v10595
      %v10597 = vpop.f32.mrb[0].mxu0
      %10598 = vmatprep.mubr.bf16.mxu0 0
      %10599 = vmatmul.mubr.bf16.gmra.mrb[0].mxu0 %v9094
      %v10600 = vpop.f32.mrb[0].mxu0
      %v10601 = vadd.f32 0.0, %v10600
      %v10602 = vpop.f32.mrb[0].mxu0
      %v10603 = vpop.f32.mrb[0].mxu0
      %v10604 = vpop.f32.mrb[0].mxu0
      %10605 = vmatprep.mubr.bf16.mxu0 0
      %10606 = vmatmul.mubr.bf16.gmra.mrb[0].mxu0 %v9097
      %v10607 = vpop.f32.mrb[0].mxu0
      %v10608 = vadd.f32 0.0, %v10607
      %v10609 = vpop.f32.mrb[0].mxu0
      %v10610 = vpop.f32.mrb[0].mxu0
      %v10611 = vadd.f32 0.0, %v10610
      %v10612 = vpop.f32.mrb[0].mxu0
      %10613 = vmatprep.mubr.bf16.mxu0 0
      %10614 = vmatmul.mubr.bf16.gmra.mrb[0].mxu0 %v9100
      %v10615 = vpop.f32.mrb[0].mxu0
      %v10616 = vpop.f32.mrb[0].mxu0
      %v10617 = vpop.f32.mrb[0].mxu0
      %v10618 = vadd.f32 0.0, %v10617
      %v10619 = vpop.f32.mrb[0].mxu0
      %10620 = vmatprep.mubr.bf16.mxu0 0
      %10621 = vmatmul.mubr.bf16.gmra.mrb[0].mxu0 %v9103
      %v10622 = vpop.f32.mrb[0].mxu0
      %v10623 = vadd.f32 0.0, %v10622
      %v10624 = vpop.f32.mrb[0].mxu0
      %v10625 = vpop.f32.mrb[0].mxu0
      %v10626 = vpop.f32.mrb[0].mxu0
      %10627 = vmatprep.mubr.bf16.mxu0 0
      %10628 = vmatmul.mubr.bf16.gmra.mrb[0].mxu0 %v9106
      %v10629 = vpop.f32.mrb[0].mxu0
      %v10630 = vadd.f32 0.0, %v10629
      %v10631 = vpop.f32.mrb[0].mxu0
      %v10632 = vpop.f32.mrb[0].mxu0
      %v10633 = vadd.f32 0.0, %v10632
      %v10634 = vpop.f32.mrb[0].mxu0
      %10635 = vmatprep.mubr.bf16.mxu0 0
      %10636 = vmatmul.mubr.bf16.gmra.mrb[0].mxu0 %v9109
      %v10637 = vpop.f32.mrb[0].mxu0
      %v10638 = vpop.f32.mrb[0].mxu0
      %v10639 = vpop.f32.mrb[0].mxu0
      %v10640 = vadd.f32 0.0, %v10639
      %v10641 = vpop.f32.mrb[0].mxu0
      %10642 = vmatprep.mubr.bf16.mxu0 0
      %10643 = vmatmul.mubr.bf16.gmra.mrb[0].mxu0 %v9809
      %v10644 = vpop.f32.mrb[0].mxu0
      %v10645 = vadd.f32 0.0, %v10644
      %v10646 = vpop.f32.mrb[0].mxu0
      %v10647 = vpop.f32.mrb[0].mxu0
      %v10648 = vpop.f32.mrb[0].mxu0
      %10649 = vmatprep.mubr.bf16.mxu0 0
      %10650 = vmatmul.mubr.bf16.gmra.mrb[0].mxu0 %v9812
      %v10651 = vpop.f32.mrb[0].mxu0
      %v10652 = vadd.f32 0.0, %v10651
      %v10653 = vpop.f32.mrb[0].mxu0
      %v10654 = vpop.f32.mrb[0].mxu0
      %v10655 = vadd.f32 0.0, %v10654
      %v10656 = vpop.f32.mrb[0].mxu0
      %10657 = vmatprep.mubr.bf16.mxu0 0
      %10658 = vmatmul.mubr.bf16.gmra.mrb[0].mxu0 %v9815
      %v10659 = vpop.f32.mrb[0].mxu0
      %v10660 = vpop.f32.mrb[0].mxu0
      %v10661 = vpop.f32.mrb[0].mxu0
      %v10662 = vadd.f32 0.0, %v10661
      %v10663 = vpop.f32.mrb[0].mxu0
      %10664 = vmatprep.mubr.bf16.mxu0 0
      %10665 = vmatmul.mubr.bf16.gmra.mrb[0].mxu0 %v10515
      %v10666 = vpop.f32.mrb[0].mxu0
      %v10667 = vadd.f32 0.0, %v10666
      %v10668 = vpop.f32.mrb[0].mxu0
      %v10669 = vpop.f32.mrb[0].mxu0
      %v10670 = vpop.f32.mrb[0].mxu0
      %10671 = vmatprep.mubr.bf16.mxu0 0
      %10672 = vmatmul.mubr.bf16.gmra.mrb[0].mxu0 %v10518
      %v10673 = vpop.f32.mrb[0].mxu0
      %v10674 = vadd.f32 0.0, %v10673
      %v10675 = vpop.f32.mrb[0].mxu0
      %v10676 = vpop.f32.mrb[0].mxu0
      %v10677 = vadd.f32 0.0, %v10676
      %v10678 = vpop.f32.mrb[0].mxu0
      %10679 = vmatprep.mubr.bf16.mxu0 0
      %10680 = vmatmul.mubr.bf16.gmra.mrb[0].mxu0 %v10521
      %v10681 = vpop.f32.mrb[0].mxu0
      %v10682 = vpop.f32.mrb[0].mxu0
      %v10683 = vpop.f32.mrb[0].mxu0
      %v10684 = vadd.f32 0.0, %v10683
      %v10685 = vpop.f32.mrb[0].mxu0
      %10686 = vmatprep.mubr.bf16.mxu0 0
      %10687 = vmatmul.mubr.bf16.gmra.mrb[0].mxu0 %v10524
      %v10688 = vpop.f32.mrb[0].mxu0
      %v10689 = vadd.f32 0.0, %v10688
      %v10690 = vpop.f32.mrb[0].mxu0
      %v10691 = vpop.f32.mrb[0].mxu0
      %v10692 = vpop.f32.mrb[0].mxu0
      %10693 = vdwg.mxu0
      %v10694 = vadd.f32 %v10471, %v10564
      %v10695 = vadd.f32 %v10472, %v10567
      %v10696 = vadd.f32 %v10473, %v10574
      %v10697 = vadd.f32 %v10474, %v10579
      %v10698 = vadd.f32 %v10475, %v10586
      %v10699 = vadd.f32 %v10476, %v10589
      %v10700 = vadd.f32 %v10477, %v10596
      %v10701 = vadd.f32 %v10478, %v10601
      %v10702 = vadd.f32 %v10479, %v10608
      %v10703 = vadd.f32 %v10480, %v10611
      %v10704 = vadd.f32 %v10481, %v10618
      %v10705 = vadd.f32 %v10482, %v10623
      %v10706 = vadd.f32 %v10483, %v10630
      %v10707 = vadd.f32 %v10484, %v10633
      %v10708 = vadd.f32 %v10485, %v10640
      %v10709 = vadd.f32 %v10486, %v10645
      %v10710 = vadd.f32 %v10487, %v10652
      %v10711 = vadd.f32 %v10488, %v10655
      %v10712 = vadd.f32 %v10489, %v10662
      %v10713 = vadd.f32 %v10490, %v10667
      %v10714 = vadd.f32 %v10491, %v10674
      %v10715 = vadd.f32 %v10492, %v10677
      %v10716 = vadd.f32 %v10493, %v10684
      %v10717 = vadd.f32 %v10494, %v10689
      %v10718 = vld [vmem:[%s7] sm:$0x1]
      %v10720 = vlaneseq
      %v10721 = vshrl.u32 %v10720, 7
      %v10722 = vsub.s32 0, %v10721
      %v10723 = vrot.slane %v10718, %v10722
      %v10725 = vadd.f32 %v10694, %v10723
      %v10726 = vadd.f32 %v10695, %v10723
      %v10727 = vadd.f32 %v10696, %v10723
      %v10728 = vadd.f32 %v10697, %v10723
      %v10729 = vadd.f32 %v10698, %v10723
      %v10730 = vadd.f32 %v10699, %v10723
      %v10731 = vadd.f32 %v10700, %v10723
      %v10732 = vadd.f32 %v10701, %v10723
      %v10733 = vadd.f32 %v10702, %v10723
      %v10734 = vadd.f32 %v10703, %v10723
      %v10735 = vadd.f32 %v10704, %v10723
      %v10736 = vadd.f32 %v10705, %v10723
      %v10737 = vadd.f32 %v10706, %v10723
      %v10738 = vadd.f32 %v10707, %v10723
      %v10739 = vadd.f32 %v10708, %v10723
      %v10740 = vadd.f32 %v10709, %v10723
      %v10741 = vadd.f32 %v10710, %v10723
      %v10742 = vadd.f32 %v10711, %v10723
      %v10743 = vadd.f32 %v10712, %v10723
      %v10744 = vadd.f32 %v10713, %v10723
      %v10745 = vadd.f32 %v10714, %v10723
      %v10746 = vadd.f32 %v10715, %v10723
      %v10747 = vadd.f32 %v10716, %v10723
      %v10748 = vadd.f32 %v10717, %v10723
      %v10749 = vmax.f32 %v10725, 0.0
      %v10750 = vmax.f32 %v10726, 0.0
      %v10751 = vmax.f32 %v10727, 0.0
      %v10752 = vmax.f32 %v10728, 0.0
      %v10753 = vmax.f32 %v10729, 0.0
      %v10754 = vmax.f32 %v10730, 0.0
      %v10755 = vmax.f32 %v10731, 0.0
      %v10756 = vmax.f32 %v10732, 0.0
      %v10757 = vmax.f32 %v10733, 0.0
      %v10758 = vmax.f32 %v10734, 0.0
      %v10759 = vmax.f32 %v10735, 0.0
      %v10760 = vmax.f32 %v10736, 0.0
      %v10761 = vmax.f32 %v10737, 0.0
      %v10762 = vmax.f32 %v10738, 0.0
      %v10763 = vmax.f32 %v10739, 0.0
      %v10764 = vmax.f32 %v10740, 0.0
      %v10765 = vmax.f32 %v10741, 0.0
      %v10766 = vmax.f32 %v10742, 0.0
      %v10767 = vmax.f32 %v10743, 0.0
      %v10768 = vmax.f32 %v10744, 0.0
      %v10769 = vmax.f32 %v10745, 0.0
      %v10770 = vmax.f32 %v10746, 0.0
      %v10771 = vmax.f32 %v10747, 0.0
      %v10772 = vmax.f32 %v10748, 0.0
      %10773 = vst.msk [vmem:[%s325] sm:$0xff] %vm4370, %v10749
      %10774 = vst.msk [vmem:[%s325 + $0x8] sm:$0xff] %vm4370, %v10750
      %10775 = vst.msk [vmem:[%s325 + $0x10] sm:$0xff] %vm4370, %v10751
      %10776 = vst.msk [vmem:[%s325 + $0x18] sm:$0xff] %vm4370, %v10752
      %10777 = vst.msk [vmem:[%s325 + $0x20] sm:$0xff] %vm4370, %v10753
      %10778 = vst.msk [vmem:[%s325 + $0x28] sm:$0xff] %vm4370, %v10754
      %10779 = vst.msk [vmem:[%s325 + $0x30] sm:$0xff] %vm4370, %v10755
      %10780 = vst.msk [vmem:[%s325 + $0x38] sm:$0xff] %vm4370, %v10756
      %10781 = vst.msk [vmem:[%s325 + $0x40] sm:$0xff] %vm4370, %v10757
      %10782 = vst.msk [vmem:[%s325 + $0x48] sm:$0xff] %vm4370, %v10758
      %10783 = vst.msk [vmem:[%s325 + $0x50] sm:$0xff] %vm4370, %v10759
      %10784 = vst.msk [vmem:[%s325 + $0x58] sm:$0xff] %vm4370, %v10760
      %10785 = vst.msk [vmem:[%s325 + $0x60] sm:$0xff] %vm4370, %v10761
      %10786 = vst.msk [vmem:[%s325 + $0x68] sm:$0xff] %vm4370, %v10762
      %10787 = vst.msk [vmem:[%s325 + $0x70] sm:$0xff] %vm4370, %v10763
      %10788 = vst.msk [vmem:[%s325 + $0x78] sm:$0xff] %vm4370, %v10764
      %10789 = vst.msk [vmem:[%s325 + $0x80] sm:$0xff] %vm4370, %v10765
      %10790 = vst.msk [vmem:[%s325 + $0x88] sm:$0xff] %vm4370, %v10766
      %10791 = vst.msk [vmem:[%s325 + $0x90] sm:$0xff] %vm4370, %v10767
      %10792 = vst.msk [vmem:[%s325 + $0x98] sm:$0xff] %vm4370, %v10768
      %10793 = vst.msk [vmem:[%s325 + $0xa0] sm:$0xff] %vm4370, %v10769
      %10794 = vst.msk [vmem:[%s325 + $0xa8] sm:$0xff] %vm4370, %v10770
      %10795 = vst.msk [vmem:[%s325 + $0xb0] sm:$0xff] %vm4370, %v10771
      %10796 = vst.msk [vmem:[%s325 + $0xb8] sm:$0xff] %vm4370, %v10772
      %p10797 = scmp.lt.s32.totalorder %s19, 1
      %s10798 = scalar_select %p10797, %s19, 1
      %s10799 = smul.addr %s10798, 24
      %s10800 = smul.addr %s10799, 8
      %s10801 = scalar_lea.vmem %s8, %s10800
      // Predicated region
      $region53: #{upblock_forward.1} parent=51 // pred_check
        %p10802 = pneg %p215
      $region54: #{upblock_forward.1} parent=51 // pred_check_branch
        %10804 = sbr.rel (%p10802) target = $region56
      $region55: #{upblock_forward.1} parent=51 // pred_region
        _
      $region56: #{upblock_forward.1} parent=51 // pred_fallthru
        _
    $region52: #{upblock_forward.1} parent=5 // pred_fallthru
      _
    %p10805 = scmp.le.s32.totalorder 2, %s14
    // Predicated region
    $region57: #{upblock_forward.1} parent=5 // pred_check
      %p10806 = pneg %p10805
    $region58: #{upblock_forward.1} parent=5 // pred_check_branch
      %10808 = sbr.rel (%p10806) target = $region60
    $region59: #{upblock_forward.1} parent=5 // pred_region
      %s10809 = ssub.s32 %s14, 2
      // Predicated region
      $region61: #{upblock_forward.1} parent=59 // pred_check
        %p10810 = pneg %p221
      $region62: #{upblock_forward.1} parent=59 // pred_check_branch
        %10812 = sbr.rel (%p10810) target = $region64
      $region63: #{upblock_forward.1} parent=59 // pred_region
        %p10813 = scmp.lt.s32.totalorder %s20, 1
        %s10814 = scalar_select %p10813, %s20, 1
        %s10815 = smul.addr %s10814, 24
        %s10816 = smul.addr %s10815, 8
        %s10817 = scalar_lea.vmem %s8, %s10816
      $region64: #{upblock_forward.1} parent=59 // pred_fallthru
        _
    $region60: #{upblock_forward.1} parent=5 // pred_fallthru
      _
  $region6: #{upblock_forward.1} parent=0 // loop_footer
    %s18 = sadd.s32 1, %s14
  $region7: #{upblock_forward.1} parent=0 // loop_footer_branch
    %13 = sbr.rel target = $region3
  $region8: #{upblock_forward.1} parent=0 // loop_exit
    _

</llo_original>
